<compile_context>
chip_gen: v6e
topology: v6e:2x2x1
jax: 0.10.0
libtpu: 0.0.40
codegen_flags: <defaults>
</compile_context>

<pallas_src>
import functools

import jax
import jax.numpy as jnp
from jax.experimental import pallas as pl
from jax.experimental.pallas import tpu as pltpu

# PyTorch module uses H = W = 512; use a small spatial size for the demo.
H = 64
W = 64

K_PAD = 32          # stem contraction dim padded from 27 (=3*3*3) to 32 lanes
C_STEM = 32         # stem output channels
C_HEAD = 1280       # head output channels
N_CLASSES = 4
N_CLASSES_PAD = 128  # class dim padded to 128 lanes -> lane-dense (unmasked) store


# ----------------------------------------------------------------------------
# Fused kernel:
#   stem conv (im2col matmul) + BN + SiLU
#   -> 1x1 head conv + BN + SiLU  (chunked over C_HEAD, bf16 epilogue)
#   -> GlobalAvgPooling           (f32 accumulation, (8, C_HEAD) sublane partials)
#   -> Linear(1280, 4)            (finalize branch, padded to 128 lanes)
# ----------------------------------------------------------------------------
def fused_ens_kernel(cols_ref, ws_ref, bs_ref, wh_ref, bh_ref, wd_ref, bd_ref,
                     logits_ref, acc_ref, *, inv_s, c_chunk):
    j = pl.program_id(1)

    @pl.when(j == 0)
    def _():
        acc_ref[...] = jnp.zeros_like(acc_ref)

    cols = cols_ref[0]                                          # (ts, K_PAD) bf16
    ts = cols.shape[0]
    c_head = wh_ref.shape[1]

    # Stem conv as matmul + folded-BN bias + SiLU (f32 epilogue; tiny: 32 channels).
    stem = jnp.dot(cols, ws_ref[...], preferred_element_type=jnp.float32)
    stem = stem + bs_ref[...]
    stem = stem * jax.nn.sigmoid(stem)                          # (ts, 32) f32
    stem_b = stem.astype(jnp.bfloat16)

    # Head 1x1 conv + BN + SiLU + partial GAP, chunked over C_HEAD so each
    # (ts, c_chunk) intermediate stays register/streaming resident instead of
    # round-tripping a 2.5 MiB f32 slab through VMEM.
    # NOTE: this matmul is K-starved (K=32): MXU utilization is capped at
    # ~12.5% (v6e/v7x) / ~25% (v5e) regardless of tiling -- the kernel is
    # compute-bound, not HBM-bound (cols tile is only 32 KiB).
    for c0 in range(0, c_head, c_chunk):                        # static unroll
        h = jnp.dot(stem_b, wh_ref[:, c0:c0 + c_chunk],
                    preferred_element_type=jnp.float32)         # (ts, CH) f32 (MXU)
        # bf16 epilogue (bias + SiLU) -- 2x VPU/EUP density on v6e/v7x.
        h = h.astype(jnp.bfloat16) + bh_ref[:, c0:c0 + c_chunk]
        h = h * jax.nn.sigmoid(h)                               # bf16 SiLU
        # Partial GAP: reduce ts rows only down to 8 sublanes (pure vreg adds,
        # f32 accumulation); the 8->1 cross-sublane reduce is deferred to finalize.
        hf = h.astype(jnp.float32).reshape(ts // 8, 8, c_chunk)
        acc_ref[:, c0:c0 + c_chunk] += jnp.sum(hf, axis=0)      # (8, CH) f32

    @pl.when(j == pl.num_programs(1) - 1)
    def _():
        # Fused dense_output: (8, 1280) partial sums @ (1280, 128) padded weights,
        # then the single cross-sublane 8->1 reduce on the narrow (8, 128) result.
        part = jnp.dot(acc_ref[...].astype(jnp.bfloat16), wd_ref[...],
                       preferred_element_type=jnp.float32)      # (8, 128) f32
        logits_ref[0] = (jnp.sum(part, axis=0, keepdims=True) * inv_s
                         + bd_ref[...])                         # (1, 128) lane-dense


def fused_forward(cols, w_stem, b_stem, w_head, b_head, w_dense, b_dense,
                  *, ts=512, c_chunk=256):
    """cols: (N, S, K_PAD) bf16 -> logits (N, N_CLASSES) f32 (single pallas_call)."""
    n, s, kp = cols.shape
    kp2, c_stem = w_stem.shape
    c_stem2, c_head = w_head.shape
    c_head2, n_cls_pad = w_dense.shape
    assert kp == kp2 and c_stem == c_stem2 and c_head == c_head2
    ts = min(ts, s)
    assert s % ts == 0 and ts % 8 == 0, f"spatial {s} not tileable by {ts}"
    assert c_head % c_chunk == 0

    kernel = functools.partial(fused_ens_kernel, inv_s=1.0 / s, c_chunk=c_chunk)
    logits = pl.pallas_call(
        kernel,
        out_shape=jax.ShapeDtypeStruct((n, 1, n_cls_pad), jnp.float32),
        grid_spec=pltpu.PrefetchScalarGridSpec(
            num_scalar_prefetch=0,
            grid=(n, s // ts),
            in_specs=[
                pl.BlockSpec((1, ts, kp), lambda i, j: (i, j, 0)),        # cols
                pl.BlockSpec((kp, c_stem), lambda i, j: (0, 0)),          # w_stem
                pl.BlockSpec((1, c_stem), lambda i, j: (0, 0)),           # b_stem
                pl.BlockSpec((c_stem, c_head), lambda i, j: (0, 0)),      # w_head
                pl.BlockSpec((1, c_head), lambda i, j: (0, 0)),           # b_head
                pl.BlockSpec((c_head, n_cls_pad), lambda i, j: (0, 0)),   # w_dense
                pl.BlockSpec((1, n_cls_pad), lambda i, j: (0, 0)),        # b_dense
            ],
            out_specs=pl.BlockSpec((1, 1, n_cls_pad), lambda i, j: (i, 0, 0)),
            scratch_shapes=[pltpu.VMEM((8, c_head), jnp.float32)],        # GAP acc
        ),
        compiler_params=pltpu.CompilerParams(
            dimension_semantics=("parallel", "arbitrary"),
            # Budget re-derived: 2x32KiB cols buffers + ~0.5 MiB resident weights
            # + per-chunk streaming intermediates << 32 MiB; safe on v7x (64 MiB).
            vmem_limit_bytes=32 * 1024 * 1024,
        ),
    )(cols, w_stem, b_stem, w_head, b_head, w_dense, b_dense)
    return logits[:, 0, :N_CLASSES]                                       # (N, 4)


# ----------------------------------------------------------------------------
# Glue: im2col for the stem 3x3 / stride-2 / SAME conv (data movement only).
# efficientnet_pytorch's Conv2dStaticSamePadding matches TF-style SAME padding,
# i.e. asymmetric (0, 1) per spatial axis for k=3, s=2, even input.
# ----------------------------------------------------------------------------
def im2col_3x3_s2_same(x_nhwc):
    n, hs, ws_, c = x_nhwc.shape
    ho, wo = hs // 2, ws_ // 2
    xp = jnp.pad(x_nhwc, ((0, 0), (0, 1), (0, 1), (0, 0)))
    patches = [
        xp[:, kh : kh + 2 * ho : 2, kw : kw + 2 * wo : 2, :]
        for kh in range(3)
        for kw in range(3)
    ]
    cols = jnp.concatenate(patches, axis=-1)       # (N, Ho, Wo, 27), order (kh, kw, cin)
    return cols.reshape(n, ho * wo, 9 * c), (ho, wo)


# ----------------------------------------------------------------------------
# Deterministic parameter construction (synthetic, no checkpoint).
# BN scale/bias are folded; matmul weights stored bf16.
# ----------------------------------------------------------------------------
def init_params(key):
    ks = jax.random.split(key, 6)
    p = {}
    # stem: Conv2d(3, 32, k=3, s=2, bias=False) + BatchNorm (folded) + SiLU.
    # NOTE: real PyTorch conv weights are (Cout, Cin, kH, kW) and must be transposed
    # to (kH, kW, Cin, Cout) before reshaping to (27, 32); here we generate HWIO directly.
    w_stem = jax.random.normal(ks[0], (3, 3, 3, C_STEM), jnp.float32) * 0.1
    scale_stem = jnp.ones((C_STEM,), jnp.float32)          # folded BN scale
    w_stem = w_stem.reshape(27, C_STEM) * scale_stem[None, :]
    w_stem = jnp.pad(w_stem, ((0, K_PAD - 27), (0, 0)))    # pad K 27 -> 32 lanes
    p["w_stem"] = w_stem.astype(jnp.bfloat16)
    p["b_stem"] = jax.random.normal(ks[1], (1, C_STEM), jnp.float32) * 0.05  # folded BN bias

    # head: Conv2d(32, 1280, k=1, bias=False) + BatchNorm (folded) + SiLU
    w_head = jax.random.normal(ks[2], (C_STEM, C_HEAD), jnp.float32) * 0.05
    scale_head = jnp.ones((C_HEAD,), jnp.float32)
    p["w_head"] = (w_head * scale_head[None, :]).astype(jnp.bfloat16)
    p["b_head"] = (jax.random.normal(ks[3], (1, C_HEAD), jnp.float32) * 0.05
                   ).astype(jnp.bfloat16)                  # bf16 head epilogue

    # dense_output: Linear(1280, 4) -- PyTorch weight is (4, 1280); store transposed
    # and pad the class dim 4 -> 128 lanes (zero columns) for a lane-dense store.
    w_dense = jax.random.normal(ks[4], (N_CLASSES, C_HEAD), jnp.float32).T * 0.1
    w_dense = jnp.pad(w_dense, ((0, 0), (0, N_CLASSES_PAD - N_CLASSES)))
    p["w_dense"] = w_dense.astype(jnp.bfloat16)
    b_dense = jax.random.normal(ks[5], (1, N_CLASSES), jnp.float32) * 0.1
    p["b_dense"] = jnp.pad(b_dense, ((0, 0), (0, N_CLASSES_PAD - N_CLASSES)))
    return p


# ----------------------------------------------------------------------------
# ENSModel.forward
# ----------------------------------------------------------------------------
@jax.jit
def ens_forward(x, params):
    # x.reshape(-1, 3, H, W)  (NCHW, as in PyTorch)  ->  NHWC for the TPU kernel
    x = x.reshape(-1, 3, H, W)
    x = jnp.transpose(x, (0, 2, 3, 1)).astype(jnp.float32)

    # --- efn.extract_features (stem + final 1x1 conv; MBConv blocks: see TODO) ---
    cols, _ = im2col_3x3_s2_same(x)                           # (N, S, 27)
    cols = jnp.pad(cols, ((0, 0), (0, 0), (0, K_PAD - cols.shape[-1])))
    cols = cols.astype(jnp.bfloat16)                          # bf16 HBM traffic

    # fused stem -> head -> GlobalAvgPooling -> dense_output (single Pallas kernel)
    return fused_forward(cols, params["w_stem"], params["b_stem"],
                         params["w_head"], params["b_head"],
                         params["w_dense"], params["b_dense"],
                         ts=512, c_chunk=256)                 # (N, 4)


# ----------------------------------------------------------------------------
# Pure-JAX reference (same dtypes/casts as the kernel) for a sanity check
# ----------------------------------------------------------------------------
def ens_reference(x, params):
    x = x.reshape(-1, 3, H, W)
    x = jnp.transpose(x, (0, 2, 3, 1)).astype(jnp.float32)
    cols, _ = im2col_3x3_s2_same(x)
    cols = jnp.pad(cols, ((0, 0), (0, 0), (0, K_PAD - cols.shape[-1]))).astype(jnp.bfloat16)
    stem = jnp.dot(cols, params["w_stem"], preferred_element_type=jnp.float32) + params["b_stem"]
    stem = stem * jax.nn.sigmoid(stem)                        # f32 SiLU
    head = jnp.dot(stem.astype(jnp.bfloat16), params["w_head"],
                   preferred_element_type=jnp.float32)
    head = head.astype(jnp.bfloat16) + params["b_head"]       # bf16 epilogue (as in kernel)
    head = head * jax.nn.sigmoid(head)
    pooled = jnp.mean(head.astype(jnp.float32), axis=1)       # f32 GAP, (N, 1280)
    logits = jnp.dot(pooled.astype(jnp.bfloat16), params["w_dense"],
                     preferred_element_type=jnp.float32) + params["b_dense"]
    return logits[:, :N_CLASSES]


if __name__ == "__main__":
    key = jax.random.PRNGKey(0)
    pkey, xkey = jax.random.split(key)
    params = init_params(pkey)

    # small demo input: batch=2, NCHW image (2, 3, 64, 64)
    x = jax.random.normal(xkey, (2, 3, H, W), jnp.float32)

    out = jax.block_until_ready(ens_forward(x, params))
    assert out.shape == (2, N_CLASSES) and out.dtype == jnp.float32

    ref = jax.block_until_ready(ens_reference(x, params))
    assert jnp.allclose(out, ref, rtol=2e-2, atol=2e-2), (out, ref)

    print("KERNEL_OK")
</pallas_src>

<mosaic_0001>
module attributes {stable_mosaic.version = 11 : i64} {
  func.func @fused_ens_kernel(%arg0: i32, %arg1: i32, %arg2: memref<1x512x32xbf16, #tpu.memory_space<vmem>>, %arg3: memref<32x32xbf16, #tpu.memory_space<vmem>>, %arg4: memref<1x32xf32, #tpu.memory_space<vmem>>, %arg5: memref<32x1280xbf16, #tpu.memory_space<vmem>>, %arg6: memref<1x1280xbf16, #tpu.memory_space<vmem>>, %arg7: memref<1280x128xbf16, #tpu.memory_space<vmem>>, %arg8: memref<1x128xf32, #tpu.memory_space<vmem>>, %arg9: memref<1x1x128xf32, #tpu.memory_space<vmem>>, %arg10: memref<8x1280xf32, #tpu.memory_space<vmem>>) attributes {dimension_semantics = [#tpu.dimension_semantics<parallel>, #tpu.dimension_semantics<arbitrary>], iteration_bounds = array<i64: 2, 2>, scalar_prefetch = 0 : i64, scratch_operands = 1 : i64, tpu.core_type = #tpu.core_type<tc>, window_params = [{transform_indices = @transform_0, window_bounds = array<i64: 1, 512, 32>}, {pipeline_mode = #tpu.pipeline_mode<synchronous>, transform_indices = @transform_1, window_bounds = array<i64: 32, 32>}, {pipeline_mode = #tpu.pipeline_mode<synchronous>, transform_indices = @transform_2, window_bounds = array<i64: 1, 32>}, {pipeline_mode = #tpu.pipeline_mode<synchronous>, transform_indices = @transform_3, window_bounds = array<i64: 32, 1280>}, {pipeline_mode = #tpu.pipeline_mode<synchronous>, transform_indices = @transform_4, window_bounds = array<i64: 1, 1280>}, {pipeline_mode = #tpu.pipeline_mode<synchronous>, transform_indices = @transform_5, window_bounds = array<i64: 1280, 128>}, {pipeline_mode = #tpu.pipeline_mode<synchronous>, transform_indices = @transform_6, window_bounds = array<i64: 1, 128>}, {transform_indices = @transform_7, window_bounds = array<i64: 1, 1, 128>}]} {
    %c0_i32 = arith.constant 0 : i32
    %0 = arith.cmpi eq, %arg1, %c0_i32 : i32
    %1 = arith.extui %0 : i1 to i32
    %c0_i32_0 = arith.constant 0 : i32
    %2 = arith.cmpi ne, %1, %c0_i32_0 : i32
    scf.if %2 {
      %cst_60 = arith.constant 0.000000e+00 : f32
      %110 = vector.broadcast %cst_60 : f32 to vector<8x1280xf32>
      %c0_61 = arith.constant 0 : index
      %c0_62 = arith.constant 0 : index
      %111 = vector.load %arg10[%c0_61, %c0_62] : memref<8x1280xf32, #tpu.memory_space<vmem>>, vector<8x1280xf32>
      tpu.vector_store %arg10[%c0_61, %c0_62], %110 {strides = array<i32>} : memref<8x1280xf32, #tpu.memory_space<vmem>>, vector<8x1280xf32>,
    } else {
    }
    %c0 = arith.constant 0 : index
    %c0_1 = arith.constant 0 : index
    %c0_2 = arith.constant 0 : index
    %3 = vector.load %arg2[%c0, %c0_1, %c0_2] : memref<1x512x32xbf16, #tpu.memory_space<vmem>>, vector<1x512x32xbf16>
    %4 = vector.shape_cast %3 : vector<1x512x32xbf16> to vector<512x32xbf16>
    %c0_3 = arith.constant 0 : index
    %c0_4 = arith.constant 0 : index
    %5 = vector.load %arg3[%c0_3, %c0_4] : memref<32x32xbf16, #tpu.memory_space<vmem>>, vector<32x32xbf16>
    %cst = arith.constant dense<0.000000e+00> : vector<512x32xf32>
    %6 = tpu.matmul %4, %5, %cst {dimension_numbers = #tpu.dot_dimension_numbers<[1], [0], [0], [1], [0, 0, 1, 1], [], []>} : vector<512x32xbf16>, vector<32x32xbf16>, vector<512x32xf32> -> vector<512x32xf32>
    %c0_5 = arith.constant 0 : index
    %c0_6 = arith.constant 0 : index
    %7 = vector.load %arg4[%c0_5, %c0_6] : memref<1x32xf32, #tpu.memory_space<vmem>>, vector<1x32xf32>
    %8 = vector.broadcast %7 : vector<1x32xf32> to vector<512x32xf32>
    %9 = arith.addf %6, %8 : vector<512x32xf32>
    %10 = arith.negf %9 : vector<512x32xf32>
    %11 = math.exp %10 : vector<512x32xf32>
    %cst_7 = arith.constant 1.000000e+00 : f32
    %12 = vector.broadcast %cst_7 : f32 to vector<512x32xf32>
    %13 = arith.addf %12, %11 : vector<512x32xf32>
    %14 = arith.divf %12, %13 : vector<512x32xf32>
    %15 = arith.mulf %9, %14 : vector<512x32xf32>
    %16 = arith.truncf %15 : vector<512x32xf32> to vector<512x32xbf16>
    %c0_8 = arith.constant 0 : index
    %c0_9 = arith.constant 0 : index
    %17 = vector.load %arg5[%c0_8, %c0_9] : memref<32x1280xbf16, #tpu.memory_space<vmem>>, vector<32x256xbf16>
    %cst_10 = arith.constant dense<0.000000e+00> : vector<512x256xf32>
    %18 = tpu.matmul %16, %17, %cst_10 {dimension_numbers = #tpu.dot_dimension_numbers<[1], [0], [0], [1], [0, 0, 1, 1], [], []>} : vector<512x32xbf16>, vector<32x256xbf16>, vector<512x256xf32> -> vector<512x256xf32>
    %19 = arith.truncf %18 : vector<512x256xf32> to vector<512x256xbf16>
    %c0_11 = arith.constant 0 : index
    %c0_12 = arith.constant 0 : index
    %20 = vector.load %arg6[%c0_11, %c0_12] : memref<1x1280xbf16, #tpu.memory_space<vmem>>, vector<1x256xbf16>
    %21 = vector.broadcast %20 : vector<1x256xbf16> to vector<512x256xbf16>
    %22 = arith.addf %19, %21 : vector<512x256xbf16>
    %23 = arith.negf %22 : vector<512x256xbf16>
    %24 = math.exp %23 : vector<512x256xbf16>
    %cst_13 = arith.constant 1.000000e+00 : bf16
    %25 = vector.broadcast %cst_13 : bf16 to vector<512x256xbf16>
    %26 = arith.addf %25, %24 : vector<512x256xbf16>
    %27 = arith.divf %25, %26 : vector<512x256xbf16>
    %28 = arith.mulf %22, %27 : vector<512x256xbf16>
    %29 = arith.extf %28 : vector<512x256xbf16> to vector<512x256xf32>
    %30 = vector.shape_cast %29 : vector<512x256xf32> to vector<64x8x256xf32>
    %c0_14 = arith.constant 0 : index
    %c0_15 = arith.constant 0 : index
    %31 = vector.load %arg10[%c0_14, %c0_15] : memref<8x1280xf32, #tpu.memory_space<vmem>>, vector<8x256xf32>
    %cst_16 = arith.constant dense<0.000000e+00> : vector<8x256xf32>
    %32 = vector.multi_reduction <add>, %30, %cst_16 [0] : vector<64x8x256xf32> to vector<8x256xf32>
    %33 = arith.addf %31, %32 : vector<8x256xf32>
    %c0_17 = arith.constant 0 : index
    %c0_18 = arith.constant 0 : index
    %34 = vector.load %arg10[%c0_17, %c0_18] : memref<8x1280xf32, #tpu.memory_space<vmem>>, vector<8x256xf32>
    tpu.vector_store %arg10[%c0_17, %c0_18], %33 {strides = array<i32>} : memref<8x1280xf32, #tpu.memory_space<vmem>>, vector<8x256xf32>,
    %c0_19 = arith.constant 0 : index
    %c256 = arith.constant 256 : index
    %35 = vector.load %arg5[%c0_19, %c256] : memref<32x1280xbf16, #tpu.memory_space<vmem>>, vector<32x256xbf16>
    %cst_20 = arith.constant dense<0.000000e+00> : vector<512x256xf32>
    %36 = tpu.matmul %16, %35, %cst_20 {dimension_numbers = #tpu.dot_dimension_numbers<[1], [0], [0], [1], [0, 0, 1, 1], [], []>} : vector<512x32xbf16>, vector<32x256xbf16>, vector<512x256xf32> -> vector<512x256xf32>
    %37 = arith.truncf %36 : vector<512x256xf32> to vector<512x256xbf16>
    %c0_21 = arith.constant 0 : index
    %c256_22 = arith.constant 256 : index
    %38 = vector.load %arg6[%c0_21, %c256_22] : memref<1x1280xbf16, #tpu.memory_space<vmem>>, vector<1x256xbf16>
    %39 = vector.broadcast %38 : vector<1x256xbf16> to vector<512x256xbf16>
    %40 = arith.addf %37, %39 : vector<512x256xbf16>
    %41 = arith.negf %40 : vector<512x256xbf16>
    %42 = math.exp %41 : vector<512x256xbf16>
    %cst_23 = arith.constant 1.000000e+00 : bf16
    %43 = vector.broadcast %cst_23 : bf16 to vector<512x256xbf16>
    %44 = arith.addf %43, %42 : vector<512x256xbf16>
    %45 = arith.divf %43, %44 : vector<512x256xbf16>
    %46 = arith.mulf %40, %45 : vector<512x256xbf16>
    %47 = arith.extf %46 : vector<512x256xbf16> to vector<512x256xf32>
    %48 = vector.shape_cast %47 : vector<512x256xf32> to vector<64x8x256xf32>
    %c0_24 = arith.constant 0 : index
    %c256_25 = arith.constant 256 : index
    %49 = vector.load %arg10[%c0_24, %c256_25] : memref<8x1280xf32, #tpu.memory_space<vmem>>, vector<8x256xf32>
    %cst_26 = arith.constant dense<0.000000e+00> : vector<8x256xf32>
    %50 = vector.multi_reduction <add>, %48, %cst_26 [0] : vector<64x8x256xf32> to vector<8x256xf32>
    %51 = arith.addf %49, %50 : vector<8x256xf32>
    %c0_27 = arith.constant 0 : index
    %c256_28 = arith.constant 256 : index
    %52 = vector.load %arg10[%c0_27, %c256_28] : memref<8x1280xf32, #tpu.memory_space<vmem>>, vector<8x256xf32>
    tpu.vector_store %arg10[%c0_27, %c256_28], %51 {strides = array<i32>} : memref<8x1280xf32, #tpu.memory_space<vmem>>, vector<8x256xf32>,
    %c0_29 = arith.constant 0 : index
    %c512 = arith.constant 512 : index
    %53 = vector.load %arg5[%c0_29, %c512] : memref<32x1280xbf16, #tpu.memory_space<vmem>>, vector<32x256xbf16>
    %cst_30 = arith.constant dense<0.000000e+00> : vector<512x256xf32>
    %54 = tpu.matmul %16, %53, %cst_30 {dimension_numbers = #tpu.dot_dimension_numbers<[1], [0], [0], [1], [0, 0, 1, 1], [], []>} : vector<512x32xbf16>, vector<32x256xbf16>, vector<512x256xf32> -> vector<512x256xf32>
    %55 = arith.truncf %54 : vector<512x256xf32> to vector<512x256xbf16>
    %c0_31 = arith.constant 0 : index
    %c512_32 = arith.constant 512 : index
    %56 = vector.load %arg6[%c0_31, %c512_32] : memref<1x1280xbf16, #tpu.memory_space<vmem>>, vector<1x256xbf16>
    %57 = vector.broadcast %56 : vector<1x256xbf16> to vector<512x256xbf16>
    %58 = arith.addf %55, %57 : vector<512x256xbf16>
    %59 = arith.negf %58 : vector<512x256xbf16>
    %60 = math.exp %59 : vector<512x256xbf16>
    %cst_33 = arith.constant 1.000000e+00 : bf16
    %61 = vector.broadcast %cst_33 : bf16 to vector<512x256xbf16>
    %62 = arith.addf %61, %60 : vector<512x256xbf16>
    %63 = arith.divf %61, %62 : vector<512x256xbf16>
    %64 = arith.mulf %58, %63 : vector<512x256xbf16>
    %65 = arith.extf %64 : vector<512x256xbf16> to vector<512x256xf32>
    %66 = vector.shape_cast %65 : vector<512x256xf32> to vector<64x8x256xf32>
    %c0_34 = arith.constant 0 : index
    %c512_35 = arith.constant 512 : index
    %67 = vector.load %arg10[%c0_34, %c512_35] : memref<8x1280xf32, #tpu.memory_space<vmem>>, vector<8x256xf32>
    %cst_36 = arith.constant dense<0.000000e+00> : vector<8x256xf32>
    %68 = vector.multi_reduction <add>, %66, %cst_36 [0] : vector<64x8x256xf32> to vector<8x256xf32>
    %69 = arith.addf %67, %68 : vector<8x256xf32>
    %c0_37 = arith.constant 0 : index
    %c512_38 = arith.constant 512 : index
    %70 = vector.load %arg10[%c0_37, %c512_38] : memref<8x1280xf32, #tpu.memory_space<vmem>>, vector<8x256xf32>
    tpu.vector_store %arg10[%c0_37, %c512_38], %69 {strides = array<i32>} : memref<8x1280xf32, #tpu.memory_space<vmem>>, vector<8x256xf32>,
    %c0_39 = arith.constant 0 : index
    %c768 = arith.constant 768 : index
    %71 = vector.load %arg5[%c0_39, %c768] : memref<32x1280xbf16, #tpu.memory_space<vmem>>, vector<32x256xbf16>
    %cst_40 = arith.constant dense<0.000000e+00> : vector<512x256xf32>
    %72 = tpu.matmul %16, %71, %cst_40 {dimension_numbers = #tpu.dot_dimension_numbers<[1], [0], [0], [1], [0, 0, 1, 1], [], []>} : vector<512x32xbf16>, vector<32x256xbf16>, vector<512x256xf32> -> vector<512x256xf32>
    %73 = arith.truncf %72 : vector<512x256xf32> to vector<512x256xbf16>
    %c0_41 = arith.constant 0 : index
    %c768_42 = arith.constant 768 : index
    %74 = vector.load %arg6[%c0_41, %c768_42] : memref<1x1280xbf16, #tpu.memory_space<vmem>>, vector<1x256xbf16>
    %75 = vector.broadcast %74 : vector<1x256xbf16> to vector<512x256xbf16>
    %76 = arith.addf %73, %75 : vector<512x256xbf16>
    %77 = arith.negf %76 : vector<512x256xbf16>
    %78 = math.exp %77 : vector<512x256xbf16>
    %cst_43 = arith.constant 1.000000e+00 : bf16
    %79 = vector.broadcast %cst_43 : bf16 to vector<512x256xbf16>
    %80 = arith.addf %79, %78 : vector<512x256xbf16>
    %81 = arith.divf %79, %80 : vector<512x256xbf16>
    %82 = arith.mulf %76, %81 : vector<512x256xbf16>
    %83 = arith.extf %82 : vector<512x256xbf16> to vector<512x256xf32>
    %84 = vector.shape_cast %83 : vector<512x256xf32> to vector<64x8x256xf32>
    %c0_44 = arith.constant 0 : index
    %c768_45 = arith.constant 768 : index
    %85 = vector.load %arg10[%c0_44, %c768_45] : memref<8x1280xf32, #tpu.memory_space<vmem>>, vector<8x256xf32>
    %cst_46 = arith.constant dense<0.000000e+00> : vector<8x256xf32>
    %86 = vector.multi_reduction <add>, %84, %cst_46 [0] : vector<64x8x256xf32> to vector<8x256xf32>
    %87 = arith.addf %85, %86 : vector<8x256xf32>
    %c0_47 = arith.constant 0 : index
    %c768_48 = arith.constant 768 : index
    %88 = vector.load %arg10[%c0_47, %c768_48] : memref<8x1280xf32, #tpu.memory_space<vmem>>, vector<8x256xf32>
    tpu.vector_store %arg10[%c0_47, %c768_48], %87 {strides = array<i32>} : memref<8x1280xf32, #tpu.memory_space<vmem>>, vector<8x256xf32>,
    %c0_49 = arith.constant 0 : index
    %c1024 = arith.constant 1024 : index
    %89 = vector.load %arg5[%c0_49, %c1024] : memref<32x1280xbf16, #tpu.memory_space<vmem>>, vector<32x256xbf16>
    %cst_50 = arith.constant dense<0.000000e+00> : vector<512x256xf32>
    %90 = tpu.matmul %16, %89, %cst_50 {dimension_numbers = #tpu.dot_dimension_numbers<[1], [0], [0], [1], [0, 0, 1, 1], [], []>} : vector<512x32xbf16>, vector<32x256xbf16>, vector<512x256xf32> -> vector<512x256xf32>
    %91 = arith.truncf %90 : vector<512x256xf32> to vector<512x256xbf16>
    %c0_51 = arith.constant 0 : index
    %c1024_52 = arith.constant 1024 : index
    %92 = vector.load %arg6[%c0_51, %c1024_52] : memref<1x1280xbf16, #tpu.memory_space<vmem>>, vector<1x256xbf16>
    %93 = vector.broadcast %92 : vector<1x256xbf16> to vector<512x256xbf16>
    %94 = arith.addf %91, %93 : vector<512x256xbf16>
    %95 = arith.negf %94 : vector<512x256xbf16>
    %96 = math.exp %95 : vector<512x256xbf16>
    %cst_53 = arith.constant 1.000000e+00 : bf16
    %97 = vector.broadcast %cst_53 : bf16 to vector<512x256xbf16>
    %98 = arith.addf %97, %96 : vector<512x256xbf16>
    %99 = arith.divf %97, %98 : vector<512x256xbf16>
    %100 = arith.mulf %94, %99 : vector<512x256xbf16>
    %101 = arith.extf %100 : vector<512x256xbf16> to vector<512x256xf32>
    %102 = vector.shape_cast %101 : vector<512x256xf32> to vector<64x8x256xf32>
    %c0_54 = arith.constant 0 : index
    %c1024_55 = arith.constant 1024 : index
    %103 = vector.load %arg10[%c0_54, %c1024_55] : memref<8x1280xf32, #tpu.memory_space<vmem>>, vector<8x256xf32>
    %cst_56 = arith.constant dense<0.000000e+00> : vector<8x256xf32>
    %104 = vector.multi_reduction <add>, %102, %cst_56 [0] : vector<64x8x256xf32> to vector<8x256xf32>
    %105 = arith.addf %103, %104 : vector<8x256xf32>
    %c0_57 = arith.constant 0 : index
    %c1024_58 = arith.constant 1024 : index
    %106 = vector.load %arg10[%c0_57, %c1024_58] : memref<8x1280xf32, #tpu.memory_space<vmem>>, vector<8x256xf32>
    tpu.vector_store %arg10[%c0_57, %c1024_58], %105 {strides = array<i32>} : memref<8x1280xf32, #tpu.memory_space<vmem>>, vector<8x256xf32>,
    %c1_i32 = arith.constant 1 : i32
    %107 = arith.cmpi eq, %arg1, %c1_i32 : i32
    %108 = arith.extui %107 : i1 to i32
    %c0_i32_59 = arith.constant 0 : i32
    %109 = arith.cmpi ne, %108, %c0_i32_59 : i32
    scf.if %109 {
      %c0_60 = arith.constant 0 : index
      %c0_61 = arith.constant 0 : index
      %110 = vector.load %arg10[%c0_60, %c0_61] : memref<8x1280xf32, #tpu.memory_space<vmem>>, vector<8x1280xf32>
      %111 = arith.truncf %110 : vector<8x1280xf32> to vector<8x1280xbf16>
      %c0_62 = arith.constant 0 : index
      %c0_63 = arith.constant 0 : index
      %112 = vector.load %arg7[%c0_62, %c0_63] : memref<1280x128xbf16, #tpu.memory_space<vmem>>, vector<1280x128xbf16>
      %cst_64 = arith.constant dense<0.000000e+00> : vector<8x128xf32>
      %113 = tpu.matmul %111, %112, %cst_64 {dimension_numbers = #tpu.dot_dimension_numbers<[1], [0], [0], [1], [0, 0, 1, 1], [], []>} : vector<8x1280xbf16>, vector<1280x128xbf16>, vector<8x128xf32> -> vector<8x128xf32>
      %cst_65 = arith.constant dense<0.000000e+00> : vector<128xf32>
      %114 = vector.multi_reduction <add>, %113, %cst_65 [0] : vector<8x128xf32> to vector<128xf32>
      %115 = vector.shape_cast %114 : vector<128xf32> to vector<1x128xf32>
      %cst_66 = arith.constant 9.765625E-4 : f32
      %116 = vector.broadcast %cst_66 : f32 to vector<1x128xf32>
      %117 = arith.mulf %115, %116 : vector<1x128xf32>
      %c0_67 = arith.constant 0 : index
      %c0_68 = arith.constant 0 : index
      %118 = vector.load %arg8[%c0_67, %c0_68] : memref<1x128xf32, #tpu.memory_space<vmem>>, vector<1x128xf32>
      %119 = arith.addf %117, %118 : vector<1x128xf32>
      %c0_69 = arith.constant 0 : index
      %c0_70 = arith.constant 0 : index
      %c0_71 = arith.constant 0 : index
      %120 = vector.load %arg9[%c0_69, %c0_70, %c0_71] : memref<1x1x128xf32, #tpu.memory_space<vmem>>, vector<1x1x128xf32>
      %121 = vector.shape_cast %120 : vector<1x1x128xf32> to vector<1x128xf32>
      %122 = vector.shape_cast %119 : vector<1x128xf32> to vector<1x1x128xf32>
      tpu.vector_store %arg9[%c0_69, %c0_70, %c0_71], %122 {strides = array<i32>} : memref<1x1x128xf32, #tpu.memory_space<vmem>>, vector<1x1x128xf32>,
    } else {
    }
    return
  }
  func.func @transform_0(%arg0: i32, %arg1: i32) -> (i32, i32, i32) {
    %c0_i32 = arith.constant 0 : i32
    %c0_i32_0 = arith.constant 0 : i32
    return %arg0, %arg1, %c0_i32 : i32, i32, i32
  }
  func.func @transform_1(%arg0: i32, %arg1: i32) -> (i32, i32) {
    %c0_i32 = arith.constant 0 : i32
    %c0_i32_0 = arith.constant 0 : i32
    %c0_i32_1 = arith.constant 0 : i32
    return %c0_i32, %c0_i32_0 : i32, i32
  }
  func.func @transform_2(%arg0: i32, %arg1: i32) -> (i32, i32) {
    %c0_i32 = arith.constant 0 : i32
    %c0_i32_0 = arith.constant 0 : i32
    %c0_i32_1 = arith.constant 0 : i32
    return %c0_i32, %c0_i32_0 : i32, i32
  }
  func.func @transform_3(%arg0: i32, %arg1: i32) -> (i32, i32) {
    %c0_i32 = arith.constant 0 : i32
    %c0_i32_0 = arith.constant 0 : i32
    %c0_i32_1 = arith.constant 0 : i32
    return %c0_i32, %c0_i32_0 : i32, i32
  }
  func.func @transform_4(%arg0: i32, %arg1: i32) -> (i32, i32) {
    %c0_i32 = arith.constant 0 : i32
    %c0_i32_0 = arith.constant 0 : i32
    %c0_i32_1 = arith.constant 0 : i32
    return %c0_i32, %c0_i32_0 : i32, i32
  }
  func.func @transform_5(%arg0: i32, %arg1: i32) -> (i32, i32) {
    %c0_i32 = arith.constant 0 : i32
    %c0_i32_0 = arith.constant 0 : i32
    %c0_i32_1 = arith.constant 0 : i32
    return %c0_i32, %c0_i32_0 : i32, i32
  }
  func.func @transform_6(%arg0: i32, %arg1: i32) -> (i32, i32) {
    %c0_i32 = arith.constant 0 : i32
    %c0_i32_0 = arith.constant 0 : i32
    %c0_i32_1 = arith.constant 0 : i32
    return %c0_i32, %c0_i32_0 : i32, i32
  }
  func.func @transform_7(%arg0: i32, %arg1: i32) -> (i32, i32, i32) {
    %c0_i32 = arith.constant 0 : i32
    %c0_i32_0 = arith.constant 0 : i32
    %c0_i32_1 = arith.constant 0 : i32
    return %arg0, %c0_i32, %c0_i32_0 : i32, i32, i32
  }
}

</mosaic_0001>

<llo_original>
// kernel: ens_forward.1
$region0: #{ens_forward.1}
  #allocation0 [shape = 'u32[]', space=smem, size = 0x4, offset = 0x4, fixed_abs, tag = 'smem constant byte address 0x4 - core index']
  #allocation1 [shape = 'u32[144,128]{1,0:T(1,128)}', space=vmem, size = 0x12000, scoped, tag = 'internal scratch']
  #allocation2 [shape = 'f32[8,1280]{1,0:T(8,128)}', space=vmem, size = 0xa000, scoped, tag = 'scratch operand']
  %s0 = inlined_call_operand.vmem [shape: bf16[2,1024,32], index: 0, kind: input, shape index: {}]
  %s1 = inlined_call_operand.vmem [shape: bf16[32,32], index: 1, kind: input, shape index: {}]
  %s2 = inlined_call_operand.vmem [shape: f32[1,32], index: 2, kind: input, shape index: {}]
  %s3 = inlined_call_operand.vmem [shape: bf16[32,1280], index: 3, kind: input, shape index: {}]
  %s4 = inlined_call_operand.vmem [shape: bf16[1,1280], index: 4, kind: input, shape index: {}]
  %s5 = inlined_call_operand.vmem [shape: bf16[1280,128], index: 5, kind: input, shape index: {}]
  %s6 = inlined_call_operand.vmem [shape: f32[1,128], index: 6, kind: input, shape index: {}]
  %s7 = inlined_call_operand.hbm [shape: f32[2,1,128], index: 7, kind: output, shape index: {}]
  %s8 = sld [smem:[#allocation0]]
  $region69: #{ens_forward.1} parent=0
    _
  %s10 = ssub.s32 1, %s8
  %s11 = scalar_select 0, %s10, %s8
  $region1: #{ens_forward.1} parent=0
    #allocation3 [shape = 'u8[1024]{0}', space=vmem, size = 0x400, scoped, tag = 'output window, operand 0']
    #allocation4 [shape = 's32[2]{0}', space=sflag, size = 0x8, scoped, tag = 'scoped memory for ens_forward.1']
    %12 = vsyncpa [#allocation4], 0
    %s13 = scalar_lea.sflag [#allocation4], 1
    %14 = vsyncpa %s13, 0
    loop: start=0, step=1, limit=6
    $region2: #{ens_forward.1} parent=1 // loop_pre_header
      _
    $region3: #{ens_forward.1} parent=1 // loop_header
      %s16 = sphi 0, %s20
      %p17 = scmp.ge.s32.totalorder %s16, 6
      %s23 = sphi 0, %s35
      %s24 = sphi 0, %s31
      %s25 = sphi 0, %s23
      %s26 = sphi 0, %s24
      %s27 = sphi 0, %s25
      %s28 = sphi 0, %s26
      %s40 = sphi 0, %s42
      %s43 = sphi 0, %s40
      %s44 = sphi 0, %s43
      %s60 = sphi 0, %s44
      %s64 = sphi 0, %s64
      %s66 = sphi 0, %s64
      %s67 = sphi 0, %s66
      %s81 = sphi 0, %s67
      %s85 = sphi 0, %s85
      %s87 = sphi 0, %s85
      %s88 = sphi 0, %s87
      %s102 = sphi 0, %s88
      %s106 = sphi 0, %s106
      %s108 = sphi 0, %s106
      %s109 = sphi 0, %s108
      %s123 = sphi 0, %s109
      %s127 = sphi 0, %s127
      %s129 = sphi 0, %s127
      %s130 = sphi 0, %s129
      %s144 = sphi 0, %s130
      %s148 = sphi 0, %s148
      %s150 = sphi 0, %s148
      %s151 = sphi 0, %s150
      %s165 = sphi 0, %s151
      %s169 = sphi 0, %s169
      %s171 = sphi 0, %s169
      %s172 = sphi 0, %s171
      %s186 = sphi 0, %s172
      %s192 = sphi 0, %s194
      %s195 = sphi 0, %s192
      %s196 = sphi 0, %s195
      %s212 = sphi 0, %s196
    $region4: #{ens_forward.1} parent=1 // loop_header_branch
      %19 = sbr.rel (%p17) target = $region8
    $region5: #{ens_forward.1} parent=1 // loop_body
      %s21 = ssub.s32 %s16, 1
      %s22 = ssub.s32 %s16, 2
      %s29 = sadd.s32 1, %s24
      %p30 = scmp.ge.s32.totalorder %s29, 2
      %s31 = scalar_select %p30, 0, %s29
      %s32 = sadd.s32 1, %s23
      %s33 = scalar_select %p30, %s32, %s23
      %p34 = scmp.ge.s32.totalorder %s33, 2
      %s35 = scalar_select %p34, 0, %s33
      %s36 = ssub.s32 %s23, %s35
      %s37 = ssub.s32 %s24, %s31
      %s38 = sor.u32 %s36, %s37
      %p39 = scmp.eq.s32.totalorder %s38, 0
      %s41 = sadd.s32 %s40, 1
      %s42 = scalar_select %p39, %s40, %s41
      %p45 = pneg %p39
      %p46 = scmp.eq.s32.totalorder %s16, 3
      %p47 = por %p45, %p46
      %p48 = scmp.ne.s32.totalorder %s40, %s43
      %p49 = scmp.eq.s32.totalorder %s16, 0
      %p50 = por %p48, %p49
      %p51 = scmp.ne.s32.totalorder %s40, %s43
      %p52 = scmp.eq.s32.totalorder %s21, 3
      %p53 = por %p51, %p52
      %p54 = scmp.ne.s32.totalorder %s43, %s44
      %p55 = scmp.eq.s32.totalorder %s21, 0
      %p56 = por %p54, %p55
      %p57 = scmp.ne.s32.totalorder %s43, %s44
      %p58 = scmp.eq.s32.totalorder %s22, 3
      %p59 = por %p57, %p58
      %p61 = scmp.ne.s32.totalorder %s44, %s60
      %p62 = scmp.eq.s32.totalorder %s22, 0
      %p63 = por %p61, %p62
      %s65 = sadd.s32 %s64, 1
      %p68 = scmp.eq.s32.totalorder %s16, 3
      %p69 = scmp.ne.s32.totalorder %s64, %s66
      %p70 = scmp.eq.s32.totalorder %s16, 0
      %p71 = por %p69, %p70
      %p72 = scmp.ne.s32.totalorder %s64, %s66
      %p73 = scmp.eq.s32.totalorder %s21, 3
      %p74 = por %p72, %p73
      %p75 = scmp.ne.s32.totalorder %s66, %s67
      %p76 = scmp.eq.s32.totalorder %s21, 0
      %p77 = por %p75, %p76
      %p78 = scmp.ne.s32.totalorder %s66, %s67
      %p79 = scmp.eq.s32.totalorder %s22, 3
      %p80 = por %p78, %p79
      %p82 = scmp.ne.s32.totalorder %s67, %s81
      %p83 = scmp.eq.s32.totalorder %s22, 0
      %p84 = por %p82, %p83
      %s86 = sadd.s32 %s85, 1
      %p89 = scmp.eq.s32.totalorder %s16, 3
      %p90 = scmp.ne.s32.totalorder %s85, %s87
      %p91 = scmp.eq.s32.totalorder %s16, 0
      %p92 = por %p90, %p91
      %p93 = scmp.ne.s32.totalorder %s85, %s87
      %p94 = scmp.eq.s32.totalorder %s21, 3
      %p95 = por %p93, %p94
      %p96 = scmp.ne.s32.totalorder %s87, %s88
      %p97 = scmp.eq.s32.totalorder %s21, 0
      %p98 = por %p96, %p97
      %p99 = scmp.ne.s32.totalorder %s87, %s88
      %p100 = scmp.eq.s32.totalorder %s22, 3
      %p101 = por %p99, %p100
      %p103 = scmp.ne.s32.totalorder %s88, %s102
      %p104 = scmp.eq.s32.totalorder %s22, 0
      %p105 = por %p103, %p104
      %s107 = sadd.s32 %s106, 1
      %p110 = scmp.eq.s32.totalorder %s16, 3
      %p111 = scmp.ne.s32.totalorder %s106, %s108
      %p112 = scmp.eq.s32.totalorder %s16, 0
      %p113 = por %p111, %p112
      %p114 = scmp.ne.s32.totalorder %s106, %s108
      %p115 = scmp.eq.s32.totalorder %s21, 3
      %p116 = por %p114, %p115
      %p117 = scmp.ne.s32.totalorder %s108, %s109
      %p118 = scmp.eq.s32.totalorder %s21, 0
      %p119 = por %p117, %p118
      %p120 = scmp.ne.s32.totalorder %s108, %s109
      %p121 = scmp.eq.s32.totalorder %s22, 3
      %p122 = por %p120, %p121
      %p124 = scmp.ne.s32.totalorder %s109, %s123
      %p125 = scmp.eq.s32.totalorder %s22, 0
      %p126 = por %p124, %p125
      %s128 = sadd.s32 %s127, 1
      %p131 = scmp.eq.s32.totalorder %s16, 3
      %p132 = scmp.ne.s32.totalorder %s127, %s129
      %p133 = scmp.eq.s32.totalorder %s16, 0
      %p134 = por %p132, %p133
      %p135 = scmp.ne.s32.totalorder %s127, %s129
      %p136 = scmp.eq.s32.totalorder %s21, 3
      %p137 = por %p135, %p136
      %p138 = scmp.ne.s32.totalorder %s129, %s130
      %p139 = scmp.eq.s32.totalorder %s21, 0
      %p140 = por %p138, %p139
      %p141 = scmp.ne.s32.totalorder %s129, %s130
      %p142 = scmp.eq.s32.totalorder %s22, 3
      %p143 = por %p141, %p142
      %p145 = scmp.ne.s32.totalorder %s130, %s144
      %p146 = scmp.eq.s32.totalorder %s22, 0
      %p147 = por %p145, %p146
      %s149 = sadd.s32 %s148, 1
      %p152 = scmp.eq.s32.totalorder %s16, 3
      %p153 = scmp.ne.s32.totalorder %s148, %s150
      %p154 = scmp.eq.s32.totalorder %s16, 0
      %p155 = por %p153, %p154
      %p156 = scmp.ne.s32.totalorder %s148, %s150
      %p157 = scmp.eq.s32.totalorder %s21, 3
      %p158 = por %p156, %p157
      %p159 = scmp.ne.s32.totalorder %s150, %s151
      %p160 = scmp.eq.s32.totalorder %s21, 0
      %p161 = por %p159, %p160
      %p162 = scmp.ne.s32.totalorder %s150, %s151
      %p163 = scmp.eq.s32.totalorder %s22, 3
      %p164 = por %p162, %p163
      %p166 = scmp.ne.s32.totalorder %s151, %s165
      %p167 = scmp.eq.s32.totalorder %s22, 0
      %p168 = por %p166, %p167
      %s170 = sadd.s32 %s169, 1
      %p173 = scmp.eq.s32.totalorder %s16, 3
      %p174 = scmp.ne.s32.totalorder %s169, %s171
      %p175 = scmp.eq.s32.totalorder %s16, 0
      %p176 = por %p174, %p175
      %p177 = scmp.ne.s32.totalorder %s169, %s171
      %p178 = scmp.eq.s32.totalorder %s21, 3
      %p179 = por %p177, %p178
      %p180 = scmp.ne.s32.totalorder %s171, %s172
      %p181 = scmp.eq.s32.totalorder %s21, 0
      %p182 = por %p180, %p181
      %p183 = scmp.ne.s32.totalorder %s171, %s172
      %p184 = scmp.eq.s32.totalorder %s22, 3
      %p185 = por %p183, %p184
      %p187 = scmp.ne.s32.totalorder %s172, %s186
      %p188 = scmp.eq.s32.totalorder %s22, 0
      %p189 = por %p187, %p188
      %s190 = ssub.s32 %s23, %s35
      %p191 = scmp.eq.s32.totalorder %s190, 0
      %s193 = sadd.s32 %s192, 1
      %s194 = scalar_select %p191, %s192, %s193
      %p197 = pneg %p191
      %p198 = scmp.eq.s32.totalorder %s16, 3
      %p199 = por %p197, %p198
      %p200 = scmp.ne.s32.totalorder %s192, %s195
      %p201 = scmp.eq.s32.totalorder %s16, 0
      %p202 = por %p200, %p201
      %p203 = scmp.ne.s32.totalorder %s192, %s195
      %p204 = scmp.eq.s32.totalorder %s21, 3
      %p205 = por %p203, %p204
      %p206 = scmp.ne.s32.totalorder %s195, %s196
      %p207 = scmp.eq.s32.totalorder %s21, 0
      %p208 = por %p206, %p207
      %p209 = scmp.ne.s32.totalorder %s195, %s196
      %p210 = scmp.eq.s32.totalorder %s22, 3
      %p211 = por %p209, %p210
      %p213 = scmp.ne.s32.totalorder %s196, %s212
      %p214 = scmp.eq.s32.totalorder %s22, 0
      %p215 = por %p213, %p214
      %p216 = scmp.le.s32.totalorder 1, %s16
      %p217 = scmp.lt.s32.totalorder %s16, 5
      %p218 = pnand %p216, %p217
      %p219 = pneg %p218
      // Predicated region
      $region9: #{ens_forward.1} parent=5 // pred_check
        _
      $region10: #{ens_forward.1} parent=5 // pred_check_branch
        %221 = sbr.rel (%p218) target = $region12
      $region11: #{ens_forward.1} parent=5 // pred_region
        %s222 = ssub.s32 %s16, 1
        // Predicated region
        $region13: #{ens_forward.1} parent=11 // pred_check
          %p223 = pneg %p77
        $region14: #{ens_forward.1} parent=11 // pred_check_branch
          %225 = sbr.rel (%p223) target = $region16
        $region15: #{ens_forward.1} parent=11 // pred_region
          _
        $region16: #{ens_forward.1} parent=11 // pred_fallthru
          _
        // Predicated region
        $region17: #{ens_forward.1} parent=11 // pred_check
          %p226 = pneg %p98
        $region18: #{ens_forward.1} parent=11 // pred_check_branch
          %228 = sbr.rel (%p226) target = $region20
        $region19: #{ens_forward.1} parent=11 // pred_region
          _
        $region20: #{ens_forward.1} parent=11 // pred_fallthru
          _
        // Predicated region
        $region21: #{ens_forward.1} parent=11 // pred_check
          %p229 = pneg %p119
        $region22: #{ens_forward.1} parent=11 // pred_check_branch
          %231 = sbr.rel (%p229) target = $region24
        $region23: #{ens_forward.1} parent=11 // pred_region
          _
        $region24: #{ens_forward.1} parent=11 // pred_fallthru
          _
        // Predicated region
        $region25: #{ens_forward.1} parent=11 // pred_check
          %p232 = pneg %p140
        $region26: #{ens_forward.1} parent=11 // pred_check_branch
          %234 = sbr.rel (%p232) target = $region28
        $region27: #{ens_forward.1} parent=11 // pred_region
          _
        $region28: #{ens_forward.1} parent=11 // pred_fallthru
          _
        // Predicated region
        $region29: #{ens_forward.1} parent=11 // pred_check
          %p235 = pneg %p161
        $region30: #{ens_forward.1} parent=11 // pred_check_branch
          %237 = sbr.rel (%p235) target = $region32
        $region31: #{ens_forward.1} parent=11 // pred_region
          _
        $region32: #{ens_forward.1} parent=11 // pred_fallthru
          _
        // Predicated region
        $region33: #{ens_forward.1} parent=11 // pred_check
          %p238 = pneg %p182
        $region34: #{ens_forward.1} parent=11 // pred_check_branch
          %240 = sbr.rel (%p238) target = $region36
        $region35: #{ens_forward.1} parent=11 // pred_region
          _
        $region36: #{ens_forward.1} parent=11 // pred_fallthru
          _
      $region12: #{ens_forward.1} parent=5 // pred_fallthru
        _
      %p241 = scmp.lt.s32.totalorder %s16, 4
      // Predicated region
      $region37: #{ens_forward.1} parent=5 // pred_check
        %p242 = pneg %p241
      $region38: #{ens_forward.1} parent=5 // pred_check_branch
        %244 = sbr.rel (%p242) target = $region40
      $region39: #{ens_forward.1} parent=5 // pred_region
        // Predicated region
        $region41: #{ens_forward.1} parent=39 // pred_check
          %p245 = pneg %p50
        $region42: #{ens_forward.1} parent=39 // pred_check_branch
          %247 = sbr.rel (%p245) target = $region44
        $region43: #{ens_forward.1} parent=39 // pred_region
          %s248 = smul.u32 64, %s24
          %p249 = scmp.lt.s32.totalorder %s23, 1
          %s250 = scalar_select %p249, %s23, 1
          %p251 = scmp.lt.s32.totalorder %s248, 127
          %s252 = scalar_select %p251, %s248, 127
          %s253 = smul.addr %s250, 128
          %s254 = sadd.s32 %s252, %s253
          %s255 = smul.addr %s254, 4
          %s256 = scalar_lea.vmem %s0, %s255
          %s257 = smul.u32 64, %s24
        $region44: #{ens_forward.1} parent=39 // pred_fallthru
          _
      $region40: #{ens_forward.1} parent=5 // pred_fallthru
        _
      %p258 = scmp.le.s32.totalorder 1, %s16
      %p259 = scmp.lt.s32.totalorder %s16, 5
      %p260 = pnand %p258, %p259
      %p261 = pneg %p260
      // Predicated region
      $region45: #{ens_forward.1} parent=5 // pred_check
        _
      $region46: #{ens_forward.1} parent=5 // pred_check_branch
        %263 = sbr.rel (%p260) target = $region48
      $region47: #{ens_forward.1} parent=5 // pred_region
        %s264 = ssub.s32 %s16, 1
        %s265 = smul.u32 64, %s26
        %p266 = scmp.lt.s32.totalorder %s25, 1
        %s267 = scalar_select %p266, %s25, 1
        %p268 = scmp.lt.s32.totalorder %s265, 127
        %s269 = scalar_select %p268, %s265, 127
        %s270 = smul.addr %s267, 128
        %s271 = sadd.s32 %s269, %s270
        %s272 = smul.addr %s271, 4
        %s273 = scalar_lea.vmem %s0, %s272
        %p274 = pneg %p56
        %p275 = pneg %p53
        %p276 = pneg %p77
        %p277 = pneg %p74
        %p278 = pneg %p98
        %p279 = pneg %p95
        %p280 = pneg %p119
        %p281 = pneg %p116
        %p282 = pneg %p140
        %p283 = pneg %p137
        %p284 = pneg %p161
        %p285 = pneg %p158
        %p286 = pneg %p182
        %p287 = pneg %p179
        %p288 = pneg %p208
        %p289 = pneg %p205
        %s290 = sand.u32 %s195, 1
        %s291 = scalar_lea.sflag [#allocation4], %s290
        %s292 = sand.u32 %s195, 1
        %s293 = scalar_lea.vmem [#allocation3], %s292
        %s294 = smul.u32 64, %s26
        %p295 = scmp.lt.s32.totalorder %s25, 1
        %s296 = scalar_select %p295, %s25, 1
        %p297 = scmp.lt.s32.totalorder %s294, 127
        %s298 = scalar_select %p297, %s294, 127
        %s299 = smul.addr %s296, 128
        %s300 = sadd.s32 %s298, %s299
        %s301 = smul.addr %s300, 4
        %s302 = scalar_lea.vmem %s0, %s301
        %s303 = smul.u32 64, %s26
        %p306 = scmp.eq.s32.totalorder %s26, 0
        // Predicated region
        $region49: #{ens_forward.1} parent=47 // pred_check
          %p307 = pneg %p306
        $region50: #{ens_forward.1} parent=47 // pred_check_branch
          %309 = sbr.rel (%p307) target = $region52
        $region51: #{ens_forward.1} parent=47 // pred_region
          %310 = vst [vmem:[#allocation2] sm:$0xff] 0.0
          %311 = vst [vmem:[#allocation2 + $0x8] sm:$0xff] 0.0
          %312 = vst [vmem:[#allocation2 + $0x10] sm:$0xff] 0.0
          %313 = vst [vmem:[#allocation2 + $0x18] sm:$0xff] 0.0
          %314 = vst [vmem:[#allocation2 + $0x20] sm:$0xff] 0.0
          %315 = vst [vmem:[#allocation2 + $0x28] sm:$0xff] 0.0
          %316 = vst [vmem:[#allocation2 + $0x30] sm:$0xff] 0.0
          %317 = vst [vmem:[#allocation2 + $0x38] sm:$0xff] 0.0
          %318 = vst [vmem:[#allocation2 + $0x40] sm:$0xff] 0.0
          %319 = vst [vmem:[#allocation2 + $0x48] sm:$0xff] 0.0
        $region52: #{ens_forward.1} parent=47 // pred_fallthru
          _
        %v320 = vld [vmem:[%s302] sm:$0xf]
        %v321 = vld [vmem:[%s302 + $0x4] sm:$0xf]
        %v322 = vld [vmem:[%s302 + $0x8] sm:$0xf]
        %v323 = vld [vmem:[%s302 + $0xc] sm:$0xf]
        %v324 = vld [vmem:[%s302 + $0x10] sm:$0xf]
        %v325 = vld [vmem:[%s302 + $0x14] sm:$0xf]
        %v326 = vld [vmem:[%s302 + $0x18] sm:$0xf]
        %v327 = vld [vmem:[%s302 + $0x1c] sm:$0xf]
        %v328 = vld [vmem:[%s302 + $0x20] sm:$0xf]
        %v329 = vld [vmem:[%s302 + $0x24] sm:$0xf]
        %v330 = vld [vmem:[%s302 + $0x28] sm:$0xf]
        %v331 = vld [vmem:[%s302 + $0x2c] sm:$0xf]
        %v332 = vld [vmem:[%s302 + $0x30] sm:$0xf]
        %v333 = vld [vmem:[%s302 + $0x34] sm:$0xf]
        %v334 = vld [vmem:[%s302 + $0x38] sm:$0xf]
        %v335 = vld [vmem:[%s302 + $0x3c] sm:$0xf]
        %v336 = vld [vmem:[%s302 + $0x40] sm:$0xf]
        %v337 = vld [vmem:[%s302 + $0x44] sm:$0xf]
        %v338 = vld [vmem:[%s302 + $0x48] sm:$0xf]
        %v339 = vld [vmem:[%s302 + $0x4c] sm:$0xf]
        %v340 = vld [vmem:[%s302 + $0x50] sm:$0xf]
        %v341 = vld [vmem:[%s302 + $0x54] sm:$0xf]
        %v342 = vld [vmem:[%s302 + $0x58] sm:$0xf]
        %v343 = vld [vmem:[%s302 + $0x5c] sm:$0xf]
        %v344 = vld [vmem:[%s302 + $0x60] sm:$0xf]
        %v345 = vld [vmem:[%s302 + $0x64] sm:$0xf]
        %v346 = vld [vmem:[%s302 + $0x68] sm:$0xf]
        %v347 = vld [vmem:[%s302 + $0x6c] sm:$0xf]
        %v348 = vld [vmem:[%s302 + $0x70] sm:$0xf]
        %v349 = vld [vmem:[%s302 + $0x74] sm:$0xf]
        %v350 = vld [vmem:[%s302 + $0x78] sm:$0xf]
        %v351 = vld [vmem:[%s302 + $0x7c] sm:$0xf]
        %v352 = vld [vmem:[%s302 + $0x80] sm:$0xf]
        %v353 = vld [vmem:[%s302 + $0x84] sm:$0xf]
        %v354 = vld [vmem:[%s302 + $0x88] sm:$0xf]
        %v355 = vld [vmem:[%s302 + $0x8c] sm:$0xf]
        %v356 = vld [vmem:[%s302 + $0x90] sm:$0xf]
        %v357 = vld [vmem:[%s302 + $0x94] sm:$0xf]
        %v358 = vld [vmem:[%s302 + $0x98] sm:$0xf]
        %v359 = vld [vmem:[%s302 + $0x9c] sm:$0xf]
        %v360 = vld [vmem:[%s302 + $0xa0] sm:$0xf]
        %v361 = vld [vmem:[%s302 + $0xa4] sm:$0xf]
        %v362 = vld [vmem:[%s302 + $0xa8] sm:$0xf]
        %v363 = vld [vmem:[%s302 + $0xac] sm:$0xf]
        %v364 = vld [vmem:[%s302 + $0xb0] sm:$0xf]
        %v365 = vld [vmem:[%s302 + $0xb4] sm:$0xf]
        %v366 = vld [vmem:[%s302 + $0xb8] sm:$0xf]
        %v367 = vld [vmem:[%s302 + $0xbc] sm:$0xf]
        %v368 = vld [vmem:[%s302 + $0xc0] sm:$0xf]
        %v369 = vld [vmem:[%s302 + $0xc4] sm:$0xf]
        %v370 = vld [vmem:[%s302 + $0xc8] sm:$0xf]
        %v371 = vld [vmem:[%s302 + $0xcc] sm:$0xf]
        %v372 = vld [vmem:[%s302 + $0xd0] sm:$0xf]
        %v373 = vld [vmem:[%s302 + $0xd4] sm:$0xf]
        %v374 = vld [vmem:[%s302 + $0xd8] sm:$0xf]
        %v375 = vld [vmem:[%s302 + $0xdc] sm:$0xf]
        %v376 = vld [vmem:[%s302 + $0xe0] sm:$0xf]
        %v377 = vld [vmem:[%s302 + $0xe4] sm:$0xf]
        %v378 = vld [vmem:[%s302 + $0xe8] sm:$0xf]
        %v379 = vld [vmem:[%s302 + $0xec] sm:$0xf]
        %v380 = vld [vmem:[%s302 + $0xf0] sm:$0xf]
        %v381 = vld [vmem:[%s302 + $0xf4] sm:$0xf]
        %v382 = vld [vmem:[%s302 + $0xf8] sm:$0xf]
        %v383 = vld [vmem:[%s302 + $0xfc] sm:$0xf]
        %v384 = vld [vmem:[%s1] sm:$0xf]
        %v385 = vld [vmem:[%s1 + $0x4] sm:$0xf]
        %v386 = vld [vmem:[%s1 + $0x8] sm:$0xf]
        %v387 = vld [vmem:[%s1 + $0xc] sm:$0xf]
        %v388 = vld [vmem:[%s2] sm:$0x1]
        %v390 = vlaneseq
        %v391 = vshrl.u32 %v390, 7
        %v392 = vsub.s32 0, %v391
        %v393 = vrot.slane %v388, %v392
        %v459 = vunpack.c.l.b16 %v320
        %v460 = vunpack.c.l.b16 %v321
        %v461 = vunpack.c.l.b16 %v322
        %v462 = vunpack.c.l.b16 %v323
        %v463 = vunpack.c.l.b16 %v324
        %v464 = vunpack.c.l.b16 %v325
        %v465 = vunpack.c.l.b16 %v326
        %v466 = vunpack.c.l.b16 %v327
        %v467 = vunpack.c.l.b16 %v328
        %v468 = vunpack.c.l.b16 %v329
        %v469 = vunpack.c.l.b16 %v330
        %v470 = vunpack.c.l.b16 %v331
        %v471 = vunpack.c.l.b16 %v332
        %v472 = vunpack.c.l.b16 %v333
        %v473 = vunpack.c.l.b16 %v334
        %v474 = vunpack.c.l.b16 %v335
        %v475 = vunpack.c.l.b16 %v336
        %v476 = vunpack.c.l.b16 %v337
        %v477 = vunpack.c.l.b16 %v338
        %v478 = vunpack.c.l.b16 %v339
        %v479 = vunpack.c.l.b16 %v340
        %v480 = vunpack.c.l.b16 %v341
        %v481 = vunpack.c.l.b16 %v342
        %v482 = vunpack.c.l.b16 %v343
        %v483 = vunpack.c.l.b16 %v344
        %v484 = vunpack.c.l.b16 %v345
        %v485 = vunpack.c.l.b16 %v346
        %v486 = vunpack.c.l.b16 %v347
        %v487 = vunpack.c.l.b16 %v348
        %v488 = vunpack.c.l.b16 %v349
        %v489 = vunpack.c.l.b16 %v350
        %v490 = vunpack.c.l.b16 %v351
        %v491 = vunpack.c.l.b16 %v352
        %v492 = vunpack.c.l.b16 %v353
        %v493 = vunpack.c.l.b16 %v354
        %v494 = vunpack.c.l.b16 %v355
        %v495 = vunpack.c.l.b16 %v356
        %v496 = vunpack.c.l.b16 %v357
        %v497 = vunpack.c.l.b16 %v358
        %v498 = vunpack.c.l.b16 %v359
        %v499 = vunpack.c.l.b16 %v360
        %v500 = vunpack.c.l.b16 %v361
        %v501 = vunpack.c.l.b16 %v362
        %v502 = vunpack.c.l.b16 %v363
        %v503 = vunpack.c.l.b16 %v364
        %v504 = vunpack.c.l.b16 %v365
        %v505 = vunpack.c.l.b16 %v366
        %v506 = vunpack.c.l.b16 %v367
        %v507 = vunpack.c.l.b16 %v368
        %v508 = vunpack.c.l.b16 %v369
        %v509 = vunpack.c.l.b16 %v370
        %v510 = vunpack.c.l.b16 %v371
        %v511 = vunpack.c.l.b16 %v372
        %v512 = vunpack.c.l.b16 %v373
        %v513 = vunpack.c.l.b16 %v374
        %v514 = vunpack.c.l.b16 %v375
        %v515 = vunpack.c.l.b16 %v376
        %v516 = vunpack.c.l.b16 %v377
        %v517 = vunpack.c.l.b16 %v378
        %v518 = vunpack.c.l.b16 %v379
        %v519 = vunpack.c.l.b16 %v380
        %v520 = vunpack.c.l.b16 %v381
        %v521 = vunpack.c.l.b16 %v382
        %v522 = vunpack.c.l.b16 %v383
        %v523 = vpack.c.b16 %v460, %v459
        %v524 = vpack.c.b16 %v462, %v461
        %v525 = vpack.c.b16 %v464, %v463
        %v526 = vpack.c.b16 %v466, %v465
        %v527 = vpack.c.b16 %v468, %v467
        %v528 = vpack.c.b16 %v470, %v469
        %v529 = vpack.c.b16 %v472, %v471
        %v530 = vpack.c.b16 %v474, %v473
        %v531 = vpack.c.b16 %v476, %v475
        %v532 = vpack.c.b16 %v478, %v477
        %v533 = vpack.c.b16 %v480, %v479
        %v534 = vpack.c.b16 %v482, %v481
        %v535 = vpack.c.b16 %v484, %v483
        %v536 = vpack.c.b16 %v486, %v485
        %v537 = vpack.c.b16 %v488, %v487
        %v538 = vpack.c.b16 %v490, %v489
        %v539 = vpack.c.b16 %v492, %v491
        %v540 = vpack.c.b16 %v494, %v493
        %v541 = vpack.c.b16 %v496, %v495
        %v542 = vpack.c.b16 %v498, %v497
        %v543 = vpack.c.b16 %v500, %v499
        %v544 = vpack.c.b16 %v502, %v501
        %v545 = vpack.c.b16 %v504, %v503
        %v546 = vpack.c.b16 %v506, %v505
        %v547 = vpack.c.b16 %v508, %v507
        %v548 = vpack.c.b16 %v510, %v509
        %v549 = vpack.c.b16 %v512, %v511
        %v550 = vpack.c.b16 %v514, %v513
        %v551 = vpack.c.b16 %v516, %v515
        %v552 = vpack.c.b16 %v518, %v517
        %v553 = vpack.c.b16 %v520, %v519
        %v554 = vpack.c.b16 %v522, %v521
        %v559 = vunpack.c.l.b16 %v384
        %v560 = vunpack.c.l.b16 %v385
        %v561 = vunpack.c.l.b16 %v386
        %v562 = vunpack.c.l.b16 %v387
        %v563 = vpack.c.b16 %v560, %v559
        %v564 = vpack.c.b16 %v562, %v561
        %vm567 = vcmask 261120
        %v569 = vsel %vm567, %v523, 0
        %v572 = vsel %vm567, %v524, 0
        %v575 = vsel %vm567, %v525, 0
        %v578 = vsel %vm567, %v526, 0
        %v581 = vsel %vm567, %v527, 0
        %v584 = vsel %vm567, %v528, 0
        %v587 = vsel %vm567, %v529, 0
        %v590 = vsel %vm567, %v530, 0
        %v593 = vsel %vm567, %v531, 0
        %v596 = vsel %vm567, %v532, 0
        %v599 = vsel %vm567, %v533, 0
        %v602 = vsel %vm567, %v534, 0
        %v605 = vsel %vm567, %v535, 0
        %v608 = vsel %vm567, %v536, 0
        %v611 = vsel %vm567, %v537, 0
        %v614 = vsel %vm567, %v538, 0
        %v617 = vsel %vm567, %v539, 0
        %v620 = vsel %vm567, %v540, 0
        %v623 = vsel %vm567, %v541, 0
        %v626 = vsel %vm567, %v542, 0
        %v629 = vsel %vm567, %v543, 0
        %v632 = vsel %vm567, %v544, 0
        %v635 = vsel %vm567, %v545, 0
        %v638 = vsel %vm567, %v546, 0
        %v641 = vsel %vm567, %v547, 0
        %v644 = vsel %vm567, %v548, 0
        %v647 = vsel %vm567, %v549, 0
        %v650 = vsel %vm567, %v550, 0
        %v653 = vsel %vm567, %v551, 0
        %v656 = vsel %vm567, %v552, 0
        %v659 = vsel %vm567, %v553, 0
        %v662 = vsel %vm567, %v554, 0
        %664 = vmatprep.subr.bf16.mxu0 0
        %665 = vmatpush1.bf16.msra.mxu0 0
        %666 = vmatprep.subr.bf16.mxu0 0
        %667 = vmatpush1.bf16.msra.mxu0 0
        %668 = vmatprep.subr.bf16.mxu0 0
        %669 = vmatpush1.bf16.msra.mxu0 0
        %670 = vmatprep.subr.bf16.mxu0 0
        %671 = vmatpush1.bf16.msra.mxu0 0
        %672 = vmatprep.subr.bf16.mxu0 0
        %673 = vmatpush1.bf16.msra.mxu0 0
        %674 = vmatprep.subr.bf16.mxu0 0
        %675 = vmatpush1.bf16.msra.mxu0 0
        %676 = vmatprep.subr.bf16.mxu0 0
        %677 = vmatpush1.bf16.msra.mxu0 %v564
        %678 = vmatprep.subr.bf16.mxu0 0
        %679 = vmatpush1.bf16.msra.mxu0 %v563
        %680 = vmatprep.subr.bf16.mxu0 0
        %681 = vmatpush2.bf16.msra.mxu0 0
        %682 = vmatprep.subr.bf16.mxu0 0
        %683 = vmatpush2.bf16.msra.mxu0 0
        %684 = vmatprep.subr.bf16.mxu0 0
        %685 = vmatpush2.bf16.msra.mxu0 0
        %686 = vmatprep.subr.bf16.mxu0 0
        %687 = vmatpush2.bf16.msra.mxu0 0
        %688 = vmatprep.subr.bf16.mxu0 0
        %689 = vmatpush2.bf16.msra.mxu0 0
        %690 = vmatprep.subr.bf16.mxu0 0
        %691 = vmatpush2.bf16.msra.mxu0 0
        %692 = vmatprep.subr.bf16.mxu0 0
        %693 = vmatpush2.bf16.msra.mxu0 0
        %694 = vmatprep.subr.bf16.mxu0 0
        %695 = vmatpush2.bf16.msra.mxu0 0
        %696 = vmatprep.mubr.bf16.mxu0 0
        %697 = vmatmul.mubr.bf16.gmra.mxu0 %v569
        %v698 = vpop.f32.mrf.mxu0
        %v699 = vadd.f32 %v393, %v698
        %v700 = vpop.f32.mrf.mxu0
        %v701 = vpop.f32.mrf.mxu0
        %v702 = vadd.f32 %v393, %v701
        %v703 = vpop.f32.mrf.mxu0
        %704 = vmatprep.mubr.bf16.mxu0 0
        %705 = vmatmul.mubr.bf16.gmra.mxu0 %v572
        %v706 = vpop.f32.mrf.mxu0
        %v707 = vadd.f32 %v393, %v706
        %v708 = vpop.f32.mrf.mxu0
        %v709 = vpop.f32.mrf.mxu0
        %v710 = vadd.f32 %v393, %v709
        %v711 = vpop.f32.mrf.mxu0
        %712 = vmatprep.mubr.bf16.mxu0 0
        %713 = vmatmul.mubr.bf16.gmra.mxu0 %v575
        %v714 = vpop.f32.mrf.mxu0
        %v715 = vadd.f32 %v393, %v714
        %v716 = vpop.f32.mrf.mxu0
        %v717 = vpop.f32.mrf.mxu0
        %v718 = vadd.f32 %v393, %v717
        %v719 = vpop.f32.mrf.mxu0
        %720 = vmatprep.mubr.bf16.mxu0 0
        %721 = vmatmul.mubr.bf16.gmra.mxu0 %v578
        %v722 = vpop.f32.mrf.mxu0
        %v723 = vadd.f32 %v393, %v722
        %v724 = vpop.f32.mrf.mxu0
        %v725 = vpop.f32.mrf.mxu0
        %v726 = vadd.f32 %v393, %v725
        %v727 = vpop.f32.mrf.mxu0
        %728 = vmatprep.mubr.bf16.mxu0 0
        %729 = vmatmul.mubr.bf16.gmra.mxu0 %v581
        %v730 = vpop.f32.mrf.mxu0
        %v731 = vadd.f32 %v393, %v730
        %v732 = vpop.f32.mrf.mxu0
        %v733 = vpop.f32.mrf.mxu0
        %v734 = vadd.f32 %v393, %v733
        %v735 = vpop.f32.mrf.mxu0
        %736 = vmatprep.mubr.bf16.mxu0 0
        %737 = vmatmul.mubr.bf16.gmra.mxu0 %v584
        %v738 = vpop.f32.mrf.mxu0
        %v739 = vadd.f32 %v393, %v738
        %v740 = vpop.f32.mrf.mxu0
        %v741 = vpop.f32.mrf.mxu0
        %v742 = vadd.f32 %v393, %v741
        %v743 = vpop.f32.mrf.mxu0
        %744 = vmatprep.mubr.bf16.mxu0 0
        %745 = vmatmul.mubr.bf16.gmra.mxu0 %v587
        %v746 = vpop.f32.mrf.mxu0
        %v747 = vadd.f32 %v393, %v746
        %v748 = vpop.f32.mrf.mxu0
        %v749 = vpop.f32.mrf.mxu0
        %v750 = vadd.f32 %v393, %v749
        %v751 = vpop.f32.mrf.mxu0
        %752 = vmatprep.mubr.bf16.mxu0 0
        %753 = vmatmul.mubr.bf16.gmra.mxu0 %v590
        %v754 = vpop.f32.mrf.mxu0
        %v755 = vadd.f32 %v393, %v754
        %v756 = vpop.f32.mrf.mxu0
        %v757 = vpop.f32.mrf.mxu0
        %v758 = vadd.f32 %v393, %v757
        %v759 = vpop.f32.mrf.mxu0
        %760 = vmatprep.mubr.bf16.mxu0 0
        %761 = vmatmul.mubr.bf16.gmra.mxu0 %v593
        %v762 = vpop.f32.mrf.mxu0
        %v763 = vadd.f32 %v393, %v762
        %v764 = vpop.f32.mrf.mxu0
        %v765 = vpop.f32.mrf.mxu0
        %v766 = vadd.f32 %v393, %v765
        %v767 = vpop.f32.mrf.mxu0
        %768 = vmatprep.mubr.bf16.mxu0 0
        %769 = vmatmul.mubr.bf16.gmra.mxu0 %v596
        %v770 = vpop.f32.mrf.mxu0
        %v771 = vadd.f32 %v393, %v770
        %v772 = vpop.f32.mrf.mxu0
        %v773 = vpop.f32.mrf.mxu0
        %v774 = vadd.f32 %v393, %v773
        %v775 = vpop.f32.mrf.mxu0
        %776 = vmatprep.mubr.bf16.mxu0 0
        %777 = vmatmul.mubr.bf16.gmra.mxu0 %v599
        %v778 = vpop.f32.mrf.mxu0
        %v779 = vadd.f32 %v393, %v778
        %v780 = vpop.f32.mrf.mxu0
        %v781 = vpop.f32.mrf.mxu0
        %v782 = vadd.f32 %v393, %v781
        %v783 = vpop.f32.mrf.mxu0
        %784 = vmatprep.mubr.bf16.mxu0 0
        %785 = vmatmul.mubr.bf16.gmra.mxu0 %v602
        %v786 = vpop.f32.mrf.mxu0
        %v787 = vadd.f32 %v393, %v786
        %v788 = vpop.f32.mrf.mxu0
        %v789 = vpop.f32.mrf.mxu0
        %v790 = vadd.f32 %v393, %v789
        %v791 = vpop.f32.mrf.mxu0
        %792 = vmatprep.mubr.bf16.mxu0 0
        %793 = vmatmul.mubr.bf16.gmra.mxu0 %v605
        %v794 = vpop.f32.mrf.mxu0
        %v795 = vadd.f32 %v393, %v794
        %v796 = vpop.f32.mrf.mxu0
        %v797 = vpop.f32.mrf.mxu0
        %v798 = vadd.f32 %v393, %v797
        %v799 = vpop.f32.mrf.mxu0
        %800 = vmatprep.mubr.bf16.mxu0 0
        %801 = vmatmul.mubr.bf16.gmra.mxu0 %v608
        %v802 = vpop.f32.mrf.mxu0
        %v803 = vadd.f32 %v393, %v802
        %v804 = vpop.f32.mrf.mxu0
        %v805 = vpop.f32.mrf.mxu0
        %v806 = vadd.f32 %v393, %v805
        %v807 = vpop.f32.mrf.mxu0
        %808 = vmatprep.mubr.bf16.mxu0 0
        %809 = vmatmul.mubr.bf16.gmra.mxu0 %v611
        %v810 = vpop.f32.mrf.mxu0
        %v811 = vadd.f32 %v393, %v810
        %v812 = vpop.f32.mrf.mxu0
        %v813 = vpop.f32.mrf.mxu0
        %v814 = vadd.f32 %v393, %v813
        %v815 = vpop.f32.mrf.mxu0
        %816 = vmatprep.mubr.bf16.mxu0 0
        %817 = vmatmul.mubr.bf16.gmra.mxu0 %v614
        %v818 = vpop.f32.mrf.mxu0
        %v819 = vadd.f32 %v393, %v818
        %v820 = vpop.f32.mrf.mxu0
        %v821 = vpop.f32.mrf.mxu0
        %v822 = vadd.f32 %v393, %v821
        %v823 = vpop.f32.mrf.mxu0
        %824 = vmatprep.mubr.bf16.mxu0 0
        %825 = vmatmul.mubr.bf16.gmra.mxu0 %v617
        %v826 = vpop.f32.mrf.mxu0
        %v827 = vadd.f32 %v393, %v826
        %v828 = vpop.f32.mrf.mxu0
        %v829 = vpop.f32.mrf.mxu0
        %v830 = vadd.f32 %v393, %v829
        %v831 = vpop.f32.mrf.mxu0
        %832 = vmatprep.mubr.bf16.mxu0 0
        %833 = vmatmul.mubr.bf16.gmra.mxu0 %v620
        %v834 = vpop.f32.mrf.mxu0
        %v835 = vadd.f32 %v393, %v834
        %v836 = vpop.f32.mrf.mxu0
        %v837 = vpop.f32.mrf.mxu0
        %v838 = vadd.f32 %v393, %v837
        %v839 = vpop.f32.mrf.mxu0
        %840 = vmatprep.mubr.bf16.mxu0 0
        %841 = vmatmul.mubr.bf16.gmra.mxu0 %v623
        %v842 = vpop.f32.mrf.mxu0
        %v843 = vadd.f32 %v393, %v842
        %v844 = vpop.f32.mrf.mxu0
        %v845 = vpop.f32.mrf.mxu0
        %v846 = vadd.f32 %v393, %v845
        %v847 = vpop.f32.mrf.mxu0
        %848 = vmatprep.mubr.bf16.mxu0 0
        %849 = vmatmul.mubr.bf16.gmra.mxu0 %v626
        %v850 = vpop.f32.mrf.mxu0
        %v851 = vadd.f32 %v393, %v850
        %v852 = vpop.f32.mrf.mxu0
        %v853 = vpop.f32.mrf.mxu0
        %v854 = vadd.f32 %v393, %v853
        %v855 = vpop.f32.mrf.mxu0
        %856 = vmatprep.mubr.bf16.mxu0 0
        %857 = vmatmul.mubr.bf16.gmra.mxu0 %v629
        %v858 = vpop.f32.mrf.mxu0
        %v859 = vadd.f32 %v393, %v858
        %v860 = vpop.f32.mrf.mxu0
        %v861 = vpop.f32.mrf.mxu0
        %v862 = vadd.f32 %v393, %v861
        %v863 = vpop.f32.mrf.mxu0
        %864 = vmatprep.mubr.bf16.mxu0 0
        %865 = vmatmul.mubr.bf16.gmra.mxu0 %v632
        %v866 = vpop.f32.mrf.mxu0
        %v867 = vadd.f32 %v393, %v866
        %v868 = vpop.f32.mrf.mxu0
        %v869 = vpop.f32.mrf.mxu0
        %v870 = vadd.f32 %v393, %v869
        %v871 = vpop.f32.mrf.mxu0
        %872 = vmatprep.mubr.bf16.mxu0 0
        %873 = vmatmul.mubr.bf16.gmra.mxu0 %v635
        %v874 = vpop.f32.mrf.mxu0
        %v875 = vadd.f32 %v393, %v874
        %v876 = vpop.f32.mrf.mxu0
        %v877 = vpop.f32.mrf.mxu0
        %v878 = vadd.f32 %v393, %v877
        %v879 = vpop.f32.mrf.mxu0
        %880 = vmatprep.mubr.bf16.mxu0 0
        %881 = vmatmul.mubr.bf16.gmra.mxu0 %v638
        %v882 = vpop.f32.mrf.mxu0
        %v883 = vadd.f32 %v393, %v882
        %v884 = vpop.f32.mrf.mxu0
        %v885 = vpop.f32.mrf.mxu0
        %v886 = vadd.f32 %v393, %v885
        %v887 = vpop.f32.mrf.mxu0
        %888 = vmatprep.mubr.bf16.mxu0 0
        %889 = vmatmul.mubr.bf16.gmra.mxu0 %v641
        %v890 = vpop.f32.mrf.mxu0
        %v891 = vadd.f32 %v393, %v890
        %v892 = vpop.f32.mrf.mxu0
        %v893 = vpop.f32.mrf.mxu0
        %v894 = vadd.f32 %v393, %v893
        %v895 = vpop.f32.mrf.mxu0
        %896 = vmatprep.mubr.bf16.mxu0 0
        %897 = vmatmul.mubr.bf16.gmra.mxu0 %v644
        %v898 = vpop.f32.mrf.mxu0
        %v899 = vadd.f32 %v393, %v898
        %v900 = vpop.f32.mrf.mxu0
        %v901 = vpop.f32.mrf.mxu0
        %v902 = vadd.f32 %v393, %v901
        %v903 = vpop.f32.mrf.mxu0
        %904 = vmatprep.mubr.bf16.mxu0 0
        %905 = vmatmul.mubr.bf16.gmra.mxu0 %v647
        %v906 = vpop.f32.mrf.mxu0
        %v907 = vadd.f32 %v393, %v906
        %v908 = vpop.f32.mrf.mxu0
        %v909 = vpop.f32.mrf.mxu0
        %v910 = vadd.f32 %v393, %v909
        %v911 = vpop.f32.mrf.mxu0
        %912 = vmatprep.mubr.bf16.mxu0 0
        %913 = vmatmul.mubr.bf16.gmra.mxu0 %v650
        %v914 = vpop.f32.mrf.mxu0
        %v915 = vadd.f32 %v393, %v914
        %v916 = vpop.f32.mrf.mxu0
        %v917 = vpop.f32.mrf.mxu0
        %v918 = vadd.f32 %v393, %v917
        %v919 = vpop.f32.mrf.mxu0
        %920 = vmatprep.mubr.bf16.mxu0 0
        %921 = vmatmul.mubr.bf16.gmra.mxu0 %v653
        %v922 = vpop.f32.mrf.mxu0
        %v923 = vadd.f32 %v393, %v922
        %v924 = vpop.f32.mrf.mxu0
        %v925 = vpop.f32.mrf.mxu0
        %v926 = vadd.f32 %v393, %v925
        %v927 = vpop.f32.mrf.mxu0
        %928 = vmatprep.mubr.bf16.mxu0 0
        %929 = vmatmul.mubr.bf16.gmra.mxu0 %v656
        %v930 = vpop.f32.mrf.mxu0
        %v931 = vadd.f32 %v393, %v930
        %v932 = vpop.f32.mrf.mxu0
        %v933 = vpop.f32.mrf.mxu0
        %v934 = vadd.f32 %v393, %v933
        %v935 = vpop.f32.mrf.mxu0
        %936 = vmatprep.mubr.bf16.mxu0 0
        %937 = vmatmul.mubr.bf16.gmra.mxu0 %v659
        %v938 = vpop.f32.mrf.mxu0
        %v939 = vadd.f32 %v393, %v938
        %v940 = vpop.f32.mrf.mxu0
        %v941 = vpop.f32.mrf.mxu0
        %v942 = vadd.f32 %v393, %v941
        %v943 = vpop.f32.mrf.mxu0
        %944 = vmatprep.mubr.bf16.mxu0 0
        %945 = vmatmul.mubr.bf16.gmra.mxu0 %v662
        %v946 = vpop.f32.mrf.mxu0
        %v947 = vadd.f32 %v393, %v946
        %v948 = vpop.f32.mrf.mxu0
        %v949 = vpop.f32.mrf.mxu0
        %v950 = vadd.f32 %v393, %v949
        %v951 = vpop.f32.mrf.mxu0
        %952 = vdwg.mxu0
        %v953 = vxor.u32 %v699, 2147483648
        %v954 = vxor.u32 %v702, 2147483648
        %v955 = vxor.u32 %v707, 2147483648
        %v956 = vxor.u32 %v710, 2147483648
        %v957 = vxor.u32 %v715, 2147483648
        %v958 = vxor.u32 %v718, 2147483648
        %v959 = vxor.u32 %v723, 2147483648
        %v960 = vxor.u32 %v726, 2147483648
        %v961 = vxor.u32 %v731, 2147483648
        %v962 = vxor.u32 %v734, 2147483648
        %v963 = vxor.u32 %v739, 2147483648
        %v964 = vxor.u32 %v742, 2147483648
        %v965 = vxor.u32 %v747, 2147483648
        %v966 = vxor.u32 %v750, 2147483648
        %v967 = vxor.u32 %v755, 2147483648
        %v968 = vxor.u32 %v758, 2147483648
        %v969 = vxor.u32 %v763, 2147483648
        %v970 = vxor.u32 %v766, 2147483648
        %v971 = vxor.u32 %v771, 2147483648
        %v972 = vxor.u32 %v774, 2147483648
        %v973 = vxor.u32 %v779, 2147483648
        %v974 = vxor.u32 %v782, 2147483648
        %v975 = vxor.u32 %v787, 2147483648
        %v976 = vxor.u32 %v790, 2147483648
        %v977 = vxor.u32 %v795, 2147483648
        %v978 = vxor.u32 %v798, 2147483648
        %v979 = vxor.u32 %v803, 2147483648
        %v980 = vxor.u32 %v806, 2147483648
        %v981 = vxor.u32 %v811, 2147483648
        %v982 = vxor.u32 %v814, 2147483648
        %v983 = vxor.u32 %v819, 2147483648
        %v984 = vxor.u32 %v822, 2147483648
        %v985 = vxor.u32 %v827, 2147483648
        %v986 = vxor.u32 %v830, 2147483648
        %v987 = vxor.u32 %v835, 2147483648
        %v988 = vxor.u32 %v838, 2147483648
        %v989 = vxor.u32 %v843, 2147483648
        %v990 = vxor.u32 %v846, 2147483648
        %v991 = vxor.u32 %v851, 2147483648
        %v992 = vxor.u32 %v854, 2147483648
        %v993 = vxor.u32 %v859, 2147483648
        %v994 = vxor.u32 %v862, 2147483648
        %v995 = vxor.u32 %v867, 2147483648
        %v996 = vxor.u32 %v870, 2147483648
        %v997 = vxor.u32 %v875, 2147483648
        %v998 = vxor.u32 %v878, 2147483648
        %v999 = vxor.u32 %v883, 2147483648
        %v1000 = vxor.u32 %v886, 2147483648
        %v1001 = vxor.u32 %v891, 2147483648
        %v1002 = vxor.u32 %v894, 2147483648
        %v1003 = vxor.u32 %v899, 2147483648
        %v1004 = vxor.u32 %v902, 2147483648
        %v1005 = vxor.u32 %v907, 2147483648
        %v1006 = vxor.u32 %v910, 2147483648
        %v1007 = vxor.u32 %v915, 2147483648
        %v1008 = vxor.u32 %v918, 2147483648
        %v1009 = vxor.u32 %v923, 2147483648
        %v1010 = vxor.u32 %v926, 2147483648
        %v1011 = vxor.u32 %v931, 2147483648
        %v1012 = vxor.u32 %v934, 2147483648
        %v1013 = vxor.u32 %v939, 2147483648
        %v1014 = vxor.u32 %v942, 2147483648
        %v1015 = vxor.u32 %v947, 2147483648
        %v1016 = vxor.u32 %v950, 2147483648
        %v1017 = vmul.f32 %v953, 1.442695
        %v1018 = vpow.pop %v1017
        %v1019 = vmul.f32 %v954, 1.442695
        %v1020 = vpow.pop %v1019
        %v1021 = vmul.f32 %v955, 1.442695
        %v1022 = vpow.pop %v1021
        %v1023 = vmul.f32 %v956, 1.442695
        %v1024 = vpow.pop %v1023
        %v1025 = vmul.f32 %v957, 1.442695
        %v1026 = vpow.pop %v1025
        %v1027 = vmul.f32 %v958, 1.442695
        %v1028 = vpow.pop %v1027
        %v1029 = vmul.f32 %v959, 1.442695
        %v1030 = vpow.pop %v1029
        %v1031 = vmul.f32 %v960, 1.442695
        %v1032 = vpow.pop %v1031
        %v1033 = vmul.f32 %v961, 1.442695
        %v1034 = vpow.pop %v1033
        %v1035 = vmul.f32 %v962, 1.442695
        %v1036 = vpow.pop %v1035
        %v1037 = vmul.f32 %v963, 1.442695
        %v1038 = vpow.pop %v1037
        %v1039 = vmul.f32 %v964, 1.442695
        %v1040 = vpow.pop %v1039
        %v1041 = vmul.f32 %v965, 1.442695
        %v1042 = vpow.pop %v1041
        %v1043 = vmul.f32 %v966, 1.442695
        %v1044 = vpow.pop %v1043
        %v1045 = vmul.f32 %v967, 1.442695
        %v1046 = vpow.pop %v1045
        %v1047 = vmul.f32 %v968, 1.442695
        %v1048 = vpow.pop %v1047
        %v1049 = vmul.f32 %v969, 1.442695
        %v1050 = vpow.pop %v1049
        %v1051 = vmul.f32 %v970, 1.442695
        %v1052 = vpow.pop %v1051
        %v1053 = vmul.f32 %v971, 1.442695
        %v1054 = vpow.pop %v1053
        %v1055 = vmul.f32 %v972, 1.442695
        %v1056 = vpow.pop %v1055
        %v1057 = vmul.f32 %v973, 1.442695
        %v1058 = vpow.pop %v1057
        %v1059 = vmul.f32 %v974, 1.442695
        %v1060 = vpow.pop %v1059
        %v1061 = vmul.f32 %v975, 1.442695
        %v1062 = vpow.pop %v1061
        %v1063 = vmul.f32 %v976, 1.442695
        %v1064 = vpow.pop %v1063
        %v1065 = vmul.f32 %v977, 1.442695
        %v1066 = vpow.pop %v1065
        %v1067 = vmul.f32 %v978, 1.442695
        %v1068 = vpow.pop %v1067
        %v1069 = vmul.f32 %v979, 1.442695
        %v1070 = vpow.pop %v1069
        %v1071 = vmul.f32 %v980, 1.442695
        %v1072 = vpow.pop %v1071
        %v1073 = vmul.f32 %v981, 1.442695
        %v1074 = vpow.pop %v1073
        %v1075 = vmul.f32 %v982, 1.442695
        %v1076 = vpow.pop %v1075
        %v1077 = vmul.f32 %v983, 1.442695
        %v1078 = vpow.pop %v1077
        %v1079 = vmul.f32 %v984, 1.442695
        %v1080 = vpow.pop %v1079
        %v1081 = vmul.f32 %v985, 1.442695
        %v1082 = vpow.pop %v1081
        %v1083 = vmul.f32 %v986, 1.442695
        %v1084 = vpow.pop %v1083
        %v1085 = vmul.f32 %v987, 1.442695
        %v1086 = vpow.pop %v1085
        %v1087 = vmul.f32 %v988, 1.442695
        %v1088 = vpow.pop %v1087
        %v1089 = vmul.f32 %v989, 1.442695
        %v1090 = vpow.pop %v1089
        %v1091 = vmul.f32 %v990, 1.442695
        %v1092 = vpow.pop %v1091
        %v1093 = vmul.f32 %v991, 1.442695
        %v1094 = vpow.pop %v1093
        %v1095 = vmul.f32 %v992, 1.442695
        %v1096 = vpow.pop %v1095
        %v1097 = vmul.f32 %v993, 1.442695
        %v1098 = vpow.pop %v1097
        %v1099 = vmul.f32 %v994, 1.442695
        %v1100 = vpow.pop %v1099
        %v1101 = vmul.f32 %v995, 1.442695
        %v1102 = vpow.pop %v1101
        %v1103 = vmul.f32 %v996, 1.442695
        %v1104 = vpow.pop %v1103
        %v1105 = vmul.f32 %v997, 1.442695
        %v1106 = vpow.pop %v1105
        %v1107 = vmul.f32 %v998, 1.442695
        %v1108 = vpow.pop %v1107
        %v1109 = vmul.f32 %v999, 1.442695
        %v1110 = vpow.pop %v1109
        %v1111 = vmul.f32 %v1000, 1.442695
        %v1112 = vpow.pop %v1111
        %v1113 = vmul.f32 %v1001, 1.442695
        %v1114 = vpow.pop %v1113
        %v1115 = vmul.f32 %v1002, 1.442695
        %v1116 = vpow.pop %v1115
        %v1117 = vmul.f32 %v1003, 1.442695
        %v1118 = vpow.pop %v1117
        %v1119 = vmul.f32 %v1004, 1.442695
        %v1120 = vpow.pop %v1119
        %v1121 = vmul.f32 %v1005, 1.442695
        %v1122 = vpow.pop %v1121
        %v1123 = vmul.f32 %v1006, 1.442695
        %v1124 = vpow.pop %v1123
        %v1125 = vmul.f32 %v1007, 1.442695
        %v1126 = vpow.pop %v1125
        %v1127 = vmul.f32 %v1008, 1.442695
        %v1128 = vpow.pop %v1127
        %v1129 = vmul.f32 %v1009, 1.442695
        %v1130 = vpow.pop %v1129
        %v1131 = vmul.f32 %v1010, 1.442695
        %v1132 = vpow.pop %v1131
        %v1133 = vmul.f32 %v1011, 1.442695
        %v1134 = vpow.pop %v1133
        %v1135 = vmul.f32 %v1012, 1.442695
        %v1136 = vpow.pop %v1135
        %v1137 = vmul.f32 %v1013, 1.442695
        %v1138 = vpow.pop %v1137
        %v1139 = vmul.f32 %v1014, 1.442695
        %v1140 = vpow.pop %v1139
        %v1141 = vmul.f32 %v1015, 1.442695
        %v1142 = vpow.pop %v1141
        %v1143 = vmul.f32 %v1016, 1.442695
        %v1144 = vpow.pop %v1143
        %v1145 = vadd.f32 %v1018, 1.0
        %v1146 = vadd.f32 %v1020, 1.0
        %v1147 = vadd.f32 %v1022, 1.0
        %v1148 = vadd.f32 %v1024, 1.0
        %v1149 = vadd.f32 %v1026, 1.0
        %v1150 = vadd.f32 %v1028, 1.0
        %v1151 = vadd.f32 %v1030, 1.0
        %v1152 = vadd.f32 %v1032, 1.0
        %v1153 = vadd.f32 %v1034, 1.0
        %v1154 = vadd.f32 %v1036, 1.0
        %v1155 = vadd.f32 %v1038, 1.0
        %v1156 = vadd.f32 %v1040, 1.0
        %v1157 = vadd.f32 %v1042, 1.0
        %v1158 = vadd.f32 %v1044, 1.0
        %v1159 = vadd.f32 %v1046, 1.0
        %v1160 = vadd.f32 %v1048, 1.0
        %v1161 = vadd.f32 %v1050, 1.0
        %v1162 = vadd.f32 %v1052, 1.0
        %v1163 = vadd.f32 %v1054, 1.0
        %v1164 = vadd.f32 %v1056, 1.0
        %v1165 = vadd.f32 %v1058, 1.0
        %v1166 = vadd.f32 %v1060, 1.0
        %v1167 = vadd.f32 %v1062, 1.0
        %v1168 = vadd.f32 %v1064, 1.0
        %v1169 = vadd.f32 %v1066, 1.0
        %v1170 = vadd.f32 %v1068, 1.0
        %v1171 = vadd.f32 %v1070, 1.0
        %v1172 = vadd.f32 %v1072, 1.0
        %v1173 = vadd.f32 %v1074, 1.0
        %v1174 = vadd.f32 %v1076, 1.0
        %v1175 = vadd.f32 %v1078, 1.0
        %v1176 = vadd.f32 %v1080, 1.0
        %v1177 = vadd.f32 %v1082, 1.0
        %v1178 = vadd.f32 %v1084, 1.0
        %v1179 = vadd.f32 %v1086, 1.0
        %v1180 = vadd.f32 %v1088, 1.0
        %v1181 = vadd.f32 %v1090, 1.0
        %v1182 = vadd.f32 %v1092, 1.0
        %v1183 = vadd.f32 %v1094, 1.0
        %v1184 = vadd.f32 %v1096, 1.0
        %v1185 = vadd.f32 %v1098, 1.0
        %v1186 = vadd.f32 %v1100, 1.0
        %v1187 = vadd.f32 %v1102, 1.0
        %v1188 = vadd.f32 %v1104, 1.0
        %v1189 = vadd.f32 %v1106, 1.0
        %v1190 = vadd.f32 %v1108, 1.0
        %v1191 = vadd.f32 %v1110, 1.0
        %v1192 = vadd.f32 %v1112, 1.0
        %v1193 = vadd.f32 %v1114, 1.0
        %v1194 = vadd.f32 %v1116, 1.0
        %v1195 = vadd.f32 %v1118, 1.0
        %v1196 = vadd.f32 %v1120, 1.0
        %v1197 = vadd.f32 %v1122, 1.0
        %v1198 = vadd.f32 %v1124, 1.0
        %v1199 = vadd.f32 %v1126, 1.0
        %v1200 = vadd.f32 %v1128, 1.0
        %v1201 = vadd.f32 %v1130, 1.0
        %v1202 = vadd.f32 %v1132, 1.0
        %v1203 = vadd.f32 %v1134, 1.0
        %v1204 = vadd.f32 %v1136, 1.0
        %v1205 = vadd.f32 %v1138, 1.0
        %v1206 = vadd.f32 %v1140, 1.0
        %v1207 = vadd.f32 %v1142, 1.0
        %v1208 = vadd.f32 %v1144, 1.0
        %v1209 = vrcp.pop %v1145
        %v1210 = vmul.f32 1.0, %v1209
        %v1211 = vrcp.pop %v1146
        %v1212 = vmul.f32 1.0, %v1211
        %v1213 = vrcp.pop %v1147
        %v1214 = vmul.f32 1.0, %v1213
        %v1215 = vrcp.pop %v1148
        %v1216 = vmul.f32 1.0, %v1215
        %v1217 = vrcp.pop %v1149
        %v1218 = vmul.f32 1.0, %v1217
        %v1219 = vrcp.pop %v1150
        %v1220 = vmul.f32 1.0, %v1219
        %v1221 = vrcp.pop %v1151
        %v1222 = vmul.f32 1.0, %v1221
        %v1223 = vrcp.pop %v1152
        %v1224 = vmul.f32 1.0, %v1223
        %v1225 = vrcp.pop %v1153
        %v1226 = vmul.f32 1.0, %v1225
        %v1227 = vrcp.pop %v1154
        %v1228 = vmul.f32 1.0, %v1227
        %v1229 = vrcp.pop %v1155
        %v1230 = vmul.f32 1.0, %v1229
        %v1231 = vrcp.pop %v1156
        %v1232 = vmul.f32 1.0, %v1231
        %v1233 = vrcp.pop %v1157
        %v1234 = vmul.f32 1.0, %v1233
        %v1235 = vrcp.pop %v1158
        %v1236 = vmul.f32 1.0, %v1235
        %v1237 = vrcp.pop %v1159
        %v1238 = vmul.f32 1.0, %v1237
        %v1239 = vrcp.pop %v1160
        %v1240 = vmul.f32 1.0, %v1239
        %v1241 = vrcp.pop %v1161
        %v1242 = vmul.f32 1.0, %v1241
        %v1243 = vrcp.pop %v1162
        %v1244 = vmul.f32 1.0, %v1243
        %v1245 = vrcp.pop %v1163
        %v1246 = vmul.f32 1.0, %v1245
        %v1247 = vrcp.pop %v1164
        %v1248 = vmul.f32 1.0, %v1247
        %v1249 = vrcp.pop %v1165
        %v1250 = vmul.f32 1.0, %v1249
        %v1251 = vrcp.pop %v1166
        %v1252 = vmul.f32 1.0, %v1251
        %v1253 = vrcp.pop %v1167
        %v1254 = vmul.f32 1.0, %v1253
        %v1255 = vrcp.pop %v1168
        %v1256 = vmul.f32 1.0, %v1255
        %v1257 = vrcp.pop %v1169
        %v1258 = vmul.f32 1.0, %v1257
        %v1259 = vrcp.pop %v1170
        %v1260 = vmul.f32 1.0, %v1259
        %v1261 = vrcp.pop %v1171
        %v1262 = vmul.f32 1.0, %v1261
        %v1263 = vrcp.pop %v1172
        %v1264 = vmul.f32 1.0, %v1263
        %v1265 = vrcp.pop %v1173
        %v1266 = vmul.f32 1.0, %v1265
        %v1267 = vrcp.pop %v1174
        %v1268 = vmul.f32 1.0, %v1267
        %v1269 = vrcp.pop %v1175
        %v1270 = vmul.f32 1.0, %v1269
        %v1271 = vrcp.pop %v1176
        %v1272 = vmul.f32 1.0, %v1271
        %v1273 = vrcp.pop %v1177
        %v1274 = vmul.f32 1.0, %v1273
        %v1275 = vrcp.pop %v1178
        %v1276 = vmul.f32 1.0, %v1275
        %v1277 = vrcp.pop %v1179
        %v1278 = vmul.f32 1.0, %v1277
        %v1279 = vrcp.pop %v1180
        %v1280 = vmul.f32 1.0, %v1279
        %v1281 = vrcp.pop %v1181
        %v1282 = vmul.f32 1.0, %v1281
        %v1283 = vrcp.pop %v1182
        %v1284 = vmul.f32 1.0, %v1283
        %v1285 = vrcp.pop %v1183
        %v1286 = vmul.f32 1.0, %v1285
        %v1287 = vrcp.pop %v1184
        %v1288 = vmul.f32 1.0, %v1287
        %v1289 = vrcp.pop %v1185
        %v1290 = vmul.f32 1.0, %v1289
        %v1291 = vrcp.pop %v1186
        %v1292 = vmul.f32 1.0, %v1291
        %v1293 = vrcp.pop %v1187
        %v1294 = vmul.f32 1.0, %v1293
        %v1295 = vrcp.pop %v1188
        %v1296 = vmul.f32 1.0, %v1295
        %v1297 = vrcp.pop %v1189
        %v1298 = vmul.f32 1.0, %v1297
        %v1299 = vrcp.pop %v1190
        %v1300 = vmul.f32 1.0, %v1299
        %v1301 = vrcp.pop %v1191
        %v1302 = vmul.f32 1.0, %v1301
        %v1303 = vrcp.pop %v1192
        %v1304 = vmul.f32 1.0, %v1303
        %v1305 = vrcp.pop %v1193
        %v1306 = vmul.f32 1.0, %v1305
        %v1307 = vrcp.pop %v1194
        %v1308 = vmul.f32 1.0, %v1307
        %v1309 = vrcp.pop %v1195
        %v1310 = vmul.f32 1.0, %v1309
        %v1311 = vrcp.pop %v1196
        %v1312 = vmul.f32 1.0, %v1311
        %v1313 = vrcp.pop %v1197
        %v1314 = vmul.f32 1.0, %v1313
        %v1315 = vrcp.pop %v1198
        %v1316 = vmul.f32 1.0, %v1315
        %v1317 = vrcp.pop %v1199
        %v1318 = vmul.f32 1.0, %v1317
        %v1319 = vrcp.pop %v1200
        %v1320 = vmul.f32 1.0, %v1319
        %v1321 = vrcp.pop %v1201
        %v1322 = vmul.f32 1.0, %v1321
        %v1323 = vrcp.pop %v1202
        %v1324 = vmul.f32 1.0, %v1323
        %v1325 = vrcp.pop %v1203
        %v1326 = vmul.f32 1.0, %v1325
        %v1327 = vrcp.pop %v1204
        %v1328 = vmul.f32 1.0, %v1327
        %v1329 = vrcp.pop %v1205
        %v1330 = vmul.f32 1.0, %v1329
        %v1331 = vrcp.pop %v1206
        %v1332 = vmul.f32 1.0, %v1331
        %v1333 = vrcp.pop %v1207
        %v1334 = vmul.f32 1.0, %v1333
        %v1335 = vrcp.pop %v1208
        %v1336 = vmul.f32 1.0, %v1335
        %v1337 = vmul.f32 %v699, %v1210
        %v1338 = vmul.f32 %v702, %v1212
        %v1339 = vmul.f32 %v707, %v1214
        %v1340 = vmul.f32 %v710, %v1216
        %v1341 = vmul.f32 %v715, %v1218
        %v1342 = vmul.f32 %v718, %v1220
        %v1343 = vmul.f32 %v723, %v1222
        %v1344 = vmul.f32 %v726, %v1224
        %v1345 = vmul.f32 %v731, %v1226
        %v1346 = vmul.f32 %v734, %v1228
        %v1347 = vmul.f32 %v739, %v1230
        %v1348 = vmul.f32 %v742, %v1232
        %v1349 = vmul.f32 %v747, %v1234
        %v1350 = vmul.f32 %v750, %v1236
        %v1351 = vmul.f32 %v755, %v1238
        %v1352 = vmul.f32 %v758, %v1240
        %v1353 = vmul.f32 %v763, %v1242
        %v1354 = vmul.f32 %v766, %v1244
        %v1355 = vmul.f32 %v771, %v1246
        %v1356 = vmul.f32 %v774, %v1248
        %v1357 = vmul.f32 %v779, %v1250
        %v1358 = vmul.f32 %v782, %v1252
        %v1359 = vmul.f32 %v787, %v1254
        %v1360 = vmul.f32 %v790, %v1256
        %v1361 = vmul.f32 %v795, %v1258
        %v1362 = vmul.f32 %v798, %v1260
        %v1363 = vmul.f32 %v803, %v1262
        %v1364 = vmul.f32 %v806, %v1264
        %v1365 = vmul.f32 %v811, %v1266
        %v1366 = vmul.f32 %v814, %v1268
        %v1367 = vmul.f32 %v819, %v1270
        %v1368 = vmul.f32 %v822, %v1272
        %v1369 = vmul.f32 %v827, %v1274
        %v1370 = vmul.f32 %v830, %v1276
        %v1371 = vmul.f32 %v835, %v1278
        %v1372 = vmul.f32 %v838, %v1280
        %v1373 = vmul.f32 %v843, %v1282
        %v1374 = vmul.f32 %v846, %v1284
        %v1375 = vmul.f32 %v851, %v1286
        %v1376 = vmul.f32 %v854, %v1288
        %v1377 = vmul.f32 %v859, %v1290
        %v1378 = vmul.f32 %v862, %v1292
        %v1379 = vmul.f32 %v867, %v1294
        %v1380 = vmul.f32 %v870, %v1296
        %v1381 = vmul.f32 %v875, %v1298
        %v1382 = vmul.f32 %v878, %v1300
        %v1383 = vmul.f32 %v883, %v1302
        %v1384 = vmul.f32 %v886, %v1304
        %v1385 = vmul.f32 %v891, %v1306
        %v1386 = vmul.f32 %v894, %v1308
        %v1387 = vmul.f32 %v899, %v1310
        %v1388 = vmul.f32 %v902, %v1312
        %v1389 = vmul.f32 %v907, %v1314
        %v1390 = vmul.f32 %v910, %v1316
        %v1391 = vmul.f32 %v915, %v1318
        %v1392 = vmul.f32 %v918, %v1320
        %v1393 = vmul.f32 %v923, %v1322
        %v1394 = vmul.f32 %v926, %v1324
        %v1395 = vmul.f32 %v931, %v1326
        %v1396 = vmul.f32 %v934, %v1328
        %v1397 = vmul.f32 %v939, %v1330
        %v1398 = vmul.f32 %v942, %v1332
        %v1399 = vmul.f32 %v947, %v1334
        %v1400 = vmul.f32 %v950, %v1336
        %v1401 = vpack.c.bf16 %v1338, %v1337
        %v1402 = vpack.c.bf16 %v1340, %v1339
        %v1403 = vpack.c.bf16 %v1342, %v1341
        %v1404 = vpack.c.bf16 %v1344, %v1343
        %v1405 = vpack.c.bf16 %v1346, %v1345
        %v1406 = vpack.c.bf16 %v1348, %v1347
        %v1407 = vpack.c.bf16 %v1350, %v1349
        %v1408 = vpack.c.bf16 %v1352, %v1351
        %v1409 = vpack.c.bf16 %v1354, %v1353
        %v1410 = vpack.c.bf16 %v1356, %v1355
        %v1411 = vpack.c.bf16 %v1358, %v1357
        %v1412 = vpack.c.bf16 %v1360, %v1359
        %v1413 = vpack.c.bf16 %v1362, %v1361
        %v1414 = vpack.c.bf16 %v1364, %v1363
        %v1415 = vpack.c.bf16 %v1366, %v1365
        %v1416 = vpack.c.bf16 %v1368, %v1367
        %v1417 = vpack.c.bf16 %v1370, %v1369
        %v1418 = vpack.c.bf16 %v1372, %v1371
        %v1419 = vpack.c.bf16 %v1374, %v1373
        %v1420 = vpack.c.bf16 %v1376, %v1375
        %v1421 = vpack.c.bf16 %v1378, %v1377
        %v1422 = vpack.c.bf16 %v1380, %v1379
        %v1423 = vpack.c.bf16 %v1382, %v1381
        %v1424 = vpack.c.bf16 %v1384, %v1383
        %v1425 = vpack.c.bf16 %v1386, %v1385
        %v1426 = vpack.c.bf16 %v1388, %v1387
        %v1427 = vpack.c.bf16 %v1390, %v1389
        %v1428 = vpack.c.bf16 %v1392, %v1391
        %v1429 = vpack.c.bf16 %v1394, %v1393
        %v1430 = vpack.c.bf16 %v1396, %v1395
        %v1431 = vpack.c.bf16 %v1398, %v1397
        %v1432 = vpack.c.bf16 %v1400, %v1399
        %v1433 = vld [vmem:[%s3] sm:$0xff]
        %v1434 = vld [vmem:[%s3 + $0x28] sm:$0xff]
        %v1435 = vld [vmem:[%s3 + $0x50] sm:$0xff]
        %v1436 = vld [vmem:[%s3 + $0x78] sm:$0xff]
        %v1441 = vunpack.c.l.b16 %v1433
        %v1442 = vunpack.c.h.b16 %v1433
        %v1443 = vunpack.c.l.b16 %v1434
        %v1444 = vunpack.c.h.b16 %v1434
        %v1445 = vunpack.c.l.b16 %v1435
        %v1446 = vunpack.c.h.b16 %v1435
        %v1447 = vunpack.c.l.b16 %v1436
        %v1448 = vunpack.c.h.b16 %v1436
        %v1449 = vpack.c.b16 %v1443, %v1441
        %v1450 = vpack.c.b16 %v1444, %v1442
        %v1451 = vpack.c.b16 %v1447, %v1445
        %v1452 = vpack.c.b16 %v1448, %v1446
        %v1458 = vsel %vm567, %v1401, 0
        %v1461 = vsel %vm567, %v1402, 0
        %v1464 = vsel %vm567, %v1403, 0
        %v1467 = vsel %vm567, %v1404, 0
        %v1470 = vsel %vm567, %v1405, 0
        %v1473 = vsel %vm567, %v1406, 0
        %v1476 = vsel %vm567, %v1407, 0
        %v1479 = vsel %vm567, %v1408, 0
        %v1482 = vsel %vm567, %v1409, 0
        %v1485 = vsel %vm567, %v1410, 0
        %v1488 = vsel %vm567, %v1411, 0
        %v1491 = vsel %vm567, %v1412, 0
        %v1494 = vsel %vm567, %v1413, 0
        %v1497 = vsel %vm567, %v1414, 0
        %v1500 = vsel %vm567, %v1415, 0
        %v1503 = vsel %vm567, %v1416, 0
        %v1506 = vsel %vm567, %v1417, 0
        %v1509 = vsel %vm567, %v1418, 0
        %v1512 = vsel %vm567, %v1419, 0
        %v1515 = vsel %vm567, %v1420, 0
        %v1518 = vsel %vm567, %v1421, 0
        %v1521 = vsel %vm567, %v1422, 0
        %v1524 = vsel %vm567, %v1423, 0
        %v1527 = vsel %vm567, %v1424, 0
        %v1530 = vsel %vm567, %v1425, 0
        %v1533 = vsel %vm567, %v1426, 0
        %v1536 = vsel %vm567, %v1427, 0
        %v1539 = vsel %vm567, %v1428, 0
        %v1542 = vsel %vm567, %v1429, 0
        %v1545 = vsel %vm567, %v1430, 0
        %v1548 = vsel %vm567, %v1431, 0
        %v1551 = vsel %vm567, %v1432, 0
        %1553 = vmatprep.subr.bf16.mxu0 0
        %1554 = vmatpush1.bf16.msra.mxu0 0
        %1555 = vmatprep.subr.bf16.mxu0 0
        %1556 = vmatpush1.bf16.msra.mxu0 0
        %1557 = vmatprep.subr.bf16.mxu0 0
        %1558 = vmatpush1.bf16.msra.mxu0 0
        %1559 = vmatprep.subr.bf16.mxu0 0
        %1560 = vmatpush1.bf16.msra.mxu0 0
        %1561 = vmatprep.subr.bf16.mxu0 0
        %1562 = vmatpush1.bf16.msra.mxu0 0
        %1563 = vmatprep.subr.bf16.mxu0 0
        %1564 = vmatpush1.bf16.msra.mxu0 0
        %1565 = vmatprep.subr.bf16.mxu0 %v1452
        %1566 = vmatpush1.bf16.msra.mxu0 %v1451
        %1567 = vmatprep.subr.bf16.mxu0 %v1450
        %1568 = vmatpush1.bf16.msra.mxu0 %v1449
        %1569 = vmatprep.subr.bf16.mxu0 0
        %1570 = vmatpush2.bf16.msra.mxu0 0
        %1571 = vmatprep.subr.bf16.mxu0 0
        %1572 = vmatpush2.bf16.msra.mxu0 0
        %1573 = vmatprep.subr.bf16.mxu0 0
        %1574 = vmatpush2.bf16.msra.mxu0 0
        %1575 = vmatprep.subr.bf16.mxu0 0
        %1576 = vmatpush2.bf16.msra.mxu0 0
        %1577 = vmatprep.subr.bf16.mxu0 0
        %1578 = vmatpush2.bf16.msra.mxu0 0
        %1579 = vmatprep.subr.bf16.mxu0 0
        %1580 = vmatpush2.bf16.msra.mxu0 0
        %1581 = vmatprep.subr.bf16.mxu0 0
        %1582 = vmatpush2.bf16.msra.mxu0 0
        %1583 = vmatprep.subr.bf16.mxu0 0
        %1584 = vmatpush2.bf16.msra.mxu0 0
        %1585 = vmatprep.mubr.bf16.mxu0 0
        %1586 = vmatmul.mubr.bf16.gmra.mxu0 %v1458
        %v1587 = vpop.f32.mrf.mxu0
        %v1588 = vadd.f32 0.0, %v1587
        %v1589 = vpop.f32.mrf.mxu0
        %v1590 = vadd.f32 0.0, %v1589
        %v1591 = vpop.f32.mrf.mxu0
        %v1592 = vadd.f32 0.0, %v1591
        %v1593 = vpop.f32.mrf.mxu0
        %v1594 = vadd.f32 0.0, %v1593
        %1595 = vmatprep.mubr.bf16.mxu0 0
        %1596 = vmatmul.mubr.bf16.gmra.mxu0 %v1461
        %v1597 = vpop.f32.mrf.mxu0
        %v1598 = vadd.f32 0.0, %v1597
        %v1599 = vpop.f32.mrf.mxu0
        %v1600 = vadd.f32 0.0, %v1599
        %v1601 = vpop.f32.mrf.mxu0
        %v1602 = vadd.f32 0.0, %v1601
        %v1603 = vpop.f32.mrf.mxu0
        %v1604 = vadd.f32 0.0, %v1603
        %1605 = vmatprep.mubr.bf16.mxu0 0
        %1606 = vmatmul.mubr.bf16.gmra.mxu0 %v1464
        %v1607 = vpop.f32.mrf.mxu0
        %v1608 = vadd.f32 0.0, %v1607
        %v1609 = vpop.f32.mrf.mxu0
        %v1610 = vadd.f32 0.0, %v1609
        %v1611 = vpop.f32.mrf.mxu0
        %v1612 = vadd.f32 0.0, %v1611
        %v1613 = vpop.f32.mrf.mxu0
        %v1614 = vadd.f32 0.0, %v1613
        %1615 = vmatprep.mubr.bf16.mxu0 0
        %1616 = vmatmul.mubr.bf16.gmra.mxu0 %v1467
        %v1617 = vpop.f32.mrf.mxu0
        %v1618 = vadd.f32 0.0, %v1617
        %v1619 = vpop.f32.mrf.mxu0
        %v1620 = vadd.f32 0.0, %v1619
        %v1621 = vpop.f32.mrf.mxu0
        %v1622 = vadd.f32 0.0, %v1621
        %v1623 = vpop.f32.mrf.mxu0
        %v1624 = vadd.f32 0.0, %v1623
        %1625 = vmatprep.mubr.bf16.mxu0 0
        %1626 = vmatmul.mubr.bf16.gmra.mxu0 %v1470
        %v1627 = vpop.f32.mrf.mxu0
        %v1628 = vadd.f32 0.0, %v1627
        %v1629 = vpop.f32.mrf.mxu0
        %v1630 = vadd.f32 0.0, %v1629
        %v1631 = vpop.f32.mrf.mxu0
        %v1632 = vadd.f32 0.0, %v1631
        %v1633 = vpop.f32.mrf.mxu0
        %v1634 = vadd.f32 0.0, %v1633
        %1635 = vmatprep.mubr.bf16.mxu0 0
        %1636 = vmatmul.mubr.bf16.gmra.mxu0 %v1473
        %v1637 = vpop.f32.mrf.mxu0
        %v1638 = vadd.f32 0.0, %v1637
        %v1639 = vpop.f32.mrf.mxu0
        %v1640 = vadd.f32 0.0, %v1639
        %v1641 = vpop.f32.mrf.mxu0
        %v1642 = vadd.f32 0.0, %v1641
        %v1643 = vpop.f32.mrf.mxu0
        %v1644 = vadd.f32 0.0, %v1643
        %1645 = vmatprep.mubr.bf16.mxu0 0
        %1646 = vmatmul.mubr.bf16.gmra.mxu0 %v1476
        %v1647 = vpop.f32.mrf.mxu0
        %v1648 = vadd.f32 0.0, %v1647
        %v1649 = vpop.f32.mrf.mxu0
        %v1650 = vadd.f32 0.0, %v1649
        %v1651 = vpop.f32.mrf.mxu0
        %v1652 = vadd.f32 0.0, %v1651
        %v1653 = vpop.f32.mrf.mxu0
        %v1654 = vadd.f32 0.0, %v1653
        %1655 = vmatprep.mubr.bf16.mxu0 0
        %1656 = vmatmul.mubr.bf16.gmra.mxu0 %v1479
        %v1657 = vpop.f32.mrf.mxu0
        %v1658 = vadd.f32 0.0, %v1657
        %v1659 = vpop.f32.mrf.mxu0
        %v1660 = vadd.f32 0.0, %v1659
        %v1661 = vpop.f32.mrf.mxu0
        %v1662 = vadd.f32 0.0, %v1661
        %v1663 = vpop.f32.mrf.mxu0
        %v1664 = vadd.f32 0.0, %v1663
        %1665 = vmatprep.mubr.bf16.mxu0 0
        %1666 = vmatmul.mubr.bf16.gmra.mxu0 %v1482
        %v1667 = vpop.f32.mrf.mxu0
        %v1668 = vadd.f32 0.0, %v1667
        %v1669 = vpop.f32.mrf.mxu0
        %v1670 = vadd.f32 0.0, %v1669
        %v1671 = vpop.f32.mrf.mxu0
        %v1672 = vadd.f32 0.0, %v1671
        %v1673 = vpop.f32.mrf.mxu0
        %v1674 = vadd.f32 0.0, %v1673
        %1675 = vmatprep.mubr.bf16.mxu0 0
        %1676 = vmatmul.mubr.bf16.gmra.mxu0 %v1485
        %v1677 = vpop.f32.mrf.mxu0
        %v1678 = vadd.f32 0.0, %v1677
        %v1679 = vpop.f32.mrf.mxu0
        %v1680 = vadd.f32 0.0, %v1679
        %v1681 = vpop.f32.mrf.mxu0
        %v1682 = vadd.f32 0.0, %v1681
        %v1683 = vpop.f32.mrf.mxu0
        %v1684 = vadd.f32 0.0, %v1683
        %1685 = vmatprep.mubr.bf16.mxu0 0
        %1686 = vmatmul.mubr.bf16.gmra.mxu0 %v1488
        %v1687 = vpop.f32.mrf.mxu0
        %v1688 = vadd.f32 0.0, %v1687
        %v1689 = vpop.f32.mrf.mxu0
        %v1690 = vadd.f32 0.0, %v1689
        %v1691 = vpop.f32.mrf.mxu0
        %v1692 = vadd.f32 0.0, %v1691
        %v1693 = vpop.f32.mrf.mxu0
        %v1694 = vadd.f32 0.0, %v1693
        %1695 = vmatprep.mubr.bf16.mxu0 0
        %1696 = vmatmul.mubr.bf16.gmra.mxu0 %v1491
        %v1697 = vpop.f32.mrf.mxu0
        %v1698 = vadd.f32 0.0, %v1697
        %v1699 = vpop.f32.mrf.mxu0
        %v1700 = vadd.f32 0.0, %v1699
        %v1701 = vpop.f32.mrf.mxu0
        %v1702 = vadd.f32 0.0, %v1701
        %v1703 = vpop.f32.mrf.mxu0
        %v1704 = vadd.f32 0.0, %v1703
        %1705 = vmatprep.mubr.bf16.mxu0 0
        %1706 = vmatmul.mubr.bf16.gmra.mxu0 %v1494
        %v1707 = vpop.f32.mrf.mxu0
        %v1708 = vadd.f32 0.0, %v1707
        %v1709 = vpop.f32.mrf.mxu0
        %v1710 = vadd.f32 0.0, %v1709
        %v1711 = vpop.f32.mrf.mxu0
        %v1712 = vadd.f32 0.0, %v1711
        %v1713 = vpop.f32.mrf.mxu0
        %v1714 = vadd.f32 0.0, %v1713
        %1715 = vmatprep.mubr.bf16.mxu0 0
        %1716 = vmatmul.mubr.bf16.gmra.mxu0 %v1497
        %v1717 = vpop.f32.mrf.mxu0
        %v1718 = vadd.f32 0.0, %v1717
        %v1719 = vpop.f32.mrf.mxu0
        %v1720 = vadd.f32 0.0, %v1719
        %v1721 = vpop.f32.mrf.mxu0
        %v1722 = vadd.f32 0.0, %v1721
        %v1723 = vpop.f32.mrf.mxu0
        %v1724 = vadd.f32 0.0, %v1723
        %1725 = vmatprep.mubr.bf16.mxu0 0
        %1726 = vmatmul.mubr.bf16.gmra.mxu0 %v1500
        %v1727 = vpop.f32.mrf.mxu0
        %v1728 = vadd.f32 0.0, %v1727
        %v1729 = vpop.f32.mrf.mxu0
        %v1730 = vadd.f32 0.0, %v1729
        %v1731 = vpop.f32.mrf.mxu0
        %v1732 = vadd.f32 0.0, %v1731
        %v1733 = vpop.f32.mrf.mxu0
        %v1734 = vadd.f32 0.0, %v1733
        %1735 = vmatprep.mubr.bf16.mxu0 0
        %1736 = vmatmul.mubr.bf16.gmra.mxu0 %v1503
        %v1737 = vpop.f32.mrf.mxu0
        %v1738 = vadd.f32 0.0, %v1737
        %v1739 = vpop.f32.mrf.mxu0
        %v1740 = vadd.f32 0.0, %v1739
        %v1741 = vpop.f32.mrf.mxu0
        %v1742 = vadd.f32 0.0, %v1741
        %v1743 = vpop.f32.mrf.mxu0
        %v1744 = vadd.f32 0.0, %v1743
        %1745 = vmatprep.mubr.bf16.mxu0 0
        %1746 = vmatmul.mubr.bf16.gmra.mxu0 %v1506
        %v1747 = vpop.f32.mrf.mxu0
        %v1748 = vadd.f32 0.0, %v1747
        %v1749 = vpop.f32.mrf.mxu0
        %v1750 = vadd.f32 0.0, %v1749
        %v1751 = vpop.f32.mrf.mxu0
        %v1752 = vadd.f32 0.0, %v1751
        %v1753 = vpop.f32.mrf.mxu0
        %v1754 = vadd.f32 0.0, %v1753
        %1755 = vmatprep.mubr.bf16.mxu0 0
        %1756 = vmatmul.mubr.bf16.gmra.mxu0 %v1509
        %v1757 = vpop.f32.mrf.mxu0
        %v1758 = vadd.f32 0.0, %v1757
        %v1759 = vpop.f32.mrf.mxu0
        %v1760 = vadd.f32 0.0, %v1759
        %v1761 = vpop.f32.mrf.mxu0
        %v1762 = vadd.f32 0.0, %v1761
        %v1763 = vpop.f32.mrf.mxu0
        %v1764 = vadd.f32 0.0, %v1763
        %1765 = vmatprep.mubr.bf16.mxu0 0
        %1766 = vmatmul.mubr.bf16.gmra.mxu0 %v1512
        %v1767 = vpop.f32.mrf.mxu0
        %v1768 = vadd.f32 0.0, %v1767
        %v1769 = vpop.f32.mrf.mxu0
        %v1770 = vadd.f32 0.0, %v1769
        %v1771 = vpop.f32.mrf.mxu0
        %v1772 = vadd.f32 0.0, %v1771
        %v1773 = vpop.f32.mrf.mxu0
        %v1774 = vadd.f32 0.0, %v1773
        %1775 = vmatprep.mubr.bf16.mxu0 0
        %1776 = vmatmul.mubr.bf16.gmra.mxu0 %v1515
        %v1777 = vpop.f32.mrf.mxu0
        %v1778 = vadd.f32 0.0, %v1777
        %v1779 = vpop.f32.mrf.mxu0
        %v1780 = vadd.f32 0.0, %v1779
        %v1781 = vpop.f32.mrf.mxu0
        %v1782 = vadd.f32 0.0, %v1781
        %v1783 = vpop.f32.mrf.mxu0
        %v1784 = vadd.f32 0.0, %v1783
        %1785 = vmatprep.mubr.bf16.mxu0 0
        %1786 = vmatmul.mubr.bf16.gmra.mxu0 %v1518
        %v1787 = vpop.f32.mrf.mxu0
        %v1788 = vadd.f32 0.0, %v1787
        %v1789 = vpop.f32.mrf.mxu0
        %v1790 = vadd.f32 0.0, %v1789
        %v1791 = vpop.f32.mrf.mxu0
        %v1792 = vadd.f32 0.0, %v1791
        %v1793 = vpop.f32.mrf.mxu0
        %v1794 = vadd.f32 0.0, %v1793
        %1795 = vmatprep.mubr.bf16.mxu0 0
        %1796 = vmatmul.mubr.bf16.gmra.mxu0 %v1521
        %v1797 = vpop.f32.mrf.mxu0
        %v1798 = vadd.f32 0.0, %v1797
        %v1799 = vpop.f32.mrf.mxu0
        %v1800 = vadd.f32 0.0, %v1799
        %v1801 = vpop.f32.mrf.mxu0
        %v1802 = vadd.f32 0.0, %v1801
        %v1803 = vpop.f32.mrf.mxu0
        %v1804 = vadd.f32 0.0, %v1803
        %1805 = vmatprep.mubr.bf16.mxu0 0
        %1806 = vmatmul.mubr.bf16.gmra.mxu0 %v1524
        %v1807 = vpop.f32.mrf.mxu0
        %v1808 = vadd.f32 0.0, %v1807
        %v1809 = vpop.f32.mrf.mxu0
        %v1810 = vadd.f32 0.0, %v1809
        %v1811 = vpop.f32.mrf.mxu0
        %v1812 = vadd.f32 0.0, %v1811
        %v1813 = vpop.f32.mrf.mxu0
        %v1814 = vadd.f32 0.0, %v1813
        %1815 = vmatprep.mubr.bf16.mxu0 0
        %1816 = vmatmul.mubr.bf16.gmra.mxu0 %v1527
        %v1817 = vpop.f32.mrf.mxu0
        %v1818 = vadd.f32 0.0, %v1817
        %v1819 = vpop.f32.mrf.mxu0
        %v1820 = vadd.f32 0.0, %v1819
        %v1821 = vpop.f32.mrf.mxu0
        %v1822 = vadd.f32 0.0, %v1821
        %v1823 = vpop.f32.mrf.mxu0
        %v1824 = vadd.f32 0.0, %v1823
        %1825 = vmatprep.mubr.bf16.mxu0 0
        %1826 = vmatmul.mubr.bf16.gmra.mxu0 %v1530
        %v1827 = vpop.f32.mrf.mxu0
        %v1828 = vadd.f32 0.0, %v1827
        %v1829 = vpop.f32.mrf.mxu0
        %v1830 = vadd.f32 0.0, %v1829
        %v1831 = vpop.f32.mrf.mxu0
        %v1832 = vadd.f32 0.0, %v1831
        %v1833 = vpop.f32.mrf.mxu0
        %v1834 = vadd.f32 0.0, %v1833
        %1835 = vmatprep.mubr.bf16.mxu0 0
        %1836 = vmatmul.mubr.bf16.gmra.mxu0 %v1533
        %v1837 = vpop.f32.mrf.mxu0
        %v1838 = vadd.f32 0.0, %v1837
        %v1839 = vpop.f32.mrf.mxu0
        %v1840 = vadd.f32 0.0, %v1839
        %v1841 = vpop.f32.mrf.mxu0
        %v1842 = vadd.f32 0.0, %v1841
        %v1843 = vpop.f32.mrf.mxu0
        %v1844 = vadd.f32 0.0, %v1843
        %1845 = vmatprep.mubr.bf16.mxu0 0
        %1846 = vmatmul.mubr.bf16.gmra.mxu0 %v1536
        %v1847 = vpop.f32.mrf.mxu0
        %v1848 = vadd.f32 0.0, %v1847
        %v1849 = vpop.f32.mrf.mxu0
        %v1850 = vadd.f32 0.0, %v1849
        %v1851 = vpop.f32.mrf.mxu0
        %v1852 = vadd.f32 0.0, %v1851
        %v1853 = vpop.f32.mrf.mxu0
        %v1854 = vadd.f32 0.0, %v1853
        %1855 = vmatprep.mubr.bf16.mxu0 0
        %1856 = vmatmul.mubr.bf16.gmra.mxu0 %v1539
        %v1857 = vpop.f32.mrf.mxu0
        %v1858 = vadd.f32 0.0, %v1857
        %v1859 = vpop.f32.mrf.mxu0
        %v1860 = vadd.f32 0.0, %v1859
        %v1861 = vpop.f32.mrf.mxu0
        %v1862 = vadd.f32 0.0, %v1861
        %v1863 = vpop.f32.mrf.mxu0
        %v1864 = vadd.f32 0.0, %v1863
        %1865 = vmatprep.mubr.bf16.mxu0 0
        %1866 = vmatmul.mubr.bf16.gmra.mxu0 %v1542
        %v1867 = vpop.f32.mrf.mxu0
        %v1868 = vadd.f32 0.0, %v1867
        %v1869 = vpop.f32.mrf.mxu0
        %v1870 = vadd.f32 0.0, %v1869
        %v1871 = vpop.f32.mrf.mxu0
        %v1872 = vadd.f32 0.0, %v1871
        %v1873 = vpop.f32.mrf.mxu0
        %v1874 = vadd.f32 0.0, %v1873
        %1875 = vmatprep.mubr.bf16.mxu0 0
        %1876 = vmatmul.mubr.bf16.gmra.mxu0 %v1545
        %v1877 = vpop.f32.mrf.mxu0
        %v1878 = vadd.f32 0.0, %v1877
        %v1879 = vpop.f32.mrf.mxu0
        %v1880 = vadd.f32 0.0, %v1879
        %v1881 = vpop.f32.mrf.mxu0
        %v1882 = vadd.f32 0.0, %v1881
        %v1883 = vpop.f32.mrf.mxu0
        %v1884 = vadd.f32 0.0, %v1883
        %1885 = vmatprep.mubr.bf16.mxu0 0
        %1886 = vmatmul.mubr.bf16.gmra.mxu0 %v1548
        %v1887 = vpop.f32.mrf.mxu0
        %v1888 = vadd.f32 0.0, %v1887
        %v1889 = vpop.f32.mrf.mxu0
        %v1890 = vadd.f32 0.0, %v1889
        %v1891 = vpop.f32.mrf.mxu0
        %v1892 = vadd.f32 0.0, %v1891
        %v1893 = vpop.f32.mrf.mxu0
        %v1894 = vadd.f32 0.0, %v1893
        %1895 = vmatprep.mubr.bf16.mxu0 0
        %1896 = vmatmul.mubr.bf16.gmra.mxu0 %v1551
        %v1897 = vpop.f32.mrf.mxu0
        %v1898 = vadd.f32 0.0, %v1897
        %v1899 = vpop.f32.mrf.mxu0
        %v1900 = vadd.f32 0.0, %v1899
        %v1901 = vpop.f32.mrf.mxu0
        %v1902 = vadd.f32 0.0, %v1901
        %v1903 = vpop.f32.mrf.mxu0
        %v1904 = vadd.f32 0.0, %v1903
        %1905 = vdwg.mxu0
        %v1906 = vpack.c.bf16 %v1592, %v1588
        %v1907 = vpack.c.bf16 %v1594, %v1590
        %v1908 = vpack.c.bf16 %v1602, %v1598
        %v1909 = vpack.c.bf16 %v1604, %v1600
        %v1910 = vpack.c.bf16 %v1612, %v1608
        %v1911 = vpack.c.bf16 %v1614, %v1610
        %v1912 = vpack.c.bf16 %v1622, %v1618
        %v1913 = vpack.c.bf16 %v1624, %v1620
        %v1914 = vpack.c.bf16 %v1632, %v1628
        %v1915 = vpack.c.bf16 %v1634, %v1630
        %v1916 = vpack.c.bf16 %v1642, %v1638
        %v1917 = vpack.c.bf16 %v1644, %v1640
        %v1918 = vpack.c.bf16 %v1652, %v1648
        %v1919 = vpack.c.bf16 %v1654, %v1650
        %v1920 = vpack.c.bf16 %v1662, %v1658
        %v1921 = vpack.c.bf16 %v1664, %v1660
        %v1922 = vpack.c.bf16 %v1672, %v1668
        %v1923 = vpack.c.bf16 %v1674, %v1670
        %v1924 = vpack.c.bf16 %v1682, %v1678
        %v1925 = vpack.c.bf16 %v1684, %v1680
        %v1926 = vpack.c.bf16 %v1692, %v1688
        %v1927 = vpack.c.bf16 %v1694, %v1690
        %v1928 = vpack.c.bf16 %v1702, %v1698
        %v1929 = vpack.c.bf16 %v1704, %v1700
        %v1930 = vpack.c.bf16 %v1712, %v1708
        %v1931 = vpack.c.bf16 %v1714, %v1710
        %v1932 = vpack.c.bf16 %v1722, %v1718
        %v1933 = vpack.c.bf16 %v1724, %v1720
        %v1934 = vpack.c.bf16 %v1732, %v1728
        %v1935 = vpack.c.bf16 %v1734, %v1730
        %v1936 = vpack.c.bf16 %v1742, %v1738
        %v1937 = vpack.c.bf16 %v1744, %v1740
        %v1938 = vpack.c.bf16 %v1752, %v1748
        %v1939 = vpack.c.bf16 %v1754, %v1750
        %v1940 = vpack.c.bf16 %v1762, %v1758
        %v1941 = vpack.c.bf16 %v1764, %v1760
        %v1942 = vpack.c.bf16 %v1772, %v1768
        %v1943 = vpack.c.bf16 %v1774, %v1770
        %v1944 = vpack.c.bf16 %v1782, %v1778
        %v1945 = vpack.c.bf16 %v1784, %v1780
        %v1946 = vpack.c.bf16 %v1792, %v1788
        %v1947 = vpack.c.bf16 %v1794, %v1790
        %v1948 = vpack.c.bf16 %v1802, %v1798
        %v1949 = vpack.c.bf16 %v1804, %v1800
        %v1950 = vpack.c.bf16 %v1812, %v1808
        %v1951 = vpack.c.bf16 %v1814, %v1810
        %v1952 = vpack.c.bf16 %v1822, %v1818
        %v1953 = vpack.c.bf16 %v1824, %v1820
        %v1954 = vpack.c.bf16 %v1832, %v1828
        %v1955 = vpack.c.bf16 %v1834, %v1830
        %v1956 = vpack.c.bf16 %v1842, %v1838
        %v1957 = vpack.c.bf16 %v1844, %v1840
        %v1958 = vpack.c.bf16 %v1852, %v1848
        %v1959 = vpack.c.bf16 %v1854, %v1850
        %v1960 = vpack.c.bf16 %v1862, %v1858
        %v1961 = vpack.c.bf16 %v1864, %v1860
        %v1962 = vpack.c.bf16 %v1872, %v1868
        %v1963 = vpack.c.bf16 %v1874, %v1870
        %v1964 = vpack.c.bf16 %v1882, %v1878
        %v1965 = vpack.c.bf16 %v1884, %v1880
        %v1966 = vpack.c.bf16 %v1892, %v1888
        %v1967 = vpack.c.bf16 %v1894, %v1890
        %v1968 = vpack.c.bf16 %v1902, %v1898
        %v1969 = vpack.c.bf16 %v1904, %v1900
        %v1970 = vld [vmem:[%s4] sm:$0x3]
        %v1973 = vunpack.c.l.s4 1966171168
        %v1974 = vunpack.c.0.s8 %v1973
        %v1975 = vlaneseq
        %v1976 = vshrl.u32 %v1975, 7
        %v1977 = vsub.s32 %v1974, %v1976
        %v1978 = vrot.slane %v1970, %v1977
        %v1979 = vcombine.high %v1978, %v1978
        %v1981 = vunpack.c.l.s4 1966171168
        %v1982 = vunpack.c.0.s8 %v1981
        %v1983 = vlaneseq
        %v1984 = vshrl.u32 %v1983, 7
        %v1985 = vsub.s32 %v1982, %v1984
        %v1986 = vrot.slane %v1978, %v1985
        %v1988 = vunpack.c.l.s4 1966171168
        %v1989 = vunpack.c.0.s8 %v1988
        %v1990 = vlaneseq
        %v1991 = vshrl.u32 %v1990, 7
        %v1992 = vsub.s32 %v1989, %v1991
        %v1993 = vrot.slane %v1979, %v1992
        %v1995 = vpack.i.b16 %v1986, %v1986
        %v1997 = vlaneseq
        %v1998 = vshrl.u32 %v1997, 7
        %v1999 = vsub.s32 0, %v1998
        %v2000 = vrot.slane %v1995, %v1999
        %v2002 = vpack.i.b16 %v1993, %v1993
        %v2004 = vlaneseq
        %v2005 = vshrl.u32 %v2004, 7
        %v2006 = vsub.s32 0, %v2005
        %v2007 = vrot.slane %v2002, %v2006
        %v2008 = vadd.bf16 %v1906, %v2000
        %v2009 = vadd.bf16 %v1907, %v2007
        %v2010 = vadd.bf16 %v1908, %v2000
        %v2011 = vadd.bf16 %v1909, %v2007
        %v2012 = vadd.bf16 %v1910, %v2000
        %v2013 = vadd.bf16 %v1911, %v2007
        %v2014 = vadd.bf16 %v1912, %v2000
        %v2015 = vadd.bf16 %v1913, %v2007
        %v2016 = vadd.bf16 %v1914, %v2000
        %v2017 = vadd.bf16 %v1915, %v2007
        %v2018 = vadd.bf16 %v1916, %v2000
        %v2019 = vadd.bf16 %v1917, %v2007
        %v2020 = vadd.bf16 %v1918, %v2000
        %v2021 = vadd.bf16 %v1919, %v2007
        %v2022 = vadd.bf16 %v1920, %v2000
        %v2023 = vadd.bf16 %v1921, %v2007
        %v2024 = vadd.bf16 %v1922, %v2000
        %v2025 = vadd.bf16 %v1923, %v2007
        %v2026 = vadd.bf16 %v1924, %v2000
        %v2027 = vadd.bf16 %v1925, %v2007
        %v2028 = vadd.bf16 %v1926, %v2000
        %v2029 = vadd.bf16 %v1927, %v2007
        %v2030 = vadd.bf16 %v1928, %v2000
        %v2031 = vadd.bf16 %v1929, %v2007
        %v2032 = vadd.bf16 %v1930, %v2000
        %v2033 = vadd.bf16 %v1931, %v2007
        %v2034 = vadd.bf16 %v1932, %v2000
        %v2035 = vadd.bf16 %v1933, %v2007
        %v2036 = vadd.bf16 %v1934, %v2000
        %v2037 = vadd.bf16 %v1935, %v2007
        %v2038 = vadd.bf16 %v1936, %v2000
        %v2039 = vadd.bf16 %v1937, %v2007
        %v2040 = vadd.bf16 %v1938, %v2000
        %v2041 = vadd.bf16 %v1939, %v2007
        %v2042 = vadd.bf16 %v1940, %v2000
        %v2043 = vadd.bf16 %v1941, %v2007
        %v2044 = vadd.bf16 %v1942, %v2000
        %v2045 = vadd.bf16 %v1943, %v2007
        %v2046 = vadd.bf16 %v1944, %v2000
        %v2047 = vadd.bf16 %v1945, %v2007
        %v2048 = vadd.bf16 %v1946, %v2000
        %v2049 = vadd.bf16 %v1947, %v2007
        %v2050 = vadd.bf16 %v1948, %v2000
        %v2051 = vadd.bf16 %v1949, %v2007
        %v2052 = vadd.bf16 %v1950, %v2000
        %v2053 = vadd.bf16 %v1951, %v2007
        %v2054 = vadd.bf16 %v1952, %v2000
        %v2055 = vadd.bf16 %v1953, %v2007
        %v2056 = vadd.bf16 %v1954, %v2000
        %v2057 = vadd.bf16 %v1955, %v2007
        %v2058 = vadd.bf16 %v1956, %v2000
        %v2059 = vadd.bf16 %v1957, %v2007
        %v2060 = vadd.bf16 %v1958, %v2000
        %v2061 = vadd.bf16 %v1959, %v2007
        %v2062 = vadd.bf16 %v1960, %v2000
        %v2063 = vadd.bf16 %v1961, %v2007
        %v2064 = vadd.bf16 %v1962, %v2000
        %v2065 = vadd.bf16 %v1963, %v2007
        %v2066 = vadd.bf16 %v1964, %v2000
        %v2067 = vadd.bf16 %v1965, %v2007
        %v2068 = vadd.bf16 %v1966, %v2000
        %v2069 = vadd.bf16 %v1967, %v2007
        %v2070 = vadd.bf16 %v1968, %v2000
        %v2071 = vadd.bf16 %v1969, %v2007
        %v2072 = vxor.u32 %v2008, 2147516416
        %v2073 = vxor.u32 %v2009, 2147516416
        %v2074 = vxor.u32 %v2010, 2147516416
        %v2075 = vxor.u32 %v2011, 2147516416
        %v2076 = vxor.u32 %v2012, 2147516416
        %v2077 = vxor.u32 %v2013, 2147516416
        %v2078 = vxor.u32 %v2014, 2147516416
        %v2079 = vxor.u32 %v2015, 2147516416
        %v2080 = vxor.u32 %v2016, 2147516416
        %v2081 = vxor.u32 %v2017, 2147516416
        %v2082 = vxor.u32 %v2018, 2147516416
        %v2083 = vxor.u32 %v2019, 2147516416
        %v2084 = vxor.u32 %v2020, 2147516416
        %v2085 = vxor.u32 %v2021, 2147516416
        %v2086 = vxor.u32 %v2022, 2147516416
        %v2087 = vxor.u32 %v2023, 2147516416
        %v2088 = vxor.u32 %v2024, 2147516416
        %v2089 = vxor.u32 %v2025, 2147516416
        %v2090 = vxor.u32 %v2026, 2147516416
        %v2091 = vxor.u32 %v2027, 2147516416
        %v2092 = vxor.u32 %v2028, 2147516416
        %v2093 = vxor.u32 %v2029, 2147516416
        %v2094 = vxor.u32 %v2030, 2147516416
        %v2095 = vxor.u32 %v2031, 2147516416
        %v2096 = vxor.u32 %v2032, 2147516416
        %v2097 = vxor.u32 %v2033, 2147516416
        %v2098 = vxor.u32 %v2034, 2147516416
        %v2099 = vxor.u32 %v2035, 2147516416
        %v2100 = vxor.u32 %v2036, 2147516416
        %v2101 = vxor.u32 %v2037, 2147516416
        %v2102 = vxor.u32 %v2038, 2147516416
        %v2103 = vxor.u32 %v2039, 2147516416
        %v2104 = vxor.u32 %v2040, 2147516416
        %v2105 = vxor.u32 %v2041, 2147516416
        %v2106 = vxor.u32 %v2042, 2147516416
        %v2107 = vxor.u32 %v2043, 2147516416
        %v2108 = vxor.u32 %v2044, 2147516416
        %v2109 = vxor.u32 %v2045, 2147516416
        %v2110 = vxor.u32 %v2046, 2147516416
        %v2111 = vxor.u32 %v2047, 2147516416
        %v2112 = vxor.u32 %v2048, 2147516416
        %v2113 = vxor.u32 %v2049, 2147516416
        %v2114 = vxor.u32 %v2050, 2147516416
        %v2115 = vxor.u32 %v2051, 2147516416
        %v2116 = vxor.u32 %v2052, 2147516416
        %v2117 = vxor.u32 %v2053, 2147516416
        %v2118 = vxor.u32 %v2054, 2147516416
        %v2119 = vxor.u32 %v2055, 2147516416
        %v2120 = vxor.u32 %v2056, 2147516416
        %v2121 = vxor.u32 %v2057, 2147516416
        %v2122 = vxor.u32 %v2058, 2147516416
        %v2123 = vxor.u32 %v2059, 2147516416
        %v2124 = vxor.u32 %v2060, 2147516416
        %v2125 = vxor.u32 %v2061, 2147516416
        %v2126 = vxor.u32 %v2062, 2147516416
        %v2127 = vxor.u32 %v2063, 2147516416
        %v2128 = vxor.u32 %v2064, 2147516416
        %v2129 = vxor.u32 %v2065, 2147516416
        %v2130 = vxor.u32 %v2066, 2147516416
        %v2131 = vxor.u32 %v2067, 2147516416
        %v2132 = vxor.u32 %v2068, 2147516416
        %v2133 = vxor.u32 %v2069, 2147516416
        %v2134 = vxor.u32 %v2070, 2147516416
        %v2135 = vxor.u32 %v2071, 2147516416
        %v2137 = vmul.bf16 %v2072, 1069105081
        %v2138 = vpow.bf16.pop %v2137
        %v2140 = vmul.bf16 %v2073, 1069105081
        %v2141 = vpow.bf16.pop %v2140
        %v2143 = vmul.bf16 %v2074, 1069105081
        %v2144 = vpow.bf16.pop %v2143
        %v2146 = vmul.bf16 %v2075, 1069105081
        %v2147 = vpow.bf16.pop %v2146
        %v2149 = vmul.bf16 %v2076, 1069105081
        %v2150 = vpow.bf16.pop %v2149
        %v2152 = vmul.bf16 %v2077, 1069105081
        %v2153 = vpow.bf16.pop %v2152
        %v2155 = vmul.bf16 %v2078, 1069105081
        %v2156 = vpow.bf16.pop %v2155
        %v2158 = vmul.bf16 %v2079, 1069105081
        %v2159 = vpow.bf16.pop %v2158
        %v2161 = vmul.bf16 %v2080, 1069105081
        %v2162 = vpow.bf16.pop %v2161
        %v2164 = vmul.bf16 %v2081, 1069105081
        %v2165 = vpow.bf16.pop %v2164
        %v2167 = vmul.bf16 %v2082, 1069105081
        %v2168 = vpow.bf16.pop %v2167
        %v2170 = vmul.bf16 %v2083, 1069105081
        %v2171 = vpow.bf16.pop %v2170
        %v2173 = vmul.bf16 %v2084, 1069105081
        %v2174 = vpow.bf16.pop %v2173
        %v2176 = vmul.bf16 %v2085, 1069105081
        %v2177 = vpow.bf16.pop %v2176
        %v2179 = vmul.bf16 %v2086, 1069105081
        %v2180 = vpow.bf16.pop %v2179
        %v2182 = vmul.bf16 %v2087, 1069105081
        %v2183 = vpow.bf16.pop %v2182
        %v2185 = vmul.bf16 %v2088, 1069105081
        %v2186 = vpow.bf16.pop %v2185
        %v2188 = vmul.bf16 %v2089, 1069105081
        %v2189 = vpow.bf16.pop %v2188
        %v2191 = vmul.bf16 %v2090, 1069105081
        %v2192 = vpow.bf16.pop %v2191
        %v2194 = vmul.bf16 %v2091, 1069105081
        %v2195 = vpow.bf16.pop %v2194
        %v2197 = vmul.bf16 %v2092, 1069105081
        %v2198 = vpow.bf16.pop %v2197
        %v2200 = vmul.bf16 %v2093, 1069105081
        %v2201 = vpow.bf16.pop %v2200
        %v2203 = vmul.bf16 %v2094, 1069105081
        %v2204 = vpow.bf16.pop %v2203
        %v2206 = vmul.bf16 %v2095, 1069105081
        %v2207 = vpow.bf16.pop %v2206
        %v2209 = vmul.bf16 %v2096, 1069105081
        %v2210 = vpow.bf16.pop %v2209
        %v2212 = vmul.bf16 %v2097, 1069105081
        %v2213 = vpow.bf16.pop %v2212
        %v2215 = vmul.bf16 %v2098, 1069105081
        %v2216 = vpow.bf16.pop %v2215
        %v2218 = vmul.bf16 %v2099, 1069105081
        %v2219 = vpow.bf16.pop %v2218
        %v2221 = vmul.bf16 %v2100, 1069105081
        %v2222 = vpow.bf16.pop %v2221
        %v2224 = vmul.bf16 %v2101, 1069105081
        %v2225 = vpow.bf16.pop %v2224
        %v2227 = vmul.bf16 %v2102, 1069105081
        %v2228 = vpow.bf16.pop %v2227
        %v2230 = vmul.bf16 %v2103, 1069105081
        %v2231 = vpow.bf16.pop %v2230
        %v2233 = vmul.bf16 %v2104, 1069105081
        %v2234 = vpow.bf16.pop %v2233
        %v2236 = vmul.bf16 %v2105, 1069105081
        %v2237 = vpow.bf16.pop %v2236
        %v2239 = vmul.bf16 %v2106, 1069105081
        %v2240 = vpow.bf16.pop %v2239
        %v2242 = vmul.bf16 %v2107, 1069105081
        %v2243 = vpow.bf16.pop %v2242
        %v2245 = vmul.bf16 %v2108, 1069105081
        %v2246 = vpow.bf16.pop %v2245
        %v2248 = vmul.bf16 %v2109, 1069105081
        %v2249 = vpow.bf16.pop %v2248
        %v2251 = vmul.bf16 %v2110, 1069105081
        %v2252 = vpow.bf16.pop %v2251
        %v2254 = vmul.bf16 %v2111, 1069105081
        %v2255 = vpow.bf16.pop %v2254
        %v2257 = vmul.bf16 %v2112, 1069105081
        %v2258 = vpow.bf16.pop %v2257
        %v2260 = vmul.bf16 %v2113, 1069105081
        %v2261 = vpow.bf16.pop %v2260
        %v2263 = vmul.bf16 %v2114, 1069105081
        %v2264 = vpow.bf16.pop %v2263
        %v2266 = vmul.bf16 %v2115, 1069105081
        %v2267 = vpow.bf16.pop %v2266
        %v2269 = vmul.bf16 %v2116, 1069105081
        %v2270 = vpow.bf16.pop %v2269
        %v2272 = vmul.bf16 %v2117, 1069105081
        %v2273 = vpow.bf16.pop %v2272
        %v2275 = vmul.bf16 %v2118, 1069105081
        %v2276 = vpow.bf16.pop %v2275
        %v2278 = vmul.bf16 %v2119, 1069105081
        %v2279 = vpow.bf16.pop %v2278
        %v2281 = vmul.bf16 %v2120, 1069105081
        %v2282 = vpow.bf16.pop %v2281
        %v2284 = vmul.bf16 %v2121, 1069105081
        %v2285 = vpow.bf16.pop %v2284
        %v2287 = vmul.bf16 %v2122, 1069105081
        %v2288 = vpow.bf16.pop %v2287
        %v2290 = vmul.bf16 %v2123, 1069105081
        %v2291 = vpow.bf16.pop %v2290
        %v2293 = vmul.bf16 %v2124, 1069105081
        %v2294 = vpow.bf16.pop %v2293
        %v2296 = vmul.bf16 %v2125, 1069105081
        %v2297 = vpow.bf16.pop %v2296
        %v2299 = vmul.bf16 %v2126, 1069105081
        %v2300 = vpow.bf16.pop %v2299
        %v2302 = vmul.bf16 %v2127, 1069105081
        %v2303 = vpow.bf16.pop %v2302
        %v2305 = vmul.bf16 %v2128, 1069105081
        %v2306 = vpow.bf16.pop %v2305
        %v2308 = vmul.bf16 %v2129, 1069105081
        %v2309 = vpow.bf16.pop %v2308
        %v2311 = vmul.bf16 %v2130, 1069105081
        %v2312 = vpow.bf16.pop %v2311
        %v2314 = vmul.bf16 %v2131, 1069105081
        %v2315 = vpow.bf16.pop %v2314
        %v2317 = vmul.bf16 %v2132, 1069105081
        %v2318 = vpow.bf16.pop %v2317
        %v2320 = vmul.bf16 %v2133, 1069105081
        %v2321 = vpow.bf16.pop %v2320
        %v2323 = vmul.bf16 %v2134, 1069105081
        %v2324 = vpow.bf16.pop %v2323
        %v2326 = vmul.bf16 %v2135, 1069105081
        %v2327 = vpow.bf16.pop %v2326
        %v2328 = vadd.bf16 %v2138, 1065369472
        %v2329 = vadd.bf16 %v2141, 1065369472
        %v2330 = vadd.bf16 %v2144, 1065369472
        %v2331 = vadd.bf16 %v2147, 1065369472
        %v2332 = vadd.bf16 %v2150, 1065369472
        %v2333 = vadd.bf16 %v2153, 1065369472
        %v2334 = vadd.bf16 %v2156, 1065369472
        %v2335 = vadd.bf16 %v2159, 1065369472
        %v2336 = vadd.bf16 %v2162, 1065369472
        %v2337 = vadd.bf16 %v2165, 1065369472
        %v2338 = vadd.bf16 %v2168, 1065369472
        %v2339 = vadd.bf16 %v2171, 1065369472
        %v2340 = vadd.bf16 %v2174, 1065369472
        %v2341 = vadd.bf16 %v2177, 1065369472
        %v2342 = vadd.bf16 %v2180, 1065369472
        %v2343 = vadd.bf16 %v2183, 1065369472
        %v2344 = vadd.bf16 %v2186, 1065369472
        %v2345 = vadd.bf16 %v2189, 1065369472
        %v2346 = vadd.bf16 %v2192, 1065369472
        %v2347 = vadd.bf16 %v2195, 1065369472
        %v2348 = vadd.bf16 %v2198, 1065369472
        %v2349 = vadd.bf16 %v2201, 1065369472
        %v2350 = vadd.bf16 %v2204, 1065369472
        %v2351 = vadd.bf16 %v2207, 1065369472
        %v2352 = vadd.bf16 %v2210, 1065369472
        %v2353 = vadd.bf16 %v2213, 1065369472
        %v2354 = vadd.bf16 %v2216, 1065369472
        %v2355 = vadd.bf16 %v2219, 1065369472
        %v2356 = vadd.bf16 %v2222, 1065369472
        %v2357 = vadd.bf16 %v2225, 1065369472
        %v2358 = vadd.bf16 %v2228, 1065369472
        %v2359 = vadd.bf16 %v2231, 1065369472
        %v2360 = vadd.bf16 %v2234, 1065369472
        %v2361 = vadd.bf16 %v2237, 1065369472
        %v2362 = vadd.bf16 %v2240, 1065369472
        %v2363 = vadd.bf16 %v2243, 1065369472
        %v2364 = vadd.bf16 %v2246, 1065369472
        %v2365 = vadd.bf16 %v2249, 1065369472
        %v2366 = vadd.bf16 %v2252, 1065369472
        %v2367 = vadd.bf16 %v2255, 1065369472
        %v2368 = vadd.bf16 %v2258, 1065369472
        %v2369 = vadd.bf16 %v2261, 1065369472
        %v2370 = vadd.bf16 %v2264, 1065369472
        %v2371 = vadd.bf16 %v2267, 1065369472
        %v2372 = vadd.bf16 %v2270, 1065369472
        %v2373 = vadd.bf16 %v2273, 1065369472
        %v2374 = vadd.bf16 %v2276, 1065369472
        %v2375 = vadd.bf16 %v2279, 1065369472
        %v2376 = vadd.bf16 %v2282, 1065369472
        %v2377 = vadd.bf16 %v2285, 1065369472
        %v2378 = vadd.bf16 %v2288, 1065369472
        %v2379 = vadd.bf16 %v2291, 1065369472
        %v2380 = vadd.bf16 %v2294, 1065369472
        %v2381 = vadd.bf16 %v2297, 1065369472
        %v2382 = vadd.bf16 %v2300, 1065369472
        %v2383 = vadd.bf16 %v2303, 1065369472
        %v2384 = vadd.bf16 %v2306, 1065369472
        %v2385 = vadd.bf16 %v2309, 1065369472
        %v2386 = vadd.bf16 %v2312, 1065369472
        %v2387 = vadd.bf16 %v2315, 1065369472
        %v2388 = vadd.bf16 %v2318, 1065369472
        %v2389 = vadd.bf16 %v2321, 1065369472
        %v2390 = vadd.bf16 %v2324, 1065369472
        %v2391 = vadd.bf16 %v2327, 1065369472
        %v2392 = vrcp.bf16.pop %v2328
        %v2393 = vmul.bf16 1065369472, %v2392
        %v2394 = vrcp.bf16.pop %v2329
        %v2395 = vmul.bf16 1065369472, %v2394
        %v2396 = vrcp.bf16.pop %v2330
        %v2397 = vmul.bf16 1065369472, %v2396
        %v2398 = vrcp.bf16.pop %v2331
        %v2399 = vmul.bf16 1065369472, %v2398
        %v2400 = vrcp.bf16.pop %v2332
        %v2401 = vmul.bf16 1065369472, %v2400
        %v2402 = vrcp.bf16.pop %v2333
        %v2403 = vmul.bf16 1065369472, %v2402
        %v2404 = vrcp.bf16.pop %v2334
        %v2405 = vmul.bf16 1065369472, %v2404
        %v2406 = vrcp.bf16.pop %v2335
        %v2407 = vmul.bf16 1065369472, %v2406
        %v2408 = vrcp.bf16.pop %v2336
        %v2409 = vmul.bf16 1065369472, %v2408
        %v2410 = vrcp.bf16.pop %v2337
        %v2411 = vmul.bf16 1065369472, %v2410
        %v2412 = vrcp.bf16.pop %v2338
        %v2413 = vmul.bf16 1065369472, %v2412
        %v2414 = vrcp.bf16.pop %v2339
        %v2415 = vmul.bf16 1065369472, %v2414
        %v2416 = vrcp.bf16.pop %v2340
        %v2417 = vmul.bf16 1065369472, %v2416
        %v2418 = vrcp.bf16.pop %v2341
        %v2419 = vmul.bf16 1065369472, %v2418
        %v2420 = vrcp.bf16.pop %v2342
        %v2421 = vmul.bf16 1065369472, %v2420
        %v2422 = vrcp.bf16.pop %v2343
        %v2423 = vmul.bf16 1065369472, %v2422
        %v2424 = vrcp.bf16.pop %v2344
        %v2425 = vmul.bf16 1065369472, %v2424
        %v2426 = vrcp.bf16.pop %v2345
        %v2427 = vmul.bf16 1065369472, %v2426
        %v2428 = vrcp.bf16.pop %v2346
        %v2429 = vmul.bf16 1065369472, %v2428
        %v2430 = vrcp.bf16.pop %v2347
        %v2431 = vmul.bf16 1065369472, %v2430
        %v2432 = vrcp.bf16.pop %v2348
        %v2433 = vmul.bf16 1065369472, %v2432
        %v2434 = vrcp.bf16.pop %v2349
        %v2435 = vmul.bf16 1065369472, %v2434
        %v2436 = vrcp.bf16.pop %v2350
        %v2437 = vmul.bf16 1065369472, %v2436
        %v2438 = vrcp.bf16.pop %v2351
        %v2439 = vmul.bf16 1065369472, %v2438
        %v2440 = vrcp.bf16.pop %v2352
        %v2441 = vmul.bf16 1065369472, %v2440
        %v2442 = vrcp.bf16.pop %v2353
        %v2443 = vmul.bf16 1065369472, %v2442
        %v2444 = vrcp.bf16.pop %v2354
        %v2445 = vmul.bf16 1065369472, %v2444
        %v2446 = vrcp.bf16.pop %v2355
        %v2447 = vmul.bf16 1065369472, %v2446
        %v2448 = vrcp.bf16.pop %v2356
        %v2449 = vmul.bf16 1065369472, %v2448
        %v2450 = vrcp.bf16.pop %v2357
        %v2451 = vmul.bf16 1065369472, %v2450
        %v2452 = vrcp.bf16.pop %v2358
        %v2453 = vmul.bf16 1065369472, %v2452
        %v2454 = vrcp.bf16.pop %v2359
        %v2455 = vmul.bf16 1065369472, %v2454
        %v2456 = vrcp.bf16.pop %v2360
        %v2457 = vmul.bf16 1065369472, %v2456
        %v2458 = vrcp.bf16.pop %v2361
        %v2459 = vmul.bf16 1065369472, %v2458
        %v2460 = vrcp.bf16.pop %v2362
        %v2461 = vmul.bf16 1065369472, %v2460
        %v2462 = vrcp.bf16.pop %v2363
        %v2463 = vmul.bf16 1065369472, %v2462
        %v2464 = vrcp.bf16.pop %v2364
        %v2465 = vmul.bf16 1065369472, %v2464
        %v2466 = vrcp.bf16.pop %v2365
        %v2467 = vmul.bf16 1065369472, %v2466
        %v2468 = vrcp.bf16.pop %v2366
        %v2469 = vmul.bf16 1065369472, %v2468
        %v2470 = vrcp.bf16.pop %v2367
        %v2471 = vmul.bf16 1065369472, %v2470
        %v2472 = vrcp.bf16.pop %v2368
        %v2473 = vmul.bf16 1065369472, %v2472
        %v2474 = vrcp.bf16.pop %v2369
        %v2475 = vmul.bf16 1065369472, %v2474
        %v2476 = vrcp.bf16.pop %v2370
        %v2477 = vmul.bf16 1065369472, %v2476
        %v2478 = vrcp.bf16.pop %v2371
        %v2479 = vmul.bf16 1065369472, %v2478
        %v2480 = vrcp.bf16.pop %v2372
        %v2481 = vmul.bf16 1065369472, %v2480
        %v2482 = vrcp.bf16.pop %v2373
        %v2483 = vmul.bf16 1065369472, %v2482
        %v2484 = vrcp.bf16.pop %v2374
        %v2485 = vmul.bf16 1065369472, %v2484
        %v2486 = vrcp.bf16.pop %v2375
        %v2487 = vmul.bf16 1065369472, %v2486
        %v2488 = vrcp.bf16.pop %v2376
        %v2489 = vmul.bf16 1065369472, %v2488
        %v2490 = vrcp.bf16.pop %v2377
        %v2491 = vmul.bf16 1065369472, %v2490
        %v2492 = vrcp.bf16.pop %v2378
        %v2493 = vmul.bf16 1065369472, %v2492
        %v2494 = vrcp.bf16.pop %v2379
        %v2495 = vmul.bf16 1065369472, %v2494
        %v2496 = vrcp.bf16.pop %v2380
        %v2497 = vmul.bf16 1065369472, %v2496
        %v2498 = vrcp.bf16.pop %v2381
        %v2499 = vmul.bf16 1065369472, %v2498
        %v2500 = vrcp.bf16.pop %v2382
        %v2501 = vmul.bf16 1065369472, %v2500
        %v2502 = vrcp.bf16.pop %v2383
        %v2503 = vmul.bf16 1065369472, %v2502
        %v2504 = vrcp.bf16.pop %v2384
        %v2505 = vmul.bf16 1065369472, %v2504
        %v2506 = vrcp.bf16.pop %v2385
        %v2507 = vmul.bf16 1065369472, %v2506
        %v2508 = vrcp.bf16.pop %v2386
        %v2509 = vmul.bf16 1065369472, %v2508
        %v2510 = vrcp.bf16.pop %v2387
        %v2511 = vmul.bf16 1065369472, %v2510
        %v2512 = vrcp.bf16.pop %v2388
        %v2513 = vmul.bf16 1065369472, %v2512
        %v2514 = vrcp.bf16.pop %v2389
        %v2515 = vmul.bf16 1065369472, %v2514
        %v2516 = vrcp.bf16.pop %v2390
        %v2517 = vmul.bf16 1065369472, %v2516
        %v2518 = vrcp.bf16.pop %v2391
        %v2519 = vmul.bf16 1065369472, %v2518
        %v2520 = vmul.bf16 %v2008, %v2393
        %v2521 = vmul.bf16 %v2009, %v2395
        %v2522 = vmul.bf16 %v2010, %v2397
        %v2523 = vmul.bf16 %v2011, %v2399
        %v2524 = vmul.bf16 %v2012, %v2401
        %v2525 = vmul.bf16 %v2013, %v2403
        %v2526 = vmul.bf16 %v2014, %v2405
        %v2527 = vmul.bf16 %v2015, %v2407
        %v2528 = vmul.bf16 %v2016, %v2409
        %v2529 = vmul.bf16 %v2017, %v2411
        %v2530 = vmul.bf16 %v2018, %v2413
        %v2531 = vmul.bf16 %v2019, %v2415
        %v2532 = vmul.bf16 %v2020, %v2417
        %v2533 = vmul.bf16 %v2021, %v2419
        %v2534 = vmul.bf16 %v2022, %v2421
        %v2535 = vmul.bf16 %v2023, %v2423
        %v2536 = vmul.bf16 %v2024, %v2425
        %v2537 = vmul.bf16 %v2025, %v2427
        %v2538 = vmul.bf16 %v2026, %v2429
        %v2539 = vmul.bf16 %v2027, %v2431
        %v2540 = vmul.bf16 %v2028, %v2433
        %v2541 = vmul.bf16 %v2029, %v2435
        %v2542 = vmul.bf16 %v2030, %v2437
        %v2543 = vmul.bf16 %v2031, %v2439
        %v2544 = vmul.bf16 %v2032, %v2441
        %v2545 = vmul.bf16 %v2033, %v2443
        %v2546 = vmul.bf16 %v2034, %v2445
        %v2547 = vmul.bf16 %v2035, %v2447
        %v2548 = vmul.bf16 %v2036, %v2449
        %v2549 = vmul.bf16 %v2037, %v2451
        %v2550 = vmul.bf16 %v2038, %v2453
        %v2551 = vmul.bf16 %v2039, %v2455
        %v2552 = vmul.bf16 %v2040, %v2457
        %v2553 = vmul.bf16 %v2041, %v2459
        %v2554 = vmul.bf16 %v2042, %v2461
        %v2555 = vmul.bf16 %v2043, %v2463
        %v2556 = vmul.bf16 %v2044, %v2465
        %v2557 = vmul.bf16 %v2045, %v2467
        %v2558 = vmul.bf16 %v2046, %v2469
        %v2559 = vmul.bf16 %v2047, %v2471
        %v2560 = vmul.bf16 %v2048, %v2473
        %v2561 = vmul.bf16 %v2049, %v2475
        %v2562 = vmul.bf16 %v2050, %v2477
        %v2563 = vmul.bf16 %v2051, %v2479
        %v2564 = vmul.bf16 %v2052, %v2481
        %v2565 = vmul.bf16 %v2053, %v2483
        %v2566 = vmul.bf16 %v2054, %v2485
        %v2567 = vmul.bf16 %v2055, %v2487
        %v2568 = vmul.bf16 %v2056, %v2489
        %v2569 = vmul.bf16 %v2057, %v2491
        %v2570 = vmul.bf16 %v2058, %v2493
        %v2571 = vmul.bf16 %v2059, %v2495
        %v2572 = vmul.bf16 %v2060, %v2497
        %v2573 = vmul.bf16 %v2061, %v2499
        %v2574 = vmul.bf16 %v2062, %v2501
        %v2575 = vmul.bf16 %v2063, %v2503
        %v2576 = vmul.bf16 %v2064, %v2505
        %v2577 = vmul.bf16 %v2065, %v2507
        %v2578 = vmul.bf16 %v2066, %v2509
        %v2579 = vmul.bf16 %v2067, %v2511
        %v2580 = vmul.bf16 %v2068, %v2513
        %v2581 = vmul.bf16 %v2069, %v2515
        %v2582 = vmul.bf16 %v2070, %v2517
        %v2583 = vmul.bf16 %v2071, %v2519
        %v2584 = vunpack.c.l.bf16 %v2520
        %v2585 = vunpack.c.l.bf16 %v2521
        %v2586 = vunpack.c.h.bf16 %v2520
        %v2587 = vunpack.c.h.bf16 %v2521
        %v2588 = vunpack.c.l.bf16 %v2522
        %v2589 = vunpack.c.l.bf16 %v2523
        %v2590 = vunpack.c.h.bf16 %v2522
        %v2591 = vunpack.c.h.bf16 %v2523
        %v2592 = vunpack.c.l.bf16 %v2524
        %v2593 = vunpack.c.l.bf16 %v2525
        %v2594 = vunpack.c.h.bf16 %v2524
        %v2595 = vunpack.c.h.bf16 %v2525
        %v2596 = vunpack.c.l.bf16 %v2526
        %v2597 = vunpack.c.l.bf16 %v2527
        %v2598 = vunpack.c.h.bf16 %v2526
        %v2599 = vunpack.c.h.bf16 %v2527
        %v2600 = vunpack.c.l.bf16 %v2528
        %v2601 = vunpack.c.l.bf16 %v2529
        %v2602 = vunpack.c.h.bf16 %v2528
        %v2603 = vunpack.c.h.bf16 %v2529
        %v2604 = vunpack.c.l.bf16 %v2530
        %v2605 = vunpack.c.l.bf16 %v2531
        %v2606 = vunpack.c.h.bf16 %v2530
        %v2607 = vunpack.c.h.bf16 %v2531
        %v2608 = vunpack.c.l.bf16 %v2532
        %v2609 = vunpack.c.l.bf16 %v2533
        %v2610 = vunpack.c.h.bf16 %v2532
        %v2611 = vunpack.c.h.bf16 %v2533
        %v2612 = vunpack.c.l.bf16 %v2534
        %v2613 = vunpack.c.l.bf16 %v2535
        %v2614 = vunpack.c.h.bf16 %v2534
        %v2615 = vunpack.c.h.bf16 %v2535
        %v2616 = vunpack.c.l.bf16 %v2536
        %v2617 = vunpack.c.l.bf16 %v2537
        %v2618 = vunpack.c.h.bf16 %v2536
        %v2619 = vunpack.c.h.bf16 %v2537
        %v2620 = vunpack.c.l.bf16 %v2538
        %v2621 = vunpack.c.l.bf16 %v2539
        %v2622 = vunpack.c.h.bf16 %v2538
        %v2623 = vunpack.c.h.bf16 %v2539
        %v2624 = vunpack.c.l.bf16 %v2540
        %v2625 = vunpack.c.l.bf16 %v2541
        %v2626 = vunpack.c.h.bf16 %v2540
        %v2627 = vunpack.c.h.bf16 %v2541
        %v2628 = vunpack.c.l.bf16 %v2542
        %v2629 = vunpack.c.l.bf16 %v2543
        %v2630 = vunpack.c.h.bf16 %v2542
        %v2631 = vunpack.c.h.bf16 %v2543
        %v2632 = vunpack.c.l.bf16 %v2544
        %v2633 = vunpack.c.l.bf16 %v2545
        %v2634 = vunpack.c.h.bf16 %v2544
        %v2635 = vunpack.c.h.bf16 %v2545
        %v2636 = vunpack.c.l.bf16 %v2546
        %v2637 = vunpack.c.l.bf16 %v2547
        %v2638 = vunpack.c.h.bf16 %v2546
        %v2639 = vunpack.c.h.bf16 %v2547
        %v2640 = vunpack.c.l.bf16 %v2548
        %v2641 = vunpack.c.l.bf16 %v2549
        %v2642 = vunpack.c.h.bf16 %v2548
        %v2643 = vunpack.c.h.bf16 %v2549
        %v2644 = vunpack.c.l.bf16 %v2550
        %v2645 = vunpack.c.l.bf16 %v2551
        %v2646 = vunpack.c.h.bf16 %v2550
        %v2647 = vunpack.c.h.bf16 %v2551
        %v2648 = vunpack.c.l.bf16 %v2552
        %v2649 = vunpack.c.l.bf16 %v2553
        %v2650 = vunpack.c.h.bf16 %v2552
        %v2651 = vunpack.c.h.bf16 %v2553
        %v2652 = vunpack.c.l.bf16 %v2554
        %v2653 = vunpack.c.l.bf16 %v2555
        %v2654 = vunpack.c.h.bf16 %v2554
        %v2655 = vunpack.c.h.bf16 %v2555
        %v2656 = vunpack.c.l.bf16 %v2556
        %v2657 = vunpack.c.l.bf16 %v2557
        %v2658 = vunpack.c.h.bf16 %v2556
        %v2659 = vunpack.c.h.bf16 %v2557
        %v2660 = vunpack.c.l.bf16 %v2558
        %v2661 = vunpack.c.l.bf16 %v2559
        %v2662 = vunpack.c.h.bf16 %v2558
        %v2663 = vunpack.c.h.bf16 %v2559
        %v2664 = vunpack.c.l.bf16 %v2560
        %v2665 = vunpack.c.l.bf16 %v2561
        %v2666 = vunpack.c.h.bf16 %v2560
        %v2667 = vunpack.c.h.bf16 %v2561
        %v2668 = vunpack.c.l.bf16 %v2562
        %v2669 = vunpack.c.l.bf16 %v2563
        %v2670 = vunpack.c.h.bf16 %v2562
        %v2671 = vunpack.c.h.bf16 %v2563
        %v2672 = vunpack.c.l.bf16 %v2564
        %v2673 = vunpack.c.l.bf16 %v2565
        %v2674 = vunpack.c.h.bf16 %v2564
        %v2675 = vunpack.c.h.bf16 %v2565
        %v2676 = vunpack.c.l.bf16 %v2566
        %v2677 = vunpack.c.l.bf16 %v2567
        %v2678 = vunpack.c.h.bf16 %v2566
        %v2679 = vunpack.c.h.bf16 %v2567
        %v2680 = vunpack.c.l.bf16 %v2568
        %v2681 = vunpack.c.l.bf16 %v2569
        %v2682 = vunpack.c.h.bf16 %v2568
        %v2683 = vunpack.c.h.bf16 %v2569
        %v2684 = vunpack.c.l.bf16 %v2570
        %v2685 = vunpack.c.l.bf16 %v2571
        %v2686 = vunpack.c.h.bf16 %v2570
        %v2687 = vunpack.c.h.bf16 %v2571
        %v2688 = vunpack.c.l.bf16 %v2572
        %v2689 = vunpack.c.l.bf16 %v2573
        %v2690 = vunpack.c.h.bf16 %v2572
        %v2691 = vunpack.c.h.bf16 %v2573
        %v2692 = vunpack.c.l.bf16 %v2574
        %v2693 = vunpack.c.l.bf16 %v2575
        %v2694 = vunpack.c.h.bf16 %v2574
        %v2695 = vunpack.c.h.bf16 %v2575
        %v2696 = vunpack.c.l.bf16 %v2576
        %v2697 = vunpack.c.l.bf16 %v2577
        %v2698 = vunpack.c.h.bf16 %v2576
        %v2699 = vunpack.c.h.bf16 %v2577
        %v2700 = vunpack.c.l.bf16 %v2578
        %v2701 = vunpack.c.l.bf16 %v2579
        %v2702 = vunpack.c.h.bf16 %v2578
        %v2703 = vunpack.c.h.bf16 %v2579
        %v2704 = vunpack.c.l.bf16 %v2580
        %v2705 = vunpack.c.l.bf16 %v2581
        %v2706 = vunpack.c.h.bf16 %v2580
        %v2707 = vunpack.c.h.bf16 %v2581
        %v2708 = vunpack.c.l.bf16 %v2582
        %v2709 = vunpack.c.l.bf16 %v2583
        %v2710 = vunpack.c.h.bf16 %v2582
        %v2711 = vunpack.c.h.bf16 %v2583
        %v2712 = vld [vmem:[#allocation2] sm:$0xff]
        %v2713 = vld [vmem:[#allocation2 + $0x8] sm:$0xff]
        %v2714 = vadd.f32 %v2584, %v2586
        %v2715 = vadd.f32 %v2714, %v2588
        %v2716 = vadd.f32 %v2715, %v2590
        %v2717 = vadd.f32 %v2716, %v2592
        %v2718 = vadd.f32 %v2717, %v2594
        %v2719 = vadd.f32 %v2718, %v2596
        %v2720 = vadd.f32 %v2719, %v2598
        %v2721 = vadd.f32 %v2720, %v2600
        %v2722 = vadd.f32 %v2721, %v2602
        %v2723 = vadd.f32 %v2722, %v2604
        %v2724 = vadd.f32 %v2723, %v2606
        %v2725 = vadd.f32 %v2724, %v2608
        %v2726 = vadd.f32 %v2725, %v2610
        %v2727 = vadd.f32 %v2726, %v2612
        %v2728 = vadd.f32 %v2727, %v2614
        %v2729 = vadd.f32 %v2728, %v2616
        %v2730 = vadd.f32 %v2729, %v2618
        %v2731 = vadd.f32 %v2730, %v2620
        %v2732 = vadd.f32 %v2731, %v2622
        %v2733 = vadd.f32 %v2732, %v2624
        %v2734 = vadd.f32 %v2733, %v2626
        %v2735 = vadd.f32 %v2734, %v2628
        %v2736 = vadd.f32 %v2735, %v2630
        %v2737 = vadd.f32 %v2736, %v2632
        %v2738 = vadd.f32 %v2737, %v2634
        %v2739 = vadd.f32 %v2738, %v2636
        %v2740 = vadd.f32 %v2739, %v2638
        %v2741 = vadd.f32 %v2740, %v2640
        %v2742 = vadd.f32 %v2741, %v2642
        %v2743 = vadd.f32 %v2742, %v2644
        %v2744 = vadd.f32 %v2743, %v2646
        %v2745 = vadd.f32 %v2744, %v2648
        %v2746 = vadd.f32 %v2745, %v2650
        %v2747 = vadd.f32 %v2746, %v2652
        %v2748 = vadd.f32 %v2747, %v2654
        %v2749 = vadd.f32 %v2748, %v2656
        %v2750 = vadd.f32 %v2749, %v2658
        %v2751 = vadd.f32 %v2750, %v2660
        %v2752 = vadd.f32 %v2751, %v2662
        %v2753 = vadd.f32 %v2752, %v2664
        %v2754 = vadd.f32 %v2753, %v2666
        %v2755 = vadd.f32 %v2754, %v2668
        %v2756 = vadd.f32 %v2755, %v2670
        %v2757 = vadd.f32 %v2756, %v2672
        %v2758 = vadd.f32 %v2757, %v2674
        %v2759 = vadd.f32 %v2758, %v2676
        %v2760 = vadd.f32 %v2759, %v2678
        %v2761 = vadd.f32 %v2760, %v2680
        %v2762 = vadd.f32 %v2761, %v2682
        %v2763 = vadd.f32 %v2762, %v2684
        %v2764 = vadd.f32 %v2763, %v2686
        %v2765 = vadd.f32 %v2764, %v2688
        %v2766 = vadd.f32 %v2765, %v2690
        %v2767 = vadd.f32 %v2766, %v2692
        %v2768 = vadd.f32 %v2767, %v2694
        %v2769 = vadd.f32 %v2768, %v2696
        %v2770 = vadd.f32 %v2769, %v2698
        %v2771 = vadd.f32 %v2770, %v2700
        %v2772 = vadd.f32 %v2771, %v2702
        %v2773 = vadd.f32 %v2772, %v2704
        %v2774 = vadd.f32 %v2773, %v2706
        %v2775 = vadd.f32 %v2774, %v2708
        %v2776 = vadd.f32 %v2775, %v2710
        %v2777 = vadd.f32 %v2585, %v2587
        %v2778 = vadd.f32 %v2777, %v2589
        %v2779 = vadd.f32 %v2778, %v2591
        %v2780 = vadd.f32 %v2779, %v2593
        %v2781 = vadd.f32 %v2780, %v2595
        %v2782 = vadd.f32 %v2781, %v2597
        %v2783 = vadd.f32 %v2782, %v2599
        %v2784 = vadd.f32 %v2783, %v2601
        %v2785 = vadd.f32 %v2784, %v2603
        %v2786 = vadd.f32 %v2785, %v2605
        %v2787 = vadd.f32 %v2786, %v2607
        %v2788 = vadd.f32 %v2787, %v2609
        %v2789 = vadd.f32 %v2788, %v2611
        %v2790 = vadd.f32 %v2789, %v2613
        %v2791 = vadd.f32 %v2790, %v2615
        %v2792 = vadd.f32 %v2791, %v2617
        %v2793 = vadd.f32 %v2792, %v2619
        %v2794 = vadd.f32 %v2793, %v2621
        %v2795 = vadd.f32 %v2794, %v2623
        %v2796 = vadd.f32 %v2795, %v2625
        %v2797 = vadd.f32 %v2796, %v2627
        %v2798 = vadd.f32 %v2797, %v2629
        %v2799 = vadd.f32 %v2798, %v2631
        %v2800 = vadd.f32 %v2799, %v2633
        %v2801 = vadd.f32 %v2800, %v2635
        %v2802 = vadd.f32 %v2801, %v2637
        %v2803 = vadd.f32 %v2802, %v2639
        %v2804 = vadd.f32 %v2803, %v2641
        %v2805 = vadd.f32 %v2804, %v2643
        %v2806 = vadd.f32 %v2805, %v2645
        %v2807 = vadd.f32 %v2806, %v2647
        %v2808 = vadd.f32 %v2807, %v2649
        %v2809 = vadd.f32 %v2808, %v2651
        %v2810 = vadd.f32 %v2809, %v2653
        %v2811 = vadd.f32 %v2810, %v2655
        %v2812 = vadd.f32 %v2811, %v2657
        %v2813 = vadd.f32 %v2812, %v2659
        %v2814 = vadd.f32 %v2813, %v2661
        %v2815 = vadd.f32 %v2814, %v2663
        %v2816 = vadd.f32 %v2815, %v2665
        %v2817 = vadd.f32 %v2816, %v2667
        %v2818 = vadd.f32 %v2817, %v2669
        %v2819 = vadd.f32 %v2818, %v2671
        %v2820 = vadd.f32 %v2819, %v2673
        %v2821 = vadd.f32 %v2820, %v2675
        %v2822 = vadd.f32 %v2821, %v2677
        %v2823 = vadd.f32 %v2822, %v2679
        %v2824 = vadd.f32 %v2823, %v2681
        %v2825 = vadd.f32 %v2824, %v2683
        %v2826 = vadd.f32 %v2825, %v2685
        %v2827 = vadd.f32 %v2826, %v2687
        %v2828 = vadd.f32 %v2827, %v2689
        %v2829 = vadd.f32 %v2828, %v2691
        %v2830 = vadd.f32 %v2829, %v2693
        %v2831 = vadd.f32 %v2830, %v2695
        %v2832 = vadd.f32 %v2831, %v2697
        %v2833 = vadd.f32 %v2832, %v2699
        %v2834 = vadd.f32 %v2833, %v2701
        %v2835 = vadd.f32 %v2834, %v2703
        %v2836 = vadd.f32 %v2835, %v2705
        %v2837 = vadd.f32 %v2836, %v2707
        %v2838 = vadd.f32 %v2837, %v2709
        %v2839 = vadd.f32 %v2838, %v2711
        %v2840 = vadd.f32 %v2712, %v2776
        %v2841 = vadd.f32 %v2713, %v2839
        %2842 = vst [vmem:[#allocation2] sm:$0xff] %v2840
        %2843 = vst [vmem:[#allocation2 + $0x8] sm:$0xff] %v2841
        %v2844 = vld [vmem:[%s3 + $0x8] sm:$0xff]
        %v2845 = vld [vmem:[%s3 + $0x30] sm:$0xff]
        %v2846 = vld [vmem:[%s3 + $0x58] sm:$0xff]
        %v2847 = vld [vmem:[%s3 + $0x80] sm:$0xff]
        %v2852 = vunpack.c.l.b16 %v2844
        %v2853 = vunpack.c.h.b16 %v2844
        %v2854 = vunpack.c.l.b16 %v2845
        %v2855 = vunpack.c.h.b16 %v2845
        %v2856 = vunpack.c.l.b16 %v2846
        %v2857 = vunpack.c.h.b16 %v2846
        %v2858 = vunpack.c.l.b16 %v2847
        %v2859 = vunpack.c.h.b16 %v2847
        %v2860 = vpack.c.b16 %v2854, %v2852
        %v2861 = vpack.c.b16 %v2855, %v2853
        %v2862 = vpack.c.b16 %v2858, %v2856
        %v2863 = vpack.c.b16 %v2859, %v2857
        %2868 = vmatprep.subr.bf16.mxu0 0
        %2869 = vmatpush1.bf16.msra.mxu0 0
        %2870 = vmatprep.subr.bf16.mxu0 0
        %2871 = vmatpush1.bf16.msra.mxu0 0
        %2872 = vmatprep.subr.bf16.mxu0 0
        %2873 = vmatpush1.bf16.msra.mxu0 0
        %2874 = vmatprep.subr.bf16.mxu0 0
        %2875 = vmatpush1.bf16.msra.mxu0 0
        %2876 = vmatprep.subr.bf16.mxu0 0
        %2877 = vmatpush1.bf16.msra.mxu0 0
        %2878 = vmatprep.subr.bf16.mxu0 0
        %2879 = vmatpush1.bf16.msra.mxu0 0
        %2880 = vmatprep.subr.bf16.mxu0 %v2863
        %2881 = vmatpush1.bf16.msra.mxu0 %v2862
        %2882 = vmatprep.subr.bf16.mxu0 %v2861
        %2883 = vmatpush1.bf16.msra.mxu0 %v2860
        %2884 = vmatprep.subr.bf16.mxu0 0
        %2885 = vmatpush2.bf16.msra.mxu0 0
        %2886 = vmatprep.subr.bf16.mxu0 0
        %2887 = vmatpush2.bf16.msra.mxu0 0
        %2888 = vmatprep.subr.bf16.mxu0 0
        %2889 = vmatpush2.bf16.msra.mxu0 0
        %2890 = vmatprep.subr.bf16.mxu0 0
        %2891 = vmatpush2.bf16.msra.mxu0 0
        %2892 = vmatprep.subr.bf16.mxu0 0
        %2893 = vmatpush2.bf16.msra.mxu0 0
        %2894 = vmatprep.subr.bf16.mxu0 0
        %2895 = vmatpush2.bf16.msra.mxu0 0
        %2896 = vmatprep.subr.bf16.mxu0 0
        %2897 = vmatpush2.bf16.msra.mxu0 0
        %2898 = vmatprep.subr.bf16.mxu0 0
        %2899 = vmatpush2.bf16.msra.mxu0 0
        %2900 = vmatprep.mubr.bf16.mxu0 0
        %2901 = vmatmul.mubr.bf16.gmra.mxu0 %v1458
        %v2902 = vpop.f32.mrf.mxu0
        %v2903 = vadd.f32 0.0, %v2902
        %v2904 = vpop.f32.mrf.mxu0
        %v2905 = vadd.f32 0.0, %v2904
        %v2906 = vpop.f32.mrf.mxu0
        %v2907 = vadd.f32 0.0, %v2906
        %v2908 = vpop.f32.mrf.mxu0
        %v2909 = vadd.f32 0.0, %v2908
        %2910 = vmatprep.mubr.bf16.mxu0 0
        %2911 = vmatmul.mubr.bf16.gmra.mxu0 %v1461
        %v2912 = vpop.f32.mrf.mxu0
        %v2913 = vadd.f32 0.0, %v2912
        %v2914 = vpop.f32.mrf.mxu0
        %v2915 = vadd.f32 0.0, %v2914
        %v2916 = vpop.f32.mrf.mxu0
        %v2917 = vadd.f32 0.0, %v2916
        %v2918 = vpop.f32.mrf.mxu0
        %v2919 = vadd.f32 0.0, %v2918
        %2920 = vmatprep.mubr.bf16.mxu0 0
        %2921 = vmatmul.mubr.bf16.gmra.mxu0 %v1464
        %v2922 = vpop.f32.mrf.mxu0
        %v2923 = vadd.f32 0.0, %v2922
        %v2924 = vpop.f32.mrf.mxu0
        %v2925 = vadd.f32 0.0, %v2924
        %v2926 = vpop.f32.mrf.mxu0
        %v2927 = vadd.f32 0.0, %v2926
        %v2928 = vpop.f32.mrf.mxu0
        %v2929 = vadd.f32 0.0, %v2928
        %2930 = vmatprep.mubr.bf16.mxu0 0
        %2931 = vmatmul.mubr.bf16.gmra.mxu0 %v1467
        %v2932 = vpop.f32.mrf.mxu0
        %v2933 = vadd.f32 0.0, %v2932
        %v2934 = vpop.f32.mrf.mxu0
        %v2935 = vadd.f32 0.0, %v2934
        %v2936 = vpop.f32.mrf.mxu0
        %v2937 = vadd.f32 0.0, %v2936
        %v2938 = vpop.f32.mrf.mxu0
        %v2939 = vadd.f32 0.0, %v2938
        %2940 = vmatprep.mubr.bf16.mxu0 0
        %2941 = vmatmul.mubr.bf16.gmra.mxu0 %v1470
        %v2942 = vpop.f32.mrf.mxu0
        %v2943 = vadd.f32 0.0, %v2942
        %v2944 = vpop.f32.mrf.mxu0
        %v2945 = vadd.f32 0.0, %v2944
        %v2946 = vpop.f32.mrf.mxu0
        %v2947 = vadd.f32 0.0, %v2946
        %v2948 = vpop.f32.mrf.mxu0
        %v2949 = vadd.f32 0.0, %v2948
        %2950 = vmatprep.mubr.bf16.mxu0 0
        %2951 = vmatmul.mubr.bf16.gmra.mxu0 %v1473
        %v2952 = vpop.f32.mrf.mxu0
        %v2953 = vadd.f32 0.0, %v2952
        %v2954 = vpop.f32.mrf.mxu0
        %v2955 = vadd.f32 0.0, %v2954
        %v2956 = vpop.f32.mrf.mxu0
        %v2957 = vadd.f32 0.0, %v2956
        %v2958 = vpop.f32.mrf.mxu0
        %v2959 = vadd.f32 0.0, %v2958
        %2960 = vmatprep.mubr.bf16.mxu0 0
        %2961 = vmatmul.mubr.bf16.gmra.mxu0 %v1476
        %v2962 = vpop.f32.mrf.mxu0
        %v2963 = vadd.f32 0.0, %v2962
        %v2964 = vpop.f32.mrf.mxu0
        %v2965 = vadd.f32 0.0, %v2964
        %v2966 = vpop.f32.mrf.mxu0
        %v2967 = vadd.f32 0.0, %v2966
        %v2968 = vpop.f32.mrf.mxu0
        %v2969 = vadd.f32 0.0, %v2968
        %2970 = vmatprep.mubr.bf16.mxu0 0
        %2971 = vmatmul.mubr.bf16.gmra.mxu0 %v1479
        %v2972 = vpop.f32.mrf.mxu0
        %v2973 = vadd.f32 0.0, %v2972
        %v2974 = vpop.f32.mrf.mxu0
        %v2975 = vadd.f32 0.0, %v2974
        %v2976 = vpop.f32.mrf.mxu0
        %v2977 = vadd.f32 0.0, %v2976
        %v2978 = vpop.f32.mrf.mxu0
        %v2979 = vadd.f32 0.0, %v2978
        %2980 = vmatprep.mubr.bf16.mxu0 0
        %2981 = vmatmul.mubr.bf16.gmra.mxu0 %v1482
        %v2982 = vpop.f32.mrf.mxu0
        %v2983 = vadd.f32 0.0, %v2982
        %v2984 = vpop.f32.mrf.mxu0
        %v2985 = vadd.f32 0.0, %v2984
        %v2986 = vpop.f32.mrf.mxu0
        %v2987 = vadd.f32 0.0, %v2986
        %v2988 = vpop.f32.mrf.mxu0
        %v2989 = vadd.f32 0.0, %v2988
        %2990 = vmatprep.mubr.bf16.mxu0 0
        %2991 = vmatmul.mubr.bf16.gmra.mxu0 %v1485
        %v2992 = vpop.f32.mrf.mxu0
        %v2993 = vadd.f32 0.0, %v2992
        %v2994 = vpop.f32.mrf.mxu0
        %v2995 = vadd.f32 0.0, %v2994
        %v2996 = vpop.f32.mrf.mxu0
        %v2997 = vadd.f32 0.0, %v2996
        %v2998 = vpop.f32.mrf.mxu0
        %v2999 = vadd.f32 0.0, %v2998
        %3000 = vmatprep.mubr.bf16.mxu0 0
        %3001 = vmatmul.mubr.bf16.gmra.mxu0 %v1488
        %v3002 = vpop.f32.mrf.mxu0
        %v3003 = vadd.f32 0.0, %v3002
        %v3004 = vpop.f32.mrf.mxu0
        %v3005 = vadd.f32 0.0, %v3004
        %v3006 = vpop.f32.mrf.mxu0
        %v3007 = vadd.f32 0.0, %v3006
        %v3008 = vpop.f32.mrf.mxu0
        %v3009 = vadd.f32 0.0, %v3008
        %3010 = vmatprep.mubr.bf16.mxu0 0
        %3011 = vmatmul.mubr.bf16.gmra.mxu0 %v1491
        %v3012 = vpop.f32.mrf.mxu0
        %v3013 = vadd.f32 0.0, %v3012
        %v3014 = vpop.f32.mrf.mxu0
        %v3015 = vadd.f32 0.0, %v3014
        %v3016 = vpop.f32.mrf.mxu0
        %v3017 = vadd.f32 0.0, %v3016
        %v3018 = vpop.f32.mrf.mxu0
        %v3019 = vadd.f32 0.0, %v3018
        %3020 = vmatprep.mubr.bf16.mxu0 0
        %3021 = vmatmul.mubr.bf16.gmra.mxu0 %v1494
        %v3022 = vpop.f32.mrf.mxu0
        %v3023 = vadd.f32 0.0, %v3022
        %v3024 = vpop.f32.mrf.mxu0
        %v3025 = vadd.f32 0.0, %v3024
        %v3026 = vpop.f32.mrf.mxu0
        %v3027 = vadd.f32 0.0, %v3026
        %v3028 = vpop.f32.mrf.mxu0
        %v3029 = vadd.f32 0.0, %v3028
        %3030 = vmatprep.mubr.bf16.mxu0 0
        %3031 = vmatmul.mubr.bf16.gmra.mxu0 %v1497
        %v3032 = vpop.f32.mrf.mxu0
        %v3033 = vadd.f32 0.0, %v3032
        %v3034 = vpop.f32.mrf.mxu0
        %v3035 = vadd.f32 0.0, %v3034
        %v3036 = vpop.f32.mrf.mxu0
        %v3037 = vadd.f32 0.0, %v3036
        %v3038 = vpop.f32.mrf.mxu0
        %v3039 = vadd.f32 0.0, %v3038
        %3040 = vmatprep.mubr.bf16.mxu0 0
        %3041 = vmatmul.mubr.bf16.gmra.mxu0 %v1500
        %v3042 = vpop.f32.mrf.mxu0
        %v3043 = vadd.f32 0.0, %v3042
        %v3044 = vpop.f32.mrf.mxu0
        %v3045 = vadd.f32 0.0, %v3044
        %v3046 = vpop.f32.mrf.mxu0
        %v3047 = vadd.f32 0.0, %v3046
        %v3048 = vpop.f32.mrf.mxu0
        %v3049 = vadd.f32 0.0, %v3048
        %3050 = vmatprep.mubr.bf16.mxu0 0
        %3051 = vmatmul.mubr.bf16.gmra.mxu0 %v1503
        %v3052 = vpop.f32.mrf.mxu0
        %v3053 = vadd.f32 0.0, %v3052
        %v3054 = vpop.f32.mrf.mxu0
        %v3055 = vadd.f32 0.0, %v3054
        %v3056 = vpop.f32.mrf.mxu0
        %v3057 = vadd.f32 0.0, %v3056
        %v3058 = vpop.f32.mrf.mxu0
        %v3059 = vadd.f32 0.0, %v3058
        %3060 = vmatprep.mubr.bf16.mxu0 0
        %3061 = vmatmul.mubr.bf16.gmra.mxu0 %v1506
        %v3062 = vpop.f32.mrf.mxu0
        %v3063 = vadd.f32 0.0, %v3062
        %v3064 = vpop.f32.mrf.mxu0
        %v3065 = vadd.f32 0.0, %v3064
        %v3066 = vpop.f32.mrf.mxu0
        %v3067 = vadd.f32 0.0, %v3066
        %v3068 = vpop.f32.mrf.mxu0
        %v3069 = vadd.f32 0.0, %v3068
        %3070 = vmatprep.mubr.bf16.mxu0 0
        %3071 = vmatmul.mubr.bf16.gmra.mxu0 %v1509
        %v3072 = vpop.f32.mrf.mxu0
        %v3073 = vadd.f32 0.0, %v3072
        %v3074 = vpop.f32.mrf.mxu0
        %v3075 = vadd.f32 0.0, %v3074
        %v3076 = vpop.f32.mrf.mxu0
        %v3077 = vadd.f32 0.0, %v3076
        %v3078 = vpop.f32.mrf.mxu0
        %v3079 = vadd.f32 0.0, %v3078
        %3080 = vmatprep.mubr.bf16.mxu0 0
        %3081 = vmatmul.mubr.bf16.gmra.mxu0 %v1512
        %v3082 = vpop.f32.mrf.mxu0
        %v3083 = vadd.f32 0.0, %v3082
        %v3084 = vpop.f32.mrf.mxu0
        %v3085 = vadd.f32 0.0, %v3084
        %v3086 = vpop.f32.mrf.mxu0
        %v3087 = vadd.f32 0.0, %v3086
        %v3088 = vpop.f32.mrf.mxu0
        %v3089 = vadd.f32 0.0, %v3088
        %3090 = vmatprep.mubr.bf16.mxu0 0
        %3091 = vmatmul.mubr.bf16.gmra.mxu0 %v1515
        %v3092 = vpop.f32.mrf.mxu0
        %v3093 = vadd.f32 0.0, %v3092
        %v3094 = vpop.f32.mrf.mxu0
        %v3095 = vadd.f32 0.0, %v3094
        %v3096 = vpop.f32.mrf.mxu0
        %v3097 = vadd.f32 0.0, %v3096
        %v3098 = vpop.f32.mrf.mxu0
        %v3099 = vadd.f32 0.0, %v3098
        %3100 = vmatprep.mubr.bf16.mxu0 0
        %3101 = vmatmul.mubr.bf16.gmra.mxu0 %v1518
        %v3102 = vpop.f32.mrf.mxu0
        %v3103 = vadd.f32 0.0, %v3102
        %v3104 = vpop.f32.mrf.mxu0
        %v3105 = vadd.f32 0.0, %v3104
        %v3106 = vpop.f32.mrf.mxu0
        %v3107 = vadd.f32 0.0, %v3106
        %v3108 = vpop.f32.mrf.mxu0
        %v3109 = vadd.f32 0.0, %v3108
        %3110 = vmatprep.mubr.bf16.mxu0 0
        %3111 = vmatmul.mubr.bf16.gmra.mxu0 %v1521
        %v3112 = vpop.f32.mrf.mxu0
        %v3113 = vadd.f32 0.0, %v3112
        %v3114 = vpop.f32.mrf.mxu0
        %v3115 = vadd.f32 0.0, %v3114
        %v3116 = vpop.f32.mrf.mxu0
        %v3117 = vadd.f32 0.0, %v3116
        %v3118 = vpop.f32.mrf.mxu0
        %v3119 = vadd.f32 0.0, %v3118
        %3120 = vmatprep.mubr.bf16.mxu0 0
        %3121 = vmatmul.mubr.bf16.gmra.mxu0 %v1524
        %v3122 = vpop.f32.mrf.mxu0
        %v3123 = vadd.f32 0.0, %v3122
        %v3124 = vpop.f32.mrf.mxu0
        %v3125 = vadd.f32 0.0, %v3124
        %v3126 = vpop.f32.mrf.mxu0
        %v3127 = vadd.f32 0.0, %v3126
        %v3128 = vpop.f32.mrf.mxu0
        %v3129 = vadd.f32 0.0, %v3128
        %3130 = vmatprep.mubr.bf16.mxu0 0
        %3131 = vmatmul.mubr.bf16.gmra.mxu0 %v1527
        %v3132 = vpop.f32.mrf.mxu0
        %v3133 = vadd.f32 0.0, %v3132
        %v3134 = vpop.f32.mrf.mxu0
        %v3135 = vadd.f32 0.0, %v3134
        %v3136 = vpop.f32.mrf.mxu0
        %v3137 = vadd.f32 0.0, %v3136
        %v3138 = vpop.f32.mrf.mxu0
        %v3139 = vadd.f32 0.0, %v3138
        %3140 = vmatprep.mubr.bf16.mxu0 0
        %3141 = vmatmul.mubr.bf16.gmra.mxu0 %v1530
        %v3142 = vpop.f32.mrf.mxu0
        %v3143 = vadd.f32 0.0, %v3142
        %v3144 = vpop.f32.mrf.mxu0
        %v3145 = vadd.f32 0.0, %v3144
        %v3146 = vpop.f32.mrf.mxu0
        %v3147 = vadd.f32 0.0, %v3146
        %v3148 = vpop.f32.mrf.mxu0
        %v3149 = vadd.f32 0.0, %v3148
        %3150 = vmatprep.mubr.bf16.mxu0 0
        %3151 = vmatmul.mubr.bf16.gmra.mxu0 %v1533
        %v3152 = vpop.f32.mrf.mxu0
        %v3153 = vadd.f32 0.0, %v3152
        %v3154 = vpop.f32.mrf.mxu0
        %v3155 = vadd.f32 0.0, %v3154
        %v3156 = vpop.f32.mrf.mxu0
        %v3157 = vadd.f32 0.0, %v3156
        %v3158 = vpop.f32.mrf.mxu0
        %v3159 = vadd.f32 0.0, %v3158
        %3160 = vmatprep.mubr.bf16.mxu0 0
        %3161 = vmatmul.mubr.bf16.gmra.mxu0 %v1536
        %v3162 = vpop.f32.mrf.mxu0
        %v3163 = vadd.f32 0.0, %v3162
        %v3164 = vpop.f32.mrf.mxu0
        %v3165 = vadd.f32 0.0, %v3164
        %v3166 = vpop.f32.mrf.mxu0
        %v3167 = vadd.f32 0.0, %v3166
        %v3168 = vpop.f32.mrf.mxu0
        %v3169 = vadd.f32 0.0, %v3168
        %3170 = vmatprep.mubr.bf16.mxu0 0
        %3171 = vmatmul.mubr.bf16.gmra.mxu0 %v1539
        %v3172 = vpop.f32.mrf.mxu0
        %v3173 = vadd.f32 0.0, %v3172
        %v3174 = vpop.f32.mrf.mxu0
        %v3175 = vadd.f32 0.0, %v3174
        %v3176 = vpop.f32.mrf.mxu0
        %v3177 = vadd.f32 0.0, %v3176
        %v3178 = vpop.f32.mrf.mxu0
        %v3179 = vadd.f32 0.0, %v3178
        %3180 = vmatprep.mubr.bf16.mxu0 0
        %3181 = vmatmul.mubr.bf16.gmra.mxu0 %v1542
        %v3182 = vpop.f32.mrf.mxu0
        %v3183 = vadd.f32 0.0, %v3182
        %v3184 = vpop.f32.mrf.mxu0
        %v3185 = vadd.f32 0.0, %v3184
        %v3186 = vpop.f32.mrf.mxu0
        %v3187 = vadd.f32 0.0, %v3186
        %v3188 = vpop.f32.mrf.mxu0
        %v3189 = vadd.f32 0.0, %v3188
        %3190 = vmatprep.mubr.bf16.mxu0 0
        %3191 = vmatmul.mubr.bf16.gmra.mxu0 %v1545
        %v3192 = vpop.f32.mrf.mxu0
        %v3193 = vadd.f32 0.0, %v3192
        %v3194 = vpop.f32.mrf.mxu0
        %v3195 = vadd.f32 0.0, %v3194
        %v3196 = vpop.f32.mrf.mxu0
        %v3197 = vadd.f32 0.0, %v3196
        %v3198 = vpop.f32.mrf.mxu0
        %v3199 = vadd.f32 0.0, %v3198
        %3200 = vmatprep.mubr.bf16.mxu0 0
        %3201 = vmatmul.mubr.bf16.gmra.mxu0 %v1548
        %v3202 = vpop.f32.mrf.mxu0
        %v3203 = vadd.f32 0.0, %v3202
        %v3204 = vpop.f32.mrf.mxu0
        %v3205 = vadd.f32 0.0, %v3204
        %v3206 = vpop.f32.mrf.mxu0
        %v3207 = vadd.f32 0.0, %v3206
        %v3208 = vpop.f32.mrf.mxu0
        %v3209 = vadd.f32 0.0, %v3208
        %3210 = vmatprep.mubr.bf16.mxu0 0
        %3211 = vmatmul.mubr.bf16.gmra.mxu0 %v1551
        %v3212 = vpop.f32.mrf.mxu0
        %v3213 = vadd.f32 0.0, %v3212
        %v3214 = vpop.f32.mrf.mxu0
        %v3215 = vadd.f32 0.0, %v3214
        %v3216 = vpop.f32.mrf.mxu0
        %v3217 = vadd.f32 0.0, %v3216
        %v3218 = vpop.f32.mrf.mxu0
        %v3219 = vadd.f32 0.0, %v3218
        %3220 = vdwg.mxu0
        %v3221 = vpack.c.bf16 %v2907, %v2903
        %v3222 = vpack.c.bf16 %v2909, %v2905
        %v3223 = vpack.c.bf16 %v2917, %v2913
        %v3224 = vpack.c.bf16 %v2919, %v2915
        %v3225 = vpack.c.bf16 %v2927, %v2923
        %v3226 = vpack.c.bf16 %v2929, %v2925
        %v3227 = vpack.c.bf16 %v2937, %v2933
        %v3228 = vpack.c.bf16 %v2939, %v2935
        %v3229 = vpack.c.bf16 %v2947, %v2943
        %v3230 = vpack.c.bf16 %v2949, %v2945
        %v3231 = vpack.c.bf16 %v2957, %v2953
        %v3232 = vpack.c.bf16 %v2959, %v2955
        %v3233 = vpack.c.bf16 %v2967, %v2963
        %v3234 = vpack.c.bf16 %v2969, %v2965
        %v3235 = vpack.c.bf16 %v2977, %v2973
        %v3236 = vpack.c.bf16 %v2979, %v2975
        %v3237 = vpack.c.bf16 %v2987, %v2983
        %v3238 = vpack.c.bf16 %v2989, %v2985
        %v3239 = vpack.c.bf16 %v2997, %v2993
        %v3240 = vpack.c.bf16 %v2999, %v2995
        %v3241 = vpack.c.bf16 %v3007, %v3003
        %v3242 = vpack.c.bf16 %v3009, %v3005
        %v3243 = vpack.c.bf16 %v3017, %v3013
        %v3244 = vpack.c.bf16 %v3019, %v3015
        %v3245 = vpack.c.bf16 %v3027, %v3023
        %v3246 = vpack.c.bf16 %v3029, %v3025
        %v3247 = vpack.c.bf16 %v3037, %v3033
        %v3248 = vpack.c.bf16 %v3039, %v3035
        %v3249 = vpack.c.bf16 %v3047, %v3043
        %v3250 = vpack.c.bf16 %v3049, %v3045
        %v3251 = vpack.c.bf16 %v3057, %v3053
        %v3252 = vpack.c.bf16 %v3059, %v3055
        %v3253 = vpack.c.bf16 %v3067, %v3063
        %v3254 = vpack.c.bf16 %v3069, %v3065
        %v3255 = vpack.c.bf16 %v3077, %v3073
        %v3256 = vpack.c.bf16 %v3079, %v3075
        %v3257 = vpack.c.bf16 %v3087, %v3083
        %v3258 = vpack.c.bf16 %v3089, %v3085
        %v3259 = vpack.c.bf16 %v3097, %v3093
        %v3260 = vpack.c.bf16 %v3099, %v3095
        %v3261 = vpack.c.bf16 %v3107, %v3103
        %v3262 = vpack.c.bf16 %v3109, %v3105
        %v3263 = vpack.c.bf16 %v3117, %v3113
        %v3264 = vpack.c.bf16 %v3119, %v3115
        %v3265 = vpack.c.bf16 %v3127, %v3123
        %v3266 = vpack.c.bf16 %v3129, %v3125
        %v3267 = vpack.c.bf16 %v3137, %v3133
        %v3268 = vpack.c.bf16 %v3139, %v3135
        %v3269 = vpack.c.bf16 %v3147, %v3143
        %v3270 = vpack.c.bf16 %v3149, %v3145
        %v3271 = vpack.c.bf16 %v3157, %v3153
        %v3272 = vpack.c.bf16 %v3159, %v3155
        %v3273 = vpack.c.bf16 %v3167, %v3163
        %v3274 = vpack.c.bf16 %v3169, %v3165
        %v3275 = vpack.c.bf16 %v3177, %v3173
        %v3276 = vpack.c.bf16 %v3179, %v3175
        %v3277 = vpack.c.bf16 %v3187, %v3183
        %v3278 = vpack.c.bf16 %v3189, %v3185
        %v3279 = vpack.c.bf16 %v3197, %v3193
        %v3280 = vpack.c.bf16 %v3199, %v3195
        %v3281 = vpack.c.bf16 %v3207, %v3203
        %v3282 = vpack.c.bf16 %v3209, %v3205
        %v3283 = vpack.c.bf16 %v3217, %v3213
        %v3284 = vpack.c.bf16 %v3219, %v3215
        %v3285 = vld [vmem:[%s4 + $0x2] sm:$0x3]
        %v3288 = vunpack.c.l.s4 1966171168
        %v3289 = vunpack.c.0.s8 %v3288
        %v3290 = vlaneseq
        %v3291 = vshrl.u32 %v3290, 7
        %v3292 = vsub.s32 %v3289, %v3291
        %v3293 = vrot.slane %v3285, %v3292
        %v3294 = vcombine.high %v3293, %v3293
        %v3296 = vunpack.c.l.s4 1966171168
        %v3297 = vunpack.c.0.s8 %v3296
        %v3298 = vlaneseq
        %v3299 = vshrl.u32 %v3298, 7
        %v3300 = vsub.s32 %v3297, %v3299
        %v3301 = vrot.slane %v3293, %v3300
        %v3303 = vunpack.c.l.s4 1966171168
        %v3304 = vunpack.c.0.s8 %v3303
        %v3305 = vlaneseq
        %v3306 = vshrl.u32 %v3305, 7
        %v3307 = vsub.s32 %v3304, %v3306
        %v3308 = vrot.slane %v3294, %v3307
        %v3310 = vpack.i.b16 %v3301, %v3301
        %v3312 = vlaneseq
        %v3313 = vshrl.u32 %v3312, 7
        %v3314 = vsub.s32 0, %v3313
        %v3315 = vrot.slane %v3310, %v3314
        %v3317 = vpack.i.b16 %v3308, %v3308
        %v3319 = vlaneseq
        %v3320 = vshrl.u32 %v3319, 7
        %v3321 = vsub.s32 0, %v3320
        %v3322 = vrot.slane %v3317, %v3321
        %v3323 = vadd.bf16 %v3221, %v3315
        %v3324 = vadd.bf16 %v3222, %v3322
        %v3325 = vadd.bf16 %v3223, %v3315
        %v3326 = vadd.bf16 %v3224, %v3322
        %v3327 = vadd.bf16 %v3225, %v3315
        %v3328 = vadd.bf16 %v3226, %v3322
        %v3329 = vadd.bf16 %v3227, %v3315
        %v3330 = vadd.bf16 %v3228, %v3322
        %v3331 = vadd.bf16 %v3229, %v3315
        %v3332 = vadd.bf16 %v3230, %v3322
        %v3333 = vadd.bf16 %v3231, %v3315
        %v3334 = vadd.bf16 %v3232, %v3322
        %v3335 = vadd.bf16 %v3233, %v3315
        %v3336 = vadd.bf16 %v3234, %v3322
        %v3337 = vadd.bf16 %v3235, %v3315
        %v3338 = vadd.bf16 %v3236, %v3322
        %v3339 = vadd.bf16 %v3237, %v3315
        %v3340 = vadd.bf16 %v3238, %v3322
        %v3341 = vadd.bf16 %v3239, %v3315
        %v3342 = vadd.bf16 %v3240, %v3322
        %v3343 = vadd.bf16 %v3241, %v3315
        %v3344 = vadd.bf16 %v3242, %v3322
        %v3345 = vadd.bf16 %v3243, %v3315
        %v3346 = vadd.bf16 %v3244, %v3322
        %v3347 = vadd.bf16 %v3245, %v3315
        %v3348 = vadd.bf16 %v3246, %v3322
        %v3349 = vadd.bf16 %v3247, %v3315
        %v3350 = vadd.bf16 %v3248, %v3322
        %v3351 = vadd.bf16 %v3249, %v3315
        %v3352 = vadd.bf16 %v3250, %v3322
        %v3353 = vadd.bf16 %v3251, %v3315
        %v3354 = vadd.bf16 %v3252, %v3322
        %v3355 = vadd.bf16 %v3253, %v3315
        %v3356 = vadd.bf16 %v3254, %v3322
        %v3357 = vadd.bf16 %v3255, %v3315
        %v3358 = vadd.bf16 %v3256, %v3322
        %v3359 = vadd.bf16 %v3257, %v3315
        %v3360 = vadd.bf16 %v3258, %v3322
        %v3361 = vadd.bf16 %v3259, %v3315
        %v3362 = vadd.bf16 %v3260, %v3322
        %v3363 = vadd.bf16 %v3261, %v3315
        %v3364 = vadd.bf16 %v3262, %v3322
        %v3365 = vadd.bf16 %v3263, %v3315
        %v3366 = vadd.bf16 %v3264, %v3322
        %v3367 = vadd.bf16 %v3265, %v3315
        %v3368 = vadd.bf16 %v3266, %v3322
        %v3369 = vadd.bf16 %v3267, %v3315
        %v3370 = vadd.bf16 %v3268, %v3322
        %v3371 = vadd.bf16 %v3269, %v3315
        %v3372 = vadd.bf16 %v3270, %v3322
        %v3373 = vadd.bf16 %v3271, %v3315
        %v3374 = vadd.bf16 %v3272, %v3322
        %v3375 = vadd.bf16 %v3273, %v3315
        %v3376 = vadd.bf16 %v3274, %v3322
        %v3377 = vadd.bf16 %v3275, %v3315
        %v3378 = vadd.bf16 %v3276, %v3322
        %v3379 = vadd.bf16 %v3277, %v3315
        %v3380 = vadd.bf16 %v3278, %v3322
        %v3381 = vadd.bf16 %v3279, %v3315
        %v3382 = vadd.bf16 %v3280, %v3322
        %v3383 = vadd.bf16 %v3281, %v3315
        %v3384 = vadd.bf16 %v3282, %v3322
        %v3385 = vadd.bf16 %v3283, %v3315
        %v3386 = vadd.bf16 %v3284, %v3322
        %v3387 = vxor.u32 %v3323, 2147516416
        %v3388 = vxor.u32 %v3324, 2147516416
        %v3389 = vxor.u32 %v3325, 2147516416
        %v3390 = vxor.u32 %v3326, 2147516416
        %v3391 = vxor.u32 %v3327, 2147516416
        %v3392 = vxor.u32 %v3328, 2147516416
        %v3393 = vxor.u32 %v3329, 2147516416
        %v3394 = vxor.u32 %v3330, 2147516416
        %v3395 = vxor.u32 %v3331, 2147516416
        %v3396 = vxor.u32 %v3332, 2147516416
        %v3397 = vxor.u32 %v3333, 2147516416
        %v3398 = vxor.u32 %v3334, 2147516416
        %v3399 = vxor.u32 %v3335, 2147516416
        %v3400 = vxor.u32 %v3336, 2147516416
        %v3401 = vxor.u32 %v3337, 2147516416
        %v3402 = vxor.u32 %v3338, 2147516416
        %v3403 = vxor.u32 %v3339, 2147516416
        %v3404 = vxor.u32 %v3340, 2147516416
        %v3405 = vxor.u32 %v3341, 2147516416
        %v3406 = vxor.u32 %v3342, 2147516416
        %v3407 = vxor.u32 %v3343, 2147516416
        %v3408 = vxor.u32 %v3344, 2147516416
        %v3409 = vxor.u32 %v3345, 2147516416
        %v3410 = vxor.u32 %v3346, 2147516416
        %v3411 = vxor.u32 %v3347, 2147516416
        %v3412 = vxor.u32 %v3348, 2147516416
        %v3413 = vxor.u32 %v3349, 2147516416
        %v3414 = vxor.u32 %v3350, 2147516416
        %v3415 = vxor.u32 %v3351, 2147516416
        %v3416 = vxor.u32 %v3352, 2147516416
        %v3417 = vxor.u32 %v3353, 2147516416
        %v3418 = vxor.u32 %v3354, 2147516416
        %v3419 = vxor.u32 %v3355, 2147516416
        %v3420 = vxor.u32 %v3356, 2147516416
        %v3421 = vxor.u32 %v3357, 2147516416
        %v3422 = vxor.u32 %v3358, 2147516416
        %v3423 = vxor.u32 %v3359, 2147516416
        %v3424 = vxor.u32 %v3360, 2147516416
        %v3425 = vxor.u32 %v3361, 2147516416
        %v3426 = vxor.u32 %v3362, 2147516416
        %v3427 = vxor.u32 %v3363, 2147516416
        %v3428 = vxor.u32 %v3364, 2147516416
        %v3429 = vxor.u32 %v3365, 2147516416
        %v3430 = vxor.u32 %v3366, 2147516416
        %v3431 = vxor.u32 %v3367, 2147516416
        %v3432 = vxor.u32 %v3368, 2147516416
        %v3433 = vxor.u32 %v3369, 2147516416
        %v3434 = vxor.u32 %v3370, 2147516416
        %v3435 = vxor.u32 %v3371, 2147516416
        %v3436 = vxor.u32 %v3372, 2147516416
        %v3437 = vxor.u32 %v3373, 2147516416
        %v3438 = vxor.u32 %v3374, 2147516416
        %v3439 = vxor.u32 %v3375, 2147516416
        %v3440 = vxor.u32 %v3376, 2147516416
        %v3441 = vxor.u32 %v3377, 2147516416
        %v3442 = vxor.u32 %v3378, 2147516416
        %v3443 = vxor.u32 %v3379, 2147516416
        %v3444 = vxor.u32 %v3380, 2147516416
        %v3445 = vxor.u32 %v3381, 2147516416
        %v3446 = vxor.u32 %v3382, 2147516416
        %v3447 = vxor.u32 %v3383, 2147516416
        %v3448 = vxor.u32 %v3384, 2147516416
        %v3449 = vxor.u32 %v3385, 2147516416
        %v3450 = vxor.u32 %v3386, 2147516416
        %v3452 = vmul.bf16 %v3387, 1069105081
        %v3453 = vpow.bf16.pop %v3452
        %v3455 = vmul.bf16 %v3388, 1069105081
        %v3456 = vpow.bf16.pop %v3455
        %v3458 = vmul.bf16 %v3389, 1069105081
        %v3459 = vpow.bf16.pop %v3458
        %v3461 = vmul.bf16 %v3390, 1069105081
        %v3462 = vpow.bf16.pop %v3461
        %v3464 = vmul.bf16 %v3391, 1069105081
        %v3465 = vpow.bf16.pop %v3464
        %v3467 = vmul.bf16 %v3392, 1069105081
        %v3468 = vpow.bf16.pop %v3467
        %v3470 = vmul.bf16 %v3393, 1069105081
        %v3471 = vpow.bf16.pop %v3470
        %v3473 = vmul.bf16 %v3394, 1069105081
        %v3474 = vpow.bf16.pop %v3473
        %v3476 = vmul.bf16 %v3395, 1069105081
        %v3477 = vpow.bf16.pop %v3476
        %v3479 = vmul.bf16 %v3396, 1069105081
        %v3480 = vpow.bf16.pop %v3479
        %v3482 = vmul.bf16 %v3397, 1069105081
        %v3483 = vpow.bf16.pop %v3482
        %v3485 = vmul.bf16 %v3398, 1069105081
        %v3486 = vpow.bf16.pop %v3485
        %v3488 = vmul.bf16 %v3399, 1069105081
        %v3489 = vpow.bf16.pop %v3488
        %v3491 = vmul.bf16 %v3400, 1069105081
        %v3492 = vpow.bf16.pop %v3491
        %v3494 = vmul.bf16 %v3401, 1069105081
        %v3495 = vpow.bf16.pop %v3494
        %v3497 = vmul.bf16 %v3402, 1069105081
        %v3498 = vpow.bf16.pop %v3497
        %v3500 = vmul.bf16 %v3403, 1069105081
        %v3501 = vpow.bf16.pop %v3500
        %v3503 = vmul.bf16 %v3404, 1069105081
        %v3504 = vpow.bf16.pop %v3503
        %v3506 = vmul.bf16 %v3405, 1069105081
        %v3507 = vpow.bf16.pop %v3506
        %v3509 = vmul.bf16 %v3406, 1069105081
        %v3510 = vpow.bf16.pop %v3509
        %v3512 = vmul.bf16 %v3407, 1069105081
        %v3513 = vpow.bf16.pop %v3512
        %v3515 = vmul.bf16 %v3408, 1069105081
        %v3516 = vpow.bf16.pop %v3515
        %v3518 = vmul.bf16 %v3409, 1069105081
        %v3519 = vpow.bf16.pop %v3518
        %v3521 = vmul.bf16 %v3410, 1069105081
        %v3522 = vpow.bf16.pop %v3521
        %v3524 = vmul.bf16 %v3411, 1069105081
        %v3525 = vpow.bf16.pop %v3524
        %v3527 = vmul.bf16 %v3412, 1069105081
        %v3528 = vpow.bf16.pop %v3527
        %v3530 = vmul.bf16 %v3413, 1069105081
        %v3531 = vpow.bf16.pop %v3530
        %v3533 = vmul.bf16 %v3414, 1069105081
        %v3534 = vpow.bf16.pop %v3533
        %v3536 = vmul.bf16 %v3415, 1069105081
        %v3537 = vpow.bf16.pop %v3536
        %v3539 = vmul.bf16 %v3416, 1069105081
        %v3540 = vpow.bf16.pop %v3539
        %v3542 = vmul.bf16 %v3417, 1069105081
        %v3543 = vpow.bf16.pop %v3542
        %v3545 = vmul.bf16 %v3418, 1069105081
        %v3546 = vpow.bf16.pop %v3545
        %v3548 = vmul.bf16 %v3419, 1069105081
        %v3549 = vpow.bf16.pop %v3548
        %v3551 = vmul.bf16 %v3420, 1069105081
        %v3552 = vpow.bf16.pop %v3551
        %v3554 = vmul.bf16 %v3421, 1069105081
        %v3555 = vpow.bf16.pop %v3554
        %v3557 = vmul.bf16 %v3422, 1069105081
        %v3558 = vpow.bf16.pop %v3557
        %v3560 = vmul.bf16 %v3423, 1069105081
        %v3561 = vpow.bf16.pop %v3560
        %v3563 = vmul.bf16 %v3424, 1069105081
        %v3564 = vpow.bf16.pop %v3563
        %v3566 = vmul.bf16 %v3425, 1069105081
        %v3567 = vpow.bf16.pop %v3566
        %v3569 = vmul.bf16 %v3426, 1069105081
        %v3570 = vpow.bf16.pop %v3569
        %v3572 = vmul.bf16 %v3427, 1069105081
        %v3573 = vpow.bf16.pop %v3572
        %v3575 = vmul.bf16 %v3428, 1069105081
        %v3576 = vpow.bf16.pop %v3575
        %v3578 = vmul.bf16 %v3429, 1069105081
        %v3579 = vpow.bf16.pop %v3578
        %v3581 = vmul.bf16 %v3430, 1069105081
        %v3582 = vpow.bf16.pop %v3581
        %v3584 = vmul.bf16 %v3431, 1069105081
        %v3585 = vpow.bf16.pop %v3584
        %v3587 = vmul.bf16 %v3432, 1069105081
        %v3588 = vpow.bf16.pop %v3587
        %v3590 = vmul.bf16 %v3433, 1069105081
        %v3591 = vpow.bf16.pop %v3590
        %v3593 = vmul.bf16 %v3434, 1069105081
        %v3594 = vpow.bf16.pop %v3593
        %v3596 = vmul.bf16 %v3435, 1069105081
        %v3597 = vpow.bf16.pop %v3596
        %v3599 = vmul.bf16 %v3436, 1069105081
        %v3600 = vpow.bf16.pop %v3599
        %v3602 = vmul.bf16 %v3437, 1069105081
        %v3603 = vpow.bf16.pop %v3602
        %v3605 = vmul.bf16 %v3438, 1069105081
        %v3606 = vpow.bf16.pop %v3605
        %v3608 = vmul.bf16 %v3439, 1069105081
        %v3609 = vpow.bf16.pop %v3608
        %v3611 = vmul.bf16 %v3440, 1069105081
        %v3612 = vpow.bf16.pop %v3611
        %v3614 = vmul.bf16 %v3441, 1069105081
        %v3615 = vpow.bf16.pop %v3614
        %v3617 = vmul.bf16 %v3442, 1069105081
        %v3618 = vpow.bf16.pop %v3617
        %v3620 = vmul.bf16 %v3443, 1069105081
        %v3621 = vpow.bf16.pop %v3620
        %v3623 = vmul.bf16 %v3444, 1069105081
        %v3624 = vpow.bf16.pop %v3623
        %v3626 = vmul.bf16 %v3445, 1069105081
        %v3627 = vpow.bf16.pop %v3626
        %v3629 = vmul.bf16 %v3446, 1069105081
        %v3630 = vpow.bf16.pop %v3629
        %v3632 = vmul.bf16 %v3447, 1069105081
        %v3633 = vpow.bf16.pop %v3632
        %v3635 = vmul.bf16 %v3448, 1069105081
        %v3636 = vpow.bf16.pop %v3635
        %v3638 = vmul.bf16 %v3449, 1069105081
        %v3639 = vpow.bf16.pop %v3638
        %v3641 = vmul.bf16 %v3450, 1069105081
        %v3642 = vpow.bf16.pop %v3641
        %v3643 = vadd.bf16 %v3453, 1065369472
        %v3644 = vadd.bf16 %v3456, 1065369472
        %v3645 = vadd.bf16 %v3459, 1065369472
        %v3646 = vadd.bf16 %v3462, 1065369472
        %v3647 = vadd.bf16 %v3465, 1065369472
        %v3648 = vadd.bf16 %v3468, 1065369472
        %v3649 = vadd.bf16 %v3471, 1065369472
        %v3650 = vadd.bf16 %v3474, 1065369472
        %v3651 = vadd.bf16 %v3477, 1065369472
        %v3652 = vadd.bf16 %v3480, 1065369472
        %v3653 = vadd.bf16 %v3483, 1065369472
        %v3654 = vadd.bf16 %v3486, 1065369472
        %v3655 = vadd.bf16 %v3489, 1065369472
        %v3656 = vadd.bf16 %v3492, 1065369472
        %v3657 = vadd.bf16 %v3495, 1065369472
        %v3658 = vadd.bf16 %v3498, 1065369472
        %v3659 = vadd.bf16 %v3501, 1065369472
        %v3660 = vadd.bf16 %v3504, 1065369472
        %v3661 = vadd.bf16 %v3507, 1065369472
        %v3662 = vadd.bf16 %v3510, 1065369472
        %v3663 = vadd.bf16 %v3513, 1065369472
        %v3664 = vadd.bf16 %v3516, 1065369472
        %v3665 = vadd.bf16 %v3519, 1065369472
        %v3666 = vadd.bf16 %v3522, 1065369472
        %v3667 = vadd.bf16 %v3525, 1065369472
        %v3668 = vadd.bf16 %v3528, 1065369472
        %v3669 = vadd.bf16 %v3531, 1065369472
        %v3670 = vadd.bf16 %v3534, 1065369472
        %v3671 = vadd.bf16 %v3537, 1065369472
        %v3672 = vadd.bf16 %v3540, 1065369472
        %v3673 = vadd.bf16 %v3543, 1065369472
        %v3674 = vadd.bf16 %v3546, 1065369472
        %v3675 = vadd.bf16 %v3549, 1065369472
        %v3676 = vadd.bf16 %v3552, 1065369472
        %v3677 = vadd.bf16 %v3555, 1065369472
        %v3678 = vadd.bf16 %v3558, 1065369472
        %v3679 = vadd.bf16 %v3561, 1065369472
        %v3680 = vadd.bf16 %v3564, 1065369472
        %v3681 = vadd.bf16 %v3567, 1065369472
        %v3682 = vadd.bf16 %v3570, 1065369472
        %v3683 = vadd.bf16 %v3573, 1065369472
        %v3684 = vadd.bf16 %v3576, 1065369472
        %v3685 = vadd.bf16 %v3579, 1065369472
        %v3686 = vadd.bf16 %v3582, 1065369472
        %v3687 = vadd.bf16 %v3585, 1065369472
        %v3688 = vadd.bf16 %v3588, 1065369472
        %v3689 = vadd.bf16 %v3591, 1065369472
        %v3690 = vadd.bf16 %v3594, 1065369472
        %v3691 = vadd.bf16 %v3597, 1065369472
        %v3692 = vadd.bf16 %v3600, 1065369472
        %v3693 = vadd.bf16 %v3603, 1065369472
        %v3694 = vadd.bf16 %v3606, 1065369472
        %v3695 = vadd.bf16 %v3609, 1065369472
        %v3696 = vadd.bf16 %v3612, 1065369472
        %v3697 = vadd.bf16 %v3615, 1065369472
        %v3698 = vadd.bf16 %v3618, 1065369472
        %v3699 = vadd.bf16 %v3621, 1065369472
        %v3700 = vadd.bf16 %v3624, 1065369472
        %v3701 = vadd.bf16 %v3627, 1065369472
        %v3702 = vadd.bf16 %v3630, 1065369472
        %v3703 = vadd.bf16 %v3633, 1065369472
        %v3704 = vadd.bf16 %v3636, 1065369472
        %v3705 = vadd.bf16 %v3639, 1065369472
        %v3706 = vadd.bf16 %v3642, 1065369472
        %v3707 = vrcp.bf16.pop %v3643
        %v3708 = vmul.bf16 1065369472, %v3707
        %v3709 = vrcp.bf16.pop %v3644
        %v3710 = vmul.bf16 1065369472, %v3709
        %v3711 = vrcp.bf16.pop %v3645
        %v3712 = vmul.bf16 1065369472, %v3711
        %v3713 = vrcp.bf16.pop %v3646
        %v3714 = vmul.bf16 1065369472, %v3713
        %v3715 = vrcp.bf16.pop %v3647
        %v3716 = vmul.bf16 1065369472, %v3715
        %v3717 = vrcp.bf16.pop %v3648
        %v3718 = vmul.bf16 1065369472, %v3717
        %v3719 = vrcp.bf16.pop %v3649
        %v3720 = vmul.bf16 1065369472, %v3719
        %v3721 = vrcp.bf16.pop %v3650
        %v3722 = vmul.bf16 1065369472, %v3721
        %v3723 = vrcp.bf16.pop %v3651
        %v3724 = vmul.bf16 1065369472, %v3723
        %v3725 = vrcp.bf16.pop %v3652
        %v3726 = vmul.bf16 1065369472, %v3725
        %v3727 = vrcp.bf16.pop %v3653
        %v3728 = vmul.bf16 1065369472, %v3727
        %v3729 = vrcp.bf16.pop %v3654
        %v3730 = vmul.bf16 1065369472, %v3729
        %v3731 = vrcp.bf16.pop %v3655
        %v3732 = vmul.bf16 1065369472, %v3731
        %v3733 = vrcp.bf16.pop %v3656
        %v3734 = vmul.bf16 1065369472, %v3733
        %v3735 = vrcp.bf16.pop %v3657
        %v3736 = vmul.bf16 1065369472, %v3735
        %v3737 = vrcp.bf16.pop %v3658
        %v3738 = vmul.bf16 1065369472, %v3737
        %v3739 = vrcp.bf16.pop %v3659
        %v3740 = vmul.bf16 1065369472, %v3739
        %v3741 = vrcp.bf16.pop %v3660
        %v3742 = vmul.bf16 1065369472, %v3741
        %v3743 = vrcp.bf16.pop %v3661
        %v3744 = vmul.bf16 1065369472, %v3743
        %v3745 = vrcp.bf16.pop %v3662
        %v3746 = vmul.bf16 1065369472, %v3745
        %v3747 = vrcp.bf16.pop %v3663
        %v3748 = vmul.bf16 1065369472, %v3747
        %v3749 = vrcp.bf16.pop %v3664
        %v3750 = vmul.bf16 1065369472, %v3749
        %v3751 = vrcp.bf16.pop %v3665
        %v3752 = vmul.bf16 1065369472, %v3751
        %v3753 = vrcp.bf16.pop %v3666
        %v3754 = vmul.bf16 1065369472, %v3753
        %v3755 = vrcp.bf16.pop %v3667
        %v3756 = vmul.bf16 1065369472, %v3755
        %v3757 = vrcp.bf16.pop %v3668
        %v3758 = vmul.bf16 1065369472, %v3757
        %v3759 = vrcp.bf16.pop %v3669
        %v3760 = vmul.bf16 1065369472, %v3759
        %v3761 = vrcp.bf16.pop %v3670
        %v3762 = vmul.bf16 1065369472, %v3761
        %v3763 = vrcp.bf16.pop %v3671
        %v3764 = vmul.bf16 1065369472, %v3763
        %v3765 = vrcp.bf16.pop %v3672
        %v3766 = vmul.bf16 1065369472, %v3765
        %v3767 = vrcp.bf16.pop %v3673
        %v3768 = vmul.bf16 1065369472, %v3767
        %v3769 = vrcp.bf16.pop %v3674
        %v3770 = vmul.bf16 1065369472, %v3769
        %v3771 = vrcp.bf16.pop %v3675
        %v3772 = vmul.bf16 1065369472, %v3771
        %v3773 = vrcp.bf16.pop %v3676
        %v3774 = vmul.bf16 1065369472, %v3773
        %v3775 = vrcp.bf16.pop %v3677
        %v3776 = vmul.bf16 1065369472, %v3775
        %v3777 = vrcp.bf16.pop %v3678
        %v3778 = vmul.bf16 1065369472, %v3777
        %v3779 = vrcp.bf16.pop %v3679
        %v3780 = vmul.bf16 1065369472, %v3779
        %v3781 = vrcp.bf16.pop %v3680
        %v3782 = vmul.bf16 1065369472, %v3781
        %v3783 = vrcp.bf16.pop %v3681
        %v3784 = vmul.bf16 1065369472, %v3783
        %v3785 = vrcp.bf16.pop %v3682
        %v3786 = vmul.bf16 1065369472, %v3785
        %v3787 = vrcp.bf16.pop %v3683
        %v3788 = vmul.bf16 1065369472, %v3787
        %v3789 = vrcp.bf16.pop %v3684
        %v3790 = vmul.bf16 1065369472, %v3789
        %v3791 = vrcp.bf16.pop %v3685
        %v3792 = vmul.bf16 1065369472, %v3791
        %v3793 = vrcp.bf16.pop %v3686
        %v3794 = vmul.bf16 1065369472, %v3793
        %v3795 = vrcp.bf16.pop %v3687
        %v3796 = vmul.bf16 1065369472, %v3795
        %v3797 = vrcp.bf16.pop %v3688
        %v3798 = vmul.bf16 1065369472, %v3797
        %v3799 = vrcp.bf16.pop %v3689
        %v3800 = vmul.bf16 1065369472, %v3799
        %v3801 = vrcp.bf16.pop %v3690
        %v3802 = vmul.bf16 1065369472, %v3801
        %v3803 = vrcp.bf16.pop %v3691
        %v3804 = vmul.bf16 1065369472, %v3803
        %v3805 = vrcp.bf16.pop %v3692
        %v3806 = vmul.bf16 1065369472, %v3805
        %v3807 = vrcp.bf16.pop %v3693
        %v3808 = vmul.bf16 1065369472, %v3807
        %v3809 = vrcp.bf16.pop %v3694
        %v3810 = vmul.bf16 1065369472, %v3809
        %v3811 = vrcp.bf16.pop %v3695
        %v3812 = vmul.bf16 1065369472, %v3811
        %v3813 = vrcp.bf16.pop %v3696
        %v3814 = vmul.bf16 1065369472, %v3813
        %v3815 = vrcp.bf16.pop %v3697
        %v3816 = vmul.bf16 1065369472, %v3815
        %v3817 = vrcp.bf16.pop %v3698
        %v3818 = vmul.bf16 1065369472, %v3817
        %v3819 = vrcp.bf16.pop %v3699
        %v3820 = vmul.bf16 1065369472, %v3819
        %v3821 = vrcp.bf16.pop %v3700
        %v3822 = vmul.bf16 1065369472, %v3821
        %v3823 = vrcp.bf16.pop %v3701
        %v3824 = vmul.bf16 1065369472, %v3823
        %v3825 = vrcp.bf16.pop %v3702
        %v3826 = vmul.bf16 1065369472, %v3825
        %v3827 = vrcp.bf16.pop %v3703
        %v3828 = vmul.bf16 1065369472, %v3827
        %v3829 = vrcp.bf16.pop %v3704
        %v3830 = vmul.bf16 1065369472, %v3829
        %v3831 = vrcp.bf16.pop %v3705
        %v3832 = vmul.bf16 1065369472, %v3831
        %v3833 = vrcp.bf16.pop %v3706
        %v3834 = vmul.bf16 1065369472, %v3833
        %v3835 = vmul.bf16 %v3323, %v3708
        %v3836 = vmul.bf16 %v3324, %v3710
        %v3837 = vmul.bf16 %v3325, %v3712
        %v3838 = vmul.bf16 %v3326, %v3714
        %v3839 = vmul.bf16 %v3327, %v3716
        %v3840 = vmul.bf16 %v3328, %v3718
        %v3841 = vmul.bf16 %v3329, %v3720
        %v3842 = vmul.bf16 %v3330, %v3722
        %v3843 = vmul.bf16 %v3331, %v3724
        %v3844 = vmul.bf16 %v3332, %v3726
        %v3845 = vmul.bf16 %v3333, %v3728
        %v3846 = vmul.bf16 %v3334, %v3730
        %v3847 = vmul.bf16 %v3335, %v3732
        %v3848 = vmul.bf16 %v3336, %v3734
        %v3849 = vmul.bf16 %v3337, %v3736
        %v3850 = vmul.bf16 %v3338, %v3738
        %v3851 = vmul.bf16 %v3339, %v3740
        %v3852 = vmul.bf16 %v3340, %v3742
        %v3853 = vmul.bf16 %v3341, %v3744
        %v3854 = vmul.bf16 %v3342, %v3746
        %v3855 = vmul.bf16 %v3343, %v3748
        %v3856 = vmul.bf16 %v3344, %v3750
        %v3857 = vmul.bf16 %v3345, %v3752
        %v3858 = vmul.bf16 %v3346, %v3754
        %v3859 = vmul.bf16 %v3347, %v3756
        %v3860 = vmul.bf16 %v3348, %v3758
        %v3861 = vmul.bf16 %v3349, %v3760
        %v3862 = vmul.bf16 %v3350, %v3762
        %v3863 = vmul.bf16 %v3351, %v3764
        %v3864 = vmul.bf16 %v3352, %v3766
        %v3865 = vmul.bf16 %v3353, %v3768
        %v3866 = vmul.bf16 %v3354, %v3770
        %v3867 = vmul.bf16 %v3355, %v3772
        %v3868 = vmul.bf16 %v3356, %v3774
        %v3869 = vmul.bf16 %v3357, %v3776
        %v3870 = vmul.bf16 %v3358, %v3778
        %v3871 = vmul.bf16 %v3359, %v3780
        %v3872 = vmul.bf16 %v3360, %v3782
        %v3873 = vmul.bf16 %v3361, %v3784
        %v3874 = vmul.bf16 %v3362, %v3786
        %v3875 = vmul.bf16 %v3363, %v3788
        %v3876 = vmul.bf16 %v3364, %v3790
        %v3877 = vmul.bf16 %v3365, %v3792
        %v3878 = vmul.bf16 %v3366, %v3794
        %v3879 = vmul.bf16 %v3367, %v3796
        %v3880 = vmul.bf16 %v3368, %v3798
        %v3881 = vmul.bf16 %v3369, %v3800
        %v3882 = vmul.bf16 %v3370, %v3802
        %v3883 = vmul.bf16 %v3371, %v3804
        %v3884 = vmul.bf16 %v3372, %v3806
        %v3885 = vmul.bf16 %v3373, %v3808
        %v3886 = vmul.bf16 %v3374, %v3810
        %v3887 = vmul.bf16 %v3375, %v3812
        %v3888 = vmul.bf16 %v3376, %v3814
        %v3889 = vmul.bf16 %v3377, %v3816
        %v3890 = vmul.bf16 %v3378, %v3818
        %v3891 = vmul.bf16 %v3379, %v3820
        %v3892 = vmul.bf16 %v3380, %v3822
        %v3893 = vmul.bf16 %v3381, %v3824
        %v3894 = vmul.bf16 %v3382, %v3826
        %v3895 = vmul.bf16 %v3383, %v3828
        %v3896 = vmul.bf16 %v3384, %v3830
        %v3897 = vmul.bf16 %v3385, %v3832
        %v3898 = vmul.bf16 %v3386, %v3834
        %v3899 = vunpack.c.l.bf16 %v3835
        %v3900 = vunpack.c.l.bf16 %v3836
        %v3901 = vunpack.c.h.bf16 %v3835
        %v3902 = vunpack.c.h.bf16 %v3836
        %v3903 = vunpack.c.l.bf16 %v3837
        %v3904 = vunpack.c.l.bf16 %v3838
        %v3905 = vunpack.c.h.bf16 %v3837
        %v3906 = vunpack.c.h.bf16 %v3838
        %v3907 = vunpack.c.l.bf16 %v3839
        %v3908 = vunpack.c.l.bf16 %v3840
        %v3909 = vunpack.c.h.bf16 %v3839
        %v3910 = vunpack.c.h.bf16 %v3840
        %v3911 = vunpack.c.l.bf16 %v3841
        %v3912 = vunpack.c.l.bf16 %v3842
        %v3913 = vunpack.c.h.bf16 %v3841
        %v3914 = vunpack.c.h.bf16 %v3842
        %v3915 = vunpack.c.l.bf16 %v3843
        %v3916 = vunpack.c.l.bf16 %v3844
        %v3917 = vunpack.c.h.bf16 %v3843
        %v3918 = vunpack.c.h.bf16 %v3844
        %v3919 = vunpack.c.l.bf16 %v3845
        %v3920 = vunpack.c.l.bf16 %v3846
        %v3921 = vunpack.c.h.bf16 %v3845
        %v3922 = vunpack.c.h.bf16 %v3846
        %v3923 = vunpack.c.l.bf16 %v3847
        %v3924 = vunpack.c.l.bf16 %v3848
        %v3925 = vunpack.c.h.bf16 %v3847
        %v3926 = vunpack.c.h.bf16 %v3848
        %v3927 = vunpack.c.l.bf16 %v3849
        %v3928 = vunpack.c.l.bf16 %v3850
        %v3929 = vunpack.c.h.bf16 %v3849
        %v3930 = vunpack.c.h.bf16 %v3850
        %v3931 = vunpack.c.l.bf16 %v3851
        %v3932 = vunpack.c.l.bf16 %v3852
        %v3933 = vunpack.c.h.bf16 %v3851
        %v3934 = vunpack.c.h.bf16 %v3852
        %v3935 = vunpack.c.l.bf16 %v3853
        %v3936 = vunpack.c.l.bf16 %v3854
        %v3937 = vunpack.c.h.bf16 %v3853
        %v3938 = vunpack.c.h.bf16 %v3854
        %v3939 = vunpack.c.l.bf16 %v3855
        %v3940 = vunpack.c.l.bf16 %v3856
        %v3941 = vunpack.c.h.bf16 %v3855
        %v3942 = vunpack.c.h.bf16 %v3856
        %v3943 = vunpack.c.l.bf16 %v3857
        %v3944 = vunpack.c.l.bf16 %v3858
        %v3945 = vunpack.c.h.bf16 %v3857
        %v3946 = vunpack.c.h.bf16 %v3858
        %v3947 = vunpack.c.l.bf16 %v3859
        %v3948 = vunpack.c.l.bf16 %v3860
        %v3949 = vunpack.c.h.bf16 %v3859
        %v3950 = vunpack.c.h.bf16 %v3860
        %v3951 = vunpack.c.l.bf16 %v3861
        %v3952 = vunpack.c.l.bf16 %v3862
        %v3953 = vunpack.c.h.bf16 %v3861
        %v3954 = vunpack.c.h.bf16 %v3862
        %v3955 = vunpack.c.l.bf16 %v3863
        %v3956 = vunpack.c.l.bf16 %v3864
        %v3957 = vunpack.c.h.bf16 %v3863
        %v3958 = vunpack.c.h.bf16 %v3864
        %v3959 = vunpack.c.l.bf16 %v3865
        %v3960 = vunpack.c.l.bf16 %v3866
        %v3961 = vunpack.c.h.bf16 %v3865
        %v3962 = vunpack.c.h.bf16 %v3866
        %v3963 = vunpack.c.l.bf16 %v3867
        %v3964 = vunpack.c.l.bf16 %v3868
        %v3965 = vunpack.c.h.bf16 %v3867
        %v3966 = vunpack.c.h.bf16 %v3868
        %v3967 = vunpack.c.l.bf16 %v3869
        %v3968 = vunpack.c.l.bf16 %v3870
        %v3969 = vunpack.c.h.bf16 %v3869
        %v3970 = vunpack.c.h.bf16 %v3870
        %v3971 = vunpack.c.l.bf16 %v3871
        %v3972 = vunpack.c.l.bf16 %v3872
        %v3973 = vunpack.c.h.bf16 %v3871
        %v3974 = vunpack.c.h.bf16 %v3872
        %v3975 = vunpack.c.l.bf16 %v3873
        %v3976 = vunpack.c.l.bf16 %v3874
        %v3977 = vunpack.c.h.bf16 %v3873
        %v3978 = vunpack.c.h.bf16 %v3874
        %v3979 = vunpack.c.l.bf16 %v3875
        %v3980 = vunpack.c.l.bf16 %v3876
        %v3981 = vunpack.c.h.bf16 %v3875
        %v3982 = vunpack.c.h.bf16 %v3876
        %v3983 = vunpack.c.l.bf16 %v3877
        %v3984 = vunpack.c.l.bf16 %v3878
        %v3985 = vunpack.c.h.bf16 %v3877
        %v3986 = vunpack.c.h.bf16 %v3878
        %v3987 = vunpack.c.l.bf16 %v3879
        %v3988 = vunpack.c.l.bf16 %v3880
        %v3989 = vunpack.c.h.bf16 %v3879
        %v3990 = vunpack.c.h.bf16 %v3880
        %v3991 = vunpack.c.l.bf16 %v3881
        %v3992 = vunpack.c.l.bf16 %v3882
        %v3993 = vunpack.c.h.bf16 %v3881
        %v3994 = vunpack.c.h.bf16 %v3882
        %v3995 = vunpack.c.l.bf16 %v3883
        %v3996 = vunpack.c.l.bf16 %v3884
        %v3997 = vunpack.c.h.bf16 %v3883
        %v3998 = vunpack.c.h.bf16 %v3884
        %v3999 = vunpack.c.l.bf16 %v3885
        %v4000 = vunpack.c.l.bf16 %v3886
        %v4001 = vunpack.c.h.bf16 %v3885
        %v4002 = vunpack.c.h.bf16 %v3886
        %v4003 = vunpack.c.l.bf16 %v3887
        %v4004 = vunpack.c.l.bf16 %v3888
        %v4005 = vunpack.c.h.bf16 %v3887
        %v4006 = vunpack.c.h.bf16 %v3888
        %v4007 = vunpack.c.l.bf16 %v3889
        %v4008 = vunpack.c.l.bf16 %v3890
        %v4009 = vunpack.c.h.bf16 %v3889
        %v4010 = vunpack.c.h.bf16 %v3890
        %v4011 = vunpack.c.l.bf16 %v3891
        %v4012 = vunpack.c.l.bf16 %v3892
        %v4013 = vunpack.c.h.bf16 %v3891
        %v4014 = vunpack.c.h.bf16 %v3892
        %v4015 = vunpack.c.l.bf16 %v3893
        %v4016 = vunpack.c.l.bf16 %v3894
        %v4017 = vunpack.c.h.bf16 %v3893
        %v4018 = vunpack.c.h.bf16 %v3894
        %v4019 = vunpack.c.l.bf16 %v3895
        %v4020 = vunpack.c.l.bf16 %v3896
        %v4021 = vunpack.c.h.bf16 %v3895
        %v4022 = vunpack.c.h.bf16 %v3896
        %v4023 = vunpack.c.l.bf16 %v3897
        %v4024 = vunpack.c.l.bf16 %v3898
        %v4025 = vunpack.c.h.bf16 %v3897
        %v4026 = vunpack.c.h.bf16 %v3898
        %v4027 = vld [vmem:[#allocation2 + $0x10] sm:$0xff]
        %v4028 = vld [vmem:[#allocation2 + $0x18] sm:$0xff]
        %v4029 = vadd.f32 %v3899, %v3901
        %v4030 = vadd.f32 %v4029, %v3903
        %v4031 = vadd.f32 %v4030, %v3905
        %v4032 = vadd.f32 %v4031, %v3907
        %v4033 = vadd.f32 %v4032, %v3909
        %v4034 = vadd.f32 %v4033, %v3911
        %v4035 = vadd.f32 %v4034, %v3913
        %v4036 = vadd.f32 %v4035, %v3915
        %v4037 = vadd.f32 %v4036, %v3917
        %v4038 = vadd.f32 %v4037, %v3919
        %v4039 = vadd.f32 %v4038, %v3921
        %v4040 = vadd.f32 %v4039, %v3923
        %v4041 = vadd.f32 %v4040, %v3925
        %v4042 = vadd.f32 %v4041, %v3927
        %v4043 = vadd.f32 %v4042, %v3929
        %v4044 = vadd.f32 %v4043, %v3931
        %v4045 = vadd.f32 %v4044, %v3933
        %v4046 = vadd.f32 %v4045, %v3935
        %v4047 = vadd.f32 %v4046, %v3937
        %v4048 = vadd.f32 %v4047, %v3939
        %v4049 = vadd.f32 %v4048, %v3941
        %v4050 = vadd.f32 %v4049, %v3943
        %v4051 = vadd.f32 %v4050, %v3945
        %v4052 = vadd.f32 %v4051, %v3947
        %v4053 = vadd.f32 %v4052, %v3949
        %v4054 = vadd.f32 %v4053, %v3951
        %v4055 = vadd.f32 %v4054, %v3953
        %v4056 = vadd.f32 %v4055, %v3955
        %v4057 = vadd.f32 %v4056, %v3957
        %v4058 = vadd.f32 %v4057, %v3959
        %v4059 = vadd.f32 %v4058, %v3961
        %v4060 = vadd.f32 %v4059, %v3963
        %v4061 = vadd.f32 %v4060, %v3965
        %v4062 = vadd.f32 %v4061, %v3967
        %v4063 = vadd.f32 %v4062, %v3969
        %v4064 = vadd.f32 %v4063, %v3971
        %v4065 = vadd.f32 %v4064, %v3973
        %v4066 = vadd.f32 %v4065, %v3975
        %v4067 = vadd.f32 %v4066, %v3977
        %v4068 = vadd.f32 %v4067, %v3979
        %v4069 = vadd.f32 %v4068, %v3981
        %v4070 = vadd.f32 %v4069, %v3983
        %v4071 = vadd.f32 %v4070, %v3985
        %v4072 = vadd.f32 %v4071, %v3987
        %v4073 = vadd.f32 %v4072, %v3989
        %v4074 = vadd.f32 %v4073, %v3991
        %v4075 = vadd.f32 %v4074, %v3993
        %v4076 = vadd.f32 %v4075, %v3995
        %v4077 = vadd.f32 %v4076, %v3997
        %v4078 = vadd.f32 %v4077, %v3999
        %v4079 = vadd.f32 %v4078, %v4001
        %v4080 = vadd.f32 %v4079, %v4003
        %v4081 = vadd.f32 %v4080, %v4005
        %v4082 = vadd.f32 %v4081, %v4007
        %v4083 = vadd.f32 %v4082, %v4009
        %v4084 = vadd.f32 %v4083, %v4011
        %v4085 = vadd.f32 %v4084, %v4013
        %v4086 = vadd.f32 %v4085, %v4015
        %v4087 = vadd.f32 %v4086, %v4017
        %v4088 = vadd.f32 %v4087, %v4019
        %v4089 = vadd.f32 %v4088, %v4021
        %v4090 = vadd.f32 %v4089, %v4023
        %v4091 = vadd.f32 %v4090, %v4025
        %v4092 = vadd.f32 %v3900, %v3902
        %v4093 = vadd.f32 %v4092, %v3904
        %v4094 = vadd.f32 %v4093, %v3906
        %v4095 = vadd.f32 %v4094, %v3908
        %v4096 = vadd.f32 %v4095, %v3910
        %v4097 = vadd.f32 %v4096, %v3912
        %v4098 = vadd.f32 %v4097, %v3914
        %v4099 = vadd.f32 %v4098, %v3916
        %v4100 = vadd.f32 %v4099, %v3918
        %v4101 = vadd.f32 %v4100, %v3920
        %v4102 = vadd.f32 %v4101, %v3922
        %v4103 = vadd.f32 %v4102, %v3924
        %v4104 = vadd.f32 %v4103, %v3926
        %v4105 = vadd.f32 %v4104, %v3928
        %v4106 = vadd.f32 %v4105, %v3930
        %v4107 = vadd.f32 %v4106, %v3932
        %v4108 = vadd.f32 %v4107, %v3934
        %v4109 = vadd.f32 %v4108, %v3936
        %v4110 = vadd.f32 %v4109, %v3938
        %v4111 = vadd.f32 %v4110, %v3940
        %v4112 = vadd.f32 %v4111, %v3942
        %v4113 = vadd.f32 %v4112, %v3944
        %v4114 = vadd.f32 %v4113, %v3946
        %v4115 = vadd.f32 %v4114, %v3948
        %v4116 = vadd.f32 %v4115, %v3950
        %v4117 = vadd.f32 %v4116, %v3952
        %v4118 = vadd.f32 %v4117, %v3954
        %v4119 = vadd.f32 %v4118, %v3956
        %v4120 = vadd.f32 %v4119, %v3958
        %v4121 = vadd.f32 %v4120, %v3960
        %v4122 = vadd.f32 %v4121, %v3962
        %v4123 = vadd.f32 %v4122, %v3964
        %v4124 = vadd.f32 %v4123, %v3966
        %v4125 = vadd.f32 %v4124, %v3968
        %v4126 = vadd.f32 %v4125, %v3970
        %v4127 = vadd.f32 %v4126, %v3972
        %v4128 = vadd.f32 %v4127, %v3974
        %v4129 = vadd.f32 %v4128, %v3976
        %v4130 = vadd.f32 %v4129, %v3978
        %v4131 = vadd.f32 %v4130, %v3980
        %v4132 = vadd.f32 %v4131, %v3982
        %v4133 = vadd.f32 %v4132, %v3984
        %v4134 = vadd.f32 %v4133, %v3986
        %v4135 = vadd.f32 %v4134, %v3988
        %v4136 = vadd.f32 %v4135, %v3990
        %v4137 = vadd.f32 %v4136, %v3992
        %v4138 = vadd.f32 %v4137, %v3994
        %v4139 = vadd.f32 %v4138, %v3996
        %v4140 = vadd.f32 %v4139, %v3998
        %v4141 = vadd.f32 %v4140, %v4000
        %v4142 = vadd.f32 %v4141, %v4002
        %v4143 = vadd.f32 %v4142, %v4004
        %v4144 = vadd.f32 %v4143, %v4006
        %v4145 = vadd.f32 %v4144, %v4008
        %v4146 = vadd.f32 %v4145, %v4010
        %v4147 = vadd.f32 %v4146, %v4012
        %v4148 = vadd.f32 %v4147, %v4014
        %v4149 = vadd.f32 %v4148, %v4016
        %v4150 = vadd.f32 %v4149, %v4018
        %v4151 = vadd.f32 %v4150, %v4020
        %v4152 = vadd.f32 %v4151, %v4022
        %v4153 = vadd.f32 %v4152, %v4024
        %v4154 = vadd.f32 %v4153, %v4026
        %v4155 = vadd.f32 %v4027, %v4091
        %v4156 = vadd.f32 %v4028, %v4154
        %4157 = vst [vmem:[#allocation2 + $0x10] sm:$0xff] %v4155
        %4158 = vst [vmem:[#allocation2 + $0x18] sm:$0xff] %v4156
        %v4159 = vld [vmem:[%s3 + $0x10] sm:$0xff]
        %v4160 = vld [vmem:[%s3 + $0x38] sm:$0xff]
        %v4161 = vld [vmem:[%s3 + $0x60] sm:$0xff]
        %v4162 = vld [vmem:[%s3 + $0x88] sm:$0xff]
        %v4167 = vunpack.c.l.b16 %v4159
        %v4168 = vunpack.c.h.b16 %v4159
        %v4169 = vunpack.c.l.b16 %v4160
        %v4170 = vunpack.c.h.b16 %v4160
        %v4171 = vunpack.c.l.b16 %v4161
        %v4172 = vunpack.c.h.b16 %v4161
        %v4173 = vunpack.c.l.b16 %v4162
        %v4174 = vunpack.c.h.b16 %v4162
        %v4175 = vpack.c.b16 %v4169, %v4167
        %v4176 = vpack.c.b16 %v4170, %v4168
        %v4177 = vpack.c.b16 %v4173, %v4171
        %v4178 = vpack.c.b16 %v4174, %v4172
        %4183 = vmatprep.subr.bf16.mxu0 0
        %4184 = vmatpush1.bf16.msra.mxu0 0
        %4185 = vmatprep.subr.bf16.mxu0 0
        %4186 = vmatpush1.bf16.msra.mxu0 0
        %4187 = vmatprep.subr.bf16.mxu0 0
        %4188 = vmatpush1.bf16.msra.mxu0 0
        %4189 = vmatprep.subr.bf16.mxu0 0
        %4190 = vmatpush1.bf16.msra.mxu0 0
        %4191 = vmatprep.subr.bf16.mxu0 0
        %4192 = vmatpush1.bf16.msra.mxu0 0
        %4193 = vmatprep.subr.bf16.mxu0 0
        %4194 = vmatpush1.bf16.msra.mxu0 0
        %4195 = vmatprep.subr.bf16.mxu0 %v4178
        %4196 = vmatpush1.bf16.msra.mxu0 %v4177
        %4197 = vmatprep.subr.bf16.mxu0 %v4176
        %4198 = vmatpush1.bf16.msra.mxu0 %v4175
        %4199 = vmatprep.subr.bf16.mxu0 0
        %4200 = vmatpush2.bf16.msra.mxu0 0
        %4201 = vmatprep.subr.bf16.mxu0 0
        %4202 = vmatpush2.bf16.msra.mxu0 0
        %4203 = vmatprep.subr.bf16.mxu0 0
        %4204 = vmatpush2.bf16.msra.mxu0 0
        %4205 = vmatprep.subr.bf16.mxu0 0
        %4206 = vmatpush2.bf16.msra.mxu0 0
        %4207 = vmatprep.subr.bf16.mxu0 0
        %4208 = vmatpush2.bf16.msra.mxu0 0
        %4209 = vmatprep.subr.bf16.mxu0 0
        %4210 = vmatpush2.bf16.msra.mxu0 0
        %4211 = vmatprep.subr.bf16.mxu0 0
        %4212 = vmatpush2.bf16.msra.mxu0 0
        %4213 = vmatprep.subr.bf16.mxu0 0
        %4214 = vmatpush2.bf16.msra.mxu0 0
        %4215 = vmatprep.mubr.bf16.mxu0 0
        %4216 = vmatmul.mubr.bf16.gmra.mxu0 %v1458
        %v4217 = vpop.f32.mrf.mxu0
        %v4218 = vadd.f32 0.0, %v4217
        %v4219 = vpop.f32.mrf.mxu0
        %v4220 = vadd.f32 0.0, %v4219
        %v4221 = vpop.f32.mrf.mxu0
        %v4222 = vadd.f32 0.0, %v4221
        %v4223 = vpop.f32.mrf.mxu0
        %v4224 = vadd.f32 0.0, %v4223
        %4225 = vmatprep.mubr.bf16.mxu0 0
        %4226 = vmatmul.mubr.bf16.gmra.mxu0 %v1461
        %v4227 = vpop.f32.mrf.mxu0
        %v4228 = vadd.f32 0.0, %v4227
        %v4229 = vpop.f32.mrf.mxu0
        %v4230 = vadd.f32 0.0, %v4229
        %v4231 = vpop.f32.mrf.mxu0
        %v4232 = vadd.f32 0.0, %v4231
        %v4233 = vpop.f32.mrf.mxu0
        %v4234 = vadd.f32 0.0, %v4233
        %4235 = vmatprep.mubr.bf16.mxu0 0
        %4236 = vmatmul.mubr.bf16.gmra.mxu0 %v1464
        %v4237 = vpop.f32.mrf.mxu0
        %v4238 = vadd.f32 0.0, %v4237
        %v4239 = vpop.f32.mrf.mxu0
        %v4240 = vadd.f32 0.0, %v4239
        %v4241 = vpop.f32.mrf.mxu0
        %v4242 = vadd.f32 0.0, %v4241
        %v4243 = vpop.f32.mrf.mxu0
        %v4244 = vadd.f32 0.0, %v4243
        %4245 = vmatprep.mubr.bf16.mxu0 0
        %4246 = vmatmul.mubr.bf16.gmra.mxu0 %v1467
        %v4247 = vpop.f32.mrf.mxu0
        %v4248 = vadd.f32 0.0, %v4247
        %v4249 = vpop.f32.mrf.mxu0
        %v4250 = vadd.f32 0.0, %v4249
        %v4251 = vpop.f32.mrf.mxu0
        %v4252 = vadd.f32 0.0, %v4251
        %v4253 = vpop.f32.mrf.mxu0
        %v4254 = vadd.f32 0.0, %v4253
        %4255 = vmatprep.mubr.bf16.mxu0 0
        %4256 = vmatmul.mubr.bf16.gmra.mxu0 %v1470
        %v4257 = vpop.f32.mrf.mxu0
        %v4258 = vadd.f32 0.0, %v4257
        %v4259 = vpop.f32.mrf.mxu0
        %v4260 = vadd.f32 0.0, %v4259
        %v4261 = vpop.f32.mrf.mxu0
        %v4262 = vadd.f32 0.0, %v4261
        %v4263 = vpop.f32.mrf.mxu0
        %v4264 = vadd.f32 0.0, %v4263
        %4265 = vmatprep.mubr.bf16.mxu0 0
        %4266 = vmatmul.mubr.bf16.gmra.mxu0 %v1473
        %v4267 = vpop.f32.mrf.mxu0
        %v4268 = vadd.f32 0.0, %v4267
        %v4269 = vpop.f32.mrf.mxu0
        %v4270 = vadd.f32 0.0, %v4269
        %v4271 = vpop.f32.mrf.mxu0
        %v4272 = vadd.f32 0.0, %v4271
        %v4273 = vpop.f32.mrf.mxu0
        %v4274 = vadd.f32 0.0, %v4273
        %4275 = vmatprep.mubr.bf16.mxu0 0
        %4276 = vmatmul.mubr.bf16.gmra.mxu0 %v1476
        %v4277 = vpop.f32.mrf.mxu0
        %v4278 = vadd.f32 0.0, %v4277
        %v4279 = vpop.f32.mrf.mxu0
        %v4280 = vadd.f32 0.0, %v4279
        %v4281 = vpop.f32.mrf.mxu0
        %v4282 = vadd.f32 0.0, %v4281
        %v4283 = vpop.f32.mrf.mxu0
        %v4284 = vadd.f32 0.0, %v4283
        %4285 = vmatprep.mubr.bf16.mxu0 0
        %4286 = vmatmul.mubr.bf16.gmra.mxu0 %v1479
        %v4287 = vpop.f32.mrf.mxu0
        %v4288 = vadd.f32 0.0, %v4287
        %v4289 = vpop.f32.mrf.mxu0
        %v4290 = vadd.f32 0.0, %v4289
        %v4291 = vpop.f32.mrf.mxu0
        %v4292 = vadd.f32 0.0, %v4291
        %v4293 = vpop.f32.mrf.mxu0
        %v4294 = vadd.f32 0.0, %v4293
        %4295 = vmatprep.mubr.bf16.mxu0 0
        %4296 = vmatmul.mubr.bf16.gmra.mxu0 %v1482
        %v4297 = vpop.f32.mrf.mxu0
        %v4298 = vadd.f32 0.0, %v4297
        %v4299 = vpop.f32.mrf.mxu0
        %v4300 = vadd.f32 0.0, %v4299
        %v4301 = vpop.f32.mrf.mxu0
        %v4302 = vadd.f32 0.0, %v4301
        %v4303 = vpop.f32.mrf.mxu0
        %v4304 = vadd.f32 0.0, %v4303
        %4305 = vmatprep.mubr.bf16.mxu0 0
        %4306 = vmatmul.mubr.bf16.gmra.mxu0 %v1485
        %v4307 = vpop.f32.mrf.mxu0
        %v4308 = vadd.f32 0.0, %v4307
        %v4309 = vpop.f32.mrf.mxu0
        %v4310 = vadd.f32 0.0, %v4309
        %v4311 = vpop.f32.mrf.mxu0
        %v4312 = vadd.f32 0.0, %v4311
        %v4313 = vpop.f32.mrf.mxu0
        %v4314 = vadd.f32 0.0, %v4313
        %4315 = vmatprep.mubr.bf16.mxu0 0
        %4316 = vmatmul.mubr.bf16.gmra.mxu0 %v1488
        %v4317 = vpop.f32.mrf.mxu0
        %v4318 = vadd.f32 0.0, %v4317
        %v4319 = vpop.f32.mrf.mxu0
        %v4320 = vadd.f32 0.0, %v4319
        %v4321 = vpop.f32.mrf.mxu0
        %v4322 = vadd.f32 0.0, %v4321
        %v4323 = vpop.f32.mrf.mxu0
        %v4324 = vadd.f32 0.0, %v4323
        %4325 = vmatprep.mubr.bf16.mxu0 0
        %4326 = vmatmul.mubr.bf16.gmra.mxu0 %v1491
        %v4327 = vpop.f32.mrf.mxu0
        %v4328 = vadd.f32 0.0, %v4327
        %v4329 = vpop.f32.mrf.mxu0
        %v4330 = vadd.f32 0.0, %v4329
        %v4331 = vpop.f32.mrf.mxu0
        %v4332 = vadd.f32 0.0, %v4331
        %v4333 = vpop.f32.mrf.mxu0
        %v4334 = vadd.f32 0.0, %v4333
        %4335 = vmatprep.mubr.bf16.mxu0 0
        %4336 = vmatmul.mubr.bf16.gmra.mxu0 %v1494
        %v4337 = vpop.f32.mrf.mxu0
        %v4338 = vadd.f32 0.0, %v4337
        %v4339 = vpop.f32.mrf.mxu0
        %v4340 = vadd.f32 0.0, %v4339
        %v4341 = vpop.f32.mrf.mxu0
        %v4342 = vadd.f32 0.0, %v4341
        %v4343 = vpop.f32.mrf.mxu0
        %v4344 = vadd.f32 0.0, %v4343
        %4345 = vmatprep.mubr.bf16.mxu0 0
        %4346 = vmatmul.mubr.bf16.gmra.mxu0 %v1497
        %v4347 = vpop.f32.mrf.mxu0
        %v4348 = vadd.f32 0.0, %v4347
        %v4349 = vpop.f32.mrf.mxu0
        %v4350 = vadd.f32 0.0, %v4349
        %v4351 = vpop.f32.mrf.mxu0
        %v4352 = vadd.f32 0.0, %v4351
        %v4353 = vpop.f32.mrf.mxu0
        %v4354 = vadd.f32 0.0, %v4353
        %4355 = vmatprep.mubr.bf16.mxu0 0
        %4356 = vmatmul.mubr.bf16.gmra.mxu0 %v1500
        %v4357 = vpop.f32.mrf.mxu0
        %v4358 = vadd.f32 0.0, %v4357
        %v4359 = vpop.f32.mrf.mxu0
        %v4360 = vadd.f32 0.0, %v4359
        %v4361 = vpop.f32.mrf.mxu0
        %v4362 = vadd.f32 0.0, %v4361
        %v4363 = vpop.f32.mrf.mxu0
        %v4364 = vadd.f32 0.0, %v4363
        %4365 = vmatprep.mubr.bf16.mxu0 0
        %4366 = vmatmul.mubr.bf16.gmra.mxu0 %v1503
        %v4367 = vpop.f32.mrf.mxu0
        %v4368 = vadd.f32 0.0, %v4367
        %v4369 = vpop.f32.mrf.mxu0
        %v4370 = vadd.f32 0.0, %v4369
        %v4371 = vpop.f32.mrf.mxu0
        %v4372 = vadd.f32 0.0, %v4371
        %v4373 = vpop.f32.mrf.mxu0
        %v4374 = vadd.f32 0.0, %v4373
        %4375 = vmatprep.mubr.bf16.mxu0 0
        %4376 = vmatmul.mubr.bf16.gmra.mxu0 %v1506
        %v4377 = vpop.f32.mrf.mxu0
        %v4378 = vadd.f32 0.0, %v4377
        %v4379 = vpop.f32.mrf.mxu0
        %v4380 = vadd.f32 0.0, %v4379
        %v4381 = vpop.f32.mrf.mxu0
        %v4382 = vadd.f32 0.0, %v4381
        %v4383 = vpop.f32.mrf.mxu0
        %v4384 = vadd.f32 0.0, %v4383
        %4385 = vmatprep.mubr.bf16.mxu0 0
        %4386 = vmatmul.mubr.bf16.gmra.mxu0 %v1509
        %v4387 = vpop.f32.mrf.mxu0
        %v4388 = vadd.f32 0.0, %v4387
        %v4389 = vpop.f32.mrf.mxu0
        %v4390 = vadd.f32 0.0, %v4389
        %v4391 = vpop.f32.mrf.mxu0
        %v4392 = vadd.f32 0.0, %v4391
        %v4393 = vpop.f32.mrf.mxu0
        %v4394 = vadd.f32 0.0, %v4393
        %4395 = vmatprep.mubr.bf16.mxu0 0
        %4396 = vmatmul.mubr.bf16.gmra.mxu0 %v1512
        %v4397 = vpop.f32.mrf.mxu0
        %v4398 = vadd.f32 0.0, %v4397
        %v4399 = vpop.f32.mrf.mxu0
        %v4400 = vadd.f32 0.0, %v4399
        %v4401 = vpop.f32.mrf.mxu0
        %v4402 = vadd.f32 0.0, %v4401
        %v4403 = vpop.f32.mrf.mxu0
        %v4404 = vadd.f32 0.0, %v4403
        %4405 = vmatprep.mubr.bf16.mxu0 0
        %4406 = vmatmul.mubr.bf16.gmra.mxu0 %v1515
        %v4407 = vpop.f32.mrf.mxu0
        %v4408 = vadd.f32 0.0, %v4407
        %v4409 = vpop.f32.mrf.mxu0
        %v4410 = vadd.f32 0.0, %v4409
        %v4411 = vpop.f32.mrf.mxu0
        %v4412 = vadd.f32 0.0, %v4411
        %v4413 = vpop.f32.mrf.mxu0
        %v4414 = vadd.f32 0.0, %v4413
        %4415 = vmatprep.mubr.bf16.mxu0 0
        %4416 = vmatmul.mubr.bf16.gmra.mxu0 %v1518
        %v4417 = vpop.f32.mrf.mxu0
        %v4418 = vadd.f32 0.0, %v4417
        %v4419 = vpop.f32.mrf.mxu0
        %v4420 = vadd.f32 0.0, %v4419
        %v4421 = vpop.f32.mrf.mxu0
        %v4422 = vadd.f32 0.0, %v4421
        %v4423 = vpop.f32.mrf.mxu0
        %v4424 = vadd.f32 0.0, %v4423
        %4425 = vmatprep.mubr.bf16.mxu0 0
        %4426 = vmatmul.mubr.bf16.gmra.mxu0 %v1521
        %v4427 = vpop.f32.mrf.mxu0
        %v4428 = vadd.f32 0.0, %v4427
        %v4429 = vpop.f32.mrf.mxu0
        %v4430 = vadd.f32 0.0, %v4429
        %v4431 = vpop.f32.mrf.mxu0
        %v4432 = vadd.f32 0.0, %v4431
        %v4433 = vpop.f32.mrf.mxu0
        %v4434 = vadd.f32 0.0, %v4433
        %4435 = vmatprep.mubr.bf16.mxu0 0
        %4436 = vmatmul.mubr.bf16.gmra.mxu0 %v1524
        %v4437 = vpop.f32.mrf.mxu0
        %v4438 = vadd.f32 0.0, %v4437
        %v4439 = vpop.f32.mrf.mxu0
        %v4440 = vadd.f32 0.0, %v4439
        %v4441 = vpop.f32.mrf.mxu0
        %v4442 = vadd.f32 0.0, %v4441
        %v4443 = vpop.f32.mrf.mxu0
        %v4444 = vadd.f32 0.0, %v4443
        %4445 = vmatprep.mubr.bf16.mxu0 0
        %4446 = vmatmul.mubr.bf16.gmra.mxu0 %v1527
        %v4447 = vpop.f32.mrf.mxu0
        %v4448 = vadd.f32 0.0, %v4447
        %v4449 = vpop.f32.mrf.mxu0
        %v4450 = vadd.f32 0.0, %v4449
        %v4451 = vpop.f32.mrf.mxu0
        %v4452 = vadd.f32 0.0, %v4451
        %v4453 = vpop.f32.mrf.mxu0
        %v4454 = vadd.f32 0.0, %v4453
        %4455 = vmatprep.mubr.bf16.mxu0 0
        %4456 = vmatmul.mubr.bf16.gmra.mxu0 %v1530
        %v4457 = vpop.f32.mrf.mxu0
        %v4458 = vadd.f32 0.0, %v4457
        %v4459 = vpop.f32.mrf.mxu0
        %v4460 = vadd.f32 0.0, %v4459
        %v4461 = vpop.f32.mrf.mxu0
        %v4462 = vadd.f32 0.0, %v4461
        %v4463 = vpop.f32.mrf.mxu0
        %v4464 = vadd.f32 0.0, %v4463
        %4465 = vmatprep.mubr.bf16.mxu0 0
        %4466 = vmatmul.mubr.bf16.gmra.mxu0 %v1533
        %v4467 = vpop.f32.mrf.mxu0
        %v4468 = vadd.f32 0.0, %v4467
        %v4469 = vpop.f32.mrf.mxu0
        %v4470 = vadd.f32 0.0, %v4469
        %v4471 = vpop.f32.mrf.mxu0
        %v4472 = vadd.f32 0.0, %v4471
        %v4473 = vpop.f32.mrf.mxu0
        %v4474 = vadd.f32 0.0, %v4473
        %4475 = vmatprep.mubr.bf16.mxu0 0
        %4476 = vmatmul.mubr.bf16.gmra.mxu0 %v1536
        %v4477 = vpop.f32.mrf.mxu0
        %v4478 = vadd.f32 0.0, %v4477
        %v4479 = vpop.f32.mrf.mxu0
        %v4480 = vadd.f32 0.0, %v4479
        %v4481 = vpop.f32.mrf.mxu0
        %v4482 = vadd.f32 0.0, %v4481
        %v4483 = vpop.f32.mrf.mxu0
        %v4484 = vadd.f32 0.0, %v4483
        %4485 = vmatprep.mubr.bf16.mxu0 0
        %4486 = vmatmul.mubr.bf16.gmra.mxu0 %v1539
        %v4487 = vpop.f32.mrf.mxu0
        %v4488 = vadd.f32 0.0, %v4487
        %v4489 = vpop.f32.mrf.mxu0
        %v4490 = vadd.f32 0.0, %v4489
        %v4491 = vpop.f32.mrf.mxu0
        %v4492 = vadd.f32 0.0, %v4491
        %v4493 = vpop.f32.mrf.mxu0
        %v4494 = vadd.f32 0.0, %v4493
        %4495 = vmatprep.mubr.bf16.mxu0 0
        %4496 = vmatmul.mubr.bf16.gmra.mxu0 %v1542
        %v4497 = vpop.f32.mrf.mxu0
        %v4498 = vadd.f32 0.0, %v4497
        %v4499 = vpop.f32.mrf.mxu0
        %v4500 = vadd.f32 0.0, %v4499
        %v4501 = vpop.f32.mrf.mxu0
        %v4502 = vadd.f32 0.0, %v4501
        %v4503 = vpop.f32.mrf.mxu0
        %v4504 = vadd.f32 0.0, %v4503
        %4505 = vmatprep.mubr.bf16.mxu0 0
        %4506 = vmatmul.mubr.bf16.gmra.mxu0 %v1545
        %v4507 = vpop.f32.mrf.mxu0
        %v4508 = vadd.f32 0.0, %v4507
        %v4509 = vpop.f32.mrf.mxu0
        %v4510 = vadd.f32 0.0, %v4509
        %v4511 = vpop.f32.mrf.mxu0
        %v4512 = vadd.f32 0.0, %v4511
        %v4513 = vpop.f32.mrf.mxu0
        %v4514 = vadd.f32 0.0, %v4513
        %4515 = vmatprep.mubr.bf16.mxu0 0
        %4516 = vmatmul.mubr.bf16.gmra.mxu0 %v1548
        %v4517 = vpop.f32.mrf.mxu0
        %v4518 = vadd.f32 0.0, %v4517
        %v4519 = vpop.f32.mrf.mxu0
        %v4520 = vadd.f32 0.0, %v4519
        %v4521 = vpop.f32.mrf.mxu0
        %v4522 = vadd.f32 0.0, %v4521
        %v4523 = vpop.f32.mrf.mxu0
        %v4524 = vadd.f32 0.0, %v4523
        %4525 = vmatprep.mubr.bf16.mxu0 0
        %4526 = vmatmul.mubr.bf16.gmra.mxu0 %v1551
        %v4527 = vpop.f32.mrf.mxu0
        %v4528 = vadd.f32 0.0, %v4527
        %v4529 = vpop.f32.mrf.mxu0
        %v4530 = vadd.f32 0.0, %v4529
        %v4531 = vpop.f32.mrf.mxu0
        %v4532 = vadd.f32 0.0, %v4531
        %v4533 = vpop.f32.mrf.mxu0
        %v4534 = vadd.f32 0.0, %v4533
        %4535 = vdwg.mxu0
        %v4536 = vpack.c.bf16 %v4222, %v4218
        %v4537 = vpack.c.bf16 %v4224, %v4220
        %v4538 = vpack.c.bf16 %v4232, %v4228
        %v4539 = vpack.c.bf16 %v4234, %v4230
        %v4540 = vpack.c.bf16 %v4242, %v4238
        %v4541 = vpack.c.bf16 %v4244, %v4240
        %v4542 = vpack.c.bf16 %v4252, %v4248
        %v4543 = vpack.c.bf16 %v4254, %v4250
        %v4544 = vpack.c.bf16 %v4262, %v4258
        %v4545 = vpack.c.bf16 %v4264, %v4260
        %v4546 = vpack.c.bf16 %v4272, %v4268
        %v4547 = vpack.c.bf16 %v4274, %v4270
        %v4548 = vpack.c.bf16 %v4282, %v4278
        %v4549 = vpack.c.bf16 %v4284, %v4280
        %v4550 = vpack.c.bf16 %v4292, %v4288
        %v4551 = vpack.c.bf16 %v4294, %v4290
        %v4552 = vpack.c.bf16 %v4302, %v4298
        %v4553 = vpack.c.bf16 %v4304, %v4300
        %v4554 = vpack.c.bf16 %v4312, %v4308
        %v4555 = vpack.c.bf16 %v4314, %v4310
        %v4556 = vpack.c.bf16 %v4322, %v4318
        %v4557 = vpack.c.bf16 %v4324, %v4320
        %v4558 = vpack.c.bf16 %v4332, %v4328
        %v4559 = vpack.c.bf16 %v4334, %v4330
        %v4560 = vpack.c.bf16 %v4342, %v4338
        %v4561 = vpack.c.bf16 %v4344, %v4340
        %v4562 = vpack.c.bf16 %v4352, %v4348
        %v4563 = vpack.c.bf16 %v4354, %v4350
        %v4564 = vpack.c.bf16 %v4362, %v4358
        %v4565 = vpack.c.bf16 %v4364, %v4360
        %v4566 = vpack.c.bf16 %v4372, %v4368
        %v4567 = vpack.c.bf16 %v4374, %v4370
        %v4568 = vpack.c.bf16 %v4382, %v4378
        %v4569 = vpack.c.bf16 %v4384, %v4380
        %v4570 = vpack.c.bf16 %v4392, %v4388
        %v4571 = vpack.c.bf16 %v4394, %v4390
        %v4572 = vpack.c.bf16 %v4402, %v4398
        %v4573 = vpack.c.bf16 %v4404, %v4400
        %v4574 = vpack.c.bf16 %v4412, %v4408
        %v4575 = vpack.c.bf16 %v4414, %v4410
        %v4576 = vpack.c.bf16 %v4422, %v4418
        %v4577 = vpack.c.bf16 %v4424, %v4420
        %v4578 = vpack.c.bf16 %v4432, %v4428
        %v4579 = vpack.c.bf16 %v4434, %v4430
        %v4580 = vpack.c.bf16 %v4442, %v4438
        %v4581 = vpack.c.bf16 %v4444, %v4440
        %v4582 = vpack.c.bf16 %v4452, %v4448
        %v4583 = vpack.c.bf16 %v4454, %v4450
        %v4584 = vpack.c.bf16 %v4462, %v4458
        %v4585 = vpack.c.bf16 %v4464, %v4460
        %v4586 = vpack.c.bf16 %v4472, %v4468
        %v4587 = vpack.c.bf16 %v4474, %v4470
        %v4588 = vpack.c.bf16 %v4482, %v4478
        %v4589 = vpack.c.bf16 %v4484, %v4480
        %v4590 = vpack.c.bf16 %v4492, %v4488
        %v4591 = vpack.c.bf16 %v4494, %v4490
        %v4592 = vpack.c.bf16 %v4502, %v4498
        %v4593 = vpack.c.bf16 %v4504, %v4500
        %v4594 = vpack.c.bf16 %v4512, %v4508
        %v4595 = vpack.c.bf16 %v4514, %v4510
        %v4596 = vpack.c.bf16 %v4522, %v4518
        %v4597 = vpack.c.bf16 %v4524, %v4520
        %v4598 = vpack.c.bf16 %v4532, %v4528
        %v4599 = vpack.c.bf16 %v4534, %v4530
        %v4600 = vld [vmem:[%s4 + $0x4] sm:$0x3]
        %v4603 = vunpack.c.l.s4 1966171168
        %v4604 = vunpack.c.0.s8 %v4603
        %v4605 = vlaneseq
        %v4606 = vshrl.u32 %v4605, 7
        %v4607 = vsub.s32 %v4604, %v4606
        %v4608 = vrot.slane %v4600, %v4607
        %v4609 = vcombine.high %v4608, %v4608
        %v4611 = vunpack.c.l.s4 1966171168
        %v4612 = vunpack.c.0.s8 %v4611
        %v4613 = vlaneseq
        %v4614 = vshrl.u32 %v4613, 7
        %v4615 = vsub.s32 %v4612, %v4614
        %v4616 = vrot.slane %v4608, %v4615
        %v4618 = vunpack.c.l.s4 1966171168
        %v4619 = vunpack.c.0.s8 %v4618
        %v4620 = vlaneseq
        %v4621 = vshrl.u32 %v4620, 7
        %v4622 = vsub.s32 %v4619, %v4621
        %v4623 = vrot.slane %v4609, %v4622
        %v4625 = vpack.i.b16 %v4616, %v4616
        %v4627 = vlaneseq
        %v4628 = vshrl.u32 %v4627, 7
        %v4629 = vsub.s32 0, %v4628
        %v4630 = vrot.slane %v4625, %v4629
        %v4632 = vpack.i.b16 %v4623, %v4623
        %v4634 = vlaneseq
        %v4635 = vshrl.u32 %v4634, 7
        %v4636 = vsub.s32 0, %v4635
        %v4637 = vrot.slane %v4632, %v4636
        %v4638 = vadd.bf16 %v4536, %v4630
        %v4639 = vadd.bf16 %v4537, %v4637
        %v4640 = vadd.bf16 %v4538, %v4630
        %v4641 = vadd.bf16 %v4539, %v4637
        %v4642 = vadd.bf16 %v4540, %v4630
        %v4643 = vadd.bf16 %v4541, %v4637
        %v4644 = vadd.bf16 %v4542, %v4630
        %v4645 = vadd.bf16 %v4543, %v4637
        %v4646 = vadd.bf16 %v4544, %v4630
        %v4647 = vadd.bf16 %v4545, %v4637
        %v4648 = vadd.bf16 %v4546, %v4630
        %v4649 = vadd.bf16 %v4547, %v4637
        %v4650 = vadd.bf16 %v4548, %v4630
        %v4651 = vadd.bf16 %v4549, %v4637
        %v4652 = vadd.bf16 %v4550, %v4630
        %v4653 = vadd.bf16 %v4551, %v4637
        %v4654 = vadd.bf16 %v4552, %v4630
        %v4655 = vadd.bf16 %v4553, %v4637
        %v4656 = vadd.bf16 %v4554, %v4630
        %v4657 = vadd.bf16 %v4555, %v4637
        %v4658 = vadd.bf16 %v4556, %v4630
        %v4659 = vadd.bf16 %v4557, %v4637
        %v4660 = vadd.bf16 %v4558, %v4630
        %v4661 = vadd.bf16 %v4559, %v4637
        %v4662 = vadd.bf16 %v4560, %v4630
        %v4663 = vadd.bf16 %v4561, %v4637
        %v4664 = vadd.bf16 %v4562, %v4630
        %v4665 = vadd.bf16 %v4563, %v4637
        %v4666 = vadd.bf16 %v4564, %v4630
        %v4667 = vadd.bf16 %v4565, %v4637
        %v4668 = vadd.bf16 %v4566, %v4630
        %v4669 = vadd.bf16 %v4567, %v4637
        %v4670 = vadd.bf16 %v4568, %v4630
        %v4671 = vadd.bf16 %v4569, %v4637
        %v4672 = vadd.bf16 %v4570, %v4630
        %v4673 = vadd.bf16 %v4571, %v4637
        %v4674 = vadd.bf16 %v4572, %v4630
        %v4675 = vadd.bf16 %v4573, %v4637
        %v4676 = vadd.bf16 %v4574, %v4630
        %v4677 = vadd.bf16 %v4575, %v4637
        %v4678 = vadd.bf16 %v4576, %v4630
        %v4679 = vadd.bf16 %v4577, %v4637
        %v4680 = vadd.bf16 %v4578, %v4630
        %v4681 = vadd.bf16 %v4579, %v4637
        %v4682 = vadd.bf16 %v4580, %v4630
        %v4683 = vadd.bf16 %v4581, %v4637
        %v4684 = vadd.bf16 %v4582, %v4630
        %v4685 = vadd.bf16 %v4583, %v4637
        %v4686 = vadd.bf16 %v4584, %v4630
        %v4687 = vadd.bf16 %v4585, %v4637
        %v4688 = vadd.bf16 %v4586, %v4630
        %v4689 = vadd.bf16 %v4587, %v4637
        %v4690 = vadd.bf16 %v4588, %v4630
        %v4691 = vadd.bf16 %v4589, %v4637
        %v4692 = vadd.bf16 %v4590, %v4630
        %v4693 = vadd.bf16 %v4591, %v4637
        %v4694 = vadd.bf16 %v4592, %v4630
        %v4695 = vadd.bf16 %v4593, %v4637
        %v4696 = vadd.bf16 %v4594, %v4630
        %v4697 = vadd.bf16 %v4595, %v4637
        %v4698 = vadd.bf16 %v4596, %v4630
        %v4699 = vadd.bf16 %v4597, %v4637
        %v4700 = vadd.bf16 %v4598, %v4630
        %v4701 = vadd.bf16 %v4599, %v4637
        %v4702 = vxor.u32 %v4638, 2147516416
        %v4703 = vxor.u32 %v4639, 2147516416
        %v4704 = vxor.u32 %v4640, 2147516416
        %v4705 = vxor.u32 %v4641, 2147516416
        %v4706 = vxor.u32 %v4642, 2147516416
        %v4707 = vxor.u32 %v4643, 2147516416
        %v4708 = vxor.u32 %v4644, 2147516416
        %v4709 = vxor.u32 %v4645, 2147516416
        %v4710 = vxor.u32 %v4646, 2147516416
        %v4711 = vxor.u32 %v4647, 2147516416
        %v4712 = vxor.u32 %v4648, 2147516416
        %v4713 = vxor.u32 %v4649, 2147516416
        %v4714 = vxor.u32 %v4650, 2147516416
        %v4715 = vxor.u32 %v4651, 2147516416
        %v4716 = vxor.u32 %v4652, 2147516416
        %v4717 = vxor.u32 %v4653, 2147516416
        %v4718 = vxor.u32 %v4654, 2147516416
        %v4719 = vxor.u32 %v4655, 2147516416
        %v4720 = vxor.u32 %v4656, 2147516416
        %v4721 = vxor.u32 %v4657, 2147516416
        %v4722 = vxor.u32 %v4658, 2147516416
        %v4723 = vxor.u32 %v4659, 2147516416
        %v4724 = vxor.u32 %v4660, 2147516416
        %v4725 = vxor.u32 %v4661, 2147516416
        %v4726 = vxor.u32 %v4662, 2147516416
        %v4727 = vxor.u32 %v4663, 2147516416
        %v4728 = vxor.u32 %v4664, 2147516416
        %v4729 = vxor.u32 %v4665, 2147516416
        %v4730 = vxor.u32 %v4666, 2147516416
        %v4731 = vxor.u32 %v4667, 2147516416
        %v4732 = vxor.u32 %v4668, 2147516416
        %v4733 = vxor.u32 %v4669, 2147516416
        %v4734 = vxor.u32 %v4670, 2147516416
        %v4735 = vxor.u32 %v4671, 2147516416
        %v4736 = vxor.u32 %v4672, 2147516416
        %v4737 = vxor.u32 %v4673, 2147516416
        %v4738 = vxor.u32 %v4674, 2147516416
        %v4739 = vxor.u32 %v4675, 2147516416
        %v4740 = vxor.u32 %v4676, 2147516416
        %v4741 = vxor.u32 %v4677, 2147516416
        %v4742 = vxor.u32 %v4678, 2147516416
        %v4743 = vxor.u32 %v4679, 2147516416
        %v4744 = vxor.u32 %v4680, 2147516416
        %v4745 = vxor.u32 %v4681, 2147516416
        %v4746 = vxor.u32 %v4682, 2147516416
        %v4747 = vxor.u32 %v4683, 2147516416
        %v4748 = vxor.u32 %v4684, 2147516416
        %v4749 = vxor.u32 %v4685, 2147516416
        %v4750 = vxor.u32 %v4686, 2147516416
        %v4751 = vxor.u32 %v4687, 2147516416
        %v4752 = vxor.u32 %v4688, 2147516416
        %v4753 = vxor.u32 %v4689, 2147516416
        %v4754 = vxor.u32 %v4690, 2147516416
        %v4755 = vxor.u32 %v4691, 2147516416
        %v4756 = vxor.u32 %v4692, 2147516416
        %v4757 = vxor.u32 %v4693, 2147516416
        %v4758 = vxor.u32 %v4694, 2147516416
        %v4759 = vxor.u32 %v4695, 2147516416
        %v4760 = vxor.u32 %v4696, 2147516416
        %v4761 = vxor.u32 %v4697, 2147516416
        %v4762 = vxor.u32 %v4698, 2147516416
        %v4763 = vxor.u32 %v4699, 2147516416
        %v4764 = vxor.u32 %v4700, 2147516416
        %v4765 = vxor.u32 %v4701, 2147516416
        %v4767 = vmul.bf16 %v4702, 1069105081
        %v4768 = vpow.bf16.pop %v4767
        %v4770 = vmul.bf16 %v4703, 1069105081
        %v4771 = vpow.bf16.pop %v4770
        %v4773 = vmul.bf16 %v4704, 1069105081
        %v4774 = vpow.bf16.pop %v4773
        %v4776 = vmul.bf16 %v4705, 1069105081
        %v4777 = vpow.bf16.pop %v4776
        %v4779 = vmul.bf16 %v4706, 1069105081
        %v4780 = vpow.bf16.pop %v4779
        %v4782 = vmul.bf16 %v4707, 1069105081
        %v4783 = vpow.bf16.pop %v4782
        %v4785 = vmul.bf16 %v4708, 1069105081
        %v4786 = vpow.bf16.pop %v4785
        %v4788 = vmul.bf16 %v4709, 1069105081
        %v4789 = vpow.bf16.pop %v4788
        %v4791 = vmul.bf16 %v4710, 1069105081
        %v4792 = vpow.bf16.pop %v4791
        %v4794 = vmul.bf16 %v4711, 1069105081
        %v4795 = vpow.bf16.pop %v4794
        %v4797 = vmul.bf16 %v4712, 1069105081
        %v4798 = vpow.bf16.pop %v4797
        %v4800 = vmul.bf16 %v4713, 1069105081
        %v4801 = vpow.bf16.pop %v4800
        %v4803 = vmul.bf16 %v4714, 1069105081
        %v4804 = vpow.bf16.pop %v4803
        %v4806 = vmul.bf16 %v4715, 1069105081
        %v4807 = vpow.bf16.pop %v4806
        %v4809 = vmul.bf16 %v4716, 1069105081
        %v4810 = vpow.bf16.pop %v4809
        %v4812 = vmul.bf16 %v4717, 1069105081
        %v4813 = vpow.bf16.pop %v4812
        %v4815 = vmul.bf16 %v4718, 1069105081
        %v4816 = vpow.bf16.pop %v4815
        %v4818 = vmul.bf16 %v4719, 1069105081
        %v4819 = vpow.bf16.pop %v4818
        %v4821 = vmul.bf16 %v4720, 1069105081
        %v4822 = vpow.bf16.pop %v4821
        %v4824 = vmul.bf16 %v4721, 1069105081
        %v4825 = vpow.bf16.pop %v4824
        %v4827 = vmul.bf16 %v4722, 1069105081
        %v4828 = vpow.bf16.pop %v4827
        %v4830 = vmul.bf16 %v4723, 1069105081
        %v4831 = vpow.bf16.pop %v4830
        %v4833 = vmul.bf16 %v4724, 1069105081
        %v4834 = vpow.bf16.pop %v4833
        %v4836 = vmul.bf16 %v4725, 1069105081
        %v4837 = vpow.bf16.pop %v4836
        %v4839 = vmul.bf16 %v4726, 1069105081
        %v4840 = vpow.bf16.pop %v4839
        %v4842 = vmul.bf16 %v4727, 1069105081
        %v4843 = vpow.bf16.pop %v4842
        %v4845 = vmul.bf16 %v4728, 1069105081
        %v4846 = vpow.bf16.pop %v4845
        %v4848 = vmul.bf16 %v4729, 1069105081
        %v4849 = vpow.bf16.pop %v4848
        %v4851 = vmul.bf16 %v4730, 1069105081
        %v4852 = vpow.bf16.pop %v4851
        %v4854 = vmul.bf16 %v4731, 1069105081
        %v4855 = vpow.bf16.pop %v4854
        %v4857 = vmul.bf16 %v4732, 1069105081
        %v4858 = vpow.bf16.pop %v4857
        %v4860 = vmul.bf16 %v4733, 1069105081
        %v4861 = vpow.bf16.pop %v4860
        %v4863 = vmul.bf16 %v4734, 1069105081
        %v4864 = vpow.bf16.pop %v4863
        %v4866 = vmul.bf16 %v4735, 1069105081
        %v4867 = vpow.bf16.pop %v4866
        %v4869 = vmul.bf16 %v4736, 1069105081
        %v4870 = vpow.bf16.pop %v4869
        %v4872 = vmul.bf16 %v4737, 1069105081
        %v4873 = vpow.bf16.pop %v4872
        %v4875 = vmul.bf16 %v4738, 1069105081
        %v4876 = vpow.bf16.pop %v4875
        %v4878 = vmul.bf16 %v4739, 1069105081
        %v4879 = vpow.bf16.pop %v4878
        %v4881 = vmul.bf16 %v4740, 1069105081
        %v4882 = vpow.bf16.pop %v4881
        %v4884 = vmul.bf16 %v4741, 1069105081
        %v4885 = vpow.bf16.pop %v4884
        %v4887 = vmul.bf16 %v4742, 1069105081
        %v4888 = vpow.bf16.pop %v4887
        %v4890 = vmul.bf16 %v4743, 1069105081
        %v4891 = vpow.bf16.pop %v4890
        %v4893 = vmul.bf16 %v4744, 1069105081
        %v4894 = vpow.bf16.pop %v4893
        %v4896 = vmul.bf16 %v4745, 1069105081
        %v4897 = vpow.bf16.pop %v4896
        %v4899 = vmul.bf16 %v4746, 1069105081
        %v4900 = vpow.bf16.pop %v4899
        %v4902 = vmul.bf16 %v4747, 1069105081
        %v4903 = vpow.bf16.pop %v4902
        %v4905 = vmul.bf16 %v4748, 1069105081
        %v4906 = vpow.bf16.pop %v4905
        %v4908 = vmul.bf16 %v4749, 1069105081
        %v4909 = vpow.bf16.pop %v4908
        %v4911 = vmul.bf16 %v4750, 1069105081
        %v4912 = vpow.bf16.pop %v4911
        %v4914 = vmul.bf16 %v4751, 1069105081
        %v4915 = vpow.bf16.pop %v4914
        %v4917 = vmul.bf16 %v4752, 1069105081
        %v4918 = vpow.bf16.pop %v4917
        %v4920 = vmul.bf16 %v4753, 1069105081
        %v4921 = vpow.bf16.pop %v4920
        %v4923 = vmul.bf16 %v4754, 1069105081
        %v4924 = vpow.bf16.pop %v4923
        %v4926 = vmul.bf16 %v4755, 1069105081
        %v4927 = vpow.bf16.pop %v4926
        %v4929 = vmul.bf16 %v4756, 1069105081
        %v4930 = vpow.bf16.pop %v4929
        %v4932 = vmul.bf16 %v4757, 1069105081
        %v4933 = vpow.bf16.pop %v4932
        %v4935 = vmul.bf16 %v4758, 1069105081
        %v4936 = vpow.bf16.pop %v4935
        %v4938 = vmul.bf16 %v4759, 1069105081
        %v4939 = vpow.bf16.pop %v4938
        %v4941 = vmul.bf16 %v4760, 1069105081
        %v4942 = vpow.bf16.pop %v4941
        %v4944 = vmul.bf16 %v4761, 1069105081
        %v4945 = vpow.bf16.pop %v4944
        %v4947 = vmul.bf16 %v4762, 1069105081
        %v4948 = vpow.bf16.pop %v4947
        %v4950 = vmul.bf16 %v4763, 1069105081
        %v4951 = vpow.bf16.pop %v4950
        %v4953 = vmul.bf16 %v4764, 1069105081
        %v4954 = vpow.bf16.pop %v4953
        %v4956 = vmul.bf16 %v4765, 1069105081
        %v4957 = vpow.bf16.pop %v4956
        %v4958 = vadd.bf16 %v4768, 1065369472
        %v4959 = vadd.bf16 %v4771, 1065369472
        %v4960 = vadd.bf16 %v4774, 1065369472
        %v4961 = vadd.bf16 %v4777, 1065369472
        %v4962 = vadd.bf16 %v4780, 1065369472
        %v4963 = vadd.bf16 %v4783, 1065369472
        %v4964 = vadd.bf16 %v4786, 1065369472
        %v4965 = vadd.bf16 %v4789, 1065369472
        %v4966 = vadd.bf16 %v4792, 1065369472
        %v4967 = vadd.bf16 %v4795, 1065369472
        %v4968 = vadd.bf16 %v4798, 1065369472
        %v4969 = vadd.bf16 %v4801, 1065369472
        %v4970 = vadd.bf16 %v4804, 1065369472
        %v4971 = vadd.bf16 %v4807, 1065369472
        %v4972 = vadd.bf16 %v4810, 1065369472
        %v4973 = vadd.bf16 %v4813, 1065369472
        %v4974 = vadd.bf16 %v4816, 1065369472
        %v4975 = vadd.bf16 %v4819, 1065369472
        %v4976 = vadd.bf16 %v4822, 1065369472
        %v4977 = vadd.bf16 %v4825, 1065369472
        %v4978 = vadd.bf16 %v4828, 1065369472
        %v4979 = vadd.bf16 %v4831, 1065369472
        %v4980 = vadd.bf16 %v4834, 1065369472
        %v4981 = vadd.bf16 %v4837, 1065369472
        %v4982 = vadd.bf16 %v4840, 1065369472
        %v4983 = vadd.bf16 %v4843, 1065369472
        %v4984 = vadd.bf16 %v4846, 1065369472
        %v4985 = vadd.bf16 %v4849, 1065369472
        %v4986 = vadd.bf16 %v4852, 1065369472
        %v4987 = vadd.bf16 %v4855, 1065369472
        %v4988 = vadd.bf16 %v4858, 1065369472
        %v4989 = vadd.bf16 %v4861, 1065369472
        %v4990 = vadd.bf16 %v4864, 1065369472
        %v4991 = vadd.bf16 %v4867, 1065369472
        %v4992 = vadd.bf16 %v4870, 1065369472
        %v4993 = vadd.bf16 %v4873, 1065369472
        %v4994 = vadd.bf16 %v4876, 1065369472
        %v4995 = vadd.bf16 %v4879, 1065369472
        %v4996 = vadd.bf16 %v4882, 1065369472
        %v4997 = vadd.bf16 %v4885, 1065369472
        %v4998 = vadd.bf16 %v4888, 1065369472
        %v4999 = vadd.bf16 %v4891, 1065369472
        %v5000 = vadd.bf16 %v4894, 1065369472
        %v5001 = vadd.bf16 %v4897, 1065369472
        %v5002 = vadd.bf16 %v4900, 1065369472
        %v5003 = vadd.bf16 %v4903, 1065369472
        %v5004 = vadd.bf16 %v4906, 1065369472
        %v5005 = vadd.bf16 %v4909, 1065369472
        %v5006 = vadd.bf16 %v4912, 1065369472
        %v5007 = vadd.bf16 %v4915, 1065369472
        %v5008 = vadd.bf16 %v4918, 1065369472
        %v5009 = vadd.bf16 %v4921, 1065369472
        %v5010 = vadd.bf16 %v4924, 1065369472
        %v5011 = vadd.bf16 %v4927, 1065369472
        %v5012 = vadd.bf16 %v4930, 1065369472
        %v5013 = vadd.bf16 %v4933, 1065369472
        %v5014 = vadd.bf16 %v4936, 1065369472
        %v5015 = vadd.bf16 %v4939, 1065369472
        %v5016 = vadd.bf16 %v4942, 1065369472
        %v5017 = vadd.bf16 %v4945, 1065369472
        %v5018 = vadd.bf16 %v4948, 1065369472
        %v5019 = vadd.bf16 %v4951, 1065369472
        %v5020 = vadd.bf16 %v4954, 1065369472
        %v5021 = vadd.bf16 %v4957, 1065369472
        %v5022 = vrcp.bf16.pop %v4958
        %v5023 = vmul.bf16 1065369472, %v5022
        %v5024 = vrcp.bf16.pop %v4959
        %v5025 = vmul.bf16 1065369472, %v5024
        %v5026 = vrcp.bf16.pop %v4960
        %v5027 = vmul.bf16 1065369472, %v5026
        %v5028 = vrcp.bf16.pop %v4961
        %v5029 = vmul.bf16 1065369472, %v5028
        %v5030 = vrcp.bf16.pop %v4962
        %v5031 = vmul.bf16 1065369472, %v5030
        %v5032 = vrcp.bf16.pop %v4963
        %v5033 = vmul.bf16 1065369472, %v5032
        %v5034 = vrcp.bf16.pop %v4964
        %v5035 = vmul.bf16 1065369472, %v5034
        %v5036 = vrcp.bf16.pop %v4965
        %v5037 = vmul.bf16 1065369472, %v5036
        %v5038 = vrcp.bf16.pop %v4966
        %v5039 = vmul.bf16 1065369472, %v5038
        %v5040 = vrcp.bf16.pop %v4967
        %v5041 = vmul.bf16 1065369472, %v5040
        %v5042 = vrcp.bf16.pop %v4968
        %v5043 = vmul.bf16 1065369472, %v5042
        %v5044 = vrcp.bf16.pop %v4969
        %v5045 = vmul.bf16 1065369472, %v5044
        %v5046 = vrcp.bf16.pop %v4970
        %v5047 = vmul.bf16 1065369472, %v5046
        %v5048 = vrcp.bf16.pop %v4971
        %v5049 = vmul.bf16 1065369472, %v5048
        %v5050 = vrcp.bf16.pop %v4972
        %v5051 = vmul.bf16 1065369472, %v5050
        %v5052 = vrcp.bf16.pop %v4973
        %v5053 = vmul.bf16 1065369472, %v5052
        %v5054 = vrcp.bf16.pop %v4974
        %v5055 = vmul.bf16 1065369472, %v5054
        %v5056 = vrcp.bf16.pop %v4975
        %v5057 = vmul.bf16 1065369472, %v5056
        %v5058 = vrcp.bf16.pop %v4976
        %v5059 = vmul.bf16 1065369472, %v5058
        %v5060 = vrcp.bf16.pop %v4977
        %v5061 = vmul.bf16 1065369472, %v5060
        %v5062 = vrcp.bf16.pop %v4978
        %v5063 = vmul.bf16 1065369472, %v5062
        %v5064 = vrcp.bf16.pop %v4979
        %v5065 = vmul.bf16 1065369472, %v5064
        %v5066 = vrcp.bf16.pop %v4980
        %v5067 = vmul.bf16 1065369472, %v5066
        %v5068 = vrcp.bf16.pop %v4981
        %v5069 = vmul.bf16 1065369472, %v5068
        %v5070 = vrcp.bf16.pop %v4982
        %v5071 = vmul.bf16 1065369472, %v5070
        %v5072 = vrcp.bf16.pop %v4983
        %v5073 = vmul.bf16 1065369472, %v5072
        %v5074 = vrcp.bf16.pop %v4984
        %v5075 = vmul.bf16 1065369472, %v5074
        %v5076 = vrcp.bf16.pop %v4985
        %v5077 = vmul.bf16 1065369472, %v5076
        %v5078 = vrcp.bf16.pop %v4986
        %v5079 = vmul.bf16 1065369472, %v5078
        %v5080 = vrcp.bf16.pop %v4987
        %v5081 = vmul.bf16 1065369472, %v5080
        %v5082 = vrcp.bf16.pop %v4988
        %v5083 = vmul.bf16 1065369472, %v5082
        %v5084 = vrcp.bf16.pop %v4989
        %v5085 = vmul.bf16 1065369472, %v5084
        %v5086 = vrcp.bf16.pop %v4990
        %v5087 = vmul.bf16 1065369472, %v5086
        %v5088 = vrcp.bf16.pop %v4991
        %v5089 = vmul.bf16 1065369472, %v5088
        %v5090 = vrcp.bf16.pop %v4992
        %v5091 = vmul.bf16 1065369472, %v5090
        %v5092 = vrcp.bf16.pop %v4993
        %v5093 = vmul.bf16 1065369472, %v5092
        %v5094 = vrcp.bf16.pop %v4994
        %v5095 = vmul.bf16 1065369472, %v5094
        %v5096 = vrcp.bf16.pop %v4995
        %v5097 = vmul.bf16 1065369472, %v5096
        %v5098 = vrcp.bf16.pop %v4996
        %v5099 = vmul.bf16 1065369472, %v5098
        %v5100 = vrcp.bf16.pop %v4997
        %v5101 = vmul.bf16 1065369472, %v5100
        %v5102 = vrcp.bf16.pop %v4998
        %v5103 = vmul.bf16 1065369472, %v5102
        %v5104 = vrcp.bf16.pop %v4999
        %v5105 = vmul.bf16 1065369472, %v5104
        %v5106 = vrcp.bf16.pop %v5000
        %v5107 = vmul.bf16 1065369472, %v5106
        %v5108 = vrcp.bf16.pop %v5001
        %v5109 = vmul.bf16 1065369472, %v5108
        %v5110 = vrcp.bf16.pop %v5002
        %v5111 = vmul.bf16 1065369472, %v5110
        %v5112 = vrcp.bf16.pop %v5003
        %v5113 = vmul.bf16 1065369472, %v5112
        %v5114 = vrcp.bf16.pop %v5004
        %v5115 = vmul.bf16 1065369472, %v5114
        %v5116 = vrcp.bf16.pop %v5005
        %v5117 = vmul.bf16 1065369472, %v5116
        %v5118 = vrcp.bf16.pop %v5006
        %v5119 = vmul.bf16 1065369472, %v5118
        %v5120 = vrcp.bf16.pop %v5007
        %v5121 = vmul.bf16 1065369472, %v5120
        %v5122 = vrcp.bf16.pop %v5008
        %v5123 = vmul.bf16 1065369472, %v5122
        %v5124 = vrcp.bf16.pop %v5009
        %v5125 = vmul.bf16 1065369472, %v5124
        %v5126 = vrcp.bf16.pop %v5010
        %v5127 = vmul.bf16 1065369472, %v5126
        %v5128 = vrcp.bf16.pop %v5011
        %v5129 = vmul.bf16 1065369472, %v5128
        %v5130 = vrcp.bf16.pop %v5012
        %v5131 = vmul.bf16 1065369472, %v5130
        %v5132 = vrcp.bf16.pop %v5013
        %v5133 = vmul.bf16 1065369472, %v5132
        %v5134 = vrcp.bf16.pop %v5014
        %v5135 = vmul.bf16 1065369472, %v5134
        %v5136 = vrcp.bf16.pop %v5015
        %v5137 = vmul.bf16 1065369472, %v5136
        %v5138 = vrcp.bf16.pop %v5016
        %v5139 = vmul.bf16 1065369472, %v5138
        %v5140 = vrcp.bf16.pop %v5017
        %v5141 = vmul.bf16 1065369472, %v5140
        %v5142 = vrcp.bf16.pop %v5018
        %v5143 = vmul.bf16 1065369472, %v5142
        %v5144 = vrcp.bf16.pop %v5019
        %v5145 = vmul.bf16 1065369472, %v5144
        %v5146 = vrcp.bf16.pop %v5020
        %v5147 = vmul.bf16 1065369472, %v5146
        %v5148 = vrcp.bf16.pop %v5021
        %v5149 = vmul.bf16 1065369472, %v5148
        %v5150 = vmul.bf16 %v4638, %v5023
        %v5151 = vmul.bf16 %v4639, %v5025
        %v5152 = vmul.bf16 %v4640, %v5027
        %v5153 = vmul.bf16 %v4641, %v5029
        %v5154 = vmul.bf16 %v4642, %v5031
        %v5155 = vmul.bf16 %v4643, %v5033
        %v5156 = vmul.bf16 %v4644, %v5035
        %v5157 = vmul.bf16 %v4645, %v5037
        %v5158 = vmul.bf16 %v4646, %v5039
        %v5159 = vmul.bf16 %v4647, %v5041
        %v5160 = vmul.bf16 %v4648, %v5043
        %v5161 = vmul.bf16 %v4649, %v5045
        %v5162 = vmul.bf16 %v4650, %v5047
        %v5163 = vmul.bf16 %v4651, %v5049
        %v5164 = vmul.bf16 %v4652, %v5051
        %v5165 = vmul.bf16 %v4653, %v5053
        %v5166 = vmul.bf16 %v4654, %v5055
        %v5167 = vmul.bf16 %v4655, %v5057
        %v5168 = vmul.bf16 %v4656, %v5059
        %v5169 = vmul.bf16 %v4657, %v5061
        %v5170 = vmul.bf16 %v4658, %v5063
        %v5171 = vmul.bf16 %v4659, %v5065
        %v5172 = vmul.bf16 %v4660, %v5067
        %v5173 = vmul.bf16 %v4661, %v5069
        %v5174 = vmul.bf16 %v4662, %v5071
        %v5175 = vmul.bf16 %v4663, %v5073
        %v5176 = vmul.bf16 %v4664, %v5075
        %v5177 = vmul.bf16 %v4665, %v5077
        %v5178 = vmul.bf16 %v4666, %v5079
        %v5179 = vmul.bf16 %v4667, %v5081
        %v5180 = vmul.bf16 %v4668, %v5083
        %v5181 = vmul.bf16 %v4669, %v5085
        %v5182 = vmul.bf16 %v4670, %v5087
        %v5183 = vmul.bf16 %v4671, %v5089
        %v5184 = vmul.bf16 %v4672, %v5091
        %v5185 = vmul.bf16 %v4673, %v5093
        %v5186 = vmul.bf16 %v4674, %v5095
        %v5187 = vmul.bf16 %v4675, %v5097
        %v5188 = vmul.bf16 %v4676, %v5099
        %v5189 = vmul.bf16 %v4677, %v5101
        %v5190 = vmul.bf16 %v4678, %v5103
        %v5191 = vmul.bf16 %v4679, %v5105
        %v5192 = vmul.bf16 %v4680, %v5107
        %v5193 = vmul.bf16 %v4681, %v5109
        %v5194 = vmul.bf16 %v4682, %v5111
        %v5195 = vmul.bf16 %v4683, %v5113
        %v5196 = vmul.bf16 %v4684, %v5115
        %v5197 = vmul.bf16 %v4685, %v5117
        %v5198 = vmul.bf16 %v4686, %v5119
        %v5199 = vmul.bf16 %v4687, %v5121
        %v5200 = vmul.bf16 %v4688, %v5123
        %v5201 = vmul.bf16 %v4689, %v5125
        %v5202 = vmul.bf16 %v4690, %v5127
        %v5203 = vmul.bf16 %v4691, %v5129
        %v5204 = vmul.bf16 %v4692, %v5131
        %v5205 = vmul.bf16 %v4693, %v5133
        %v5206 = vmul.bf16 %v4694, %v5135
        %v5207 = vmul.bf16 %v4695, %v5137
        %v5208 = vmul.bf16 %v4696, %v5139
        %v5209 = vmul.bf16 %v4697, %v5141
        %v5210 = vmul.bf16 %v4698, %v5143
        %v5211 = vmul.bf16 %v4699, %v5145
        %v5212 = vmul.bf16 %v4700, %v5147
        %v5213 = vmul.bf16 %v4701, %v5149
        %v5214 = vunpack.c.l.bf16 %v5150
        %v5215 = vunpack.c.l.bf16 %v5151
        %v5216 = vunpack.c.h.bf16 %v5150
        %v5217 = vunpack.c.h.bf16 %v5151
        %v5218 = vunpack.c.l.bf16 %v5152
        %v5219 = vunpack.c.l.bf16 %v5153
        %v5220 = vunpack.c.h.bf16 %v5152
        %v5221 = vunpack.c.h.bf16 %v5153
        %v5222 = vunpack.c.l.bf16 %v5154
        %v5223 = vunpack.c.l.bf16 %v5155
        %v5224 = vunpack.c.h.bf16 %v5154
        %v5225 = vunpack.c.h.bf16 %v5155
        %v5226 = vunpack.c.l.bf16 %v5156
        %v5227 = vunpack.c.l.bf16 %v5157
        %v5228 = vunpack.c.h.bf16 %v5156
        %v5229 = vunpack.c.h.bf16 %v5157
        %v5230 = vunpack.c.l.bf16 %v5158
        %v5231 = vunpack.c.l.bf16 %v5159
        %v5232 = vunpack.c.h.bf16 %v5158
        %v5233 = vunpack.c.h.bf16 %v5159
        %v5234 = vunpack.c.l.bf16 %v5160
        %v5235 = vunpack.c.l.bf16 %v5161
        %v5236 = vunpack.c.h.bf16 %v5160
        %v5237 = vunpack.c.h.bf16 %v5161
        %v5238 = vunpack.c.l.bf16 %v5162
        %v5239 = vunpack.c.l.bf16 %v5163
        %v5240 = vunpack.c.h.bf16 %v5162
        %v5241 = vunpack.c.h.bf16 %v5163
        %v5242 = vunpack.c.l.bf16 %v5164
        %v5243 = vunpack.c.l.bf16 %v5165
        %v5244 = vunpack.c.h.bf16 %v5164
        %v5245 = vunpack.c.h.bf16 %v5165
        %v5246 = vunpack.c.l.bf16 %v5166
        %v5247 = vunpack.c.l.bf16 %v5167
        %v5248 = vunpack.c.h.bf16 %v5166
        %v5249 = vunpack.c.h.bf16 %v5167
        %v5250 = vunpack.c.l.bf16 %v5168
        %v5251 = vunpack.c.l.bf16 %v5169
        %v5252 = vunpack.c.h.bf16 %v5168
        %v5253 = vunpack.c.h.bf16 %v5169
        %v5254 = vunpack.c.l.bf16 %v5170
        %v5255 = vunpack.c.l.bf16 %v5171
        %v5256 = vunpack.c.h.bf16 %v5170
        %v5257 = vunpack.c.h.bf16 %v5171
        %v5258 = vunpack.c.l.bf16 %v5172
        %v5259 = vunpack.c.l.bf16 %v5173
        %v5260 = vunpack.c.h.bf16 %v5172
        %v5261 = vunpack.c.h.bf16 %v5173
        %v5262 = vunpack.c.l.bf16 %v5174
        %v5263 = vunpack.c.l.bf16 %v5175
        %v5264 = vunpack.c.h.bf16 %v5174
        %v5265 = vunpack.c.h.bf16 %v5175
        %v5266 = vunpack.c.l.bf16 %v5176
        %v5267 = vunpack.c.l.bf16 %v5177
        %v5268 = vunpack.c.h.bf16 %v5176
        %v5269 = vunpack.c.h.bf16 %v5177
        %v5270 = vunpack.c.l.bf16 %v5178
        %v5271 = vunpack.c.l.bf16 %v5179
        %v5272 = vunpack.c.h.bf16 %v5178
        %v5273 = vunpack.c.h.bf16 %v5179
        %v5274 = vunpack.c.l.bf16 %v5180
        %v5275 = vunpack.c.l.bf16 %v5181
        %v5276 = vunpack.c.h.bf16 %v5180
        %v5277 = vunpack.c.h.bf16 %v5181
        %v5278 = vunpack.c.l.bf16 %v5182
        %v5279 = vunpack.c.l.bf16 %v5183
        %v5280 = vunpack.c.h.bf16 %v5182
        %v5281 = vunpack.c.h.bf16 %v5183
        %v5282 = vunpack.c.l.bf16 %v5184
        %v5283 = vunpack.c.l.bf16 %v5185
        %v5284 = vunpack.c.h.bf16 %v5184
        %v5285 = vunpack.c.h.bf16 %v5185
        %v5286 = vunpack.c.l.bf16 %v5186
        %v5287 = vunpack.c.l.bf16 %v5187
        %v5288 = vunpack.c.h.bf16 %v5186
        %v5289 = vunpack.c.h.bf16 %v5187
        %v5290 = vunpack.c.l.bf16 %v5188
        %v5291 = vunpack.c.l.bf16 %v5189
        %v5292 = vunpack.c.h.bf16 %v5188
        %v5293 = vunpack.c.h.bf16 %v5189
        %v5294 = vunpack.c.l.bf16 %v5190
        %v5295 = vunpack.c.l.bf16 %v5191
        %v5296 = vunpack.c.h.bf16 %v5190
        %v5297 = vunpack.c.h.bf16 %v5191
        %v5298 = vunpack.c.l.bf16 %v5192
        %v5299 = vunpack.c.l.bf16 %v5193
        %v5300 = vunpack.c.h.bf16 %v5192
        %v5301 = vunpack.c.h.bf16 %v5193
        %v5302 = vunpack.c.l.bf16 %v5194
        %v5303 = vunpack.c.l.bf16 %v5195
        %v5304 = vunpack.c.h.bf16 %v5194
        %v5305 = vunpack.c.h.bf16 %v5195
        %v5306 = vunpack.c.l.bf16 %v5196
        %v5307 = vunpack.c.l.bf16 %v5197
        %v5308 = vunpack.c.h.bf16 %v5196
        %v5309 = vunpack.c.h.bf16 %v5197
        %v5310 = vunpack.c.l.bf16 %v5198
        %v5311 = vunpack.c.l.bf16 %v5199
        %v5312 = vunpack.c.h.bf16 %v5198
        %v5313 = vunpack.c.h.bf16 %v5199
        %v5314 = vunpack.c.l.bf16 %v5200
        %v5315 = vunpack.c.l.bf16 %v5201
        %v5316 = vunpack.c.h.bf16 %v5200
        %v5317 = vunpack.c.h.bf16 %v5201
        %v5318 = vunpack.c.l.bf16 %v5202
        %v5319 = vunpack.c.l.bf16 %v5203
        %v5320 = vunpack.c.h.bf16 %v5202
        %v5321 = vunpack.c.h.bf16 %v5203
        %v5322 = vunpack.c.l.bf16 %v5204
        %v5323 = vunpack.c.l.bf16 %v5205
        %v5324 = vunpack.c.h.bf16 %v5204
        %v5325 = vunpack.c.h.bf16 %v5205
        %v5326 = vunpack.c.l.bf16 %v5206
        %v5327 = vunpack.c.l.bf16 %v5207
        %v5328 = vunpack.c.h.bf16 %v5206
        %v5329 = vunpack.c.h.bf16 %v5207
        %v5330 = vunpack.c.l.bf16 %v5208
        %v5331 = vunpack.c.l.bf16 %v5209
        %v5332 = vunpack.c.h.bf16 %v5208
        %v5333 = vunpack.c.h.bf16 %v5209
        %v5334 = vunpack.c.l.bf16 %v5210
        %v5335 = vunpack.c.l.bf16 %v5211
        %v5336 = vunpack.c.h.bf16 %v5210
        %v5337 = vunpack.c.h.bf16 %v5211
        %v5338 = vunpack.c.l.bf16 %v5212
        %v5339 = vunpack.c.l.bf16 %v5213
        %v5340 = vunpack.c.h.bf16 %v5212
        %v5341 = vunpack.c.h.bf16 %v5213
        %v5342 = vld [vmem:[#allocation2 + $0x20] sm:$0xff]
        %v5343 = vld [vmem:[#allocation2 + $0x28] sm:$0xff]
        %v5344 = vadd.f32 %v5214, %v5216
        %v5345 = vadd.f32 %v5344, %v5218
        %v5346 = vadd.f32 %v5345, %v5220
        %v5347 = vadd.f32 %v5346, %v5222
        %v5348 = vadd.f32 %v5347, %v5224
        %v5349 = vadd.f32 %v5348, %v5226
        %v5350 = vadd.f32 %v5349, %v5228
        %v5351 = vadd.f32 %v5350, %v5230
        %v5352 = vadd.f32 %v5351, %v5232
        %v5353 = vadd.f32 %v5352, %v5234
        %v5354 = vadd.f32 %v5353, %v5236
        %v5355 = vadd.f32 %v5354, %v5238
        %v5356 = vadd.f32 %v5355, %v5240
        %v5357 = vadd.f32 %v5356, %v5242
        %v5358 = vadd.f32 %v5357, %v5244
        %v5359 = vadd.f32 %v5358, %v5246
        %v5360 = vadd.f32 %v5359, %v5248
        %v5361 = vadd.f32 %v5360, %v5250
        %v5362 = vadd.f32 %v5361, %v5252
        %v5363 = vadd.f32 %v5362, %v5254
        %v5364 = vadd.f32 %v5363, %v5256
        %v5365 = vadd.f32 %v5364, %v5258
        %v5366 = vadd.f32 %v5365, %v5260
        %v5367 = vadd.f32 %v5366, %v5262
        %v5368 = vadd.f32 %v5367, %v5264
        %v5369 = vadd.f32 %v5368, %v5266
        %v5370 = vadd.f32 %v5369, %v5268
        %v5371 = vadd.f32 %v5370, %v5270
        %v5372 = vadd.f32 %v5371, %v5272
        %v5373 = vadd.f32 %v5372, %v5274
        %v5374 = vadd.f32 %v5373, %v5276
        %v5375 = vadd.f32 %v5374, %v5278
        %v5376 = vadd.f32 %v5375, %v5280
        %v5377 = vadd.f32 %v5376, %v5282
        %v5378 = vadd.f32 %v5377, %v5284
        %v5379 = vadd.f32 %v5378, %v5286
        %v5380 = vadd.f32 %v5379, %v5288
        %v5381 = vadd.f32 %v5380, %v5290
        %v5382 = vadd.f32 %v5381, %v5292
        %v5383 = vadd.f32 %v5382, %v5294
        %v5384 = vadd.f32 %v5383, %v5296
        %v5385 = vadd.f32 %v5384, %v5298
        %v5386 = vadd.f32 %v5385, %v5300
        %v5387 = vadd.f32 %v5386, %v5302
        %v5388 = vadd.f32 %v5387, %v5304
        %v5389 = vadd.f32 %v5388, %v5306
        %v5390 = vadd.f32 %v5389, %v5308
        %v5391 = vadd.f32 %v5390, %v5310
        %v5392 = vadd.f32 %v5391, %v5312
        %v5393 = vadd.f32 %v5392, %v5314
        %v5394 = vadd.f32 %v5393, %v5316
        %v5395 = vadd.f32 %v5394, %v5318
        %v5396 = vadd.f32 %v5395, %v5320
        %v5397 = vadd.f32 %v5396, %v5322
        %v5398 = vadd.f32 %v5397, %v5324
        %v5399 = vadd.f32 %v5398, %v5326
        %v5400 = vadd.f32 %v5399, %v5328
        %v5401 = vadd.f32 %v5400, %v5330
        %v5402 = vadd.f32 %v5401, %v5332
        %v5403 = vadd.f32 %v5402, %v5334
        %v5404 = vadd.f32 %v5403, %v5336
        %v5405 = vadd.f32 %v5404, %v5338
        %v5406 = vadd.f32 %v5405, %v5340
        %v5407 = vadd.f32 %v5215, %v5217
        %v5408 = vadd.f32 %v5407, %v5219
        %v5409 = vadd.f32 %v5408, %v5221
        %v5410 = vadd.f32 %v5409, %v5223
        %v5411 = vadd.f32 %v5410, %v5225
        %v5412 = vadd.f32 %v5411, %v5227
        %v5413 = vadd.f32 %v5412, %v5229
        %v5414 = vadd.f32 %v5413, %v5231
        %v5415 = vadd.f32 %v5414, %v5233
        %v5416 = vadd.f32 %v5415, %v5235
        %v5417 = vadd.f32 %v5416, %v5237
        %v5418 = vadd.f32 %v5417, %v5239
        %v5419 = vadd.f32 %v5418, %v5241
        %v5420 = vadd.f32 %v5419, %v5243
        %v5421 = vadd.f32 %v5420, %v5245
        %v5422 = vadd.f32 %v5421, %v5247
        %v5423 = vadd.f32 %v5422, %v5249
        %v5424 = vadd.f32 %v5423, %v5251
        %v5425 = vadd.f32 %v5424, %v5253
        %v5426 = vadd.f32 %v5425, %v5255
        %v5427 = vadd.f32 %v5426, %v5257
        %v5428 = vadd.f32 %v5427, %v5259
        %v5429 = vadd.f32 %v5428, %v5261
        %v5430 = vadd.f32 %v5429, %v5263
        %v5431 = vadd.f32 %v5430, %v5265
        %v5432 = vadd.f32 %v5431, %v5267
        %v5433 = vadd.f32 %v5432, %v5269
        %v5434 = vadd.f32 %v5433, %v5271
        %v5435 = vadd.f32 %v5434, %v5273
        %v5436 = vadd.f32 %v5435, %v5275
        %v5437 = vadd.f32 %v5436, %v5277
        %v5438 = vadd.f32 %v5437, %v5279
        %v5439 = vadd.f32 %v5438, %v5281
        %v5440 = vadd.f32 %v5439, %v5283
        %v5441 = vadd.f32 %v5440, %v5285
        %v5442 = vadd.f32 %v5441, %v5287
        %v5443 = vadd.f32 %v5442, %v5289
        %v5444 = vadd.f32 %v5443, %v5291
        %v5445 = vadd.f32 %v5444, %v5293
        %v5446 = vadd.f32 %v5445, %v5295
        %v5447 = vadd.f32 %v5446, %v5297
        %v5448 = vadd.f32 %v5447, %v5299
        %v5449 = vadd.f32 %v5448, %v5301
        %v5450 = vadd.f32 %v5449, %v5303
        %v5451 = vadd.f32 %v5450, %v5305
        %v5452 = vadd.f32 %v5451, %v5307
        %v5453 = vadd.f32 %v5452, %v5309
        %v5454 = vadd.f32 %v5453, %v5311
        %v5455 = vadd.f32 %v5454, %v5313
        %v5456 = vadd.f32 %v5455, %v5315
        %v5457 = vadd.f32 %v5456, %v5317
        %v5458 = vadd.f32 %v5457, %v5319
        %v5459 = vadd.f32 %v5458, %v5321
        %v5460 = vadd.f32 %v5459, %v5323
        %v5461 = vadd.f32 %v5460, %v5325
        %v5462 = vadd.f32 %v5461, %v5327
        %v5463 = vadd.f32 %v5462, %v5329
        %v5464 = vadd.f32 %v5463, %v5331
        %v5465 = vadd.f32 %v5464, %v5333
        %v5466 = vadd.f32 %v5465, %v5335
        %v5467 = vadd.f32 %v5466, %v5337
        %v5468 = vadd.f32 %v5467, %v5339
        %v5469 = vadd.f32 %v5468, %v5341
        %v5470 = vadd.f32 %v5342, %v5406
        %v5471 = vadd.f32 %v5343, %v5469
        %5472 = vst [vmem:[#allocation2 + $0x20] sm:$0xff] %v5470
        %5473 = vst [vmem:[#allocation2 + $0x28] sm:$0xff] %v5471
        %v5474 = vld [vmem:[%s3 + $0x18] sm:$0xff]
        %v5475 = vld [vmem:[%s3 + $0x40] sm:$0xff]
        %v5476 = vld [vmem:[%s3 + $0x68] sm:$0xff]
        %v5477 = vld [vmem:[%s3 + $0x90] sm:$0xff]
        %v5482 = vunpack.c.l.b16 %v5474
        %v5483 = vunpack.c.h.b16 %v5474
        %v5484 = vunpack.c.l.b16 %v5475
        %v5485 = vunpack.c.h.b16 %v5475
        %v5486 = vunpack.c.l.b16 %v5476
        %v5487 = vunpack.c.h.b16 %v5476
        %v5488 = vunpack.c.l.b16 %v5477
        %v5489 = vunpack.c.h.b16 %v5477
        %v5490 = vpack.c.b16 %v5484, %v5482
        %v5491 = vpack.c.b16 %v5485, %v5483
        %v5492 = vpack.c.b16 %v5488, %v5486
        %v5493 = vpack.c.b16 %v5489, %v5487
        %5498 = vmatprep.subr.bf16.mxu0 0
        %5499 = vmatpush1.bf16.msra.mxu0 0
        %5500 = vmatprep.subr.bf16.mxu0 0
        %5501 = vmatpush1.bf16.msra.mxu0 0
        %5502 = vmatprep.subr.bf16.mxu0 0
        %5503 = vmatpush1.bf16.msra.mxu0 0
        %5504 = vmatprep.subr.bf16.mxu0 0
        %5505 = vmatpush1.bf16.msra.mxu0 0
        %5506 = vmatprep.subr.bf16.mxu0 0
        %5507 = vmatpush1.bf16.msra.mxu0 0
        %5508 = vmatprep.subr.bf16.mxu0 0
        %5509 = vmatpush1.bf16.msra.mxu0 0
        %5510 = vmatprep.subr.bf16.mxu0 %v5493
        %5511 = vmatpush1.bf16.msra.mxu0 %v5492
        %5512 = vmatprep.subr.bf16.mxu0 %v5491
        %5513 = vmatpush1.bf16.msra.mxu0 %v5490
        %5514 = vmatprep.subr.bf16.mxu0 0
        %5515 = vmatpush2.bf16.msra.mxu0 0
        %5516 = vmatprep.subr.bf16.mxu0 0
        %5517 = vmatpush2.bf16.msra.mxu0 0
        %5518 = vmatprep.subr.bf16.mxu0 0
        %5519 = vmatpush2.bf16.msra.mxu0 0
        %5520 = vmatprep.subr.bf16.mxu0 0
        %5521 = vmatpush2.bf16.msra.mxu0 0
        %5522 = vmatprep.subr.bf16.mxu0 0
        %5523 = vmatpush2.bf16.msra.mxu0 0
        %5524 = vmatprep.subr.bf16.mxu0 0
        %5525 = vmatpush2.bf16.msra.mxu0 0
        %5526 = vmatprep.subr.bf16.mxu0 0
        %5527 = vmatpush2.bf16.msra.mxu0 0
        %5528 = vmatprep.subr.bf16.mxu0 0
        %5529 = vmatpush2.bf16.msra.mxu0 0
        %5530 = vmatprep.mubr.bf16.mxu0 0
        %5531 = vmatmul.mubr.bf16.gmra.mxu0 %v1458
        %v5532 = vpop.f32.mrf.mxu0
        %v5533 = vadd.f32 0.0, %v5532
        %v5534 = vpop.f32.mrf.mxu0
        %v5535 = vadd.f32 0.0, %v5534
        %v5536 = vpop.f32.mrf.mxu0
        %v5537 = vadd.f32 0.0, %v5536
        %v5538 = vpop.f32.mrf.mxu0
        %v5539 = vadd.f32 0.0, %v5538
        %5540 = vmatprep.mubr.bf16.mxu0 0
        %5541 = vmatmul.mubr.bf16.gmra.mxu0 %v1461
        %v5542 = vpop.f32.mrf.mxu0
        %v5543 = vadd.f32 0.0, %v5542
        %v5544 = vpop.f32.mrf.mxu0
        %v5545 = vadd.f32 0.0, %v5544
        %v5546 = vpop.f32.mrf.mxu0
        %v5547 = vadd.f32 0.0, %v5546
        %v5548 = vpop.f32.mrf.mxu0
        %v5549 = vadd.f32 0.0, %v5548
        %5550 = vmatprep.mubr.bf16.mxu0 0
        %5551 = vmatmul.mubr.bf16.gmra.mxu0 %v1464
        %v5552 = vpop.f32.mrf.mxu0
        %v5553 = vadd.f32 0.0, %v5552
        %v5554 = vpop.f32.mrf.mxu0
        %v5555 = vadd.f32 0.0, %v5554
        %v5556 = vpop.f32.mrf.mxu0
        %v5557 = vadd.f32 0.0, %v5556
        %v5558 = vpop.f32.mrf.mxu0
        %v5559 = vadd.f32 0.0, %v5558
        %5560 = vmatprep.mubr.bf16.mxu0 0
        %5561 = vmatmul.mubr.bf16.gmra.mxu0 %v1467
        %v5562 = vpop.f32.mrf.mxu0
        %v5563 = vadd.f32 0.0, %v5562
        %v5564 = vpop.f32.mrf.mxu0
        %v5565 = vadd.f32 0.0, %v5564
        %v5566 = vpop.f32.mrf.mxu0
        %v5567 = vadd.f32 0.0, %v5566
        %v5568 = vpop.f32.mrf.mxu0
        %v5569 = vadd.f32 0.0, %v5568
        %5570 = vmatprep.mubr.bf16.mxu0 0
        %5571 = vmatmul.mubr.bf16.gmra.mxu0 %v1470
        %v5572 = vpop.f32.mrf.mxu0
        %v5573 = vadd.f32 0.0, %v5572
        %v5574 = vpop.f32.mrf.mxu0
        %v5575 = vadd.f32 0.0, %v5574
        %v5576 = vpop.f32.mrf.mxu0
        %v5577 = vadd.f32 0.0, %v5576
        %v5578 = vpop.f32.mrf.mxu0
        %v5579 = vadd.f32 0.0, %v5578
        %5580 = vmatprep.mubr.bf16.mxu0 0
        %5581 = vmatmul.mubr.bf16.gmra.mxu0 %v1473
        %v5582 = vpop.f32.mrf.mxu0
        %v5583 = vadd.f32 0.0, %v5582
        %v5584 = vpop.f32.mrf.mxu0
        %v5585 = vadd.f32 0.0, %v5584
        %v5586 = vpop.f32.mrf.mxu0
        %v5587 = vadd.f32 0.0, %v5586
        %v5588 = vpop.f32.mrf.mxu0
        %v5589 = vadd.f32 0.0, %v5588
        %5590 = vmatprep.mubr.bf16.mxu0 0
        %5591 = vmatmul.mubr.bf16.gmra.mxu0 %v1476
        %v5592 = vpop.f32.mrf.mxu0
        %v5593 = vadd.f32 0.0, %v5592
        %v5594 = vpop.f32.mrf.mxu0
        %v5595 = vadd.f32 0.0, %v5594
        %v5596 = vpop.f32.mrf.mxu0
        %v5597 = vadd.f32 0.0, %v5596
        %v5598 = vpop.f32.mrf.mxu0
        %v5599 = vadd.f32 0.0, %v5598
        %5600 = vmatprep.mubr.bf16.mxu0 0
        %5601 = vmatmul.mubr.bf16.gmra.mxu0 %v1479
        %v5602 = vpop.f32.mrf.mxu0
        %v5603 = vadd.f32 0.0, %v5602
        %v5604 = vpop.f32.mrf.mxu0
        %v5605 = vadd.f32 0.0, %v5604
        %v5606 = vpop.f32.mrf.mxu0
        %v5607 = vadd.f32 0.0, %v5606
        %v5608 = vpop.f32.mrf.mxu0
        %v5609 = vadd.f32 0.0, %v5608
        %5610 = vmatprep.mubr.bf16.mxu0 0
        %5611 = vmatmul.mubr.bf16.gmra.mxu0 %v1482
        %v5612 = vpop.f32.mrf.mxu0
        %v5613 = vadd.f32 0.0, %v5612
        %v5614 = vpop.f32.mrf.mxu0
        %v5615 = vadd.f32 0.0, %v5614
        %v5616 = vpop.f32.mrf.mxu0
        %v5617 = vadd.f32 0.0, %v5616
        %v5618 = vpop.f32.mrf.mxu0
        %v5619 = vadd.f32 0.0, %v5618
        %5620 = vmatprep.mubr.bf16.mxu0 0
        %5621 = vmatmul.mubr.bf16.gmra.mxu0 %v1485
        %v5622 = vpop.f32.mrf.mxu0
        %v5623 = vadd.f32 0.0, %v5622
        %v5624 = vpop.f32.mrf.mxu0
        %v5625 = vadd.f32 0.0, %v5624
        %v5626 = vpop.f32.mrf.mxu0
        %v5627 = vadd.f32 0.0, %v5626
        %v5628 = vpop.f32.mrf.mxu0
        %v5629 = vadd.f32 0.0, %v5628
        %5630 = vmatprep.mubr.bf16.mxu0 0
        %5631 = vmatmul.mubr.bf16.gmra.mxu0 %v1488
        %v5632 = vpop.f32.mrf.mxu0
        %v5633 = vadd.f32 0.0, %v5632
        %v5634 = vpop.f32.mrf.mxu0
        %v5635 = vadd.f32 0.0, %v5634
        %v5636 = vpop.f32.mrf.mxu0
        %v5637 = vadd.f32 0.0, %v5636
        %v5638 = vpop.f32.mrf.mxu0
        %v5639 = vadd.f32 0.0, %v5638
        %5640 = vmatprep.mubr.bf16.mxu0 0
        %5641 = vmatmul.mubr.bf16.gmra.mxu0 %v1491
        %v5642 = vpop.f32.mrf.mxu0
        %v5643 = vadd.f32 0.0, %v5642
        %v5644 = vpop.f32.mrf.mxu0
        %v5645 = vadd.f32 0.0, %v5644
        %v5646 = vpop.f32.mrf.mxu0
        %v5647 = vadd.f32 0.0, %v5646
        %v5648 = vpop.f32.mrf.mxu0
        %v5649 = vadd.f32 0.0, %v5648
        %5650 = vmatprep.mubr.bf16.mxu0 0
        %5651 = vmatmul.mubr.bf16.gmra.mxu0 %v1494
        %v5652 = vpop.f32.mrf.mxu0
        %v5653 = vadd.f32 0.0, %v5652
        %v5654 = vpop.f32.mrf.mxu0
        %v5655 = vadd.f32 0.0, %v5654
        %v5656 = vpop.f32.mrf.mxu0
        %v5657 = vadd.f32 0.0, %v5656
        %v5658 = vpop.f32.mrf.mxu0
        %v5659 = vadd.f32 0.0, %v5658
        %5660 = vmatprep.mubr.bf16.mxu0 0
        %5661 = vmatmul.mubr.bf16.gmra.mxu0 %v1497
        %v5662 = vpop.f32.mrf.mxu0
        %v5663 = vadd.f32 0.0, %v5662
        %v5664 = vpop.f32.mrf.mxu0
        %v5665 = vadd.f32 0.0, %v5664
        %v5666 = vpop.f32.mrf.mxu0
        %v5667 = vadd.f32 0.0, %v5666
        %v5668 = vpop.f32.mrf.mxu0
        %v5669 = vadd.f32 0.0, %v5668
        %5670 = vmatprep.mubr.bf16.mxu0 0
        %5671 = vmatmul.mubr.bf16.gmra.mxu0 %v1500
        %v5672 = vpop.f32.mrf.mxu0
        %v5673 = vadd.f32 0.0, %v5672
        %v5674 = vpop.f32.mrf.mxu0
        %v5675 = vadd.f32 0.0, %v5674
        %v5676 = vpop.f32.mrf.mxu0
        %v5677 = vadd.f32 0.0, %v5676
        %v5678 = vpop.f32.mrf.mxu0
        %v5679 = vadd.f32 0.0, %v5678
        %5680 = vmatprep.mubr.bf16.mxu0 0
        %5681 = vmatmul.mubr.bf16.gmra.mxu0 %v1503
        %v5682 = vpop.f32.mrf.mxu0
        %v5683 = vadd.f32 0.0, %v5682
        %v5684 = vpop.f32.mrf.mxu0
        %v5685 = vadd.f32 0.0, %v5684
        %v5686 = vpop.f32.mrf.mxu0
        %v5687 = vadd.f32 0.0, %v5686
        %v5688 = vpop.f32.mrf.mxu0
        %v5689 = vadd.f32 0.0, %v5688
        %5690 = vmatprep.mubr.bf16.mxu0 0
        %5691 = vmatmul.mubr.bf16.gmra.mxu0 %v1506
        %v5692 = vpop.f32.mrf.mxu0
        %v5693 = vadd.f32 0.0, %v5692
        %v5694 = vpop.f32.mrf.mxu0
        %v5695 = vadd.f32 0.0, %v5694
        %v5696 = vpop.f32.mrf.mxu0
        %v5697 = vadd.f32 0.0, %v5696
        %v5698 = vpop.f32.mrf.mxu0
        %v5699 = vadd.f32 0.0, %v5698
        %5700 = vmatprep.mubr.bf16.mxu0 0
        %5701 = vmatmul.mubr.bf16.gmra.mxu0 %v1509
        %v5702 = vpop.f32.mrf.mxu0
        %v5703 = vadd.f32 0.0, %v5702
        %v5704 = vpop.f32.mrf.mxu0
        %v5705 = vadd.f32 0.0, %v5704
        %v5706 = vpop.f32.mrf.mxu0
        %v5707 = vadd.f32 0.0, %v5706
        %v5708 = vpop.f32.mrf.mxu0
        %v5709 = vadd.f32 0.0, %v5708
        %5710 = vmatprep.mubr.bf16.mxu0 0
        %5711 = vmatmul.mubr.bf16.gmra.mxu0 %v1512
        %v5712 = vpop.f32.mrf.mxu0
        %v5713 = vadd.f32 0.0, %v5712
        %v5714 = vpop.f32.mrf.mxu0
        %v5715 = vadd.f32 0.0, %v5714
        %v5716 = vpop.f32.mrf.mxu0
        %v5717 = vadd.f32 0.0, %v5716
        %v5718 = vpop.f32.mrf.mxu0
        %v5719 = vadd.f32 0.0, %v5718
        %5720 = vmatprep.mubr.bf16.mxu0 0
        %5721 = vmatmul.mubr.bf16.gmra.mxu0 %v1515
        %v5722 = vpop.f32.mrf.mxu0
        %v5723 = vadd.f32 0.0, %v5722
        %v5724 = vpop.f32.mrf.mxu0
        %v5725 = vadd.f32 0.0, %v5724
        %v5726 = vpop.f32.mrf.mxu0
        %v5727 = vadd.f32 0.0, %v5726
        %v5728 = vpop.f32.mrf.mxu0
        %v5729 = vadd.f32 0.0, %v5728
        %5730 = vmatprep.mubr.bf16.mxu0 0
        %5731 = vmatmul.mubr.bf16.gmra.mxu0 %v1518
        %v5732 = vpop.f32.mrf.mxu0
        %v5733 = vadd.f32 0.0, %v5732
        %v5734 = vpop.f32.mrf.mxu0
        %v5735 = vadd.f32 0.0, %v5734
        %v5736 = vpop.f32.mrf.mxu0
        %v5737 = vadd.f32 0.0, %v5736
        %v5738 = vpop.f32.mrf.mxu0
        %v5739 = vadd.f32 0.0, %v5738
        %5740 = vmatprep.mubr.bf16.mxu0 0
        %5741 = vmatmul.mubr.bf16.gmra.mxu0 %v1521
        %v5742 = vpop.f32.mrf.mxu0
        %v5743 = vadd.f32 0.0, %v5742
        %v5744 = vpop.f32.mrf.mxu0
        %v5745 = vadd.f32 0.0, %v5744
        %v5746 = vpop.f32.mrf.mxu0
        %v5747 = vadd.f32 0.0, %v5746
        %v5748 = vpop.f32.mrf.mxu0
        %v5749 = vadd.f32 0.0, %v5748
        %5750 = vmatprep.mubr.bf16.mxu0 0
        %5751 = vmatmul.mubr.bf16.gmra.mxu0 %v1524
        %v5752 = vpop.f32.mrf.mxu0
        %v5753 = vadd.f32 0.0, %v5752
        %v5754 = vpop.f32.mrf.mxu0
        %v5755 = vadd.f32 0.0, %v5754
        %v5756 = vpop.f32.mrf.mxu0
        %v5757 = vadd.f32 0.0, %v5756
        %v5758 = vpop.f32.mrf.mxu0
        %v5759 = vadd.f32 0.0, %v5758
        %5760 = vmatprep.mubr.bf16.mxu0 0
        %5761 = vmatmul.mubr.bf16.gmra.mxu0 %v1527
        %v5762 = vpop.f32.mrf.mxu0
        %v5763 = vadd.f32 0.0, %v5762
        %v5764 = vpop.f32.mrf.mxu0
        %v5765 = vadd.f32 0.0, %v5764
        %v5766 = vpop.f32.mrf.mxu0
        %v5767 = vadd.f32 0.0, %v5766
        %v5768 = vpop.f32.mrf.mxu0
        %v5769 = vadd.f32 0.0, %v5768
        %5770 = vmatprep.mubr.bf16.mxu0 0
        %5771 = vmatmul.mubr.bf16.gmra.mxu0 %v1530
        %v5772 = vpop.f32.mrf.mxu0
        %v5773 = vadd.f32 0.0, %v5772
        %v5774 = vpop.f32.mrf.mxu0
        %v5775 = vadd.f32 0.0, %v5774
        %v5776 = vpop.f32.mrf.mxu0
        %v5777 = vadd.f32 0.0, %v5776
        %v5778 = vpop.f32.mrf.mxu0
        %v5779 = vadd.f32 0.0, %v5778
        %5780 = vmatprep.mubr.bf16.mxu0 0
        %5781 = vmatmul.mubr.bf16.gmra.mxu0 %v1533
        %v5782 = vpop.f32.mrf.mxu0
        %v5783 = vadd.f32 0.0, %v5782
        %v5784 = vpop.f32.mrf.mxu0
        %v5785 = vadd.f32 0.0, %v5784
        %v5786 = vpop.f32.mrf.mxu0
        %v5787 = vadd.f32 0.0, %v5786
        %v5788 = vpop.f32.mrf.mxu0
        %v5789 = vadd.f32 0.0, %v5788
        %5790 = vmatprep.mubr.bf16.mxu0 0
        %5791 = vmatmul.mubr.bf16.gmra.mxu0 %v1536
        %v5792 = vpop.f32.mrf.mxu0
        %v5793 = vadd.f32 0.0, %v5792
        %v5794 = vpop.f32.mrf.mxu0
        %v5795 = vadd.f32 0.0, %v5794
        %v5796 = vpop.f32.mrf.mxu0
        %v5797 = vadd.f32 0.0, %v5796
        %v5798 = vpop.f32.mrf.mxu0
        %v5799 = vadd.f32 0.0, %v5798
        %5800 = vmatprep.mubr.bf16.mxu0 0
        %5801 = vmatmul.mubr.bf16.gmra.mxu0 %v1539
        %v5802 = vpop.f32.mrf.mxu0
        %v5803 = vadd.f32 0.0, %v5802
        %v5804 = vpop.f32.mrf.mxu0
        %v5805 = vadd.f32 0.0, %v5804
        %v5806 = vpop.f32.mrf.mxu0
        %v5807 = vadd.f32 0.0, %v5806
        %v5808 = vpop.f32.mrf.mxu0
        %v5809 = vadd.f32 0.0, %v5808
        %5810 = vmatprep.mubr.bf16.mxu0 0
        %5811 = vmatmul.mubr.bf16.gmra.mxu0 %v1542
        %v5812 = vpop.f32.mrf.mxu0
        %v5813 = vadd.f32 0.0, %v5812
        %v5814 = vpop.f32.mrf.mxu0
        %v5815 = vadd.f32 0.0, %v5814
        %v5816 = vpop.f32.mrf.mxu0
        %v5817 = vadd.f32 0.0, %v5816
        %v5818 = vpop.f32.mrf.mxu0
        %v5819 = vadd.f32 0.0, %v5818
        %5820 = vmatprep.mubr.bf16.mxu0 0
        %5821 = vmatmul.mubr.bf16.gmra.mxu0 %v1545
        %v5822 = vpop.f32.mrf.mxu0
        %v5823 = vadd.f32 0.0, %v5822
        %v5824 = vpop.f32.mrf.mxu0
        %v5825 = vadd.f32 0.0, %v5824
        %v5826 = vpop.f32.mrf.mxu0
        %v5827 = vadd.f32 0.0, %v5826
        %v5828 = vpop.f32.mrf.mxu0
        %v5829 = vadd.f32 0.0, %v5828
        %5830 = vmatprep.mubr.bf16.mxu0 0
        %5831 = vmatmul.mubr.bf16.gmra.mxu0 %v1548
        %v5832 = vpop.f32.mrf.mxu0
        %v5833 = vadd.f32 0.0, %v5832
        %v5834 = vpop.f32.mrf.mxu0
        %v5835 = vadd.f32 0.0, %v5834
        %v5836 = vpop.f32.mrf.mxu0
        %v5837 = vadd.f32 0.0, %v5836
        %v5838 = vpop.f32.mrf.mxu0
        %v5839 = vadd.f32 0.0, %v5838
        %5840 = vmatprep.mubr.bf16.mxu0 0
        %5841 = vmatmul.mubr.bf16.gmra.mxu0 %v1551
        %v5842 = vpop.f32.mrf.mxu0
        %v5843 = vadd.f32 0.0, %v5842
        %v5844 = vpop.f32.mrf.mxu0
        %v5845 = vadd.f32 0.0, %v5844
        %v5846 = vpop.f32.mrf.mxu0
        %v5847 = vadd.f32 0.0, %v5846
        %v5848 = vpop.f32.mrf.mxu0
        %v5849 = vadd.f32 0.0, %v5848
        %5850 = vdwg.mxu0
        %v5851 = vpack.c.bf16 %v5537, %v5533
        %v5852 = vpack.c.bf16 %v5539, %v5535
        %v5853 = vpack.c.bf16 %v5547, %v5543
        %v5854 = vpack.c.bf16 %v5549, %v5545
        %v5855 = vpack.c.bf16 %v5557, %v5553
        %v5856 = vpack.c.bf16 %v5559, %v5555
        %v5857 = vpack.c.bf16 %v5567, %v5563
        %v5858 = vpack.c.bf16 %v5569, %v5565
        %v5859 = vpack.c.bf16 %v5577, %v5573
        %v5860 = vpack.c.bf16 %v5579, %v5575
        %v5861 = vpack.c.bf16 %v5587, %v5583
        %v5862 = vpack.c.bf16 %v5589, %v5585
        %v5863 = vpack.c.bf16 %v5597, %v5593
        %v5864 = vpack.c.bf16 %v5599, %v5595
        %v5865 = vpack.c.bf16 %v5607, %v5603
        %v5866 = vpack.c.bf16 %v5609, %v5605
        %v5867 = vpack.c.bf16 %v5617, %v5613
        %v5868 = vpack.c.bf16 %v5619, %v5615
        %v5869 = vpack.c.bf16 %v5627, %v5623
        %v5870 = vpack.c.bf16 %v5629, %v5625
        %v5871 = vpack.c.bf16 %v5637, %v5633
        %v5872 = vpack.c.bf16 %v5639, %v5635
        %v5873 = vpack.c.bf16 %v5647, %v5643
        %v5874 = vpack.c.bf16 %v5649, %v5645
        %v5875 = vpack.c.bf16 %v5657, %v5653
        %v5876 = vpack.c.bf16 %v5659, %v5655
        %v5877 = vpack.c.bf16 %v5667, %v5663
        %v5878 = vpack.c.bf16 %v5669, %v5665
        %v5879 = vpack.c.bf16 %v5677, %v5673
        %v5880 = vpack.c.bf16 %v5679, %v5675
        %v5881 = vpack.c.bf16 %v5687, %v5683
        %v5882 = vpack.c.bf16 %v5689, %v5685
        %v5883 = vpack.c.bf16 %v5697, %v5693
        %v5884 = vpack.c.bf16 %v5699, %v5695
        %v5885 = vpack.c.bf16 %v5707, %v5703
        %v5886 = vpack.c.bf16 %v5709, %v5705
        %v5887 = vpack.c.bf16 %v5717, %v5713
        %v5888 = vpack.c.bf16 %v5719, %v5715
        %v5889 = vpack.c.bf16 %v5727, %v5723
        %v5890 = vpack.c.bf16 %v5729, %v5725
        %v5891 = vpack.c.bf16 %v5737, %v5733
        %v5892 = vpack.c.bf16 %v5739, %v5735
        %v5893 = vpack.c.bf16 %v5747, %v5743
        %v5894 = vpack.c.bf16 %v5749, %v5745
        %v5895 = vpack.c.bf16 %v5757, %v5753
        %v5896 = vpack.c.bf16 %v5759, %v5755
        %v5897 = vpack.c.bf16 %v5767, %v5763
        %v5898 = vpack.c.bf16 %v5769, %v5765
        %v5899 = vpack.c.bf16 %v5777, %v5773
        %v5900 = vpack.c.bf16 %v5779, %v5775
        %v5901 = vpack.c.bf16 %v5787, %v5783
        %v5902 = vpack.c.bf16 %v5789, %v5785
        %v5903 = vpack.c.bf16 %v5797, %v5793
        %v5904 = vpack.c.bf16 %v5799, %v5795
        %v5905 = vpack.c.bf16 %v5807, %v5803
        %v5906 = vpack.c.bf16 %v5809, %v5805
        %v5907 = vpack.c.bf16 %v5817, %v5813
        %v5908 = vpack.c.bf16 %v5819, %v5815
        %v5909 = vpack.c.bf16 %v5827, %v5823
        %v5910 = vpack.c.bf16 %v5829, %v5825
        %v5911 = vpack.c.bf16 %v5837, %v5833
        %v5912 = vpack.c.bf16 %v5839, %v5835
        %v5913 = vpack.c.bf16 %v5847, %v5843
        %v5914 = vpack.c.bf16 %v5849, %v5845
        %v5915 = vld [vmem:[%s4 + $0x6] sm:$0x3]
        %v5918 = vunpack.c.l.s4 1966171168
        %v5919 = vunpack.c.0.s8 %v5918
        %v5920 = vlaneseq
        %v5921 = vshrl.u32 %v5920, 7
        %v5922 = vsub.s32 %v5919, %v5921
        %v5923 = vrot.slane %v5915, %v5922
        %v5924 = vcombine.high %v5923, %v5923
        %v5926 = vunpack.c.l.s4 1966171168
        %v5927 = vunpack.c.0.s8 %v5926
        %v5928 = vlaneseq
        %v5929 = vshrl.u32 %v5928, 7
        %v5930 = vsub.s32 %v5927, %v5929
        %v5931 = vrot.slane %v5923, %v5930
        %v5933 = vunpack.c.l.s4 1966171168
        %v5934 = vunpack.c.0.s8 %v5933
        %v5935 = vlaneseq
        %v5936 = vshrl.u32 %v5935, 7
        %v5937 = vsub.s32 %v5934, %v5936
        %v5938 = vrot.slane %v5924, %v5937
        %v5940 = vpack.i.b16 %v5931, %v5931
        %v5942 = vlaneseq
        %v5943 = vshrl.u32 %v5942, 7
        %v5944 = vsub.s32 0, %v5943
        %v5945 = vrot.slane %v5940, %v5944
        %v5947 = vpack.i.b16 %v5938, %v5938
        %v5949 = vlaneseq
        %v5950 = vshrl.u32 %v5949, 7
        %v5951 = vsub.s32 0, %v5950
        %v5952 = vrot.slane %v5947, %v5951
        %v5953 = vadd.bf16 %v5851, %v5945
        %v5954 = vadd.bf16 %v5852, %v5952
        %v5955 = vadd.bf16 %v5853, %v5945
        %v5956 = vadd.bf16 %v5854, %v5952
        %v5957 = vadd.bf16 %v5855, %v5945
        %v5958 = vadd.bf16 %v5856, %v5952
        %v5959 = vadd.bf16 %v5857, %v5945
        %v5960 = vadd.bf16 %v5858, %v5952
        %v5961 = vadd.bf16 %v5859, %v5945
        %v5962 = vadd.bf16 %v5860, %v5952
        %v5963 = vadd.bf16 %v5861, %v5945
        %v5964 = vadd.bf16 %v5862, %v5952
        %v5965 = vadd.bf16 %v5863, %v5945
        %v5966 = vadd.bf16 %v5864, %v5952
        %v5967 = vadd.bf16 %v5865, %v5945
        %v5968 = vadd.bf16 %v5866, %v5952
        %v5969 = vadd.bf16 %v5867, %v5945
        %v5970 = vadd.bf16 %v5868, %v5952
        %v5971 = vadd.bf16 %v5869, %v5945
        %v5972 = vadd.bf16 %v5870, %v5952
        %v5973 = vadd.bf16 %v5871, %v5945
        %v5974 = vadd.bf16 %v5872, %v5952
        %v5975 = vadd.bf16 %v5873, %v5945
        %v5976 = vadd.bf16 %v5874, %v5952
        %v5977 = vadd.bf16 %v5875, %v5945
        %v5978 = vadd.bf16 %v5876, %v5952
        %v5979 = vadd.bf16 %v5877, %v5945
        %v5980 = vadd.bf16 %v5878, %v5952
        %v5981 = vadd.bf16 %v5879, %v5945
        %v5982 = vadd.bf16 %v5880, %v5952
        %v5983 = vadd.bf16 %v5881, %v5945
        %v5984 = vadd.bf16 %v5882, %v5952
        %v5985 = vadd.bf16 %v5883, %v5945
        %v5986 = vadd.bf16 %v5884, %v5952
        %v5987 = vadd.bf16 %v5885, %v5945
        %v5988 = vadd.bf16 %v5886, %v5952
        %v5989 = vadd.bf16 %v5887, %v5945
        %v5990 = vadd.bf16 %v5888, %v5952
        %v5991 = vadd.bf16 %v5889, %v5945
        %v5992 = vadd.bf16 %v5890, %v5952
        %v5993 = vadd.bf16 %v5891, %v5945
        %v5994 = vadd.bf16 %v5892, %v5952
        %v5995 = vadd.bf16 %v5893, %v5945
        %v5996 = vadd.bf16 %v5894, %v5952
        %v5997 = vadd.bf16 %v5895, %v5945
        %v5998 = vadd.bf16 %v5896, %v5952
        %v5999 = vadd.bf16 %v5897, %v5945
        %v6000 = vadd.bf16 %v5898, %v5952
        %v6001 = vadd.bf16 %v5899, %v5945
        %v6002 = vadd.bf16 %v5900, %v5952
        %v6003 = vadd.bf16 %v5901, %v5945
        %v6004 = vadd.bf16 %v5902, %v5952
        %v6005 = vadd.bf16 %v5903, %v5945
        %v6006 = vadd.bf16 %v5904, %v5952
        %v6007 = vadd.bf16 %v5905, %v5945
        %v6008 = vadd.bf16 %v5906, %v5952
        %v6009 = vadd.bf16 %v5907, %v5945
        %v6010 = vadd.bf16 %v5908, %v5952
        %v6011 = vadd.bf16 %v5909, %v5945
        %v6012 = vadd.bf16 %v5910, %v5952
        %v6013 = vadd.bf16 %v5911, %v5945
        %v6014 = vadd.bf16 %v5912, %v5952
        %v6015 = vadd.bf16 %v5913, %v5945
        %v6016 = vadd.bf16 %v5914, %v5952
        %v6017 = vxor.u32 %v5953, 2147516416
        %v6018 = vxor.u32 %v5954, 2147516416
        %v6019 = vxor.u32 %v5955, 2147516416
        %v6020 = vxor.u32 %v5956, 2147516416
        %v6021 = vxor.u32 %v5957, 2147516416
        %v6022 = vxor.u32 %v5958, 2147516416
        %v6023 = vxor.u32 %v5959, 2147516416
        %v6024 = vxor.u32 %v5960, 2147516416
        %v6025 = vxor.u32 %v5961, 2147516416
        %v6026 = vxor.u32 %v5962, 2147516416
        %v6027 = vxor.u32 %v5963, 2147516416
        %v6028 = vxor.u32 %v5964, 2147516416
        %v6029 = vxor.u32 %v5965, 2147516416
        %v6030 = vxor.u32 %v5966, 2147516416
        %v6031 = vxor.u32 %v5967, 2147516416
        %v6032 = vxor.u32 %v5968, 2147516416
        %v6033 = vxor.u32 %v5969, 2147516416
        %v6034 = vxor.u32 %v5970, 2147516416
        %v6035 = vxor.u32 %v5971, 2147516416
        %v6036 = vxor.u32 %v5972, 2147516416
        %v6037 = vxor.u32 %v5973, 2147516416
        %v6038 = vxor.u32 %v5974, 2147516416
        %v6039 = vxor.u32 %v5975, 2147516416
        %v6040 = vxor.u32 %v5976, 2147516416
        %v6041 = vxor.u32 %v5977, 2147516416
        %v6042 = vxor.u32 %v5978, 2147516416
        %v6043 = vxor.u32 %v5979, 2147516416
        %v6044 = vxor.u32 %v5980, 2147516416
        %v6045 = vxor.u32 %v5981, 2147516416
        %v6046 = vxor.u32 %v5982, 2147516416
        %v6047 = vxor.u32 %v5983, 2147516416
        %v6048 = vxor.u32 %v5984, 2147516416
        %v6049 = vxor.u32 %v5985, 2147516416
        %v6050 = vxor.u32 %v5986, 2147516416
        %v6051 = vxor.u32 %v5987, 2147516416
        %v6052 = vxor.u32 %v5988, 2147516416
        %v6053 = vxor.u32 %v5989, 2147516416
        %v6054 = vxor.u32 %v5990, 2147516416
        %v6055 = vxor.u32 %v5991, 2147516416
        %v6056 = vxor.u32 %v5992, 2147516416
        %v6057 = vxor.u32 %v5993, 2147516416
        %v6058 = vxor.u32 %v5994, 2147516416
        %v6059 = vxor.u32 %v5995, 2147516416
        %v6060 = vxor.u32 %v5996, 2147516416
        %v6061 = vxor.u32 %v5997, 2147516416
        %v6062 = vxor.u32 %v5998, 2147516416
        %v6063 = vxor.u32 %v5999, 2147516416
        %v6064 = vxor.u32 %v6000, 2147516416
        %v6065 = vxor.u32 %v6001, 2147516416
        %v6066 = vxor.u32 %v6002, 2147516416
        %v6067 = vxor.u32 %v6003, 2147516416
        %v6068 = vxor.u32 %v6004, 2147516416
        %v6069 = vxor.u32 %v6005, 2147516416
        %v6070 = vxor.u32 %v6006, 2147516416
        %v6071 = vxor.u32 %v6007, 2147516416
        %v6072 = vxor.u32 %v6008, 2147516416
        %v6073 = vxor.u32 %v6009, 2147516416
        %v6074 = vxor.u32 %v6010, 2147516416
        %v6075 = vxor.u32 %v6011, 2147516416
        %v6076 = vxor.u32 %v6012, 2147516416
        %v6077 = vxor.u32 %v6013, 2147516416
        %v6078 = vxor.u32 %v6014, 2147516416
        %v6079 = vxor.u32 %v6015, 2147516416
        %v6080 = vxor.u32 %v6016, 2147516416
        %v6082 = vmul.bf16 %v6017, 1069105081
        %v6083 = vpow.bf16.pop %v6082
        %v6085 = vmul.bf16 %v6018, 1069105081
        %v6086 = vpow.bf16.pop %v6085
        %v6088 = vmul.bf16 %v6019, 1069105081
        %v6089 = vpow.bf16.pop %v6088
        %v6091 = vmul.bf16 %v6020, 1069105081
        %v6092 = vpow.bf16.pop %v6091
        %v6094 = vmul.bf16 %v6021, 1069105081
        %v6095 = vpow.bf16.pop %v6094
        %v6097 = vmul.bf16 %v6022, 1069105081
        %v6098 = vpow.bf16.pop %v6097
        %v6100 = vmul.bf16 %v6023, 1069105081
        %v6101 = vpow.bf16.pop %v6100
        %v6103 = vmul.bf16 %v6024, 1069105081
        %v6104 = vpow.bf16.pop %v6103
        %v6106 = vmul.bf16 %v6025, 1069105081
        %v6107 = vpow.bf16.pop %v6106
        %v6109 = vmul.bf16 %v6026, 1069105081
        %v6110 = vpow.bf16.pop %v6109
        %v6112 = vmul.bf16 %v6027, 1069105081
        %v6113 = vpow.bf16.pop %v6112
        %v6115 = vmul.bf16 %v6028, 1069105081
        %v6116 = vpow.bf16.pop %v6115
        %v6118 = vmul.bf16 %v6029, 1069105081
        %v6119 = vpow.bf16.pop %v6118
        %v6121 = vmul.bf16 %v6030, 1069105081
        %v6122 = vpow.bf16.pop %v6121
        %v6124 = vmul.bf16 %v6031, 1069105081
        %v6125 = vpow.bf16.pop %v6124
        %v6127 = vmul.bf16 %v6032, 1069105081
        %v6128 = vpow.bf16.pop %v6127
        %v6130 = vmul.bf16 %v6033, 1069105081
        %v6131 = vpow.bf16.pop %v6130
        %v6133 = vmul.bf16 %v6034, 1069105081
        %v6134 = vpow.bf16.pop %v6133
        %v6136 = vmul.bf16 %v6035, 1069105081
        %v6137 = vpow.bf16.pop %v6136
        %v6139 = vmul.bf16 %v6036, 1069105081
        %v6140 = vpow.bf16.pop %v6139
        %v6142 = vmul.bf16 %v6037, 1069105081
        %v6143 = vpow.bf16.pop %v6142
        %v6145 = vmul.bf16 %v6038, 1069105081
        %v6146 = vpow.bf16.pop %v6145
        %v6148 = vmul.bf16 %v6039, 1069105081
        %v6149 = vpow.bf16.pop %v6148
        %v6151 = vmul.bf16 %v6040, 1069105081
        %v6152 = vpow.bf16.pop %v6151
        %v6154 = vmul.bf16 %v6041, 1069105081
        %v6155 = vpow.bf16.pop %v6154
        %v6157 = vmul.bf16 %v6042, 1069105081
        %v6158 = vpow.bf16.pop %v6157
        %v6160 = vmul.bf16 %v6043, 1069105081
        %v6161 = vpow.bf16.pop %v6160
        %v6163 = vmul.bf16 %v6044, 1069105081
        %v6164 = vpow.bf16.pop %v6163
        %v6166 = vmul.bf16 %v6045, 1069105081
        %v6167 = vpow.bf16.pop %v6166
        %v6169 = vmul.bf16 %v6046, 1069105081
        %v6170 = vpow.bf16.pop %v6169
        %v6172 = vmul.bf16 %v6047, 1069105081
        %v6173 = vpow.bf16.pop %v6172
        %v6175 = vmul.bf16 %v6048, 1069105081
        %v6176 = vpow.bf16.pop %v6175
        %v6178 = vmul.bf16 %v6049, 1069105081
        %v6179 = vpow.bf16.pop %v6178
        %v6181 = vmul.bf16 %v6050, 1069105081
        %v6182 = vpow.bf16.pop %v6181
        %v6184 = vmul.bf16 %v6051, 1069105081
        %v6185 = vpow.bf16.pop %v6184
        %v6187 = vmul.bf16 %v6052, 1069105081
        %v6188 = vpow.bf16.pop %v6187
        %v6190 = vmul.bf16 %v6053, 1069105081
        %v6191 = vpow.bf16.pop %v6190
        %v6193 = vmul.bf16 %v6054, 1069105081
        %v6194 = vpow.bf16.pop %v6193
        %v6196 = vmul.bf16 %v6055, 1069105081
        %v6197 = vpow.bf16.pop %v6196
        %v6199 = vmul.bf16 %v6056, 1069105081
        %v6200 = vpow.bf16.pop %v6199
        %v6202 = vmul.bf16 %v6057, 1069105081
        %v6203 = vpow.bf16.pop %v6202
        %v6205 = vmul.bf16 %v6058, 1069105081
        %v6206 = vpow.bf16.pop %v6205
        %v6208 = vmul.bf16 %v6059, 1069105081
        %v6209 = vpow.bf16.pop %v6208
        %v6211 = vmul.bf16 %v6060, 1069105081
        %v6212 = vpow.bf16.pop %v6211
        %v6214 = vmul.bf16 %v6061, 1069105081
        %v6215 = vpow.bf16.pop %v6214
        %v6217 = vmul.bf16 %v6062, 1069105081
        %v6218 = vpow.bf16.pop %v6217
        %v6220 = vmul.bf16 %v6063, 1069105081
        %v6221 = vpow.bf16.pop %v6220
        %v6223 = vmul.bf16 %v6064, 1069105081
        %v6224 = vpow.bf16.pop %v6223
        %v6226 = vmul.bf16 %v6065, 1069105081
        %v6227 = vpow.bf16.pop %v6226
        %v6229 = vmul.bf16 %v6066, 1069105081
        %v6230 = vpow.bf16.pop %v6229
        %v6232 = vmul.bf16 %v6067, 1069105081
        %v6233 = vpow.bf16.pop %v6232
        %v6235 = vmul.bf16 %v6068, 1069105081
        %v6236 = vpow.bf16.pop %v6235
        %v6238 = vmul.bf16 %v6069, 1069105081
        %v6239 = vpow.bf16.pop %v6238
        %v6241 = vmul.bf16 %v6070, 1069105081
        %v6242 = vpow.bf16.pop %v6241
        %v6244 = vmul.bf16 %v6071, 1069105081
        %v6245 = vpow.bf16.pop %v6244
        %v6247 = vmul.bf16 %v6072, 1069105081
        %v6248 = vpow.bf16.pop %v6247
        %v6250 = vmul.bf16 %v6073, 1069105081
        %v6251 = vpow.bf16.pop %v6250
        %v6253 = vmul.bf16 %v6074, 1069105081
        %v6254 = vpow.bf16.pop %v6253
        %v6256 = vmul.bf16 %v6075, 1069105081
        %v6257 = vpow.bf16.pop %v6256
        %v6259 = vmul.bf16 %v6076, 1069105081
        %v6260 = vpow.bf16.pop %v6259
        %v6262 = vmul.bf16 %v6077, 1069105081
        %v6263 = vpow.bf16.pop %v6262
        %v6265 = vmul.bf16 %v6078, 1069105081
        %v6266 = vpow.bf16.pop %v6265
        %v6268 = vmul.bf16 %v6079, 1069105081
        %v6269 = vpow.bf16.pop %v6268
        %v6271 = vmul.bf16 %v6080, 1069105081
        %v6272 = vpow.bf16.pop %v6271
        %v6273 = vadd.bf16 %v6083, 1065369472
        %v6274 = vadd.bf16 %v6086, 1065369472
        %v6275 = vadd.bf16 %v6089, 1065369472
        %v6276 = vadd.bf16 %v6092, 1065369472
        %v6277 = vadd.bf16 %v6095, 1065369472
        %v6278 = vadd.bf16 %v6098, 1065369472
        %v6279 = vadd.bf16 %v6101, 1065369472
        %v6280 = vadd.bf16 %v6104, 1065369472
        %v6281 = vadd.bf16 %v6107, 1065369472
        %v6282 = vadd.bf16 %v6110, 1065369472
        %v6283 = vadd.bf16 %v6113, 1065369472
        %v6284 = vadd.bf16 %v6116, 1065369472
        %v6285 = vadd.bf16 %v6119, 1065369472
        %v6286 = vadd.bf16 %v6122, 1065369472
        %v6287 = vadd.bf16 %v6125, 1065369472
        %v6288 = vadd.bf16 %v6128, 1065369472
        %v6289 = vadd.bf16 %v6131, 1065369472
        %v6290 = vadd.bf16 %v6134, 1065369472
        %v6291 = vadd.bf16 %v6137, 1065369472
        %v6292 = vadd.bf16 %v6140, 1065369472
        %v6293 = vadd.bf16 %v6143, 1065369472
        %v6294 = vadd.bf16 %v6146, 1065369472
        %v6295 = vadd.bf16 %v6149, 1065369472
        %v6296 = vadd.bf16 %v6152, 1065369472
        %v6297 = vadd.bf16 %v6155, 1065369472
        %v6298 = vadd.bf16 %v6158, 1065369472
        %v6299 = vadd.bf16 %v6161, 1065369472
        %v6300 = vadd.bf16 %v6164, 1065369472
        %v6301 = vadd.bf16 %v6167, 1065369472
        %v6302 = vadd.bf16 %v6170, 1065369472
        %v6303 = vadd.bf16 %v6173, 1065369472
        %v6304 = vadd.bf16 %v6176, 1065369472
        %v6305 = vadd.bf16 %v6179, 1065369472
        %v6306 = vadd.bf16 %v6182, 1065369472
        %v6307 = vadd.bf16 %v6185, 1065369472
        %v6308 = vadd.bf16 %v6188, 1065369472
        %v6309 = vadd.bf16 %v6191, 1065369472
        %v6310 = vadd.bf16 %v6194, 1065369472
        %v6311 = vadd.bf16 %v6197, 1065369472
        %v6312 = vadd.bf16 %v6200, 1065369472
        %v6313 = vadd.bf16 %v6203, 1065369472
        %v6314 = vadd.bf16 %v6206, 1065369472
        %v6315 = vadd.bf16 %v6209, 1065369472
        %v6316 = vadd.bf16 %v6212, 1065369472
        %v6317 = vadd.bf16 %v6215, 1065369472
        %v6318 = vadd.bf16 %v6218, 1065369472
        %v6319 = vadd.bf16 %v6221, 1065369472
        %v6320 = vadd.bf16 %v6224, 1065369472
        %v6321 = vadd.bf16 %v6227, 1065369472
        %v6322 = vadd.bf16 %v6230, 1065369472
        %v6323 = vadd.bf16 %v6233, 1065369472
        %v6324 = vadd.bf16 %v6236, 1065369472
        %v6325 = vadd.bf16 %v6239, 1065369472
        %v6326 = vadd.bf16 %v6242, 1065369472
        %v6327 = vadd.bf16 %v6245, 1065369472
        %v6328 = vadd.bf16 %v6248, 1065369472
        %v6329 = vadd.bf16 %v6251, 1065369472
        %v6330 = vadd.bf16 %v6254, 1065369472
        %v6331 = vadd.bf16 %v6257, 1065369472
        %v6332 = vadd.bf16 %v6260, 1065369472
        %v6333 = vadd.bf16 %v6263, 1065369472
        %v6334 = vadd.bf16 %v6266, 1065369472
        %v6335 = vadd.bf16 %v6269, 1065369472
        %v6336 = vadd.bf16 %v6272, 1065369472
        %v6337 = vrcp.bf16.pop %v6273
        %v6338 = vmul.bf16 1065369472, %v6337
        %v6339 = vrcp.bf16.pop %v6274
        %v6340 = vmul.bf16 1065369472, %v6339
        %v6341 = vrcp.bf16.pop %v6275
        %v6342 = vmul.bf16 1065369472, %v6341
        %v6343 = vrcp.bf16.pop %v6276
        %v6344 = vmul.bf16 1065369472, %v6343
        %v6345 = vrcp.bf16.pop %v6277
        %v6346 = vmul.bf16 1065369472, %v6345
        %v6347 = vrcp.bf16.pop %v6278
        %v6348 = vmul.bf16 1065369472, %v6347
        %v6349 = vrcp.bf16.pop %v6279
        %v6350 = vmul.bf16 1065369472, %v6349
        %v6351 = vrcp.bf16.pop %v6280
        %v6352 = vmul.bf16 1065369472, %v6351
        %v6353 = vrcp.bf16.pop %v6281
        %v6354 = vmul.bf16 1065369472, %v6353
        %v6355 = vrcp.bf16.pop %v6282
        %v6356 = vmul.bf16 1065369472, %v6355
        %v6357 = vrcp.bf16.pop %v6283
        %v6358 = vmul.bf16 1065369472, %v6357
        %v6359 = vrcp.bf16.pop %v6284
        %v6360 = vmul.bf16 1065369472, %v6359
        %v6361 = vrcp.bf16.pop %v6285
        %v6362 = vmul.bf16 1065369472, %v6361
        %v6363 = vrcp.bf16.pop %v6286
        %v6364 = vmul.bf16 1065369472, %v6363
        %v6365 = vrcp.bf16.pop %v6287
        %v6366 = vmul.bf16 1065369472, %v6365
        %v6367 = vrcp.bf16.pop %v6288
        %v6368 = vmul.bf16 1065369472, %v6367
        %v6369 = vrcp.bf16.pop %v6289
        %v6370 = vmul.bf16 1065369472, %v6369
        %v6371 = vrcp.bf16.pop %v6290
        %v6372 = vmul.bf16 1065369472, %v6371
        %v6373 = vrcp.bf16.pop %v6291
        %v6374 = vmul.bf16 1065369472, %v6373
        %v6375 = vrcp.bf16.pop %v6292
        %v6376 = vmul.bf16 1065369472, %v6375
        %v6377 = vrcp.bf16.pop %v6293
        %v6378 = vmul.bf16 1065369472, %v6377
        %v6379 = vrcp.bf16.pop %v6294
        %v6380 = vmul.bf16 1065369472, %v6379
        %v6381 = vrcp.bf16.pop %v6295
        %v6382 = vmul.bf16 1065369472, %v6381
        %v6383 = vrcp.bf16.pop %v6296
        %v6384 = vmul.bf16 1065369472, %v6383
        %v6385 = vrcp.bf16.pop %v6297
        %v6386 = vmul.bf16 1065369472, %v6385
        %v6387 = vrcp.bf16.pop %v6298
        %v6388 = vmul.bf16 1065369472, %v6387
        %v6389 = vrcp.bf16.pop %v6299
        %v6390 = vmul.bf16 1065369472, %v6389
        %v6391 = vrcp.bf16.pop %v6300
        %v6392 = vmul.bf16 1065369472, %v6391
        %v6393 = vrcp.bf16.pop %v6301
        %v6394 = vmul.bf16 1065369472, %v6393
        %v6395 = vrcp.bf16.pop %v6302
        %v6396 = vmul.bf16 1065369472, %v6395
        %v6397 = vrcp.bf16.pop %v6303
        %v6398 = vmul.bf16 1065369472, %v6397
        %v6399 = vrcp.bf16.pop %v6304
        %v6400 = vmul.bf16 1065369472, %v6399
        %v6401 = vrcp.bf16.pop %v6305
        %v6402 = vmul.bf16 1065369472, %v6401
        %v6403 = vrcp.bf16.pop %v6306
        %v6404 = vmul.bf16 1065369472, %v6403
        %v6405 = vrcp.bf16.pop %v6307
        %v6406 = vmul.bf16 1065369472, %v6405
        %v6407 = vrcp.bf16.pop %v6308
        %v6408 = vmul.bf16 1065369472, %v6407
        %v6409 = vrcp.bf16.pop %v6309
        %v6410 = vmul.bf16 1065369472, %v6409
        %v6411 = vrcp.bf16.pop %v6310
        %v6412 = vmul.bf16 1065369472, %v6411
        %v6413 = vrcp.bf16.pop %v6311
        %v6414 = vmul.bf16 1065369472, %v6413
        %v6415 = vrcp.bf16.pop %v6312
        %v6416 = vmul.bf16 1065369472, %v6415
        %v6417 = vrcp.bf16.pop %v6313
        %v6418 = vmul.bf16 1065369472, %v6417
        %v6419 = vrcp.bf16.pop %v6314
        %v6420 = vmul.bf16 1065369472, %v6419
        %v6421 = vrcp.bf16.pop %v6315
        %v6422 = vmul.bf16 1065369472, %v6421
        %v6423 = vrcp.bf16.pop %v6316
        %v6424 = vmul.bf16 1065369472, %v6423
        %v6425 = vrcp.bf16.pop %v6317
        %v6426 = vmul.bf16 1065369472, %v6425
        %v6427 = vrcp.bf16.pop %v6318
        %v6428 = vmul.bf16 1065369472, %v6427
        %v6429 = vrcp.bf16.pop %v6319
        %v6430 = vmul.bf16 1065369472, %v6429
        %v6431 = vrcp.bf16.pop %v6320
        %v6432 = vmul.bf16 1065369472, %v6431
        %v6433 = vrcp.bf16.pop %v6321
        %v6434 = vmul.bf16 1065369472, %v6433
        %v6435 = vrcp.bf16.pop %v6322
        %v6436 = vmul.bf16 1065369472, %v6435
        %v6437 = vrcp.bf16.pop %v6323
        %v6438 = vmul.bf16 1065369472, %v6437
        %v6439 = vrcp.bf16.pop %v6324
        %v6440 = vmul.bf16 1065369472, %v6439
        %v6441 = vrcp.bf16.pop %v6325
        %v6442 = vmul.bf16 1065369472, %v6441
        %v6443 = vrcp.bf16.pop %v6326
        %v6444 = vmul.bf16 1065369472, %v6443
        %v6445 = vrcp.bf16.pop %v6327
        %v6446 = vmul.bf16 1065369472, %v6445
        %v6447 = vrcp.bf16.pop %v6328
        %v6448 = vmul.bf16 1065369472, %v6447
        %v6449 = vrcp.bf16.pop %v6329
        %v6450 = vmul.bf16 1065369472, %v6449
        %v6451 = vrcp.bf16.pop %v6330
        %v6452 = vmul.bf16 1065369472, %v6451
        %v6453 = vrcp.bf16.pop %v6331
        %v6454 = vmul.bf16 1065369472, %v6453
        %v6455 = vrcp.bf16.pop %v6332
        %v6456 = vmul.bf16 1065369472, %v6455
        %v6457 = vrcp.bf16.pop %v6333
        %v6458 = vmul.bf16 1065369472, %v6457
        %v6459 = vrcp.bf16.pop %v6334
        %v6460 = vmul.bf16 1065369472, %v6459
        %v6461 = vrcp.bf16.pop %v6335
        %v6462 = vmul.bf16 1065369472, %v6461
        %v6463 = vrcp.bf16.pop %v6336
        %v6464 = vmul.bf16 1065369472, %v6463
        %v6465 = vmul.bf16 %v5953, %v6338
        %v6466 = vmul.bf16 %v5954, %v6340
        %v6467 = vmul.bf16 %v5955, %v6342
        %v6468 = vmul.bf16 %v5956, %v6344
        %v6469 = vmul.bf16 %v5957, %v6346
        %v6470 = vmul.bf16 %v5958, %v6348
        %v6471 = vmul.bf16 %v5959, %v6350
        %v6472 = vmul.bf16 %v5960, %v6352
        %v6473 = vmul.bf16 %v5961, %v6354
        %v6474 = vmul.bf16 %v5962, %v6356
        %v6475 = vmul.bf16 %v5963, %v6358
        %v6476 = vmul.bf16 %v5964, %v6360
        %v6477 = vmul.bf16 %v5965, %v6362
        %v6478 = vmul.bf16 %v5966, %v6364
        %v6479 = vmul.bf16 %v5967, %v6366
        %v6480 = vmul.bf16 %v5968, %v6368
        %v6481 = vmul.bf16 %v5969, %v6370
        %v6482 = vmul.bf16 %v5970, %v6372
        %v6483 = vmul.bf16 %v5971, %v6374
        %v6484 = vmul.bf16 %v5972, %v6376
        %v6485 = vmul.bf16 %v5973, %v6378
        %v6486 = vmul.bf16 %v5974, %v6380
        %v6487 = vmul.bf16 %v5975, %v6382
        %v6488 = vmul.bf16 %v5976, %v6384
        %v6489 = vmul.bf16 %v5977, %v6386
        %v6490 = vmul.bf16 %v5978, %v6388
        %v6491 = vmul.bf16 %v5979, %v6390
        %v6492 = vmul.bf16 %v5980, %v6392
        %v6493 = vmul.bf16 %v5981, %v6394
        %v6494 = vmul.bf16 %v5982, %v6396
        %v6495 = vmul.bf16 %v5983, %v6398
        %v6496 = vmul.bf16 %v5984, %v6400
        %v6497 = vmul.bf16 %v5985, %v6402
        %v6498 = vmul.bf16 %v5986, %v6404
        %v6499 = vmul.bf16 %v5987, %v6406
        %v6500 = vmul.bf16 %v5988, %v6408
        %v6501 = vmul.bf16 %v5989, %v6410
        %v6502 = vmul.bf16 %v5990, %v6412
        %v6503 = vmul.bf16 %v5991, %v6414
        %v6504 = vmul.bf16 %v5992, %v6416
        %v6505 = vmul.bf16 %v5993, %v6418
        %v6506 = vmul.bf16 %v5994, %v6420
        %v6507 = vmul.bf16 %v5995, %v6422
        %v6508 = vmul.bf16 %v5996, %v6424
        %v6509 = vmul.bf16 %v5997, %v6426
        %v6510 = vmul.bf16 %v5998, %v6428
        %v6511 = vmul.bf16 %v5999, %v6430
        %v6512 = vmul.bf16 %v6000, %v6432
        %v6513 = vmul.bf16 %v6001, %v6434
        %v6514 = vmul.bf16 %v6002, %v6436
        %v6515 = vmul.bf16 %v6003, %v6438
        %v6516 = vmul.bf16 %v6004, %v6440
        %v6517 = vmul.bf16 %v6005, %v6442
        %v6518 = vmul.bf16 %v6006, %v6444
        %v6519 = vmul.bf16 %v6007, %v6446
        %v6520 = vmul.bf16 %v6008, %v6448
        %v6521 = vmul.bf16 %v6009, %v6450
        %v6522 = vmul.bf16 %v6010, %v6452
        %v6523 = vmul.bf16 %v6011, %v6454
        %v6524 = vmul.bf16 %v6012, %v6456
        %v6525 = vmul.bf16 %v6013, %v6458
        %v6526 = vmul.bf16 %v6014, %v6460
        %v6527 = vmul.bf16 %v6015, %v6462
        %v6528 = vmul.bf16 %v6016, %v6464
        %v6529 = vunpack.c.l.bf16 %v6465
        %v6530 = vunpack.c.l.bf16 %v6466
        %v6531 = vunpack.c.h.bf16 %v6465
        %v6532 = vunpack.c.h.bf16 %v6466
        %v6533 = vunpack.c.l.bf16 %v6467
        %v6534 = vunpack.c.l.bf16 %v6468
        %v6535 = vunpack.c.h.bf16 %v6467
        %v6536 = vunpack.c.h.bf16 %v6468
        %v6537 = vunpack.c.l.bf16 %v6469
        %v6538 = vunpack.c.l.bf16 %v6470
        %v6539 = vunpack.c.h.bf16 %v6469
        %v6540 = vunpack.c.h.bf16 %v6470
        %v6541 = vunpack.c.l.bf16 %v6471
        %v6542 = vunpack.c.l.bf16 %v6472
        %v6543 = vunpack.c.h.bf16 %v6471
        %v6544 = vunpack.c.h.bf16 %v6472
        %v6545 = vunpack.c.l.bf16 %v6473
        %v6546 = vunpack.c.l.bf16 %v6474
        %v6547 = vunpack.c.h.bf16 %v6473
        %v6548 = vunpack.c.h.bf16 %v6474
        %v6549 = vunpack.c.l.bf16 %v6475
        %v6550 = vunpack.c.l.bf16 %v6476
        %v6551 = vunpack.c.h.bf16 %v6475
        %v6552 = vunpack.c.h.bf16 %v6476
        %v6553 = vunpack.c.l.bf16 %v6477
        %v6554 = vunpack.c.l.bf16 %v6478
        %v6555 = vunpack.c.h.bf16 %v6477
        %v6556 = vunpack.c.h.bf16 %v6478
        %v6557 = vunpack.c.l.bf16 %v6479
        %v6558 = vunpack.c.l.bf16 %v6480
        %v6559 = vunpack.c.h.bf16 %v6479
        %v6560 = vunpack.c.h.bf16 %v6480
        %v6561 = vunpack.c.l.bf16 %v6481
        %v6562 = vunpack.c.l.bf16 %v6482
        %v6563 = vunpack.c.h.bf16 %v6481
        %v6564 = vunpack.c.h.bf16 %v6482
        %v6565 = vunpack.c.l.bf16 %v6483
        %v6566 = vunpack.c.l.bf16 %v6484
        %v6567 = vunpack.c.h.bf16 %v6483
        %v6568 = vunpack.c.h.bf16 %v6484
        %v6569 = vunpack.c.l.bf16 %v6485
        %v6570 = vunpack.c.l.bf16 %v6486
        %v6571 = vunpack.c.h.bf16 %v6485
        %v6572 = vunpack.c.h.bf16 %v6486
        %v6573 = vunpack.c.l.bf16 %v6487
        %v6574 = vunpack.c.l.bf16 %v6488
        %v6575 = vunpack.c.h.bf16 %v6487
        %v6576 = vunpack.c.h.bf16 %v6488
        %v6577 = vunpack.c.l.bf16 %v6489
        %v6578 = vunpack.c.l.bf16 %v6490
        %v6579 = vunpack.c.h.bf16 %v6489
        %v6580 = vunpack.c.h.bf16 %v6490
        %v6581 = vunpack.c.l.bf16 %v6491
        %v6582 = vunpack.c.l.bf16 %v6492
        %v6583 = vunpack.c.h.bf16 %v6491
        %v6584 = vunpack.c.h.bf16 %v6492
        %v6585 = vunpack.c.l.bf16 %v6493
        %v6586 = vunpack.c.l.bf16 %v6494
        %v6587 = vunpack.c.h.bf16 %v6493
        %v6588 = vunpack.c.h.bf16 %v6494
        %v6589 = vunpack.c.l.bf16 %v6495
        %v6590 = vunpack.c.l.bf16 %v6496
        %v6591 = vunpack.c.h.bf16 %v6495
        %v6592 = vunpack.c.h.bf16 %v6496
        %v6593 = vunpack.c.l.bf16 %v6497
        %v6594 = vunpack.c.l.bf16 %v6498
        %v6595 = vunpack.c.h.bf16 %v6497
        %v6596 = vunpack.c.h.bf16 %v6498
        %v6597 = vunpack.c.l.bf16 %v6499
        %v6598 = vunpack.c.l.bf16 %v6500
        %v6599 = vunpack.c.h.bf16 %v6499
        %v6600 = vunpack.c.h.bf16 %v6500
        %v6601 = vunpack.c.l.bf16 %v6501
        %v6602 = vunpack.c.l.bf16 %v6502
        %v6603 = vunpack.c.h.bf16 %v6501
        %v6604 = vunpack.c.h.bf16 %v6502
        %v6605 = vunpack.c.l.bf16 %v6503
        %v6606 = vunpack.c.l.bf16 %v6504
        %v6607 = vunpack.c.h.bf16 %v6503
        %v6608 = vunpack.c.h.bf16 %v6504
        %v6609 = vunpack.c.l.bf16 %v6505
        %v6610 = vunpack.c.l.bf16 %v6506
        %v6611 = vunpack.c.h.bf16 %v6505
        %v6612 = vunpack.c.h.bf16 %v6506
        %v6613 = vunpack.c.l.bf16 %v6507
        %v6614 = vunpack.c.l.bf16 %v6508
        %v6615 = vunpack.c.h.bf16 %v6507
        %v6616 = vunpack.c.h.bf16 %v6508
        %v6617 = vunpack.c.l.bf16 %v6509
        %v6618 = vunpack.c.l.bf16 %v6510
        %v6619 = vunpack.c.h.bf16 %v6509
        %v6620 = vunpack.c.h.bf16 %v6510
        %v6621 = vunpack.c.l.bf16 %v6511
        %v6622 = vunpack.c.l.bf16 %v6512
        %v6623 = vunpack.c.h.bf16 %v6511
        %v6624 = vunpack.c.h.bf16 %v6512
        %v6625 = vunpack.c.l.bf16 %v6513
        %v6626 = vunpack.c.l.bf16 %v6514
        %v6627 = vunpack.c.h.bf16 %v6513
        %v6628 = vunpack.c.h.bf16 %v6514
        %v6629 = vunpack.c.l.bf16 %v6515
        %v6630 = vunpack.c.l.bf16 %v6516
        %v6631 = vunpack.c.h.bf16 %v6515
        %v6632 = vunpack.c.h.bf16 %v6516
        %v6633 = vunpack.c.l.bf16 %v6517
        %v6634 = vunpack.c.l.bf16 %v6518
        %v6635 = vunpack.c.h.bf16 %v6517
        %v6636 = vunpack.c.h.bf16 %v6518
        %v6637 = vunpack.c.l.bf16 %v6519
        %v6638 = vunpack.c.l.bf16 %v6520
        %v6639 = vunpack.c.h.bf16 %v6519
        %v6640 = vunpack.c.h.bf16 %v6520
        %v6641 = vunpack.c.l.bf16 %v6521
        %v6642 = vunpack.c.l.bf16 %v6522
        %v6643 = vunpack.c.h.bf16 %v6521
        %v6644 = vunpack.c.h.bf16 %v6522
        %v6645 = vunpack.c.l.bf16 %v6523
        %v6646 = vunpack.c.l.bf16 %v6524
        %v6647 = vunpack.c.h.bf16 %v6523
        %v6648 = vunpack.c.h.bf16 %v6524
        %v6649 = vunpack.c.l.bf16 %v6525
        %v6650 = vunpack.c.l.bf16 %v6526
        %v6651 = vunpack.c.h.bf16 %v6525
        %v6652 = vunpack.c.h.bf16 %v6526
        %v6653 = vunpack.c.l.bf16 %v6527
        %v6654 = vunpack.c.l.bf16 %v6528
        %v6655 = vunpack.c.h.bf16 %v6527
        %v6656 = vunpack.c.h.bf16 %v6528
        %v6657 = vld [vmem:[#allocation2 + $0x30] sm:$0xff]
        %v6658 = vld [vmem:[#allocation2 + $0x38] sm:$0xff]
        %v6659 = vadd.f32 %v6529, %v6531
        %v6660 = vadd.f32 %v6659, %v6533
        %v6661 = vadd.f32 %v6660, %v6535
        %v6662 = vadd.f32 %v6661, %v6537
        %v6663 = vadd.f32 %v6662, %v6539
        %v6664 = vadd.f32 %v6663, %v6541
        %v6665 = vadd.f32 %v6664, %v6543
        %v6666 = vadd.f32 %v6665, %v6545
        %v6667 = vadd.f32 %v6666, %v6547
        %v6668 = vadd.f32 %v6667, %v6549
        %v6669 = vadd.f32 %v6668, %v6551
        %v6670 = vadd.f32 %v6669, %v6553
        %v6671 = vadd.f32 %v6670, %v6555
        %v6672 = vadd.f32 %v6671, %v6557
        %v6673 = vadd.f32 %v6672, %v6559
        %v6674 = vadd.f32 %v6673, %v6561
        %v6675 = vadd.f32 %v6674, %v6563
        %v6676 = vadd.f32 %v6675, %v6565
        %v6677 = vadd.f32 %v6676, %v6567
        %v6678 = vadd.f32 %v6677, %v6569
        %v6679 = vadd.f32 %v6678, %v6571
        %v6680 = vadd.f32 %v6679, %v6573
        %v6681 = vadd.f32 %v6680, %v6575
        %v6682 = vadd.f32 %v6681, %v6577
        %v6683 = vadd.f32 %v6682, %v6579
        %v6684 = vadd.f32 %v6683, %v6581
        %v6685 = vadd.f32 %v6684, %v6583
        %v6686 = vadd.f32 %v6685, %v6585
        %v6687 = vadd.f32 %v6686, %v6587
        %v6688 = vadd.f32 %v6687, %v6589
        %v6689 = vadd.f32 %v6688, %v6591
        %v6690 = vadd.f32 %v6689, %v6593
        %v6691 = vadd.f32 %v6690, %v6595
        %v6692 = vadd.f32 %v6691, %v6597
        %v6693 = vadd.f32 %v6692, %v6599
        %v6694 = vadd.f32 %v6693, %v6601
        %v6695 = vadd.f32 %v6694, %v6603
        %v6696 = vadd.f32 %v6695, %v6605
        %v6697 = vadd.f32 %v6696, %v6607
        %v6698 = vadd.f32 %v6697, %v6609
        %v6699 = vadd.f32 %v6698, %v6611
        %v6700 = vadd.f32 %v6699, %v6613
        %v6701 = vadd.f32 %v6700, %v6615
        %v6702 = vadd.f32 %v6701, %v6617
        %v6703 = vadd.f32 %v6702, %v6619
        %v6704 = vadd.f32 %v6703, %v6621
        %v6705 = vadd.f32 %v6704, %v6623
        %v6706 = vadd.f32 %v6705, %v6625
        %v6707 = vadd.f32 %v6706, %v6627
        %v6708 = vadd.f32 %v6707, %v6629
        %v6709 = vadd.f32 %v6708, %v6631
        %v6710 = vadd.f32 %v6709, %v6633
        %v6711 = vadd.f32 %v6710, %v6635
        %v6712 = vadd.f32 %v6711, %v6637
        %v6713 = vadd.f32 %v6712, %v6639
        %v6714 = vadd.f32 %v6713, %v6641
        %v6715 = vadd.f32 %v6714, %v6643
        %v6716 = vadd.f32 %v6715, %v6645
        %v6717 = vadd.f32 %v6716, %v6647
        %v6718 = vadd.f32 %v6717, %v6649
        %v6719 = vadd.f32 %v6718, %v6651
        %v6720 = vadd.f32 %v6719, %v6653
        %v6721 = vadd.f32 %v6720, %v6655
        %v6722 = vadd.f32 %v6530, %v6532
        %v6723 = vadd.f32 %v6722, %v6534
        %v6724 = vadd.f32 %v6723, %v6536
        %v6725 = vadd.f32 %v6724, %v6538
        %v6726 = vadd.f32 %v6725, %v6540
        %v6727 = vadd.f32 %v6726, %v6542
        %v6728 = vadd.f32 %v6727, %v6544
        %v6729 = vadd.f32 %v6728, %v6546
        %v6730 = vadd.f32 %v6729, %v6548
        %v6731 = vadd.f32 %v6730, %v6550
        %v6732 = vadd.f32 %v6731, %v6552
        %v6733 = vadd.f32 %v6732, %v6554
        %v6734 = vadd.f32 %v6733, %v6556
        %v6735 = vadd.f32 %v6734, %v6558
        %v6736 = vadd.f32 %v6735, %v6560
        %v6737 = vadd.f32 %v6736, %v6562
        %v6738 = vadd.f32 %v6737, %v6564
        %v6739 = vadd.f32 %v6738, %v6566
        %v6740 = vadd.f32 %v6739, %v6568
        %v6741 = vadd.f32 %v6740, %v6570
        %v6742 = vadd.f32 %v6741, %v6572
        %v6743 = vadd.f32 %v6742, %v6574
        %v6744 = vadd.f32 %v6743, %v6576
        %v6745 = vadd.f32 %v6744, %v6578
        %v6746 = vadd.f32 %v6745, %v6580
        %v6747 = vadd.f32 %v6746, %v6582
        %v6748 = vadd.f32 %v6747, %v6584
        %v6749 = vadd.f32 %v6748, %v6586
        %v6750 = vadd.f32 %v6749, %v6588
        %v6751 = vadd.f32 %v6750, %v6590
        %v6752 = vadd.f32 %v6751, %v6592
        %v6753 = vadd.f32 %v6752, %v6594
        %v6754 = vadd.f32 %v6753, %v6596
        %v6755 = vadd.f32 %v6754, %v6598
        %v6756 = vadd.f32 %v6755, %v6600
        %v6757 = vadd.f32 %v6756, %v6602
        %v6758 = vadd.f32 %v6757, %v6604
        %v6759 = vadd.f32 %v6758, %v6606
        %v6760 = vadd.f32 %v6759, %v6608
        %v6761 = vadd.f32 %v6760, %v6610
        %v6762 = vadd.f32 %v6761, %v6612
        %v6763 = vadd.f32 %v6762, %v6614
        %v6764 = vadd.f32 %v6763, %v6616
        %v6765 = vadd.f32 %v6764, %v6618
        %v6766 = vadd.f32 %v6765, %v6620
        %v6767 = vadd.f32 %v6766, %v6622
        %v6768 = vadd.f32 %v6767, %v6624
        %v6769 = vadd.f32 %v6768, %v6626
        %v6770 = vadd.f32 %v6769, %v6628
        %v6771 = vadd.f32 %v6770, %v6630
        %v6772 = vadd.f32 %v6771, %v6632
        %v6773 = vadd.f32 %v6772, %v6634
        %v6774 = vadd.f32 %v6773, %v6636
        %v6775 = vadd.f32 %v6774, %v6638
        %v6776 = vadd.f32 %v6775, %v6640
        %v6777 = vadd.f32 %v6776, %v6642
        %v6778 = vadd.f32 %v6777, %v6644
        %v6779 = vadd.f32 %v6778, %v6646
        %v6780 = vadd.f32 %v6779, %v6648
        %v6781 = vadd.f32 %v6780, %v6650
        %v6782 = vadd.f32 %v6781, %v6652
        %v6783 = vadd.f32 %v6782, %v6654
        %v6784 = vadd.f32 %v6783, %v6656
        %v6785 = vadd.f32 %v6657, %v6721
        %v6786 = vadd.f32 %v6658, %v6784
        %6787 = vst [vmem:[#allocation2 + $0x30] sm:$0xff] %v6785
        %6788 = vst [vmem:[#allocation2 + $0x38] sm:$0xff] %v6786
        %v6789 = vld [vmem:[%s3 + $0x20] sm:$0xff]
        %v6790 = vld [vmem:[%s3 + $0x48] sm:$0xff]
        %v6791 = vld [vmem:[%s3 + $0x70] sm:$0xff]
        %v6792 = vld [vmem:[%s3 + $0x98] sm:$0xff]
        %v6797 = vunpack.c.l.b16 %v6789
        %v6798 = vunpack.c.h.b16 %v6789
        %v6799 = vunpack.c.l.b16 %v6790
        %v6800 = vunpack.c.h.b16 %v6790
        %v6801 = vunpack.c.l.b16 %v6791
        %v6802 = vunpack.c.h.b16 %v6791
        %v6803 = vunpack.c.l.b16 %v6792
        %v6804 = vunpack.c.h.b16 %v6792
        %v6805 = vpack.c.b16 %v6799, %v6797
        %v6806 = vpack.c.b16 %v6800, %v6798
        %v6807 = vpack.c.b16 %v6803, %v6801
        %v6808 = vpack.c.b16 %v6804, %v6802
        %6813 = vmatprep.subr.bf16.mxu0 0
        %6814 = vmatpush1.bf16.msra.mxu0 0
        %6815 = vmatprep.subr.bf16.mxu0 0
        %6816 = vmatpush1.bf16.msra.mxu0 0
        %6817 = vmatprep.subr.bf16.mxu0 0
        %6818 = vmatpush1.bf16.msra.mxu0 0
        %6819 = vmatprep.subr.bf16.mxu0 0
        %6820 = vmatpush1.bf16.msra.mxu0 0
        %6821 = vmatprep.subr.bf16.mxu0 0
        %6822 = vmatpush1.bf16.msra.mxu0 0
        %6823 = vmatprep.subr.bf16.mxu0 0
        %6824 = vmatpush1.bf16.msra.mxu0 0
        %6825 = vmatprep.subr.bf16.mxu0 %v6808
        %6826 = vmatpush1.bf16.msra.mxu0 %v6807
        %6827 = vmatprep.subr.bf16.mxu0 %v6806
        %6828 = vmatpush1.bf16.msra.mxu0 %v6805
        %6829 = vmatprep.subr.bf16.mxu0 0
        %6830 = vmatpush2.bf16.msra.mxu0 0
        %6831 = vmatprep.subr.bf16.mxu0 0
        %6832 = vmatpush2.bf16.msra.mxu0 0
        %6833 = vmatprep.subr.bf16.mxu0 0
        %6834 = vmatpush2.bf16.msra.mxu0 0
        %6835 = vmatprep.subr.bf16.mxu0 0
        %6836 = vmatpush2.bf16.msra.mxu0 0
        %6837 = vmatprep.subr.bf16.mxu0 0
        %6838 = vmatpush2.bf16.msra.mxu0 0
        %6839 = vmatprep.subr.bf16.mxu0 0
        %6840 = vmatpush2.bf16.msra.mxu0 0
        %6841 = vmatprep.subr.bf16.mxu0 0
        %6842 = vmatpush2.bf16.msra.mxu0 0
        %6843 = vmatprep.subr.bf16.mxu0 0
        %6844 = vmatpush2.bf16.msra.mxu0 0
        %6845 = vmatprep.mubr.bf16.mxu0 0
        %6846 = vmatmul.mubr.bf16.gmra.mxu0 %v1458
        %v6847 = vpop.f32.mrf.mxu0
        %v6848 = vadd.f32 0.0, %v6847
        %v6849 = vpop.f32.mrf.mxu0
        %v6850 = vadd.f32 0.0, %v6849
        %v6851 = vpop.f32.mrf.mxu0
        %v6852 = vadd.f32 0.0, %v6851
        %v6853 = vpop.f32.mrf.mxu0
        %v6854 = vadd.f32 0.0, %v6853
        %6855 = vmatprep.mubr.bf16.mxu0 0
        %6856 = vmatmul.mubr.bf16.gmra.mxu0 %v1461
        %v6857 = vpop.f32.mrf.mxu0
        %v6858 = vadd.f32 0.0, %v6857
        %v6859 = vpop.f32.mrf.mxu0
        %v6860 = vadd.f32 0.0, %v6859
        %v6861 = vpop.f32.mrf.mxu0
        %v6862 = vadd.f32 0.0, %v6861
        %v6863 = vpop.f32.mrf.mxu0
        %v6864 = vadd.f32 0.0, %v6863
        %6865 = vmatprep.mubr.bf16.mxu0 0
        %6866 = vmatmul.mubr.bf16.gmra.mxu0 %v1464
        %v6867 = vpop.f32.mrf.mxu0
        %v6868 = vadd.f32 0.0, %v6867
        %v6869 = vpop.f32.mrf.mxu0
        %v6870 = vadd.f32 0.0, %v6869
        %v6871 = vpop.f32.mrf.mxu0
        %v6872 = vadd.f32 0.0, %v6871
        %v6873 = vpop.f32.mrf.mxu0
        %v6874 = vadd.f32 0.0, %v6873
        %6875 = vmatprep.mubr.bf16.mxu0 0
        %6876 = vmatmul.mubr.bf16.gmra.mxu0 %v1467
        %v6877 = vpop.f32.mrf.mxu0
        %v6878 = vadd.f32 0.0, %v6877
        %v6879 = vpop.f32.mrf.mxu0
        %v6880 = vadd.f32 0.0, %v6879
        %v6881 = vpop.f32.mrf.mxu0
        %v6882 = vadd.f32 0.0, %v6881
        %v6883 = vpop.f32.mrf.mxu0
        %v6884 = vadd.f32 0.0, %v6883
        %6885 = vmatprep.mubr.bf16.mxu0 0
        %6886 = vmatmul.mubr.bf16.gmra.mxu0 %v1470
        %v6887 = vpop.f32.mrf.mxu0
        %v6888 = vadd.f32 0.0, %v6887
        %v6889 = vpop.f32.mrf.mxu0
        %v6890 = vadd.f32 0.0, %v6889
        %v6891 = vpop.f32.mrf.mxu0
        %v6892 = vadd.f32 0.0, %v6891
        %v6893 = vpop.f32.mrf.mxu0
        %v6894 = vadd.f32 0.0, %v6893
        %6895 = vmatprep.mubr.bf16.mxu0 0
        %6896 = vmatmul.mubr.bf16.gmra.mxu0 %v1473
        %v6897 = vpop.f32.mrf.mxu0
        %v6898 = vadd.f32 0.0, %v6897
        %v6899 = vpop.f32.mrf.mxu0
        %v6900 = vadd.f32 0.0, %v6899
        %v6901 = vpop.f32.mrf.mxu0
        %v6902 = vadd.f32 0.0, %v6901
        %v6903 = vpop.f32.mrf.mxu0
        %v6904 = vadd.f32 0.0, %v6903
        %6905 = vmatprep.mubr.bf16.mxu0 0
        %6906 = vmatmul.mubr.bf16.gmra.mxu0 %v1476
        %v6907 = vpop.f32.mrf.mxu0
        %v6908 = vadd.f32 0.0, %v6907
        %v6909 = vpop.f32.mrf.mxu0
        %v6910 = vadd.f32 0.0, %v6909
        %v6911 = vpop.f32.mrf.mxu0
        %v6912 = vadd.f32 0.0, %v6911
        %v6913 = vpop.f32.mrf.mxu0
        %v6914 = vadd.f32 0.0, %v6913
        %6915 = vmatprep.mubr.bf16.mxu0 0
        %6916 = vmatmul.mubr.bf16.gmra.mxu0 %v1479
        %v6917 = vpop.f32.mrf.mxu0
        %v6918 = vadd.f32 0.0, %v6917
        %v6919 = vpop.f32.mrf.mxu0
        %v6920 = vadd.f32 0.0, %v6919
        %v6921 = vpop.f32.mrf.mxu0
        %v6922 = vadd.f32 0.0, %v6921
        %v6923 = vpop.f32.mrf.mxu0
        %v6924 = vadd.f32 0.0, %v6923
        %6925 = vmatprep.mubr.bf16.mxu0 0
        %6926 = vmatmul.mubr.bf16.gmra.mxu0 %v1482
        %v6927 = vpop.f32.mrf.mxu0
        %v6928 = vadd.f32 0.0, %v6927
        %v6929 = vpop.f32.mrf.mxu0
        %v6930 = vadd.f32 0.0, %v6929
        %v6931 = vpop.f32.mrf.mxu0
        %v6932 = vadd.f32 0.0, %v6931
        %v6933 = vpop.f32.mrf.mxu0
        %v6934 = vadd.f32 0.0, %v6933
        %6935 = vmatprep.mubr.bf16.mxu0 0
        %6936 = vmatmul.mubr.bf16.gmra.mxu0 %v1485
        %v6937 = vpop.f32.mrf.mxu0
        %v6938 = vadd.f32 0.0, %v6937
        %v6939 = vpop.f32.mrf.mxu0
        %v6940 = vadd.f32 0.0, %v6939
        %v6941 = vpop.f32.mrf.mxu0
        %v6942 = vadd.f32 0.0, %v6941
        %v6943 = vpop.f32.mrf.mxu0
        %v6944 = vadd.f32 0.0, %v6943
        %6945 = vmatprep.mubr.bf16.mxu0 0
        %6946 = vmatmul.mubr.bf16.gmra.mxu0 %v1488
        %v6947 = vpop.f32.mrf.mxu0
        %v6948 = vadd.f32 0.0, %v6947
        %v6949 = vpop.f32.mrf.mxu0
        %v6950 = vadd.f32 0.0, %v6949
        %v6951 = vpop.f32.mrf.mxu0
        %v6952 = vadd.f32 0.0, %v6951
        %v6953 = vpop.f32.mrf.mxu0
        %v6954 = vadd.f32 0.0, %v6953
        %6955 = vmatprep.mubr.bf16.mxu0 0
        %6956 = vmatmul.mubr.bf16.gmra.mxu0 %v1491
        %v6957 = vpop.f32.mrf.mxu0
        %v6958 = vadd.f32 0.0, %v6957
        %v6959 = vpop.f32.mrf.mxu0
        %v6960 = vadd.f32 0.0, %v6959
        %v6961 = vpop.f32.mrf.mxu0
        %v6962 = vadd.f32 0.0, %v6961
        %v6963 = vpop.f32.mrf.mxu0
        %v6964 = vadd.f32 0.0, %v6963
        %6965 = vmatprep.mubr.bf16.mxu0 0
        %6966 = vmatmul.mubr.bf16.gmra.mxu0 %v1494
        %v6967 = vpop.f32.mrf.mxu0
        %v6968 = vadd.f32 0.0, %v6967
        %v6969 = vpop.f32.mrf.mxu0
        %v6970 = vadd.f32 0.0, %v6969
        %v6971 = vpop.f32.mrf.mxu0
        %v6972 = vadd.f32 0.0, %v6971
        %v6973 = vpop.f32.mrf.mxu0
        %v6974 = vadd.f32 0.0, %v6973
        %6975 = vmatprep.mubr.bf16.mxu0 0
        %6976 = vmatmul.mubr.bf16.gmra.mxu0 %v1497
        %v6977 = vpop.f32.mrf.mxu0
        %v6978 = vadd.f32 0.0, %v6977
        %v6979 = vpop.f32.mrf.mxu0
        %v6980 = vadd.f32 0.0, %v6979
        %v6981 = vpop.f32.mrf.mxu0
        %v6982 = vadd.f32 0.0, %v6981
        %v6983 = vpop.f32.mrf.mxu0
        %v6984 = vadd.f32 0.0, %v6983
        %6985 = vmatprep.mubr.bf16.mxu0 0
        %6986 = vmatmul.mubr.bf16.gmra.mxu0 %v1500
        %v6987 = vpop.f32.mrf.mxu0
        %v6988 = vadd.f32 0.0, %v6987
        %v6989 = vpop.f32.mrf.mxu0
        %v6990 = vadd.f32 0.0, %v6989
        %v6991 = vpop.f32.mrf.mxu0
        %v6992 = vadd.f32 0.0, %v6991
        %v6993 = vpop.f32.mrf.mxu0
        %v6994 = vadd.f32 0.0, %v6993
        %6995 = vmatprep.mubr.bf16.mxu0 0
        %6996 = vmatmul.mubr.bf16.gmra.mxu0 %v1503
        %v6997 = vpop.f32.mrf.mxu0
        %v6998 = vadd.f32 0.0, %v6997
        %v6999 = vpop.f32.mrf.mxu0
        %v7000 = vadd.f32 0.0, %v6999
        %v7001 = vpop.f32.mrf.mxu0
        %v7002 = vadd.f32 0.0, %v7001
        %v7003 = vpop.f32.mrf.mxu0
        %v7004 = vadd.f32 0.0, %v7003
        %7005 = vmatprep.mubr.bf16.mxu0 0
        %7006 = vmatmul.mubr.bf16.gmra.mxu0 %v1506
        %v7007 = vpop.f32.mrf.mxu0
        %v7008 = vadd.f32 0.0, %v7007
        %v7009 = vpop.f32.mrf.mxu0
        %v7010 = vadd.f32 0.0, %v7009
        %v7011 = vpop.f32.mrf.mxu0
        %v7012 = vadd.f32 0.0, %v7011
        %v7013 = vpop.f32.mrf.mxu0
        %v7014 = vadd.f32 0.0, %v7013
        %7015 = vmatprep.mubr.bf16.mxu0 0
        %7016 = vmatmul.mubr.bf16.gmra.mxu0 %v1509
        %v7017 = vpop.f32.mrf.mxu0
        %v7018 = vadd.f32 0.0, %v7017
        %v7019 = vpop.f32.mrf.mxu0
        %v7020 = vadd.f32 0.0, %v7019
        %v7021 = vpop.f32.mrf.mxu0
        %v7022 = vadd.f32 0.0, %v7021
        %v7023 = vpop.f32.mrf.mxu0
        %v7024 = vadd.f32 0.0, %v7023
        %7025 = vmatprep.mubr.bf16.mxu0 0
        %7026 = vmatmul.mubr.bf16.gmra.mxu0 %v1512
        %v7027 = vpop.f32.mrf.mxu0
        %v7028 = vadd.f32 0.0, %v7027
        %v7029 = vpop.f32.mrf.mxu0
        %v7030 = vadd.f32 0.0, %v7029
        %v7031 = vpop.f32.mrf.mxu0
        %v7032 = vadd.f32 0.0, %v7031
        %v7033 = vpop.f32.mrf.mxu0
        %v7034 = vadd.f32 0.0, %v7033
        %7035 = vmatprep.mubr.bf16.mxu0 0
        %7036 = vmatmul.mubr.bf16.gmra.mxu0 %v1515
        %v7037 = vpop.f32.mrf.mxu0
        %v7038 = vadd.f32 0.0, %v7037
        %v7039 = vpop.f32.mrf.mxu0
        %v7040 = vadd.f32 0.0, %v7039
        %v7041 = vpop.f32.mrf.mxu0
        %v7042 = vadd.f32 0.0, %v7041
        %v7043 = vpop.f32.mrf.mxu0
        %v7044 = vadd.f32 0.0, %v7043
        %7045 = vmatprep.mubr.bf16.mxu0 0
        %7046 = vmatmul.mubr.bf16.gmra.mxu0 %v1518
        %v7047 = vpop.f32.mrf.mxu0
        %v7048 = vadd.f32 0.0, %v7047
        %v7049 = vpop.f32.mrf.mxu0
        %v7050 = vadd.f32 0.0, %v7049
        %v7051 = vpop.f32.mrf.mxu0
        %v7052 = vadd.f32 0.0, %v7051
        %v7053 = vpop.f32.mrf.mxu0
        %v7054 = vadd.f32 0.0, %v7053
        %7055 = vmatprep.mubr.bf16.mxu0 0
        %7056 = vmatmul.mubr.bf16.gmra.mxu0 %v1521
        %v7057 = vpop.f32.mrf.mxu0
        %v7058 = vadd.f32 0.0, %v7057
        %v7059 = vpop.f32.mrf.mxu0
        %v7060 = vadd.f32 0.0, %v7059
        %v7061 = vpop.f32.mrf.mxu0
        %v7062 = vadd.f32 0.0, %v7061
        %v7063 = vpop.f32.mrf.mxu0
        %v7064 = vadd.f32 0.0, %v7063
        %7065 = vmatprep.mubr.bf16.mxu0 0
        %7066 = vmatmul.mubr.bf16.gmra.mxu0 %v1524
        %v7067 = vpop.f32.mrf.mxu0
        %v7068 = vadd.f32 0.0, %v7067
        %v7069 = vpop.f32.mrf.mxu0
        %v7070 = vadd.f32 0.0, %v7069
        %v7071 = vpop.f32.mrf.mxu0
        %v7072 = vadd.f32 0.0, %v7071
        %v7073 = vpop.f32.mrf.mxu0
        %v7074 = vadd.f32 0.0, %v7073
        %7075 = vmatprep.mubr.bf16.mxu0 0
        %7076 = vmatmul.mubr.bf16.gmra.mxu0 %v1527
        %v7077 = vpop.f32.mrf.mxu0
        %v7078 = vadd.f32 0.0, %v7077
        %v7079 = vpop.f32.mrf.mxu0
        %v7080 = vadd.f32 0.0, %v7079
        %v7081 = vpop.f32.mrf.mxu0
        %v7082 = vadd.f32 0.0, %v7081
        %v7083 = vpop.f32.mrf.mxu0
        %v7084 = vadd.f32 0.0, %v7083
        %7085 = vmatprep.mubr.bf16.mxu0 0
        %7086 = vmatmul.mubr.bf16.gmra.mxu0 %v1530
        %v7087 = vpop.f32.mrf.mxu0
        %v7088 = vadd.f32 0.0, %v7087
        %v7089 = vpop.f32.mrf.mxu0
        %v7090 = vadd.f32 0.0, %v7089
        %v7091 = vpop.f32.mrf.mxu0
        %v7092 = vadd.f32 0.0, %v7091
        %v7093 = vpop.f32.mrf.mxu0
        %v7094 = vadd.f32 0.0, %v7093
        %7095 = vmatprep.mubr.bf16.mxu0 0
        %7096 = vmatmul.mubr.bf16.gmra.mxu0 %v1533
        %v7097 = vpop.f32.mrf.mxu0
        %v7098 = vadd.f32 0.0, %v7097
        %v7099 = vpop.f32.mrf.mxu0
        %v7100 = vadd.f32 0.0, %v7099
        %v7101 = vpop.f32.mrf.mxu0
        %v7102 = vadd.f32 0.0, %v7101
        %v7103 = vpop.f32.mrf.mxu0
        %v7104 = vadd.f32 0.0, %v7103
        %7105 = vmatprep.mubr.bf16.mxu0 0
        %7106 = vmatmul.mubr.bf16.gmra.mxu0 %v1536
        %v7107 = vpop.f32.mrf.mxu0
        %v7108 = vadd.f32 0.0, %v7107
        %v7109 = vpop.f32.mrf.mxu0
        %v7110 = vadd.f32 0.0, %v7109
        %v7111 = vpop.f32.mrf.mxu0
        %v7112 = vadd.f32 0.0, %v7111
        %v7113 = vpop.f32.mrf.mxu0
        %v7114 = vadd.f32 0.0, %v7113
        %7115 = vmatprep.mubr.bf16.mxu0 0
        %7116 = vmatmul.mubr.bf16.gmra.mxu0 %v1539
        %v7117 = vpop.f32.mrf.mxu0
        %v7118 = vadd.f32 0.0, %v7117
        %v7119 = vpop.f32.mrf.mxu0
        %v7120 = vadd.f32 0.0, %v7119
        %v7121 = vpop.f32.mrf.mxu0
        %v7122 = vadd.f32 0.0, %v7121
        %v7123 = vpop.f32.mrf.mxu0
        %v7124 = vadd.f32 0.0, %v7123
        %7125 = vmatprep.mubr.bf16.mxu0 0
        %7126 = vmatmul.mubr.bf16.gmra.mxu0 %v1542
        %v7127 = vpop.f32.mrf.mxu0
        %v7128 = vadd.f32 0.0, %v7127
        %v7129 = vpop.f32.mrf.mxu0
        %v7130 = vadd.f32 0.0, %v7129
        %v7131 = vpop.f32.mrf.mxu0
        %v7132 = vadd.f32 0.0, %v7131
        %v7133 = vpop.f32.mrf.mxu0
        %v7134 = vadd.f32 0.0, %v7133
        %7135 = vmatprep.mubr.bf16.mxu0 0
        %7136 = vmatmul.mubr.bf16.gmra.mxu0 %v1545
        %v7137 = vpop.f32.mrf.mxu0
        %v7138 = vadd.f32 0.0, %v7137
        %v7139 = vpop.f32.mrf.mxu0
        %v7140 = vadd.f32 0.0, %v7139
        %v7141 = vpop.f32.mrf.mxu0
        %v7142 = vadd.f32 0.0, %v7141
        %v7143 = vpop.f32.mrf.mxu0
        %v7144 = vadd.f32 0.0, %v7143
        %7145 = vmatprep.mubr.bf16.mxu0 0
        %7146 = vmatmul.mubr.bf16.gmra.mxu0 %v1548
        %v7147 = vpop.f32.mrf.mxu0
        %v7148 = vadd.f32 0.0, %v7147
        %v7149 = vpop.f32.mrf.mxu0
        %v7150 = vadd.f32 0.0, %v7149
        %v7151 = vpop.f32.mrf.mxu0
        %v7152 = vadd.f32 0.0, %v7151
        %v7153 = vpop.f32.mrf.mxu0
        %v7154 = vadd.f32 0.0, %v7153
        %7155 = vmatprep.mubr.bf16.mxu0 0
        %7156 = vmatmul.mubr.bf16.gmra.mxu0 %v1551
        %v7157 = vpop.f32.mrf.mxu0
        %v7158 = vadd.f32 0.0, %v7157
        %v7159 = vpop.f32.mrf.mxu0
        %v7160 = vadd.f32 0.0, %v7159
        %v7161 = vpop.f32.mrf.mxu0
        %v7162 = vadd.f32 0.0, %v7161
        %v7163 = vpop.f32.mrf.mxu0
        %v7164 = vadd.f32 0.0, %v7163
        %7165 = vdwg.mxu0
        %v7166 = vpack.c.bf16 %v6852, %v6848
        %v7167 = vpack.c.bf16 %v6854, %v6850
        %v7168 = vpack.c.bf16 %v6862, %v6858
        %v7169 = vpack.c.bf16 %v6864, %v6860
        %v7170 = vpack.c.bf16 %v6872, %v6868
        %v7171 = vpack.c.bf16 %v6874, %v6870
        %v7172 = vpack.c.bf16 %v6882, %v6878
        %v7173 = vpack.c.bf16 %v6884, %v6880
        %v7174 = vpack.c.bf16 %v6892, %v6888
        %v7175 = vpack.c.bf16 %v6894, %v6890
        %v7176 = vpack.c.bf16 %v6902, %v6898
        %v7177 = vpack.c.bf16 %v6904, %v6900
        %v7178 = vpack.c.bf16 %v6912, %v6908
        %v7179 = vpack.c.bf16 %v6914, %v6910
        %v7180 = vpack.c.bf16 %v6922, %v6918
        %v7181 = vpack.c.bf16 %v6924, %v6920
        %v7182 = vpack.c.bf16 %v6932, %v6928
        %v7183 = vpack.c.bf16 %v6934, %v6930
        %v7184 = vpack.c.bf16 %v6942, %v6938
        %v7185 = vpack.c.bf16 %v6944, %v6940
        %v7186 = vpack.c.bf16 %v6952, %v6948
        %v7187 = vpack.c.bf16 %v6954, %v6950
        %v7188 = vpack.c.bf16 %v6962, %v6958
        %v7189 = vpack.c.bf16 %v6964, %v6960
        %v7190 = vpack.c.bf16 %v6972, %v6968
        %v7191 = vpack.c.bf16 %v6974, %v6970
        %v7192 = vpack.c.bf16 %v6982, %v6978
        %v7193 = vpack.c.bf16 %v6984, %v6980
        %v7194 = vpack.c.bf16 %v6992, %v6988
        %v7195 = vpack.c.bf16 %v6994, %v6990
        %v7196 = vpack.c.bf16 %v7002, %v6998
        %v7197 = vpack.c.bf16 %v7004, %v7000
        %v7198 = vpack.c.bf16 %v7012, %v7008
        %v7199 = vpack.c.bf16 %v7014, %v7010
        %v7200 = vpack.c.bf16 %v7022, %v7018
        %v7201 = vpack.c.bf16 %v7024, %v7020
        %v7202 = vpack.c.bf16 %v7032, %v7028
        %v7203 = vpack.c.bf16 %v7034, %v7030
        %v7204 = vpack.c.bf16 %v7042, %v7038
        %v7205 = vpack.c.bf16 %v7044, %v7040
        %v7206 = vpack.c.bf16 %v7052, %v7048
        %v7207 = vpack.c.bf16 %v7054, %v7050
        %v7208 = vpack.c.bf16 %v7062, %v7058
        %v7209 = vpack.c.bf16 %v7064, %v7060
        %v7210 = vpack.c.bf16 %v7072, %v7068
        %v7211 = vpack.c.bf16 %v7074, %v7070
        %v7212 = vpack.c.bf16 %v7082, %v7078
        %v7213 = vpack.c.bf16 %v7084, %v7080
        %v7214 = vpack.c.bf16 %v7092, %v7088
        %v7215 = vpack.c.bf16 %v7094, %v7090
        %v7216 = vpack.c.bf16 %v7102, %v7098
        %v7217 = vpack.c.bf16 %v7104, %v7100
        %v7218 = vpack.c.bf16 %v7112, %v7108
        %v7219 = vpack.c.bf16 %v7114, %v7110
        %v7220 = vpack.c.bf16 %v7122, %v7118
        %v7221 = vpack.c.bf16 %v7124, %v7120
        %v7222 = vpack.c.bf16 %v7132, %v7128
        %v7223 = vpack.c.bf16 %v7134, %v7130
        %v7224 = vpack.c.bf16 %v7142, %v7138
        %v7225 = vpack.c.bf16 %v7144, %v7140
        %v7226 = vpack.c.bf16 %v7152, %v7148
        %v7227 = vpack.c.bf16 %v7154, %v7150
        %v7228 = vpack.c.bf16 %v7162, %v7158
        %v7229 = vpack.c.bf16 %v7164, %v7160
        %v7230 = vld [vmem:[%s4 + $0x8] sm:$0x3]
        %v7233 = vunpack.c.l.s4 1966171168
        %v7234 = vunpack.c.0.s8 %v7233
        %v7235 = vlaneseq
        %v7236 = vshrl.u32 %v7235, 7
        %v7237 = vsub.s32 %v7234, %v7236
        %v7238 = vrot.slane %v7230, %v7237
        %v7239 = vcombine.high %v7238, %v7238
        %v7241 = vunpack.c.l.s4 1966171168
        %v7242 = vunpack.c.0.s8 %v7241
        %v7243 = vlaneseq
        %v7244 = vshrl.u32 %v7243, 7
        %v7245 = vsub.s32 %v7242, %v7244
        %v7246 = vrot.slane %v7238, %v7245
        %v7248 = vunpack.c.l.s4 1966171168
        %v7249 = vunpack.c.0.s8 %v7248
        %v7250 = vlaneseq
        %v7251 = vshrl.u32 %v7250, 7
        %v7252 = vsub.s32 %v7249, %v7251
        %v7253 = vrot.slane %v7239, %v7252
        %v7255 = vpack.i.b16 %v7246, %v7246
        %v7257 = vlaneseq
        %v7258 = vshrl.u32 %v7257, 7
        %v7259 = vsub.s32 0, %v7258
        %v7260 = vrot.slane %v7255, %v7259
        %v7262 = vpack.i.b16 %v7253, %v7253
        %v7264 = vlaneseq
        %v7265 = vshrl.u32 %v7264, 7
        %v7266 = vsub.s32 0, %v7265
        %v7267 = vrot.slane %v7262, %v7266
        %v7268 = vadd.bf16 %v7166, %v7260
        %v7269 = vadd.bf16 %v7167, %v7267
        %v7270 = vadd.bf16 %v7168, %v7260
        %v7271 = vadd.bf16 %v7169, %v7267
        %v7272 = vadd.bf16 %v7170, %v7260
        %v7273 = vadd.bf16 %v7171, %v7267
        %v7274 = vadd.bf16 %v7172, %v7260
        %v7275 = vadd.bf16 %v7173, %v7267
        %v7276 = vadd.bf16 %v7174, %v7260
        %v7277 = vadd.bf16 %v7175, %v7267
        %v7278 = vadd.bf16 %v7176, %v7260
        %v7279 = vadd.bf16 %v7177, %v7267
        %v7280 = vadd.bf16 %v7178, %v7260
        %v7281 = vadd.bf16 %v7179, %v7267
        %v7282 = vadd.bf16 %v7180, %v7260
        %v7283 = vadd.bf16 %v7181, %v7267
        %v7284 = vadd.bf16 %v7182, %v7260
        %v7285 = vadd.bf16 %v7183, %v7267
        %v7286 = vadd.bf16 %v7184, %v7260
        %v7287 = vadd.bf16 %v7185, %v7267
        %v7288 = vadd.bf16 %v7186, %v7260
        %v7289 = vadd.bf16 %v7187, %v7267
        %v7290 = vadd.bf16 %v7188, %v7260
        %v7291 = vadd.bf16 %v7189, %v7267
        %v7292 = vadd.bf16 %v7190, %v7260
        %v7293 = vadd.bf16 %v7191, %v7267
        %v7294 = vadd.bf16 %v7192, %v7260
        %v7295 = vadd.bf16 %v7193, %v7267
        %v7296 = vadd.bf16 %v7194, %v7260
        %v7297 = vadd.bf16 %v7195, %v7267
        %v7298 = vadd.bf16 %v7196, %v7260
        %v7299 = vadd.bf16 %v7197, %v7267
        %v7300 = vadd.bf16 %v7198, %v7260
        %v7301 = vadd.bf16 %v7199, %v7267
        %v7302 = vadd.bf16 %v7200, %v7260
        %v7303 = vadd.bf16 %v7201, %v7267
        %v7304 = vadd.bf16 %v7202, %v7260
        %v7305 = vadd.bf16 %v7203, %v7267
        %v7306 = vadd.bf16 %v7204, %v7260
        %v7307 = vadd.bf16 %v7205, %v7267
        %v7308 = vadd.bf16 %v7206, %v7260
        %v7309 = vadd.bf16 %v7207, %v7267
        %v7310 = vadd.bf16 %v7208, %v7260
        %v7311 = vadd.bf16 %v7209, %v7267
        %v7312 = vadd.bf16 %v7210, %v7260
        %v7313 = vadd.bf16 %v7211, %v7267
        %v7314 = vadd.bf16 %v7212, %v7260
        %v7315 = vadd.bf16 %v7213, %v7267
        %v7316 = vadd.bf16 %v7214, %v7260
        %v7317 = vadd.bf16 %v7215, %v7267
        %v7318 = vadd.bf16 %v7216, %v7260
        %v7319 = vadd.bf16 %v7217, %v7267
        %v7320 = vadd.bf16 %v7218, %v7260
        %v7321 = vadd.bf16 %v7219, %v7267
        %v7322 = vadd.bf16 %v7220, %v7260
        %v7323 = vadd.bf16 %v7221, %v7267
        %v7324 = vadd.bf16 %v7222, %v7260
        %v7325 = vadd.bf16 %v7223, %v7267
        %v7326 = vadd.bf16 %v7224, %v7260
        %v7327 = vadd.bf16 %v7225, %v7267
        %v7328 = vadd.bf16 %v7226, %v7260
        %v7329 = vadd.bf16 %v7227, %v7267
        %v7330 = vadd.bf16 %v7228, %v7260
        %v7331 = vadd.bf16 %v7229, %v7267
        %v7332 = vxor.u32 %v7268, 2147516416
        %v7333 = vxor.u32 %v7269, 2147516416
        %v7334 = vxor.u32 %v7270, 2147516416
        %v7335 = vxor.u32 %v7271, 2147516416
        %v7336 = vxor.u32 %v7272, 2147516416
        %v7337 = vxor.u32 %v7273, 2147516416
        %v7338 = vxor.u32 %v7274, 2147516416
        %v7339 = vxor.u32 %v7275, 2147516416
        %v7340 = vxor.u32 %v7276, 2147516416
        %v7341 = vxor.u32 %v7277, 2147516416
        %v7342 = vxor.u32 %v7278, 2147516416
        %v7343 = vxor.u32 %v7279, 2147516416
        %v7344 = vxor.u32 %v7280, 2147516416
        %v7345 = vxor.u32 %v7281, 2147516416
        %v7346 = vxor.u32 %v7282, 2147516416
        %v7347 = vxor.u32 %v7283, 2147516416
        %v7348 = vxor.u32 %v7284, 2147516416
        %v7349 = vxor.u32 %v7285, 2147516416
        %v7350 = vxor.u32 %v7286, 2147516416
        %v7351 = vxor.u32 %v7287, 2147516416
        %v7352 = vxor.u32 %v7288, 2147516416
        %v7353 = vxor.u32 %v7289, 2147516416
        %v7354 = vxor.u32 %v7290, 2147516416
        %v7355 = vxor.u32 %v7291, 2147516416
        %v7356 = vxor.u32 %v7292, 2147516416
        %v7357 = vxor.u32 %v7293, 2147516416
        %v7358 = vxor.u32 %v7294, 2147516416
        %v7359 = vxor.u32 %v7295, 2147516416
        %v7360 = vxor.u32 %v7296, 2147516416
        %v7361 = vxor.u32 %v7297, 2147516416
        %v7362 = vxor.u32 %v7298, 2147516416
        %v7363 = vxor.u32 %v7299, 2147516416
        %v7364 = vxor.u32 %v7300, 2147516416
        %v7365 = vxor.u32 %v7301, 2147516416
        %v7366 = vxor.u32 %v7302, 2147516416
        %v7367 = vxor.u32 %v7303, 2147516416
        %v7368 = vxor.u32 %v7304, 2147516416
        %v7369 = vxor.u32 %v7305, 2147516416
        %v7370 = vxor.u32 %v7306, 2147516416
        %v7371 = vxor.u32 %v7307, 2147516416
        %v7372 = vxor.u32 %v7308, 2147516416
        %v7373 = vxor.u32 %v7309, 2147516416
        %v7374 = vxor.u32 %v7310, 2147516416
        %v7375 = vxor.u32 %v7311, 2147516416
        %v7376 = vxor.u32 %v7312, 2147516416
        %v7377 = vxor.u32 %v7313, 2147516416
        %v7378 = vxor.u32 %v7314, 2147516416
        %v7379 = vxor.u32 %v7315, 2147516416
        %v7380 = vxor.u32 %v7316, 2147516416
        %v7381 = vxor.u32 %v7317, 2147516416
        %v7382 = vxor.u32 %v7318, 2147516416
        %v7383 = vxor.u32 %v7319, 2147516416
        %v7384 = vxor.u32 %v7320, 2147516416
        %v7385 = vxor.u32 %v7321, 2147516416
        %v7386 = vxor.u32 %v7322, 2147516416
        %v7387 = vxor.u32 %v7323, 2147516416
        %v7388 = vxor.u32 %v7324, 2147516416
        %v7389 = vxor.u32 %v7325, 2147516416
        %v7390 = vxor.u32 %v7326, 2147516416
        %v7391 = vxor.u32 %v7327, 2147516416
        %v7392 = vxor.u32 %v7328, 2147516416
        %v7393 = vxor.u32 %v7329, 2147516416
        %v7394 = vxor.u32 %v7330, 2147516416
        %v7395 = vxor.u32 %v7331, 2147516416
        %v7397 = vmul.bf16 %v7332, 1069105081
        %v7398 = vpow.bf16.pop %v7397
        %v7400 = vmul.bf16 %v7333, 1069105081
        %v7401 = vpow.bf16.pop %v7400
        %v7403 = vmul.bf16 %v7334, 1069105081
        %v7404 = vpow.bf16.pop %v7403
        %v7406 = vmul.bf16 %v7335, 1069105081
        %v7407 = vpow.bf16.pop %v7406
        %v7409 = vmul.bf16 %v7336, 1069105081
        %v7410 = vpow.bf16.pop %v7409
        %v7412 = vmul.bf16 %v7337, 1069105081
        %v7413 = vpow.bf16.pop %v7412
        %v7415 = vmul.bf16 %v7338, 1069105081
        %v7416 = vpow.bf16.pop %v7415
        %v7418 = vmul.bf16 %v7339, 1069105081
        %v7419 = vpow.bf16.pop %v7418
        %v7421 = vmul.bf16 %v7340, 1069105081
        %v7422 = vpow.bf16.pop %v7421
        %v7424 = vmul.bf16 %v7341, 1069105081
        %v7425 = vpow.bf16.pop %v7424
        %v7427 = vmul.bf16 %v7342, 1069105081
        %v7428 = vpow.bf16.pop %v7427
        %v7430 = vmul.bf16 %v7343, 1069105081
        %v7431 = vpow.bf16.pop %v7430
        %v7433 = vmul.bf16 %v7344, 1069105081
        %v7434 = vpow.bf16.pop %v7433
        %v7436 = vmul.bf16 %v7345, 1069105081
        %v7437 = vpow.bf16.pop %v7436
        %v7439 = vmul.bf16 %v7346, 1069105081
        %v7440 = vpow.bf16.pop %v7439
        %v7442 = vmul.bf16 %v7347, 1069105081
        %v7443 = vpow.bf16.pop %v7442
        %v7445 = vmul.bf16 %v7348, 1069105081
        %v7446 = vpow.bf16.pop %v7445
        %v7448 = vmul.bf16 %v7349, 1069105081
        %v7449 = vpow.bf16.pop %v7448
        %v7451 = vmul.bf16 %v7350, 1069105081
        %v7452 = vpow.bf16.pop %v7451
        %v7454 = vmul.bf16 %v7351, 1069105081
        %v7455 = vpow.bf16.pop %v7454
        %v7457 = vmul.bf16 %v7352, 1069105081
        %v7458 = vpow.bf16.pop %v7457
        %v7460 = vmul.bf16 %v7353, 1069105081
        %v7461 = vpow.bf16.pop %v7460
        %v7463 = vmul.bf16 %v7354, 1069105081
        %v7464 = vpow.bf16.pop %v7463
        %v7466 = vmul.bf16 %v7355, 1069105081
        %v7467 = vpow.bf16.pop %v7466
        %v7469 = vmul.bf16 %v7356, 1069105081
        %v7470 = vpow.bf16.pop %v7469
        %v7472 = vmul.bf16 %v7357, 1069105081
        %v7473 = vpow.bf16.pop %v7472
        %v7475 = vmul.bf16 %v7358, 1069105081
        %v7476 = vpow.bf16.pop %v7475
        %v7478 = vmul.bf16 %v7359, 1069105081
        %v7479 = vpow.bf16.pop %v7478
        %v7481 = vmul.bf16 %v7360, 1069105081
        %v7482 = vpow.bf16.pop %v7481
        %v7484 = vmul.bf16 %v7361, 1069105081
        %v7485 = vpow.bf16.pop %v7484
        %v7487 = vmul.bf16 %v7362, 1069105081
        %v7488 = vpow.bf16.pop %v7487
        %v7490 = vmul.bf16 %v7363, 1069105081
        %v7491 = vpow.bf16.pop %v7490
        %v7493 = vmul.bf16 %v7364, 1069105081
        %v7494 = vpow.bf16.pop %v7493
        %v7496 = vmul.bf16 %v7365, 1069105081
        %v7497 = vpow.bf16.pop %v7496
        %v7499 = vmul.bf16 %v7366, 1069105081
        %v7500 = vpow.bf16.pop %v7499
        %v7502 = vmul.bf16 %v7367, 1069105081
        %v7503 = vpow.bf16.pop %v7502
        %v7505 = vmul.bf16 %v7368, 1069105081
        %v7506 = vpow.bf16.pop %v7505
        %v7508 = vmul.bf16 %v7369, 1069105081
        %v7509 = vpow.bf16.pop %v7508
        %v7511 = vmul.bf16 %v7370, 1069105081
        %v7512 = vpow.bf16.pop %v7511
        %v7514 = vmul.bf16 %v7371, 1069105081
        %v7515 = vpow.bf16.pop %v7514
        %v7517 = vmul.bf16 %v7372, 1069105081
        %v7518 = vpow.bf16.pop %v7517
        %v7520 = vmul.bf16 %v7373, 1069105081
        %v7521 = vpow.bf16.pop %v7520
        %v7523 = vmul.bf16 %v7374, 1069105081
        %v7524 = vpow.bf16.pop %v7523
        %v7526 = vmul.bf16 %v7375, 1069105081
        %v7527 = vpow.bf16.pop %v7526
        %v7529 = vmul.bf16 %v7376, 1069105081
        %v7530 = vpow.bf16.pop %v7529
        %v7532 = vmul.bf16 %v7377, 1069105081
        %v7533 = vpow.bf16.pop %v7532
        %v7535 = vmul.bf16 %v7378, 1069105081
        %v7536 = vpow.bf16.pop %v7535
        %v7538 = vmul.bf16 %v7379, 1069105081
        %v7539 = vpow.bf16.pop %v7538
        %v7541 = vmul.bf16 %v7380, 1069105081
        %v7542 = vpow.bf16.pop %v7541
        %v7544 = vmul.bf16 %v7381, 1069105081
        %v7545 = vpow.bf16.pop %v7544
        %v7547 = vmul.bf16 %v7382, 1069105081
        %v7548 = vpow.bf16.pop %v7547
        %v7550 = vmul.bf16 %v7383, 1069105081
        %v7551 = vpow.bf16.pop %v7550
        %v7553 = vmul.bf16 %v7384, 1069105081
        %v7554 = vpow.bf16.pop %v7553
        %v7556 = vmul.bf16 %v7385, 1069105081
        %v7557 = vpow.bf16.pop %v7556
        %v7559 = vmul.bf16 %v7386, 1069105081
        %v7560 = vpow.bf16.pop %v7559
        %v7562 = vmul.bf16 %v7387, 1069105081
        %v7563 = vpow.bf16.pop %v7562
        %v7565 = vmul.bf16 %v7388, 1069105081
        %v7566 = vpow.bf16.pop %v7565
        %v7568 = vmul.bf16 %v7389, 1069105081
        %v7569 = vpow.bf16.pop %v7568
        %v7571 = vmul.bf16 %v7390, 1069105081
        %v7572 = vpow.bf16.pop %v7571
        %v7574 = vmul.bf16 %v7391, 1069105081
        %v7575 = vpow.bf16.pop %v7574
        %v7577 = vmul.bf16 %v7392, 1069105081
        %v7578 = vpow.bf16.pop %v7577
        %v7580 = vmul.bf16 %v7393, 1069105081
        %v7581 = vpow.bf16.pop %v7580
        %v7583 = vmul.bf16 %v7394, 1069105081
        %v7584 = vpow.bf16.pop %v7583
        %v7586 = vmul.bf16 %v7395, 1069105081
        %v7587 = vpow.bf16.pop %v7586
        %v7588 = vadd.bf16 %v7398, 1065369472
        %v7589 = vadd.bf16 %v7401, 1065369472
        %v7590 = vadd.bf16 %v7404, 1065369472
        %v7591 = vadd.bf16 %v7407, 1065369472
        %v7592 = vadd.bf16 %v7410, 1065369472
        %v7593 = vadd.bf16 %v7413, 1065369472
        %v7594 = vadd.bf16 %v7416, 1065369472
        %v7595 = vadd.bf16 %v7419, 1065369472
        %v7596 = vadd.bf16 %v7422, 1065369472
        %v7597 = vadd.bf16 %v7425, 1065369472
        %v7598 = vadd.bf16 %v7428, 1065369472
        %v7599 = vadd.bf16 %v7431, 1065369472
        %v7600 = vadd.bf16 %v7434, 1065369472
        %v7601 = vadd.bf16 %v7437, 1065369472
        %v7602 = vadd.bf16 %v7440, 1065369472
        %v7603 = vadd.bf16 %v7443, 1065369472
        %v7604 = vadd.bf16 %v7446, 1065369472
        %v7605 = vadd.bf16 %v7449, 1065369472
        %v7606 = vadd.bf16 %v7452, 1065369472
        %v7607 = vadd.bf16 %v7455, 1065369472
        %v7608 = vadd.bf16 %v7458, 1065369472
        %v7609 = vadd.bf16 %v7461, 1065369472
        %v7610 = vadd.bf16 %v7464, 1065369472
        %v7611 = vadd.bf16 %v7467, 1065369472
        %v7612 = vadd.bf16 %v7470, 1065369472
        %v7613 = vadd.bf16 %v7473, 1065369472
        %v7614 = vadd.bf16 %v7476, 1065369472
        %v7615 = vadd.bf16 %v7479, 1065369472
        %v7616 = vadd.bf16 %v7482, 1065369472
        %v7617 = vadd.bf16 %v7485, 1065369472
        %v7618 = vadd.bf16 %v7488, 1065369472
        %v7619 = vadd.bf16 %v7491, 1065369472
        %v7620 = vadd.bf16 %v7494, 1065369472
        %v7621 = vadd.bf16 %v7497, 1065369472
        %v7622 = vadd.bf16 %v7500, 1065369472
        %v7623 = vadd.bf16 %v7503, 1065369472
        %v7624 = vadd.bf16 %v7506, 1065369472
        %v7625 = vadd.bf16 %v7509, 1065369472
        %v7626 = vadd.bf16 %v7512, 1065369472
        %v7627 = vadd.bf16 %v7515, 1065369472
        %v7628 = vadd.bf16 %v7518, 1065369472
        %v7629 = vadd.bf16 %v7521, 1065369472
        %v7630 = vadd.bf16 %v7524, 1065369472
        %v7631 = vadd.bf16 %v7527, 1065369472
        %v7632 = vadd.bf16 %v7530, 1065369472
        %v7633 = vadd.bf16 %v7533, 1065369472
        %v7634 = vadd.bf16 %v7536, 1065369472
        %v7635 = vadd.bf16 %v7539, 1065369472
        %v7636 = vadd.bf16 %v7542, 1065369472
        %v7637 = vadd.bf16 %v7545, 1065369472
        %v7638 = vadd.bf16 %v7548, 1065369472
        %v7639 = vadd.bf16 %v7551, 1065369472
        %v7640 = vadd.bf16 %v7554, 1065369472
        %v7641 = vadd.bf16 %v7557, 1065369472
        %v7642 = vadd.bf16 %v7560, 1065369472
        %v7643 = vadd.bf16 %v7563, 1065369472
        %v7644 = vadd.bf16 %v7566, 1065369472
        %v7645 = vadd.bf16 %v7569, 1065369472
        %v7646 = vadd.bf16 %v7572, 1065369472
        %v7647 = vadd.bf16 %v7575, 1065369472
        %v7648 = vadd.bf16 %v7578, 1065369472
        %v7649 = vadd.bf16 %v7581, 1065369472
        %v7650 = vadd.bf16 %v7584, 1065369472
        %v7651 = vadd.bf16 %v7587, 1065369472
        %v7652 = vrcp.bf16.pop %v7588
        %v7653 = vmul.bf16 1065369472, %v7652
        %v7654 = vrcp.bf16.pop %v7589
        %v7655 = vmul.bf16 1065369472, %v7654
        %v7656 = vrcp.bf16.pop %v7590
        %v7657 = vmul.bf16 1065369472, %v7656
        %v7658 = vrcp.bf16.pop %v7591
        %v7659 = vmul.bf16 1065369472, %v7658
        %v7660 = vrcp.bf16.pop %v7592
        %v7661 = vmul.bf16 1065369472, %v7660
        %v7662 = vrcp.bf16.pop %v7593
        %v7663 = vmul.bf16 1065369472, %v7662
        %v7664 = vrcp.bf16.pop %v7594
        %v7665 = vmul.bf16 1065369472, %v7664
        %v7666 = vrcp.bf16.pop %v7595
        %v7667 = vmul.bf16 1065369472, %v7666
        %v7668 = vrcp.bf16.pop %v7596
        %v7669 = vmul.bf16 1065369472, %v7668
        %v7670 = vrcp.bf16.pop %v7597
        %v7671 = vmul.bf16 1065369472, %v7670
        %v7672 = vrcp.bf16.pop %v7598
        %v7673 = vmul.bf16 1065369472, %v7672
        %v7674 = vrcp.bf16.pop %v7599
        %v7675 = vmul.bf16 1065369472, %v7674
        %v7676 = vrcp.bf16.pop %v7600
        %v7677 = vmul.bf16 1065369472, %v7676
        %v7678 = vrcp.bf16.pop %v7601
        %v7679 = vmul.bf16 1065369472, %v7678
        %v7680 = vrcp.bf16.pop %v7602
        %v7681 = vmul.bf16 1065369472, %v7680
        %v7682 = vrcp.bf16.pop %v7603
        %v7683 = vmul.bf16 1065369472, %v7682
        %v7684 = vrcp.bf16.pop %v7604
        %v7685 = vmul.bf16 1065369472, %v7684
        %v7686 = vrcp.bf16.pop %v7605
        %v7687 = vmul.bf16 1065369472, %v7686
        %v7688 = vrcp.bf16.pop %v7606
        %v7689 = vmul.bf16 1065369472, %v7688
        %v7690 = vrcp.bf16.pop %v7607
        %v7691 = vmul.bf16 1065369472, %v7690
        %v7692 = vrcp.bf16.pop %v7608
        %v7693 = vmul.bf16 1065369472, %v7692
        %v7694 = vrcp.bf16.pop %v7609
        %v7695 = vmul.bf16 1065369472, %v7694
        %v7696 = vrcp.bf16.pop %v7610
        %v7697 = vmul.bf16 1065369472, %v7696
        %v7698 = vrcp.bf16.pop %v7611
        %v7699 = vmul.bf16 1065369472, %v7698
        %v7700 = vrcp.bf16.pop %v7612
        %v7701 = vmul.bf16 1065369472, %v7700
        %v7702 = vrcp.bf16.pop %v7613
        %v7703 = vmul.bf16 1065369472, %v7702
        %v7704 = vrcp.bf16.pop %v7614
        %v7705 = vmul.bf16 1065369472, %v7704
        %v7706 = vrcp.bf16.pop %v7615
        %v7707 = vmul.bf16 1065369472, %v7706
        %v7708 = vrcp.bf16.pop %v7616
        %v7709 = vmul.bf16 1065369472, %v7708
        %v7710 = vrcp.bf16.pop %v7617
        %v7711 = vmul.bf16 1065369472, %v7710
        %v7712 = vrcp.bf16.pop %v7618
        %v7713 = vmul.bf16 1065369472, %v7712
        %v7714 = vrcp.bf16.pop %v7619
        %v7715 = vmul.bf16 1065369472, %v7714
        %v7716 = vrcp.bf16.pop %v7620
        %v7717 = vmul.bf16 1065369472, %v7716
        %v7718 = vrcp.bf16.pop %v7621
        %v7719 = vmul.bf16 1065369472, %v7718
        %v7720 = vrcp.bf16.pop %v7622
        %v7721 = vmul.bf16 1065369472, %v7720
        %v7722 = vrcp.bf16.pop %v7623
        %v7723 = vmul.bf16 1065369472, %v7722
        %v7724 = vrcp.bf16.pop %v7624
        %v7725 = vmul.bf16 1065369472, %v7724
        %v7726 = vrcp.bf16.pop %v7625
        %v7727 = vmul.bf16 1065369472, %v7726
        %v7728 = vrcp.bf16.pop %v7626
        %v7729 = vmul.bf16 1065369472, %v7728
        %v7730 = vrcp.bf16.pop %v7627
        %v7731 = vmul.bf16 1065369472, %v7730
        %v7732 = vrcp.bf16.pop %v7628
        %v7733 = vmul.bf16 1065369472, %v7732
        %v7734 = vrcp.bf16.pop %v7629
        %v7735 = vmul.bf16 1065369472, %v7734
        %v7736 = vrcp.bf16.pop %v7630
        %v7737 = vmul.bf16 1065369472, %v7736
        %v7738 = vrcp.bf16.pop %v7631
        %v7739 = vmul.bf16 1065369472, %v7738
        %v7740 = vrcp.bf16.pop %v7632
        %v7741 = vmul.bf16 1065369472, %v7740
        %v7742 = vrcp.bf16.pop %v7633
        %v7743 = vmul.bf16 1065369472, %v7742
        %v7744 = vrcp.bf16.pop %v7634
        %v7745 = vmul.bf16 1065369472, %v7744
        %v7746 = vrcp.bf16.pop %v7635
        %v7747 = vmul.bf16 1065369472, %v7746
        %v7748 = vrcp.bf16.pop %v7636
        %v7749 = vmul.bf16 1065369472, %v7748
        %v7750 = vrcp.bf16.pop %v7637
        %v7751 = vmul.bf16 1065369472, %v7750
        %v7752 = vrcp.bf16.pop %v7638
        %v7753 = vmul.bf16 1065369472, %v7752
        %v7754 = vrcp.bf16.pop %v7639
        %v7755 = vmul.bf16 1065369472, %v7754
        %v7756 = vrcp.bf16.pop %v7640
        %v7757 = vmul.bf16 1065369472, %v7756
        %v7758 = vrcp.bf16.pop %v7641
        %v7759 = vmul.bf16 1065369472, %v7758
        %v7760 = vrcp.bf16.pop %v7642
        %v7761 = vmul.bf16 1065369472, %v7760
        %v7762 = vrcp.bf16.pop %v7643
        %v7763 = vmul.bf16 1065369472, %v7762
        %v7764 = vrcp.bf16.pop %v7644
        %v7765 = vmul.bf16 1065369472, %v7764
        %v7766 = vrcp.bf16.pop %v7645
        %v7767 = vmul.bf16 1065369472, %v7766
        %v7768 = vrcp.bf16.pop %v7646
        %v7769 = vmul.bf16 1065369472, %v7768
        %v7770 = vrcp.bf16.pop %v7647
        %v7771 = vmul.bf16 1065369472, %v7770
        %v7772 = vrcp.bf16.pop %v7648
        %v7773 = vmul.bf16 1065369472, %v7772
        %v7774 = vrcp.bf16.pop %v7649
        %v7775 = vmul.bf16 1065369472, %v7774
        %v7776 = vrcp.bf16.pop %v7650
        %v7777 = vmul.bf16 1065369472, %v7776
        %v7778 = vrcp.bf16.pop %v7651
        %v7779 = vmul.bf16 1065369472, %v7778
        %v7780 = vmul.bf16 %v7268, %v7653
        %v7781 = vmul.bf16 %v7269, %v7655
        %v7782 = vmul.bf16 %v7270, %v7657
        %v7783 = vmul.bf16 %v7271, %v7659
        %v7784 = vmul.bf16 %v7272, %v7661
        %v7785 = vmul.bf16 %v7273, %v7663
        %v7786 = vmul.bf16 %v7274, %v7665
        %v7787 = vmul.bf16 %v7275, %v7667
        %v7788 = vmul.bf16 %v7276, %v7669
        %v7789 = vmul.bf16 %v7277, %v7671
        %v7790 = vmul.bf16 %v7278, %v7673
        %v7791 = vmul.bf16 %v7279, %v7675
        %v7792 = vmul.bf16 %v7280, %v7677
        %v7793 = vmul.bf16 %v7281, %v7679
        %v7794 = vmul.bf16 %v7282, %v7681
        %v7795 = vmul.bf16 %v7283, %v7683
        %v7796 = vmul.bf16 %v7284, %v7685
        %v7797 = vmul.bf16 %v7285, %v7687
        %v7798 = vmul.bf16 %v7286, %v7689
        %v7799 = vmul.bf16 %v7287, %v7691
        %v7800 = vmul.bf16 %v7288, %v7693
        %v7801 = vmul.bf16 %v7289, %v7695
        %v7802 = vmul.bf16 %v7290, %v7697
        %v7803 = vmul.bf16 %v7291, %v7699
        %v7804 = vmul.bf16 %v7292, %v7701
        %v7805 = vmul.bf16 %v7293, %v7703
        %v7806 = vmul.bf16 %v7294, %v7705
        %v7807 = vmul.bf16 %v7295, %v7707
        %v7808 = vmul.bf16 %v7296, %v7709
        %v7809 = vmul.bf16 %v7297, %v7711
        %v7810 = vmul.bf16 %v7298, %v7713
        %v7811 = vmul.bf16 %v7299, %v7715
        %v7812 = vmul.bf16 %v7300, %v7717
        %v7813 = vmul.bf16 %v7301, %v7719
        %v7814 = vmul.bf16 %v7302, %v7721
        %v7815 = vmul.bf16 %v7303, %v7723
        %v7816 = vmul.bf16 %v7304, %v7725
        %v7817 = vmul.bf16 %v7305, %v7727
        %v7818 = vmul.bf16 %v7306, %v7729
        %v7819 = vmul.bf16 %v7307, %v7731
        %v7820 = vmul.bf16 %v7308, %v7733
        %v7821 = vmul.bf16 %v7309, %v7735
        %v7822 = vmul.bf16 %v7310, %v7737
        %v7823 = vmul.bf16 %v7311, %v7739
        %v7824 = vmul.bf16 %v7312, %v7741
        %v7825 = vmul.bf16 %v7313, %v7743
        %v7826 = vmul.bf16 %v7314, %v7745
        %v7827 = vmul.bf16 %v7315, %v7747
        %v7828 = vmul.bf16 %v7316, %v7749
        %v7829 = vmul.bf16 %v7317, %v7751
        %v7830 = vmul.bf16 %v7318, %v7753
        %v7831 = vmul.bf16 %v7319, %v7755
        %v7832 = vmul.bf16 %v7320, %v7757
        %v7833 = vmul.bf16 %v7321, %v7759
        %v7834 = vmul.bf16 %v7322, %v7761
        %v7835 = vmul.bf16 %v7323, %v7763
        %v7836 = vmul.bf16 %v7324, %v7765
        %v7837 = vmul.bf16 %v7325, %v7767
        %v7838 = vmul.bf16 %v7326, %v7769
        %v7839 = vmul.bf16 %v7327, %v7771
        %v7840 = vmul.bf16 %v7328, %v7773
        %v7841 = vmul.bf16 %v7329, %v7775
        %v7842 = vmul.bf16 %v7330, %v7777
        %v7843 = vmul.bf16 %v7331, %v7779
        %v7844 = vunpack.c.l.bf16 %v7780
        %v7845 = vunpack.c.l.bf16 %v7781
        %v7846 = vunpack.c.h.bf16 %v7780
        %v7847 = vunpack.c.h.bf16 %v7781
        %v7848 = vunpack.c.l.bf16 %v7782
        %v7849 = vunpack.c.l.bf16 %v7783
        %v7850 = vunpack.c.h.bf16 %v7782
        %v7851 = vunpack.c.h.bf16 %v7783
        %v7852 = vunpack.c.l.bf16 %v7784
        %v7853 = vunpack.c.l.bf16 %v7785
        %v7854 = vunpack.c.h.bf16 %v7784
        %v7855 = vunpack.c.h.bf16 %v7785
        %v7856 = vunpack.c.l.bf16 %v7786
        %v7857 = vunpack.c.l.bf16 %v7787
        %v7858 = vunpack.c.h.bf16 %v7786
        %v7859 = vunpack.c.h.bf16 %v7787
        %v7860 = vunpack.c.l.bf16 %v7788
        %v7861 = vunpack.c.l.bf16 %v7789
        %v7862 = vunpack.c.h.bf16 %v7788
        %v7863 = vunpack.c.h.bf16 %v7789
        %v7864 = vunpack.c.l.bf16 %v7790
        %v7865 = vunpack.c.l.bf16 %v7791
        %v7866 = vunpack.c.h.bf16 %v7790
        %v7867 = vunpack.c.h.bf16 %v7791
        %v7868 = vunpack.c.l.bf16 %v7792
        %v7869 = vunpack.c.l.bf16 %v7793
        %v7870 = vunpack.c.h.bf16 %v7792
        %v7871 = vunpack.c.h.bf16 %v7793
        %v7872 = vunpack.c.l.bf16 %v7794
        %v7873 = vunpack.c.l.bf16 %v7795
        %v7874 = vunpack.c.h.bf16 %v7794
        %v7875 = vunpack.c.h.bf16 %v7795
        %v7876 = vunpack.c.l.bf16 %v7796
        %v7877 = vunpack.c.l.bf16 %v7797
        %v7878 = vunpack.c.h.bf16 %v7796
        %v7879 = vunpack.c.h.bf16 %v7797
        %v7880 = vunpack.c.l.bf16 %v7798
        %v7881 = vunpack.c.l.bf16 %v7799
        %v7882 = vunpack.c.h.bf16 %v7798
        %v7883 = vunpack.c.h.bf16 %v7799
        %v7884 = vunpack.c.l.bf16 %v7800
        %v7885 = vunpack.c.l.bf16 %v7801
        %v7886 = vunpack.c.h.bf16 %v7800
        %v7887 = vunpack.c.h.bf16 %v7801
        %v7888 = vunpack.c.l.bf16 %v7802
        %v7889 = vunpack.c.l.bf16 %v7803
        %v7890 = vunpack.c.h.bf16 %v7802
        %v7891 = vunpack.c.h.bf16 %v7803
        %v7892 = vunpack.c.l.bf16 %v7804
        %v7893 = vunpack.c.l.bf16 %v7805
        %v7894 = vunpack.c.h.bf16 %v7804
        %v7895 = vunpack.c.h.bf16 %v7805
        %v7896 = vunpack.c.l.bf16 %v7806
        %v7897 = vunpack.c.l.bf16 %v7807
        %v7898 = vunpack.c.h.bf16 %v7806
        %v7899 = vunpack.c.h.bf16 %v7807
        %v7900 = vunpack.c.l.bf16 %v7808
        %v7901 = vunpack.c.l.bf16 %v7809
        %v7902 = vunpack.c.h.bf16 %v7808
        %v7903 = vunpack.c.h.bf16 %v7809
        %v7904 = vunpack.c.l.bf16 %v7810
        %v7905 = vunpack.c.l.bf16 %v7811
        %v7906 = vunpack.c.h.bf16 %v7810
        %v7907 = vunpack.c.h.bf16 %v7811
        %v7908 = vunpack.c.l.bf16 %v7812
        %v7909 = vunpack.c.l.bf16 %v7813
        %v7910 = vunpack.c.h.bf16 %v7812
        %v7911 = vunpack.c.h.bf16 %v7813
        %v7912 = vunpack.c.l.bf16 %v7814
        %v7913 = vunpack.c.l.bf16 %v7815
        %v7914 = vunpack.c.h.bf16 %v7814
        %v7915 = vunpack.c.h.bf16 %v7815
        %v7916 = vunpack.c.l.bf16 %v7816
        %v7917 = vunpack.c.l.bf16 %v7817
        %v7918 = vunpack.c.h.bf16 %v7816
        %v7919 = vunpack.c.h.bf16 %v7817
        %v7920 = vunpack.c.l.bf16 %v7818
        %v7921 = vunpack.c.l.bf16 %v7819
        %v7922 = vunpack.c.h.bf16 %v7818
        %v7923 = vunpack.c.h.bf16 %v7819
        %v7924 = vunpack.c.l.bf16 %v7820
        %v7925 = vunpack.c.l.bf16 %v7821
        %v7926 = vunpack.c.h.bf16 %v7820
        %v7927 = vunpack.c.h.bf16 %v7821
        %v7928 = vunpack.c.l.bf16 %v7822
        %v7929 = vunpack.c.l.bf16 %v7823
        %v7930 = vunpack.c.h.bf16 %v7822
        %v7931 = vunpack.c.h.bf16 %v7823
        %v7932 = vunpack.c.l.bf16 %v7824
        %v7933 = vunpack.c.l.bf16 %v7825
        %v7934 = vunpack.c.h.bf16 %v7824
        %v7935 = vunpack.c.h.bf16 %v7825
        %v7936 = vunpack.c.l.bf16 %v7826
        %v7937 = vunpack.c.l.bf16 %v7827
        %v7938 = vunpack.c.h.bf16 %v7826
        %v7939 = vunpack.c.h.bf16 %v7827
        %v7940 = vunpack.c.l.bf16 %v7828
        %v7941 = vunpack.c.l.bf16 %v7829
        %v7942 = vunpack.c.h.bf16 %v7828
        %v7943 = vunpack.c.h.bf16 %v7829
        %v7944 = vunpack.c.l.bf16 %v7830
        %v7945 = vunpack.c.l.bf16 %v7831
        %v7946 = vunpack.c.h.bf16 %v7830
        %v7947 = vunpack.c.h.bf16 %v7831
        %v7948 = vunpack.c.l.bf16 %v7832
        %v7949 = vunpack.c.l.bf16 %v7833
        %v7950 = vunpack.c.h.bf16 %v7832
        %v7951 = vunpack.c.h.bf16 %v7833
        %v7952 = vunpack.c.l.bf16 %v7834
        %v7953 = vunpack.c.l.bf16 %v7835
        %v7954 = vunpack.c.h.bf16 %v7834
        %v7955 = vunpack.c.h.bf16 %v7835
        %v7956 = vunpack.c.l.bf16 %v7836
        %v7957 = vunpack.c.l.bf16 %v7837
        %v7958 = vunpack.c.h.bf16 %v7836
        %v7959 = vunpack.c.h.bf16 %v7837
        %v7960 = vunpack.c.l.bf16 %v7838
        %v7961 = vunpack.c.l.bf16 %v7839
        %v7962 = vunpack.c.h.bf16 %v7838
        %v7963 = vunpack.c.h.bf16 %v7839
        %v7964 = vunpack.c.l.bf16 %v7840
        %v7965 = vunpack.c.l.bf16 %v7841
        %v7966 = vunpack.c.h.bf16 %v7840
        %v7967 = vunpack.c.h.bf16 %v7841
        %v7968 = vunpack.c.l.bf16 %v7842
        %v7969 = vunpack.c.l.bf16 %v7843
        %v7970 = vunpack.c.h.bf16 %v7842
        %v7971 = vunpack.c.h.bf16 %v7843
        %v7972 = vld [vmem:[#allocation2 + $0x40] sm:$0xff]
        %v7973 = vld [vmem:[#allocation2 + $0x48] sm:$0xff]
        %v7974 = vadd.f32 %v7844, %v7846
        %v7975 = vadd.f32 %v7974, %v7848
        %v7976 = vadd.f32 %v7975, %v7850
        %v7977 = vadd.f32 %v7976, %v7852
        %v7978 = vadd.f32 %v7977, %v7854
        %v7979 = vadd.f32 %v7978, %v7856
        %v7980 = vadd.f32 %v7979, %v7858
        %v7981 = vadd.f32 %v7980, %v7860
        %v7982 = vadd.f32 %v7981, %v7862
        %v7983 = vadd.f32 %v7982, %v7864
        %v7984 = vadd.f32 %v7983, %v7866
        %v7985 = vadd.f32 %v7984, %v7868
        %v7986 = vadd.f32 %v7985, %v7870
        %v7987 = vadd.f32 %v7986, %v7872
        %v7988 = vadd.f32 %v7987, %v7874
        %v7989 = vadd.f32 %v7988, %v7876
        %v7990 = vadd.f32 %v7989, %v7878
        %v7991 = vadd.f32 %v7990, %v7880
        %v7992 = vadd.f32 %v7991, %v7882
        %v7993 = vadd.f32 %v7992, %v7884
        %v7994 = vadd.f32 %v7993, %v7886
        %v7995 = vadd.f32 %v7994, %v7888
        %v7996 = vadd.f32 %v7995, %v7890
        %v7997 = vadd.f32 %v7996, %v7892
        %v7998 = vadd.f32 %v7997, %v7894
        %v7999 = vadd.f32 %v7998, %v7896
        %v8000 = vadd.f32 %v7999, %v7898
        %v8001 = vadd.f32 %v8000, %v7900
        %v8002 = vadd.f32 %v8001, %v7902
        %v8003 = vadd.f32 %v8002, %v7904
        %v8004 = vadd.f32 %v8003, %v7906
        %v8005 = vadd.f32 %v8004, %v7908
        %v8006 = vadd.f32 %v8005, %v7910
        %v8007 = vadd.f32 %v8006, %v7912
        %v8008 = vadd.f32 %v8007, %v7914
        %v8009 = vadd.f32 %v8008, %v7916
        %v8010 = vadd.f32 %v8009, %v7918
        %v8011 = vadd.f32 %v8010, %v7920
        %v8012 = vadd.f32 %v8011, %v7922
        %v8013 = vadd.f32 %v8012, %v7924
        %v8014 = vadd.f32 %v8013, %v7926
        %v8015 = vadd.f32 %v8014, %v7928
        %v8016 = vadd.f32 %v8015, %v7930
        %v8017 = vadd.f32 %v8016, %v7932
        %v8018 = vadd.f32 %v8017, %v7934
        %v8019 = vadd.f32 %v8018, %v7936
        %v8020 = vadd.f32 %v8019, %v7938
        %v8021 = vadd.f32 %v8020, %v7940
        %v8022 = vadd.f32 %v8021, %v7942
        %v8023 = vadd.f32 %v8022, %v7944
        %v8024 = vadd.f32 %v8023, %v7946
        %v8025 = vadd.f32 %v8024, %v7948
        %v8026 = vadd.f32 %v8025, %v7950
        %v8027 = vadd.f32 %v8026, %v7952
        %v8028 = vadd.f32 %v8027, %v7954
        %v8029 = vadd.f32 %v8028, %v7956
        %v8030 = vadd.f32 %v8029, %v7958
        %v8031 = vadd.f32 %v8030, %v7960
        %v8032 = vadd.f32 %v8031, %v7962
        %v8033 = vadd.f32 %v8032, %v7964
        %v8034 = vadd.f32 %v8033, %v7966
        %v8035 = vadd.f32 %v8034, %v7968
        %v8036 = vadd.f32 %v8035, %v7970
        %v8037 = vadd.f32 %v7845, %v7847
        %v8038 = vadd.f32 %v8037, %v7849
        %v8039 = vadd.f32 %v8038, %v7851
        %v8040 = vadd.f32 %v8039, %v7853
        %v8041 = vadd.f32 %v8040, %v7855
        %v8042 = vadd.f32 %v8041, %v7857
        %v8043 = vadd.f32 %v8042, %v7859
        %v8044 = vadd.f32 %v8043, %v7861
        %v8045 = vadd.f32 %v8044, %v7863
        %v8046 = vadd.f32 %v8045, %v7865
        %v8047 = vadd.f32 %v8046, %v7867
        %v8048 = vadd.f32 %v8047, %v7869
        %v8049 = vadd.f32 %v8048, %v7871
        %v8050 = vadd.f32 %v8049, %v7873
        %v8051 = vadd.f32 %v8050, %v7875
        %v8052 = vadd.f32 %v8051, %v7877
        %v8053 = vadd.f32 %v8052, %v7879
        %v8054 = vadd.f32 %v8053, %v7881
        %v8055 = vadd.f32 %v8054, %v7883
        %v8056 = vadd.f32 %v8055, %v7885
        %v8057 = vadd.f32 %v8056, %v7887
        %v8058 = vadd.f32 %v8057, %v7889
        %v8059 = vadd.f32 %v8058, %v7891
        %v8060 = vadd.f32 %v8059, %v7893
        %v8061 = vadd.f32 %v8060, %v7895
        %v8062 = vadd.f32 %v8061, %v7897
        %v8063 = vadd.f32 %v8062, %v7899
        %v8064 = vadd.f32 %v8063, %v7901
        %v8065 = vadd.f32 %v8064, %v7903
        %v8066 = vadd.f32 %v8065, %v7905
        %v8067 = vadd.f32 %v8066, %v7907
        %v8068 = vadd.f32 %v8067, %v7909
        %v8069 = vadd.f32 %v8068, %v7911
        %v8070 = vadd.f32 %v8069, %v7913
        %v8071 = vadd.f32 %v8070, %v7915
        %v8072 = vadd.f32 %v8071, %v7917
        %v8073 = vadd.f32 %v8072, %v7919
        %v8074 = vadd.f32 %v8073, %v7921
        %v8075 = vadd.f32 %v8074, %v7923
        %v8076 = vadd.f32 %v8075, %v7925
        %v8077 = vadd.f32 %v8076, %v7927
        %v8078 = vadd.f32 %v8077, %v7929
        %v8079 = vadd.f32 %v8078, %v7931
        %v8080 = vadd.f32 %v8079, %v7933
        %v8081 = vadd.f32 %v8080, %v7935
        %v8082 = vadd.f32 %v8081, %v7937
        %v8083 = vadd.f32 %v8082, %v7939
        %v8084 = vadd.f32 %v8083, %v7941
        %v8085 = vadd.f32 %v8084, %v7943
        %v8086 = vadd.f32 %v8085, %v7945
        %v8087 = vadd.f32 %v8086, %v7947
        %v8088 = vadd.f32 %v8087, %v7949
        %v8089 = vadd.f32 %v8088, %v7951
        %v8090 = vadd.f32 %v8089, %v7953
        %v8091 = vadd.f32 %v8090, %v7955
        %v8092 = vadd.f32 %v8091, %v7957
        %v8093 = vadd.f32 %v8092, %v7959
        %v8094 = vadd.f32 %v8093, %v7961
        %v8095 = vadd.f32 %v8094, %v7963
        %v8096 = vadd.f32 %v8095, %v7965
        %v8097 = vadd.f32 %v8096, %v7967
        %v8098 = vadd.f32 %v8097, %v7969
        %v8099 = vadd.f32 %v8098, %v7971
        %v8100 = vadd.f32 %v7972, %v8036
        %v8101 = vadd.f32 %v7973, %v8099
        %8102 = vst [vmem:[#allocation2 + $0x40] sm:$0xff] %v8100
        %8103 = vst [vmem:[#allocation2 + $0x48] sm:$0xff] %v8101
        %p8104 = scmp.eq.s32.totalorder %s26, 1
        // Predicated region
        $region53: #{ens_forward.1} parent=47 // pred_check
          %p8105 = pneg %p8104
        $region54: #{ens_forward.1} parent=47 // pred_check_branch
          %8107 = sbr.rel (%p8105) target = $region56
        $region55: #{ens_forward.1} parent=47 // pred_region
          %v8108 = vld [vmem:[#allocation2] sm:$0xff]
          %v8109 = vld [vmem:[#allocation2 + $0x8] sm:$0xff]
          %v8110 = vld [vmem:[#allocation2 + $0x10] sm:$0xff]
          %v8111 = vld [vmem:[#allocation2 + $0x18] sm:$0xff]
          %v8112 = vld [vmem:[#allocation2 + $0x20] sm:$0xff]
          %v8113 = vld [vmem:[#allocation2 + $0x28] sm:$0xff]
          %v8114 = vld [vmem:[#allocation2 + $0x30] sm:$0xff]
          %v8115 = vld [vmem:[#allocation2 + $0x38] sm:$0xff]
          %v8116 = vld [vmem:[#allocation2 + $0x40] sm:$0xff]
          %v8117 = vld [vmem:[#allocation2 + $0x48] sm:$0xff]
          %v8118 = vpack.c.bf16 %v8108, %v8108
          %v8119 = vpack.c.bf16 %v8109, %v8109
          %v8120 = vpack.c.bf16 %v8110, %v8110
          %v8121 = vpack.c.bf16 %v8111, %v8111
          %v8122 = vpack.c.bf16 %v8112, %v8112
          %v8123 = vpack.c.bf16 %v8113, %v8113
          %v8124 = vpack.c.bf16 %v8114, %v8114
          %v8125 = vpack.c.bf16 %v8115, %v8115
          %v8126 = vpack.c.bf16 %v8116, %v8116
          %v8127 = vpack.c.bf16 %v8117, %v8117
          %v8128 = vld [vmem:[%s5] sm:$0xf]
          %v8129 = vld [vmem:[%s5 + $0x4] sm:$0xf]
          %v8130 = vld [vmem:[%s5 + $0x8] sm:$0xf]
          %v8131 = vld [vmem:[%s5 + $0xc] sm:$0xf]
          %v8132 = vld [vmem:[%s5 + $0x10] sm:$0xf]
          %v8133 = vld [vmem:[%s5 + $0x14] sm:$0xf]
          %v8134 = vld [vmem:[%s5 + $0x18] sm:$0xf]
          %v8135 = vld [vmem:[%s5 + $0x1c] sm:$0xf]
          %v8136 = vld [vmem:[%s5 + $0x20] sm:$0xf]
          %v8137 = vld [vmem:[%s5 + $0x24] sm:$0xf]
          %v8138 = vld [vmem:[%s5 + $0x28] sm:$0xf]
          %v8139 = vld [vmem:[%s5 + $0x2c] sm:$0xf]
          %v8140 = vld [vmem:[%s5 + $0x30] sm:$0xf]
          %v8141 = vld [vmem:[%s5 + $0x34] sm:$0xf]
          %v8142 = vld [vmem:[%s5 + $0x38] sm:$0xf]
          %v8143 = vld [vmem:[%s5 + $0x3c] sm:$0xf]
          %v8144 = vld [vmem:[%s5 + $0x40] sm:$0xf]
          %v8145 = vld [vmem:[%s5 + $0x44] sm:$0xf]
          %v8146 = vld [vmem:[%s5 + $0x48] sm:$0xf]
          %v8147 = vld [vmem:[%s5 + $0x4c] sm:$0xf]
          %v8148 = vld [vmem:[%s5 + $0x50] sm:$0xf]
          %v8149 = vld [vmem:[%s5 + $0x54] sm:$0xf]
          %v8150 = vld [vmem:[%s5 + $0x58] sm:$0xf]
          %v8151 = vld [vmem:[%s5 + $0x5c] sm:$0xf]
          %v8152 = vld [vmem:[%s5 + $0x60] sm:$0xf]
          %v8153 = vld [vmem:[%s5 + $0x64] sm:$0xf]
          %v8154 = vld [vmem:[%s5 + $0x68] sm:$0xf]
          %v8155 = vld [vmem:[%s5 + $0x6c] sm:$0xf]
          %v8156 = vld [vmem:[%s5 + $0x70] sm:$0xf]
          %v8157 = vld [vmem:[%s5 + $0x74] sm:$0xf]
          %v8158 = vld [vmem:[%s5 + $0x78] sm:$0xf]
          %v8159 = vld [vmem:[%s5 + $0x7c] sm:$0xf]
          %v8160 = vld [vmem:[%s5 + $0x80] sm:$0xf]
          %v8161 = vld [vmem:[%s5 + $0x84] sm:$0xf]
          %v8162 = vld [vmem:[%s5 + $0x88] sm:$0xf]
          %v8163 = vld [vmem:[%s5 + $0x8c] sm:$0xf]
          %v8164 = vld [vmem:[%s5 + $0x90] sm:$0xf]
          %v8165 = vld [vmem:[%s5 + $0x94] sm:$0xf]
          %v8166 = vld [vmem:[%s5 + $0x98] sm:$0xf]
          %v8167 = vld [vmem:[%s5 + $0x9c] sm:$0xf]
          %v8168 = vld [vmem:[%s5 + $0xa0] sm:$0xf]
          %v8169 = vld [vmem:[%s5 + $0xa4] sm:$0xf]
          %v8170 = vld [vmem:[%s5 + $0xa8] sm:$0xf]
          %v8171 = vld [vmem:[%s5 + $0xac] sm:$0xf]
          %v8172 = vld [vmem:[%s5 + $0xb0] sm:$0xf]
          %v8173 = vld [vmem:[%s5 + $0xb4] sm:$0xf]
          %v8174 = vld [vmem:[%s5 + $0xb8] sm:$0xf]
          %v8175 = vld [vmem:[%s5 + $0xbc] sm:$0xf]
          %v8176 = vld [vmem:[%s5 + $0xc0] sm:$0xf]
          %v8177 = vld [vmem:[%s5 + $0xc4] sm:$0xf]
          %v8178 = vld [vmem:[%s5 + $0xc8] sm:$0xf]
          %v8179 = vld [vmem:[%s5 + $0xcc] sm:$0xf]
          %v8180 = vld [vmem:[%s5 + $0xd0] sm:$0xf]
          %v8181 = vld [vmem:[%s5 + $0xd4] sm:$0xf]
          %v8182 = vld [vmem:[%s5 + $0xd8] sm:$0xf]
          %v8183 = vld [vmem:[%s5 + $0xdc] sm:$0xf]
          %v8184 = vld [vmem:[%s5 + $0xe0] sm:$0xf]
          %v8185 = vld [vmem:[%s5 + $0xe4] sm:$0xf]
          %v8186 = vld [vmem:[%s5 + $0xe8] sm:$0xf]
          %v8187 = vld [vmem:[%s5 + $0xec] sm:$0xf]
          %v8188 = vld [vmem:[%s5 + $0xf0] sm:$0xf]
          %v8189 = vld [vmem:[%s5 + $0xf4] sm:$0xf]
          %v8190 = vld [vmem:[%s5 + $0xf8] sm:$0xf]
          %v8191 = vld [vmem:[%s5 + $0xfc] sm:$0xf]
          %v8192 = vld [vmem:[%s5 + $0x100] sm:$0xf]
          %v8193 = vld [vmem:[%s5 + $0x104] sm:$0xf]
          %v8194 = vld [vmem:[%s5 + $0x108] sm:$0xf]
          %v8195 = vld [vmem:[%s5 + $0x10c] sm:$0xf]
          %v8196 = vld [vmem:[%s5 + $0x110] sm:$0xf]
          %v8197 = vld [vmem:[%s5 + $0x114] sm:$0xf]
          %v8198 = vld [vmem:[%s5 + $0x118] sm:$0xf]
          %v8199 = vld [vmem:[%s5 + $0x11c] sm:$0xf]
          %v8200 = vld [vmem:[%s5 + $0x120] sm:$0xf]
          %v8201 = vld [vmem:[%s5 + $0x124] sm:$0xf]
          %v8202 = vld [vmem:[%s5 + $0x128] sm:$0xf]
          %v8203 = vld [vmem:[%s5 + $0x12c] sm:$0xf]
          %v8204 = vld [vmem:[%s5 + $0x130] sm:$0xf]
          %v8205 = vld [vmem:[%s5 + $0x134] sm:$0xf]
          %v8206 = vld [vmem:[%s5 + $0x138] sm:$0xf]
          %v8207 = vld [vmem:[%s5 + $0x13c] sm:$0xf]
          %v8208 = vld [vmem:[%s5 + $0x140] sm:$0xf]
          %v8209 = vld [vmem:[%s5 + $0x144] sm:$0xf]
          %v8210 = vld [vmem:[%s5 + $0x148] sm:$0xf]
          %v8211 = vld [vmem:[%s5 + $0x14c] sm:$0xf]
          %v8212 = vld [vmem:[%s5 + $0x150] sm:$0xf]
          %v8213 = vld [vmem:[%s5 + $0x154] sm:$0xf]
          %v8214 = vld [vmem:[%s5 + $0x158] sm:$0xf]
          %v8215 = vld [vmem:[%s5 + $0x15c] sm:$0xf]
          %v8216 = vld [vmem:[%s5 + $0x160] sm:$0xf]
          %v8217 = vld [vmem:[%s5 + $0x164] sm:$0xf]
          %v8218 = vld [vmem:[%s5 + $0x168] sm:$0xf]
          %v8219 = vld [vmem:[%s5 + $0x16c] sm:$0xf]
          %v8220 = vld [vmem:[%s5 + $0x170] sm:$0xf]
          %v8221 = vld [vmem:[%s5 + $0x174] sm:$0xf]
          %v8222 = vld [vmem:[%s5 + $0x178] sm:$0xf]
          %v8223 = vld [vmem:[%s5 + $0x17c] sm:$0xf]
          %v8224 = vld [vmem:[%s5 + $0x180] sm:$0xf]
          %v8225 = vld [vmem:[%s5 + $0x184] sm:$0xf]
          %v8226 = vld [vmem:[%s5 + $0x188] sm:$0xf]
          %v8227 = vld [vmem:[%s5 + $0x18c] sm:$0xf]
          %v8228 = vld [vmem:[%s5 + $0x190] sm:$0xf]
          %v8229 = vld [vmem:[%s5 + $0x194] sm:$0xf]
          %v8230 = vld [vmem:[%s5 + $0x198] sm:$0xf]
          %v8231 = vld [vmem:[%s5 + $0x19c] sm:$0xf]
          %v8232 = vld [vmem:[%s5 + $0x1a0] sm:$0xf]
          %v8233 = vld [vmem:[%s5 + $0x1a4] sm:$0xf]
          %v8234 = vld [vmem:[%s5 + $0x1a8] sm:$0xf]
          %v8235 = vld [vmem:[%s5 + $0x1ac] sm:$0xf]
          %v8236 = vld [vmem:[%s5 + $0x1b0] sm:$0xf]
          %v8237 = vld [vmem:[%s5 + $0x1b4] sm:$0xf]
          %v8238 = vld [vmem:[%s5 + $0x1b8] sm:$0xf]
          %v8239 = vld [vmem:[%s5 + $0x1bc] sm:$0xf]
          %v8240 = vld [vmem:[%s5 + $0x1c0] sm:$0xf]
          %v8241 = vld [vmem:[%s5 + $0x1c4] sm:$0xf]
          %v8242 = vld [vmem:[%s5 + $0x1c8] sm:$0xf]
          %v8243 = vld [vmem:[%s5 + $0x1cc] sm:$0xf]
          %v8244 = vld [vmem:[%s5 + $0x1d0] sm:$0xf]
          %v8245 = vld [vmem:[%s5 + $0x1d4] sm:$0xf]
          %v8246 = vld [vmem:[%s5 + $0x1d8] sm:$0xf]
          %v8247 = vld [vmem:[%s5 + $0x1dc] sm:$0xf]
          %v8248 = vld [vmem:[%s5 + $0x1e0] sm:$0xf]
          %v8249 = vld [vmem:[%s5 + $0x1e4] sm:$0xf]
          %v8250 = vld [vmem:[%s5 + $0x1e8] sm:$0xf]
          %v8251 = vld [vmem:[%s5 + $0x1ec] sm:$0xf]
          %v8252 = vld [vmem:[%s5 + $0x1f0] sm:$0xf]
          %v8253 = vld [vmem:[%s5 + $0x1f4] sm:$0xf]
          %v8254 = vld [vmem:[%s5 + $0x1f8] sm:$0xf]
          %v8255 = vld [vmem:[%s5 + $0x1fc] sm:$0xf]
          %v8256 = vld [vmem:[%s5 + $0x200] sm:$0xf]
          %v8257 = vld [vmem:[%s5 + $0x204] sm:$0xf]
          %v8258 = vld [vmem:[%s5 + $0x208] sm:$0xf]
          %v8259 = vld [vmem:[%s5 + $0x20c] sm:$0xf]
          %v8260 = vld [vmem:[%s5 + $0x210] sm:$0xf]
          %v8261 = vld [vmem:[%s5 + $0x214] sm:$0xf]
          %v8262 = vld [vmem:[%s5 + $0x218] sm:$0xf]
          %v8263 = vld [vmem:[%s5 + $0x21c] sm:$0xf]
          %v8264 = vld [vmem:[%s5 + $0x220] sm:$0xf]
          %v8265 = vld [vmem:[%s5 + $0x224] sm:$0xf]
          %v8266 = vld [vmem:[%s5 + $0x228] sm:$0xf]
          %v8267 = vld [vmem:[%s5 + $0x22c] sm:$0xf]
          %v8268 = vld [vmem:[%s5 + $0x230] sm:$0xf]
          %v8269 = vld [vmem:[%s5 + $0x234] sm:$0xf]
          %v8270 = vld [vmem:[%s5 + $0x238] sm:$0xf]
          %v8271 = vld [vmem:[%s5 + $0x23c] sm:$0xf]
          %v8272 = vld [vmem:[%s5 + $0x240] sm:$0xf]
          %v8273 = vld [vmem:[%s5 + $0x244] sm:$0xf]
          %v8274 = vld [vmem:[%s5 + $0x248] sm:$0xf]
          %v8275 = vld [vmem:[%s5 + $0x24c] sm:$0xf]
          %v8276 = vld [vmem:[%s5 + $0x250] sm:$0xf]
          %v8277 = vld [vmem:[%s5 + $0x254] sm:$0xf]
          %v8278 = vld [vmem:[%s5 + $0x258] sm:$0xf]
          %v8279 = vld [vmem:[%s5 + $0x25c] sm:$0xf]
          %v8280 = vld [vmem:[%s5 + $0x260] sm:$0xf]
          %v8281 = vld [vmem:[%s5 + $0x264] sm:$0xf]
          %v8282 = vld [vmem:[%s5 + $0x268] sm:$0xf]
          %v8283 = vld [vmem:[%s5 + $0x26c] sm:$0xf]
          %v8284 = vld [vmem:[%s5 + $0x270] sm:$0xf]
          %v8285 = vld [vmem:[%s5 + $0x274] sm:$0xf]
          %v8286 = vld [vmem:[%s5 + $0x278] sm:$0xf]
          %v8287 = vld [vmem:[%s5 + $0x27c] sm:$0xf]
          %v8448 = vunpack.c.l.b16 %v8128
          %v8449 = vunpack.c.l.b16 %v8129
          %v8450 = vunpack.c.l.b16 %v8130
          %v8451 = vunpack.c.l.b16 %v8131
          %v8452 = vunpack.c.l.b16 %v8132
          %v8453 = vunpack.c.l.b16 %v8133
          %v8454 = vunpack.c.l.b16 %v8134
          %v8455 = vunpack.c.l.b16 %v8135
          %v8456 = vunpack.c.l.b16 %v8136
          %v8457 = vunpack.c.l.b16 %v8137
          %v8458 = vunpack.c.l.b16 %v8138
          %v8459 = vunpack.c.l.b16 %v8139
          %v8460 = vunpack.c.l.b16 %v8140
          %v8461 = vunpack.c.l.b16 %v8141
          %v8462 = vunpack.c.l.b16 %v8142
          %v8463 = vunpack.c.l.b16 %v8143
          %v8464 = vunpack.c.l.b16 %v8144
          %v8465 = vunpack.c.l.b16 %v8145
          %v8466 = vunpack.c.l.b16 %v8146
          %v8467 = vunpack.c.l.b16 %v8147
          %v8468 = vunpack.c.l.b16 %v8148
          %v8469 = vunpack.c.l.b16 %v8149
          %v8470 = vunpack.c.l.b16 %v8150
          %v8471 = vunpack.c.l.b16 %v8151
          %v8472 = vunpack.c.l.b16 %v8152
          %v8473 = vunpack.c.l.b16 %v8153
          %v8474 = vunpack.c.l.b16 %v8154
          %v8475 = vunpack.c.l.b16 %v8155
          %v8476 = vunpack.c.l.b16 %v8156
          %v8477 = vunpack.c.l.b16 %v8157
          %v8478 = vunpack.c.l.b16 %v8158
          %v8479 = vunpack.c.l.b16 %v8159
          %v8480 = vunpack.c.l.b16 %v8160
          %v8481 = vunpack.c.l.b16 %v8161
          %v8482 = vunpack.c.l.b16 %v8162
          %v8483 = vunpack.c.l.b16 %v8163
          %v8484 = vunpack.c.l.b16 %v8164
          %v8485 = vunpack.c.l.b16 %v8165
          %v8486 = vunpack.c.l.b16 %v8166
          %v8487 = vunpack.c.l.b16 %v8167
          %v8488 = vunpack.c.l.b16 %v8168
          %v8489 = vunpack.c.l.b16 %v8169
          %v8490 = vunpack.c.l.b16 %v8170
          %v8491 = vunpack.c.l.b16 %v8171
          %v8492 = vunpack.c.l.b16 %v8172
          %v8493 = vunpack.c.l.b16 %v8173
          %v8494 = vunpack.c.l.b16 %v8174
          %v8495 = vunpack.c.l.b16 %v8175
          %v8496 = vunpack.c.l.b16 %v8176
          %v8497 = vunpack.c.l.b16 %v8177
          %v8498 = vunpack.c.l.b16 %v8178
          %v8499 = vunpack.c.l.b16 %v8179
          %v8500 = vunpack.c.l.b16 %v8180
          %v8501 = vunpack.c.l.b16 %v8181
          %v8502 = vunpack.c.l.b16 %v8182
          %v8503 = vunpack.c.l.b16 %v8183
          %v8504 = vunpack.c.l.b16 %v8184
          %v8505 = vunpack.c.l.b16 %v8185
          %v8506 = vunpack.c.l.b16 %v8186
          %v8507 = vunpack.c.l.b16 %v8187
          %v8508 = vunpack.c.l.b16 %v8188
          %v8509 = vunpack.c.l.b16 %v8189
          %v8510 = vunpack.c.l.b16 %v8190
          %v8511 = vunpack.c.l.b16 %v8191
          %v8512 = vunpack.c.l.b16 %v8192
          %v8513 = vunpack.c.l.b16 %v8193
          %v8514 = vunpack.c.l.b16 %v8194
          %v8515 = vunpack.c.l.b16 %v8195
          %v8516 = vunpack.c.l.b16 %v8196
          %v8517 = vunpack.c.l.b16 %v8197
          %v8518 = vunpack.c.l.b16 %v8198
          %v8519 = vunpack.c.l.b16 %v8199
          %v8520 = vunpack.c.l.b16 %v8200
          %v8521 = vunpack.c.l.b16 %v8201
          %v8522 = vunpack.c.l.b16 %v8202
          %v8523 = vunpack.c.l.b16 %v8203
          %v8524 = vunpack.c.l.b16 %v8204
          %v8525 = vunpack.c.l.b16 %v8205
          %v8526 = vunpack.c.l.b16 %v8206
          %v8527 = vunpack.c.l.b16 %v8207
          %v8528 = vunpack.c.l.b16 %v8208
          %v8529 = vunpack.c.l.b16 %v8209
          %v8530 = vunpack.c.l.b16 %v8210
          %v8531 = vunpack.c.l.b16 %v8211
          %v8532 = vunpack.c.l.b16 %v8212
          %v8533 = vunpack.c.l.b16 %v8213
          %v8534 = vunpack.c.l.b16 %v8214
          %v8535 = vunpack.c.l.b16 %v8215
          %v8536 = vunpack.c.l.b16 %v8216
          %v8537 = vunpack.c.l.b16 %v8217
          %v8538 = vunpack.c.l.b16 %v8218
          %v8539 = vunpack.c.l.b16 %v8219
          %v8540 = vunpack.c.l.b16 %v8220
          %v8541 = vunpack.c.l.b16 %v8221
          %v8542 = vunpack.c.l.b16 %v8222
          %v8543 = vunpack.c.l.b16 %v8223
          %v8544 = vunpack.c.l.b16 %v8224
          %v8545 = vunpack.c.l.b16 %v8225
          %v8546 = vunpack.c.l.b16 %v8226
          %v8547 = vunpack.c.l.b16 %v8227
          %v8548 = vunpack.c.l.b16 %v8228
          %v8549 = vunpack.c.l.b16 %v8229
          %v8550 = vunpack.c.l.b16 %v8230
          %v8551 = vunpack.c.l.b16 %v8231
          %v8552 = vunpack.c.l.b16 %v8232
          %v8553 = vunpack.c.l.b16 %v8233
          %v8554 = vunpack.c.l.b16 %v8234
          %v8555 = vunpack.c.l.b16 %v8235
          %v8556 = vunpack.c.l.b16 %v8236
          %v8557 = vunpack.c.l.b16 %v8237
          %v8558 = vunpack.c.l.b16 %v8238
          %v8559 = vunpack.c.l.b16 %v8239
          %v8560 = vunpack.c.l.b16 %v8240
          %v8561 = vunpack.c.l.b16 %v8241
          %v8562 = vunpack.c.l.b16 %v8242
          %v8563 = vunpack.c.l.b16 %v8243
          %v8564 = vunpack.c.l.b16 %v8244
          %v8565 = vunpack.c.l.b16 %v8245
          %v8566 = vunpack.c.l.b16 %v8246
          %v8567 = vunpack.c.l.b16 %v8247
          %v8568 = vunpack.c.l.b16 %v8248
          %v8569 = vunpack.c.l.b16 %v8249
          %v8570 = vunpack.c.l.b16 %v8250
          %v8571 = vunpack.c.l.b16 %v8251
          %v8572 = vunpack.c.l.b16 %v8252
          %v8573 = vunpack.c.l.b16 %v8253
          %v8574 = vunpack.c.l.b16 %v8254
          %v8575 = vunpack.c.l.b16 %v8255
          %v8576 = vunpack.c.l.b16 %v8256
          %v8577 = vunpack.c.l.b16 %v8257
          %v8578 = vunpack.c.l.b16 %v8258
          %v8579 = vunpack.c.l.b16 %v8259
          %v8580 = vunpack.c.l.b16 %v8260
          %v8581 = vunpack.c.l.b16 %v8261
          %v8582 = vunpack.c.l.b16 %v8262
          %v8583 = vunpack.c.l.b16 %v8263
          %v8584 = vunpack.c.l.b16 %v8264
          %v8585 = vunpack.c.l.b16 %v8265
          %v8586 = vunpack.c.l.b16 %v8266
          %v8587 = vunpack.c.l.b16 %v8267
          %v8588 = vunpack.c.l.b16 %v8268
          %v8589 = vunpack.c.l.b16 %v8269
          %v8590 = vunpack.c.l.b16 %v8270
          %v8591 = vunpack.c.l.b16 %v8271
          %v8592 = vunpack.c.l.b16 %v8272
          %v8593 = vunpack.c.l.b16 %v8273
          %v8594 = vunpack.c.l.b16 %v8274
          %v8595 = vunpack.c.l.b16 %v8275
          %v8596 = vunpack.c.l.b16 %v8276
          %v8597 = vunpack.c.l.b16 %v8277
          %v8598 = vunpack.c.l.b16 %v8278
          %v8599 = vunpack.c.l.b16 %v8279
          %v8600 = vunpack.c.l.b16 %v8280
          %v8601 = vunpack.c.l.b16 %v8281
          %v8602 = vunpack.c.l.b16 %v8282
          %v8603 = vunpack.c.l.b16 %v8283
          %v8604 = vunpack.c.l.b16 %v8284
          %v8605 = vunpack.c.l.b16 %v8285
          %v8606 = vunpack.c.l.b16 %v8286
          %v8607 = vunpack.c.l.b16 %v8287
          %v8608 = vpack.c.b16 %v8449, %v8448
          %v8609 = vpack.c.b16 %v8451, %v8450
          %v8610 = vpack.c.b16 %v8453, %v8452
          %v8611 = vpack.c.b16 %v8455, %v8454
          %v8612 = vpack.c.b16 %v8457, %v8456
          %v8613 = vpack.c.b16 %v8459, %v8458
          %v8614 = vpack.c.b16 %v8461, %v8460
          %v8615 = vpack.c.b16 %v8463, %v8462
          %v8616 = vpack.c.b16 %v8465, %v8464
          %v8617 = vpack.c.b16 %v8467, %v8466
          %v8618 = vpack.c.b16 %v8469, %v8468
          %v8619 = vpack.c.b16 %v8471, %v8470
          %v8620 = vpack.c.b16 %v8473, %v8472
          %v8621 = vpack.c.b16 %v8475, %v8474
          %v8622 = vpack.c.b16 %v8477, %v8476
          %v8623 = vpack.c.b16 %v8479, %v8478
          %v8624 = vpack.c.b16 %v8481, %v8480
          %v8625 = vpack.c.b16 %v8483, %v8482
          %v8626 = vpack.c.b16 %v8485, %v8484
          %v8627 = vpack.c.b16 %v8487, %v8486
          %v8628 = vpack.c.b16 %v8489, %v8488
          %v8629 = vpack.c.b16 %v8491, %v8490
          %v8630 = vpack.c.b16 %v8493, %v8492
          %v8631 = vpack.c.b16 %v8495, %v8494
          %v8632 = vpack.c.b16 %v8497, %v8496
          %v8633 = vpack.c.b16 %v8499, %v8498
          %v8634 = vpack.c.b16 %v8501, %v8500
          %v8635 = vpack.c.b16 %v8503, %v8502
          %v8636 = vpack.c.b16 %v8505, %v8504
          %v8637 = vpack.c.b16 %v8507, %v8506
          %v8638 = vpack.c.b16 %v8509, %v8508
          %v8639 = vpack.c.b16 %v8511, %v8510
          %v8640 = vpack.c.b16 %v8513, %v8512
          %v8641 = vpack.c.b16 %v8515, %v8514
          %v8642 = vpack.c.b16 %v8517, %v8516
          %v8643 = vpack.c.b16 %v8519, %v8518
          %v8644 = vpack.c.b16 %v8521, %v8520
          %v8645 = vpack.c.b16 %v8523, %v8522
          %v8646 = vpack.c.b16 %v8525, %v8524
          %v8647 = vpack.c.b16 %v8527, %v8526
          %v8648 = vpack.c.b16 %v8529, %v8528
          %v8649 = vpack.c.b16 %v8531, %v8530
          %v8650 = vpack.c.b16 %v8533, %v8532
          %v8651 = vpack.c.b16 %v8535, %v8534
          %v8652 = vpack.c.b16 %v8537, %v8536
          %v8653 = vpack.c.b16 %v8539, %v8538
          %v8654 = vpack.c.b16 %v8541, %v8540
          %v8655 = vpack.c.b16 %v8543, %v8542
          %v8656 = vpack.c.b16 %v8545, %v8544
          %v8657 = vpack.c.b16 %v8547, %v8546
          %v8658 = vpack.c.b16 %v8549, %v8548
          %v8659 = vpack.c.b16 %v8551, %v8550
          %v8660 = vpack.c.b16 %v8553, %v8552
          %v8661 = vpack.c.b16 %v8555, %v8554
          %v8662 = vpack.c.b16 %v8557, %v8556
          %v8663 = vpack.c.b16 %v8559, %v8558
          %v8664 = vpack.c.b16 %v8561, %v8560
          %v8665 = vpack.c.b16 %v8563, %v8562
          %v8666 = vpack.c.b16 %v8565, %v8564
          %v8667 = vpack.c.b16 %v8567, %v8566
          %v8668 = vpack.c.b16 %v8569, %v8568
          %v8669 = vpack.c.b16 %v8571, %v8570
          %v8670 = vpack.c.b16 %v8573, %v8572
          %v8671 = vpack.c.b16 %v8575, %v8574
          %v8672 = vpack.c.b16 %v8577, %v8576
          %v8673 = vpack.c.b16 %v8579, %v8578
          %v8674 = vpack.c.b16 %v8581, %v8580
          %v8675 = vpack.c.b16 %v8583, %v8582
          %v8676 = vpack.c.b16 %v8585, %v8584
          %v8677 = vpack.c.b16 %v8587, %v8586
          %v8678 = vpack.c.b16 %v8589, %v8588
          %v8679 = vpack.c.b16 %v8591, %v8590
          %v8680 = vpack.c.b16 %v8593, %v8592
          %v8681 = vpack.c.b16 %v8595, %v8594
          %v8682 = vpack.c.b16 %v8597, %v8596
          %v8683 = vpack.c.b16 %v8599, %v8598
          %v8684 = vpack.c.b16 %v8601, %v8600
          %v8685 = vpack.c.b16 %v8603, %v8602
          %v8686 = vpack.c.b16 %v8605, %v8604
          %v8687 = vpack.c.b16 %v8607, %v8606
          %8768 = vmatprep.subr.bf16.mxu0 0
          %8769 = vmatpush1.bf16.msra.mxu0 %v8615
          %8770 = vmatprep.subr.bf16.mxu0 0
          %8771 = vmatpush1.bf16.msra.mxu0 %v8614
          %8772 = vmatprep.subr.bf16.mxu0 0
          %8773 = vmatpush1.bf16.msra.mxu0 %v8613
          %8774 = vmatprep.subr.bf16.mxu0 0
          %8775 = vmatpush1.bf16.msra.mxu0 %v8612
          %8776 = vmatprep.subr.bf16.mxu0 0
          %8777 = vmatpush1.bf16.msra.mxu0 %v8611
          %8778 = vmatprep.subr.bf16.mxu0 0
          %8779 = vmatpush1.bf16.msra.mxu0 %v8610
          %8780 = vmatprep.subr.bf16.mxu0 0
          %8781 = vmatpush1.bf16.msra.mxu0 %v8609
          %8782 = vmatprep.subr.bf16.mxu0 0
          %8783 = vmatpush1.bf16.msra.mxu0 %v8608
          %8784 = vmatprep.subr.bf16.mxu0 0
          %8785 = vmatpush2.bf16.msra.mxu0 %v8623
          %8786 = vmatprep.subr.bf16.mxu0 0
          %8787 = vmatpush2.bf16.msra.mxu0 %v8622
          %8788 = vmatprep.subr.bf16.mxu0 0
          %8789 = vmatpush2.bf16.msra.mxu0 %v8621
          %8790 = vmatprep.subr.bf16.mxu0 0
          %8791 = vmatpush2.bf16.msra.mxu0 %v8620
          %8792 = vmatprep.subr.bf16.mxu0 0
          %8793 = vmatpush2.bf16.msra.mxu0 %v8619
          %8794 = vmatprep.subr.bf16.mxu0 0
          %8795 = vmatpush2.bf16.msra.mxu0 %v8618
          %8796 = vmatprep.subr.bf16.mxu0 0
          %8797 = vmatpush2.bf16.msra.mxu0 %v8617
          %8798 = vmatprep.subr.bf16.mxu0 0
          %8799 = vmatpush2.bf16.msra.mxu0 %v8616
          %8800 = vmatprep.mubr.bf16.mxu0 %v8119
          %8801 = vmatmul.mubr.bf16.gmra.mxu0 %v8118
          %v8802 = vpop.f32.mrf.mxu0
          %v8803 = vadd.f32 0.0, %v8802
          %v8804 = vpop.f32.mrf.mxu0
          %v8805 = vpop.f32.mrf.mxu0
          %v8806 = vpop.f32.mrf.mxu0
          %8807 = vdwg.mxu0
          %8808 = vmatprep.subr.bf16.mxu0 0
          %8809 = vmatpush1.bf16.msra.mxu0 %v8631
          %8810 = vmatprep.subr.bf16.mxu0 0
          %8811 = vmatpush1.bf16.msra.mxu0 %v8630
          %8812 = vmatprep.subr.bf16.mxu0 0
          %8813 = vmatpush1.bf16.msra.mxu0 %v8629
          %8814 = vmatprep.subr.bf16.mxu0 0
          %8815 = vmatpush1.bf16.msra.mxu0 %v8628
          %8816 = vmatprep.subr.bf16.mxu0 0
          %8817 = vmatpush1.bf16.msra.mxu0 %v8627
          %8818 = vmatprep.subr.bf16.mxu0 0
          %8819 = vmatpush1.bf16.msra.mxu0 %v8626
          %8820 = vmatprep.subr.bf16.mxu0 0
          %8821 = vmatpush1.bf16.msra.mxu0 %v8625
          %8822 = vmatprep.subr.bf16.mxu0 0
          %8823 = vmatpush1.bf16.msra.mxu0 %v8624
          %8824 = vmatprep.subr.bf16.mxu0 0
          %8825 = vmatpush2.bf16.msra.mxu0 %v8639
          %8826 = vmatprep.subr.bf16.mxu0 0
          %8827 = vmatpush2.bf16.msra.mxu0 %v8638
          %8828 = vmatprep.subr.bf16.mxu0 0
          %8829 = vmatpush2.bf16.msra.mxu0 %v8637
          %8830 = vmatprep.subr.bf16.mxu0 0
          %8831 = vmatpush2.bf16.msra.mxu0 %v8636
          %8832 = vmatprep.subr.bf16.mxu0 0
          %8833 = vmatpush2.bf16.msra.mxu0 %v8635
          %8834 = vmatprep.subr.bf16.mxu0 0
          %8835 = vmatpush2.bf16.msra.mxu0 %v8634
          %8836 = vmatprep.subr.bf16.mxu0 0
          %8837 = vmatpush2.bf16.msra.mxu0 %v8633
          %8838 = vmatprep.subr.bf16.mxu0 0
          %8839 = vmatpush2.bf16.msra.mxu0 %v8632
          %8840 = vmatprep.mubr.bf16.mxu0 %v8121
          %8841 = vmatmul.mubr.bf16.gmra.mxu0 %v8120
          %v8842 = vpop.f32.mrf.mxu0
          %v8843 = vadd.f32 %v8803, %v8842
          %v8844 = vpop.f32.mrf.mxu0
          %v8845 = vpop.f32.mrf.mxu0
          %v8846 = vpop.f32.mrf.mxu0
          %8847 = vdwg.mxu0
          %8848 = vmatprep.subr.bf16.mxu0 0
          %8849 = vmatpush1.bf16.msra.mxu0 %v8647
          %8850 = vmatprep.subr.bf16.mxu0 0
          %8851 = vmatpush1.bf16.msra.mxu0 %v8646
          %8852 = vmatprep.subr.bf16.mxu0 0
          %8853 = vmatpush1.bf16.msra.mxu0 %v8645
          %8854 = vmatprep.subr.bf16.mxu0 0
          %8855 = vmatpush1.bf16.msra.mxu0 %v8644
          %8856 = vmatprep.subr.bf16.mxu0 0
          %8857 = vmatpush1.bf16.msra.mxu0 %v8643
          %8858 = vmatprep.subr.bf16.mxu0 0
          %8859 = vmatpush1.bf16.msra.mxu0 %v8642
          %8860 = vmatprep.subr.bf16.mxu0 0
          %8861 = vmatpush1.bf16.msra.mxu0 %v8641
          %8862 = vmatprep.subr.bf16.mxu0 0
          %8863 = vmatpush1.bf16.msra.mxu0 %v8640
          %8864 = vmatprep.subr.bf16.mxu0 0
          %8865 = vmatpush2.bf16.msra.mxu0 %v8655
          %8866 = vmatprep.subr.bf16.mxu0 0
          %8867 = vmatpush2.bf16.msra.mxu0 %v8654
          %8868 = vmatprep.subr.bf16.mxu0 0
          %8869 = vmatpush2.bf16.msra.mxu0 %v8653
          %8870 = vmatprep.subr.bf16.mxu0 0
          %8871 = vmatpush2.bf16.msra.mxu0 %v8652
          %8872 = vmatprep.subr.bf16.mxu0 0
          %8873 = vmatpush2.bf16.msra.mxu0 %v8651
          %8874 = vmatprep.subr.bf16.mxu0 0
          %8875 = vmatpush2.bf16.msra.mxu0 %v8650
          %8876 = vmatprep.subr.bf16.mxu0 0
          %8877 = vmatpush2.bf16.msra.mxu0 %v8649
          %8878 = vmatprep.subr.bf16.mxu0 0
          %8879 = vmatpush2.bf16.msra.mxu0 %v8648
          %8880 = vmatprep.mubr.bf16.mxu0 %v8123
          %8881 = vmatmul.mubr.bf16.gmra.mxu0 %v8122
          %v8882 = vpop.f32.mrf.mxu0
          %v8883 = vadd.f32 %v8843, %v8882
          %v8884 = vpop.f32.mrf.mxu0
          %v8885 = vpop.f32.mrf.mxu0
          %v8886 = vpop.f32.mrf.mxu0
          %8887 = vdwg.mxu0
          %8888 = vmatprep.subr.bf16.mxu0 0
          %8889 = vmatpush1.bf16.msra.mxu0 %v8663
          %8890 = vmatprep.subr.bf16.mxu0 0
          %8891 = vmatpush1.bf16.msra.mxu0 %v8662
          %8892 = vmatprep.subr.bf16.mxu0 0
          %8893 = vmatpush1.bf16.msra.mxu0 %v8661
          %8894 = vmatprep.subr.bf16.mxu0 0
          %8895 = vmatpush1.bf16.msra.mxu0 %v8660
          %8896 = vmatprep.subr.bf16.mxu0 0
          %8897 = vmatpush1.bf16.msra.mxu0 %v8659
          %8898 = vmatprep.subr.bf16.mxu0 0
          %8899 = vmatpush1.bf16.msra.mxu0 %v8658
          %8900 = vmatprep.subr.bf16.mxu0 0
          %8901 = vmatpush1.bf16.msra.mxu0 %v8657
          %8902 = vmatprep.subr.bf16.mxu0 0
          %8903 = vmatpush1.bf16.msra.mxu0 %v8656
          %8904 = vmatprep.subr.bf16.mxu0 0
          %8905 = vmatpush2.bf16.msra.mxu0 %v8671
          %8906 = vmatprep.subr.bf16.mxu0 0
          %8907 = vmatpush2.bf16.msra.mxu0 %v8670
          %8908 = vmatprep.subr.bf16.mxu0 0
          %8909 = vmatpush2.bf16.msra.mxu0 %v8669
          %8910 = vmatprep.subr.bf16.mxu0 0
          %8911 = vmatpush2.bf16.msra.mxu0 %v8668
          %8912 = vmatprep.subr.bf16.mxu0 0
          %8913 = vmatpush2.bf16.msra.mxu0 %v8667
          %8914 = vmatprep.subr.bf16.mxu0 0
          %8915 = vmatpush2.bf16.msra.mxu0 %v8666
          %8916 = vmatprep.subr.bf16.mxu0 0
          %8917 = vmatpush2.bf16.msra.mxu0 %v8665
          %8918 = vmatprep.subr.bf16.mxu0 0
          %8919 = vmatpush2.bf16.msra.mxu0 %v8664
          %8920 = vmatprep.mubr.bf16.mxu0 %v8125
          %8921 = vmatmul.mubr.bf16.gmra.mxu0 %v8124
          %v8922 = vpop.f32.mrf.mxu0
          %v8923 = vadd.f32 %v8883, %v8922
          %v8924 = vpop.f32.mrf.mxu0
          %v8925 = vpop.f32.mrf.mxu0
          %v8926 = vpop.f32.mrf.mxu0
          %8927 = vdwg.mxu0
          %8928 = vmatprep.subr.bf16.mxu0 0
          %8929 = vmatpush1.bf16.msra.mxu0 %v8679
          %8930 = vmatprep.subr.bf16.mxu0 0
          %8931 = vmatpush1.bf16.msra.mxu0 %v8678
          %8932 = vmatprep.subr.bf16.mxu0 0
          %8933 = vmatpush1.bf16.msra.mxu0 %v8677
          %8934 = vmatprep.subr.bf16.mxu0 0
          %8935 = vmatpush1.bf16.msra.mxu0 %v8676
          %8936 = vmatprep.subr.bf16.mxu0 0
          %8937 = vmatpush1.bf16.msra.mxu0 %v8675
          %8938 = vmatprep.subr.bf16.mxu0 0
          %8939 = vmatpush1.bf16.msra.mxu0 %v8674
          %8940 = vmatprep.subr.bf16.mxu0 0
          %8941 = vmatpush1.bf16.msra.mxu0 %v8673
          %8942 = vmatprep.subr.bf16.mxu0 0
          %8943 = vmatpush1.bf16.msra.mxu0 %v8672
          %8944 = vmatprep.subr.bf16.mxu0 0
          %8945 = vmatpush2.bf16.msra.mxu0 %v8687
          %8946 = vmatprep.subr.bf16.mxu0 0
          %8947 = vmatpush2.bf16.msra.mxu0 %v8686
          %8948 = vmatprep.subr.bf16.mxu0 0
          %8949 = vmatpush2.bf16.msra.mxu0 %v8685
          %8950 = vmatprep.subr.bf16.mxu0 0
          %8951 = vmatpush2.bf16.msra.mxu0 %v8684
          %8952 = vmatprep.subr.bf16.mxu0 0
          %8953 = vmatpush2.bf16.msra.mxu0 %v8683
          %8954 = vmatprep.subr.bf16.mxu0 0
          %8955 = vmatpush2.bf16.msra.mxu0 %v8682
          %8956 = vmatprep.subr.bf16.mxu0 0
          %8957 = vmatpush2.bf16.msra.mxu0 %v8681
          %8958 = vmatprep.subr.bf16.mxu0 0
          %8959 = vmatpush2.bf16.msra.mxu0 %v8680
          %8960 = vmatprep.mubr.bf16.mxu0 %v8127
          %8961 = vmatmul.mubr.bf16.gmra.mxu0 %v8126
          %v8962 = vpop.f32.mrf.mxu0
          %v8963 = vadd.f32 %v8923, %v8962
          %v8964 = vpop.f32.mrf.mxu0
          %v8965 = vpop.f32.mrf.mxu0
          %v8966 = vpop.f32.mrf.mxu0
          %8967 = vdwg.mxu0
          %v8968 = vrot.slane %v8963, 4
          %v8969 = vadd.f32 %v8963, %v8968
          %v8970 = vrot.slane %v8969, 2
          %v8971 = vadd.f32 %v8969, %v8970
          %v8972 = vrot.slane %v8971, 1
          %v8973 = vadd.f32 %v8971, %v8972
          %v8974 = vmul.f32 %v8973, 0.0009765625
          %v8975 = vld [vmem:[%s6] sm:$0x1]
          %v8976 = vadd.f32 %v8974, %v8975
          %8977 = vst [vmem:[%s293] sm:$0x1] %v8976
        $region56: #{ens_forward.1} parent=47 // pred_fallthru
          _
        %s8978 = sand.u32 %s195, 1
        %s8979 = scalar_lea.sflag [#allocation4], %s8978
        %s8980 = sand.u32 %s195, 1
        %s8981 = scalar_lea.vmem [#allocation3], %s8980
        // Predicated region
        $region57: #{ens_forward.1} parent=47 // pred_check
          %p8982 = pneg %p205
        $region58: #{ens_forward.1} parent=47 // pred_check_branch
          %8984 = sbr.rel (%p8982) target = $region60
        $region59: #{ens_forward.1} parent=47 // pred_region
          %s8986 = ssub.s32 16, 16
          %8987 = vsyncadd %s8979, %s8986
          %s8988 = smul.addr %s25, 16
          %s8989 = scalar_lea.hbm %s7, %s8988
          %s8991 = sshll.u32 %s8981, 4
          %s8992 = int_to_ptr.vmem [resolvable:$true] %s8991
          %8994 = dma.vmem_to_hbm [thread:$0]  %s8992, 16, %s8989, %s8979
        $region60: #{ens_forward.1} parent=47 // pred_fallthru
          _
      $region48: #{ens_forward.1} parent=5 // pred_fallthru
        _
      %p8995 = scmp.le.s32.totalorder 2, %s16
      // Predicated region
      $region61: #{ens_forward.1} parent=5 // pred_check
        %p8996 = pneg %p8995
      $region62: #{ens_forward.1} parent=5 // pred_check_branch
        %8998 = sbr.rel (%p8996) target = $region64
      $region63: #{ens_forward.1} parent=5 // pred_region
        %s8999 = ssub.s32 %s16, 2
        // Predicated region
        $region65: #{ens_forward.1} parent=63 // pred_check
          %p9000 = pneg %p211
        $region66: #{ens_forward.1} parent=63 // pred_check_branch
          %9002 = sbr.rel (%p9000) target = $region68
        $region67: #{ens_forward.1} parent=63 // pred_region
          %s9003 = sand.u32 %s196, 1
          %s9004 = scalar_lea.sflag [#allocation4], %s9003
          %s9005 = sand.u32 %s196, 1
          %s9006 = scalar_lea.vmem [#allocation3], %s9005
          %9007 = dma.done %s9004, 16
        $region68: #{ens_forward.1} parent=63 // pred_fallthru
          _
      $region64: #{ens_forward.1} parent=5 // pred_fallthru
        _
    $region6: #{ens_forward.1} parent=1 // loop_footer
      %s20 = sadd.s32 1, %s16
    $region7: #{ens_forward.1} parent=1 // loop_footer_branch
      %15 = sbr.rel target = $region3
    $region8: #{ens_forward.1} parent=1 // loop_exit
      _
    %9008 = vsyncpa [#allocation4], 1
    %s9009 = scalar_lea.sflag [#allocation4], 1
    %9010 = vsyncpa %s9009, 1

</llo_original>
